<compile_context>
chip_gen: v6e
topology: v6e:2x2x1
jax: 0.10.0
libtpu: 0.0.40
codegen_flags: <defaults>
</compile_context>

<pallas_src>
import numpy as np
import jax
import jax.numpy as jnp
from jax.experimental import pallas as pl
from jax.experimental.pallas import tpu as pltpu


def get_haar_wavelet():
    # Mirrors the torch reference (in_channels is unused there as well).
    l = (1.0 / np.sqrt(2.0)) * np.ones((1, 2), np.float64)
    h = (1.0 / np.sqrt(2.0)) * np.ones((1, 2), np.float64)
    h[0, 0] = -h[0, 0]
    return l.T @ l, h.T @ l, l.T @ h, h.T @ h


def _ihaar_kernel(x_ref, o_ref):
    # x_ref : (1, 4, TC, TH, W)   groups (ll, lh, hl, hh), TC channels, TH rows
    # o_ref : (1, TC, 2*TH, 2*W)  final NCHW output tile
    f32 = jnp.float32
    x_ll = x_ref[0, 0].astype(f32)     # (TC, TH, W)
    x_lh = x_ref[0, 1].astype(f32)
    x_hl = x_ref[0, 2].astype(f32)
    x_hh = x_ref[0, 3].astype(f32)

    # Hard-coded +-0.5 Haar butterfly (12 VPU ops / input element, no weight table).
    p = x_ll + x_lh
    q = x_ll - x_lh
    r = x_hl + x_hh
    s = x_hl - x_hh
    b00 = 0.5 * (p + r)   # sub-pixel (dy=0, dx=0)
    b01 = 0.5 * (p - r)   # (0, 1)
    b10 = 0.5 * (q + s)   # (1, 0)
    b11 = 0.5 * (q - s)   # (1, 1)

    tc, th, w = b00.shape
    # Lane (column) interleave: col 2j <- b.0[j], col 2j+1 <- b.1[j]   (VPU/XLU pack).
    top = jnp.stack([b00, b01], axis=-1).reshape(tc, th, 2 * w)   # even output rows
    bot = jnp.stack([b10, b11], axis=-1).reshape(tc, th, 2 * w)   # odd  output rows
    # Sublane (row) interleave: row 2i <- top[i], row 2i+1 <- bot[i].
    tile = jnp.stack([top, bot], axis=-2).reshape(tc, 2 * th, 2 * w)
    # Single dense store of the full (2TH, 2W) tile (no strided lane writes).
    o_ref[0] = tile.astype(o_ref.dtype)


def _sublane_granularity(dtype):
    # f32 -> 8, bf16/f16 -> 16, int8/fp8 -> 32 (sub-32-bit dtypes pack along sublanes).
    bits = jnp.dtype(dtype).itemsize * 8
    return max(8, 256 // bits)


def _vmem_budgets():
    """(tile_budget_bytes, vmem_limit_bytes): generation-aware but always v7x-safe."""
    try:
        phys = int(pltpu.get_tpu_info().vmem_capacity_bytes)
    except Exception:
        phys = 64 * 1024 * 1024          # v7x per-TensorCore floor
    # Never plan for more than 48 MiB of live blocks: v7x has only 64 MiB per core and
    # we leave headroom for compiler scratch regardless of what the query reports.
    tile_budget = min((phys * 3) // 4, 48 * 1024 * 1024)
    vmem_limit = min((phys * 3) // 4, 64 * 1024 * 1024)
    return tile_budget, vmem_limit


def _pick_tiles(N, C, H, W, itemsize, gran, budget):
    # Per-step VMEM model:
    #   input  block: 4*TC*TH*W elems, double-buffered       -> 8*blk*itemsize
    #   output block: TC*2TH*2W = 4*blk elems, double-buffered-> 8*blk*itemsize
    #   in-kernel f32 temporaries (butterfly + interleave)    -> ~16*blk*4 bytes
    def step_bytes(tc, th):
        blk = tc * th * W
        return 16 * blk * itemsize + 64 * blk

    th_cands = [t for t in range(gran, H + 1, gran) if H % t == 0] or [H]
    tc_cands = [t for t in range(1, C + 1) if C % t == 0]

    best = None
    for tc in tc_cands:
        for th in th_cands:
            if step_bytes(tc, th) > budget:
                continue
            steps = N * (C // tc) * (H // th)
            # Prefer >= 2 total grid steps (v7x has 2 TensorCores), then largest block.
            key = (min(steps, 2), tc * th * W)
            if best is None or key > best[0]:
                best = (key, tc, th)
    if best is None:
        # Even the smallest block exceeds the budget (absurdly wide image): fall back
        # to the smallest legal tile and let vmem_limit_bytes arbitrate.
        return 1, min(th_cands)
    return best[1], best[2]


def inverse_haar_transform(x):
    # input NCHW (N, 4*C, H, W)  ->  output NCHW (N, C, 2H, 2W)
    N, C4, H, W = x.shape
    assert C4 % 4 == 0, "channel dim must be divisible by 4 (ll/lh/hl/hh groups)"
    C = C4 // 4

    itemsize = jnp.dtype(x.dtype).itemsize
    gran = _sublane_granularity(x.dtype)
    tile_budget, vmem_limit = _vmem_budgets()
    TC, TH = _pick_tiles(N, C, H, W, itemsize, gran, tile_budget)
    grid = (N, C // TC, H // TH)

    # Free view (adjacent-dim split, no data movement): channels -> (group, channel);
    # the ll/lh/hl/hh gather happens inside the BlockSpec DMA.
    x5 = x.reshape(N, 4, C, H, W)

    # Butterfly-only compute; one read + one write of the tensor.
    flops = int(12 * N * C * H * W)
    bytes_accessed = int(2 * N * 4 * C * H * W * itemsize)

    # TODO(synk): for W < 64 the output last dim 2W < 128 gives masked partial stores;
    # folding channels into the lane dimension would fix it but only matters for tiny tensors.
    return pl.pallas_call(
        _ihaar_kernel,
        out_shape=jax.ShapeDtypeStruct((N, C, 2 * H, 2 * W), x.dtype),
        grid=grid,
        in_specs=[
            pl.BlockSpec((1, 4, TC, TH, W), lambda n, c, h: (n, 0, c, h, 0)),
        ],
        out_specs=pl.BlockSpec((1, TC, 2 * TH, 2 * W), lambda n, c, h: (n, c, h, 0)),
        compiler_params=pltpu.CompilerParams(
            dimension_semantics=("parallel", "parallel", "parallel"),
            vmem_limit_bytes=int(vmem_limit),
        ),
        cost_estimate=pl.CostEstimate(
            flops=flops, transcendentals=0, bytes_accessed=bytes_accessed),
    )(x5)


def _reference(x):
    # Pure-numpy (float64) reference: out[n,c,2a+ry,2b+rx] = sum_g x_g[n,c,a,b]*k_g[ry,rx]
    # with module buffers (ll, -lh, -hl, hh) -- matches upfirdn2d(up=2, pad=(1,0,1,0)).
    x = np.asarray(x, np.float64)
    N, C4, H, W = x.shape
    C = C4 // 4
    ll, lh, hl, hh = get_haar_wavelet()
    ks = np.stack([ll, -lh, -hl, hh], axis=0)
    xg = x.reshape(N, 4, C, H, W)
    out = np.einsum("nichw,iyx->nchywx", xg, ks)       # (N, C, H, 2, W, 2)
    return out.reshape(N, C, 2 * H, 2 * W)


if __name__ == "__main__":
    key = jax.random.PRNGKey(0)
    x = jax.random.normal(key, (2, 8, 16, 16), dtype=jnp.float32)  # (N, 4*C, H, W), C=2

    fwd = jax.jit(inverse_haar_transform)
    out = jax.block_until_ready(fwd(x))

    ref = _reference(np.asarray(x))
    assert out.shape == (2, 2, 32, 32), out.shape
    err = float(np.max(np.abs(np.asarray(out, np.float64) - ref)))
    assert np.allclose(np.asarray(out, np.float64), ref, atol=1e-4, rtol=1e-4), err
    print("KERNEL_OK")
</pallas_src>

<mosaic_0001>
module attributes {stable_mosaic.version = 11 : i64} {
  func.func @_ihaar_kernel(%arg0: i32, %arg1: i32, %arg2: i32, %arg3: memref<1x4x2x16x16xf32, #tpu.memory_space<vmem>>, %arg4: memref<1x2x32x32xf32, #tpu.memory_space<vmem>>) attributes {dimension_semantics = [#tpu.dimension_semantics<parallel>, #tpu.dimension_semantics<parallel>, #tpu.dimension_semantics<parallel>], iteration_bounds = array<i64: 2, 1, 1>, scalar_prefetch = 0 : i64, scratch_operands = 0 : i64, tpu.core_type = #tpu.core_type<tc>, window_params = [{transform_indices = @transform_0, window_bounds = array<i64: 1, 4, 2, 16, 16>}, {transform_indices = @transform_1, window_bounds = array<i64: 1, 2, 32, 32>}]} {
    %c0 = arith.constant 0 : index
    %c0_0 = arith.constant 0 : index
    %c0_1 = arith.constant 0 : index
    %c0_2 = arith.constant 0 : index
    %c0_3 = arith.constant 0 : index
    %0 = vector.load %arg3[%c0, %c0_0, %c0_1, %c0_2, %c0_3] : memref<1x4x2x16x16xf32, #tpu.memory_space<vmem>>, vector<1x1x2x16x16xf32>
    %1 = vector.shape_cast %0 : vector<1x1x2x16x16xf32> to vector<2x16x16xf32>
    %c0_4 = arith.constant 0 : index
    %c1 = arith.constant 1 : index
    %c0_5 = arith.constant 0 : index
    %c0_6 = arith.constant 0 : index
    %c0_7 = arith.constant 0 : index
    %2 = vector.load %arg3[%c0_4, %c1, %c0_5, %c0_6, %c0_7] : memref<1x4x2x16x16xf32, #tpu.memory_space<vmem>>, vector<1x1x2x16x16xf32>
    %3 = vector.shape_cast %2 : vector<1x1x2x16x16xf32> to vector<2x16x16xf32>
    %c0_8 = arith.constant 0 : index
    %c2 = arith.constant 2 : index
    %c0_9 = arith.constant 0 : index
    %c0_10 = arith.constant 0 : index
    %c0_11 = arith.constant 0 : index
    %4 = vector.load %arg3[%c0_8, %c2, %c0_9, %c0_10, %c0_11] : memref<1x4x2x16x16xf32, #tpu.memory_space<vmem>>, vector<1x1x2x16x16xf32>
    %5 = vector.shape_cast %4 : vector<1x1x2x16x16xf32> to vector<2x16x16xf32>
    %c0_12 = arith.constant 0 : index
    %c3 = arith.constant 3 : index
    %c0_13 = arith.constant 0 : index
    %c0_14 = arith.constant 0 : index
    %c0_15 = arith.constant 0 : index
    %6 = vector.load %arg3[%c0_12, %c3, %c0_13, %c0_14, %c0_15] : memref<1x4x2x16x16xf32, #tpu.memory_space<vmem>>, vector<1x1x2x16x16xf32>
    %7 = vector.shape_cast %6 : vector<1x1x2x16x16xf32> to vector<2x16x16xf32>
    %8 = arith.addf %1, %3 : vector<2x16x16xf32>
    %9 = arith.subf %1, %3 : vector<2x16x16xf32>
    %10 = arith.addf %5, %7 : vector<2x16x16xf32>
    %11 = arith.subf %5, %7 : vector<2x16x16xf32>
    %12 = arith.addf %8, %10 : vector<2x16x16xf32>
    %cst = arith.constant 5.000000e-01 : f32
    %13 = vector.broadcast %cst : f32 to vector<2x16x16xf32>
    %14 = arith.mulf %13, %12 : vector<2x16x16xf32>
    %15 = arith.subf %8, %10 : vector<2x16x16xf32>
    %cst_16 = arith.constant 5.000000e-01 : f32
    %16 = vector.broadcast %cst_16 : f32 to vector<2x16x16xf32>
    %17 = arith.mulf %16, %15 : vector<2x16x16xf32>
    %18 = arith.addf %9, %11 : vector<2x16x16xf32>
    %cst_17 = arith.constant 5.000000e-01 : f32
    %19 = vector.broadcast %cst_17 : f32 to vector<2x16x16xf32>
    %20 = arith.mulf %19, %18 : vector<2x16x16xf32>
    %21 = arith.subf %9, %11 : vector<2x16x16xf32>
    %cst_18 = arith.constant 5.000000e-01 : f32
    %22 = vector.broadcast %cst_18 : f32 to vector<2x16x16xf32>
    %23 = arith.mulf %22, %21 : vector<2x16x16xf32>
    %24 = vector.shape_cast %14 : vector<2x16x16xf32> to vector<2x16x16x1xf32>
    %25 = vector.shape_cast %17 : vector<2x16x16xf32> to vector<2x16x16x1xf32>
    %26 = tpu.concatenate %24, %25 in 3 : vector<2x16x16x1xf32>, vector<2x16x16x1xf32> -> vector<2x16x16x2xf32>
    %27 = vector.shape_cast %26 : vector<2x16x16x2xf32> to vector<2x16x32xf32>
    %28 = vector.shape_cast %20 : vector<2x16x16xf32> to vector<2x16x16x1xf32>
    %29 = vector.shape_cast %23 : vector<2x16x16xf32> to vector<2x16x16x1xf32>
    %30 = tpu.concatenate %28, %29 in 3 : vector<2x16x16x1xf32>, vector<2x16x16x1xf32> -> vector<2x16x16x2xf32>
    %31 = vector.shape_cast %30 : vector<2x16x16x2xf32> to vector<2x16x32xf32>
    %32 = vector.shape_cast %27 : vector<2x16x32xf32> to vector<2x16x1x32xf32>
    %33 = vector.shape_cast %31 : vector<2x16x32xf32> to vector<2x16x1x32xf32>
    %34 = tpu.concatenate %32, %33 in 2 : vector<2x16x1x32xf32>, vector<2x16x1x32xf32> -> vector<2x16x2x32xf32>
    %35 = vector.shape_cast %34 : vector<2x16x2x32xf32> to vector<2x32x32xf32>
    %c0_19 = arith.constant 0 : index
    %c0_20 = arith.constant 0 : index
    %c0_21 = arith.constant 0 : index
    %c0_22 = arith.constant 0 : index
    %36 = vector.load %arg4[%c0_19, %c0_20, %c0_21, %c0_22] : memref<1x2x32x32xf32, #tpu.memory_space<vmem>>, vector<1x2x32x32xf32>
    %37 = vector.shape_cast %36 : vector<1x2x32x32xf32> to vector<2x32x32xf32>
    %38 = vector.shape_cast %35 : vector<2x32x32xf32> to vector<1x2x32x32xf32>
    tpu.vector_store %arg4[%c0_19, %c0_20, %c0_21, %c0_22], %38 {strides = array<i32>} : memref<1x2x32x32xf32, #tpu.memory_space<vmem>>, vector<1x2x32x32xf32>,
    return
  }
  func.func @transform_0(%arg0: i32, %arg1: i32, %arg2: i32) -> (i32, i32, i32, i32, i32) {
    %c0_i32 = arith.constant 0 : i32
    %c0_i32_0 = arith.constant 0 : i32
    %c0_i32_1 = arith.constant 0 : i32
    return %arg0, %c0_i32, %arg1, %arg2, %c0_i32_0 : i32, i32, i32, i32, i32
  }
  func.func @transform_1(%arg0: i32, %arg1: i32, %arg2: i32) -> (i32, i32, i32, i32) {
    %c0_i32 = arith.constant 0 : i32
    %c0_i32_0 = arith.constant 0 : i32
    return %arg0, %arg1, %arg2, %c0_i32 : i32, i32, i32, i32
  }
}

</mosaic_0001>

<llo_original>
// kernel: inverse_haar_transform.1
$region0: #{inverse_haar_transform.1}
  #allocation0 [shape = 'u32[]', space=smem, size = 0x4, offset = 0x4, fixed_abs, tag = 'smem constant byte address 0x4 - core index']
  #allocation1 [shape = 'u32[144,128]{1,0:T(1,128)}', space=vmem, size = 0x12000, scoped, tag = 'internal scratch']
  %s0 = inlined_call_operand.hbm [shape: f32[2,4,2,16,16], index: 0, kind: input, shape index: {}]
  %s1 = inlined_call_operand.hbm [shape: f32[2,2,32,32], index: 1, kind: output, shape index: {}]
  %s2 = sld [smem:[#allocation0]]
  $region41: #{inverse_haar_transform.1} parent=0
    _
  %s4 = ssub.s32 1, %s2
  %s5 = scalar_select 0, %s4, %s2
  $region1: #{inverse_haar_transform.1} parent=0
    #allocation2 [shape = 'u8[131072]{0}', space=vmem, size = 0x20000, scoped, tag = 'input window, operand 0']
    #allocation3 [shape = 's32[2]{0}', space=sflag, size = 0x8, scoped, tag = 'scoped memory for inverse_haar_transform.1']
    #allocation4 [shape = 's32[2]{0}', space=sflag, size = 0x8, scoped, tag = 'scoped memory for inverse_haar_transform.1']
    #allocation5 [shape = 'u8[65536]{0}', space=vmem, size = 0x10000, scoped, tag = 'output window, operand 0']
    %6 = vsyncpa [#allocation3], 0
    %s7 = scalar_lea.sflag [#allocation3], 1
    %8 = vsyncpa %s7, 0
    %9 = vsyncpa [#allocation4], 0
    %s10 = scalar_lea.sflag [#allocation4], 1
    %11 = vsyncpa %s10, 0
    loop: start=0, step=1, limit=4
    $region2: #{inverse_haar_transform.1} parent=1 // loop_pre_header
      _
    $region3: #{inverse_haar_transform.1} parent=1 // loop_header
      %s13 = sphi 0, %s17
      %p14 = scmp.ge.s32.totalorder %s13, 4
      %s20 = sphi 0, %s39
      %s21 = sphi 0, %s35
      %s22 = sphi 0, %s31
      %s23 = sphi 0, %s20
      %s24 = sphi 0, %s21
      %s25 = sphi 0, %s22
      %s26 = sphi 0, %s23
      %s27 = sphi 0, %s24
      %s28 = sphi 0, %s25
      %s46 = sphi 0, %s48
      %s49 = sphi 0, %s46
      %s50 = sphi 0, %s49
      %s66 = sphi 0, %s50
      %s76 = sphi 0, %s78
      %s79 = sphi 0, %s76
      %s80 = sphi 0, %s79
      %s96 = sphi 0, %s80
    $region4: #{inverse_haar_transform.1} parent=1 // loop_header_branch
      %16 = sbr.rel (%p14) target = $region8
    $region5: #{inverse_haar_transform.1} parent=1 // loop_body
      %s18 = ssub.s32 %s13, 1
      %s19 = ssub.s32 %s13, 2
      %s29 = sadd.s32 1, %s22
      %p30 = scmp.ge.s32.totalorder %s29, 1
      %s31 = scalar_select %p30, 0, %s29
      %s32 = sadd.s32 1, %s21
      %s33 = scalar_select %p30, %s32, %s21
      %p34 = scmp.ge.s32.totalorder %s33, 1
      %s35 = scalar_select %p34, 0, %s33
      %s36 = sadd.s32 1, %s20
      %s37 = scalar_select %p34, %s36, %s20
      %p38 = scmp.ge.s32.totalorder %s37, 2
      %s39 = scalar_select %p38, 0, %s37
      %s40 = ssub.s32 %s20, %s39
      %s41 = ssub.s32 %s21, %s35
      %s42 = sor.u32 %s40, %s41
      %s43 = ssub.s32 %s22, %s31
      %s44 = sor.u32 %s42, %s43
      %p45 = scmp.eq.s32.totalorder %s44, 0
      %s47 = sadd.s32 %s46, 1
      %s48 = scalar_select %p45, %s46, %s47
      %p51 = pneg %p45
      %p52 = scmp.eq.s32.totalorder %s13, 1
      %p53 = por %p51, %p52
      %p54 = scmp.ne.s32.totalorder %s46, %s49
      %p55 = scmp.eq.s32.totalorder %s13, 0
      %p56 = por %p54, %p55
      %p57 = scmp.ne.s32.totalorder %s46, %s49
      %p58 = scmp.eq.s32.totalorder %s18, 1
      %p59 = por %p57, %p58
      %p60 = scmp.ne.s32.totalorder %s49, %s50
      %p61 = scmp.eq.s32.totalorder %s18, 0
      %p62 = por %p60, %p61
      %p63 = scmp.ne.s32.totalorder %s49, %s50
      %p64 = scmp.eq.s32.totalorder %s19, 1
      %p65 = por %p63, %p64
      %p67 = scmp.ne.s32.totalorder %s50, %s66
      %p68 = scmp.eq.s32.totalorder %s19, 0
      %p69 = por %p67, %p68
      %s70 = ssub.s32 %s20, %s39
      %s71 = ssub.s32 %s21, %s35
      %s72 = sor.u32 %s70, %s71
      %s73 = ssub.s32 %s22, %s31
      %s74 = sor.u32 %s72, %s73
      %p75 = scmp.eq.s32.totalorder %s74, 0
      %s77 = sadd.s32 %s76, 1
      %s78 = scalar_select %p75, %s76, %s77
      %p81 = pneg %p75
      %p82 = scmp.eq.s32.totalorder %s13, 1
      %p83 = por %p81, %p82
      %p84 = scmp.ne.s32.totalorder %s76, %s79
      %p85 = scmp.eq.s32.totalorder %s13, 0
      %p86 = por %p84, %p85
      %p87 = scmp.ne.s32.totalorder %s76, %s79
      %p88 = scmp.eq.s32.totalorder %s18, 1
      %p89 = por %p87, %p88
      %p90 = scmp.ne.s32.totalorder %s79, %s80
      %p91 = scmp.eq.s32.totalorder %s18, 0
      %p92 = por %p90, %p91
      %p93 = scmp.ne.s32.totalorder %s79, %s80
      %p94 = scmp.eq.s32.totalorder %s19, 1
      %p95 = por %p93, %p94
      %p97 = scmp.ne.s32.totalorder %s80, %s96
      %p98 = scmp.eq.s32.totalorder %s19, 0
      %p99 = por %p97, %p98
      %p100 = scmp.le.s32.totalorder 1, %s13
      %p101 = scmp.lt.s32.totalorder %s13, 3
      %p102 = pnand %p100, %p101
      %p103 = pneg %p102
      // Predicated region
      $region9: #{inverse_haar_transform.1} parent=5 // pred_check
        _
      $region10: #{inverse_haar_transform.1} parent=5 // pred_check_branch
        %105 = sbr.rel (%p102) target = $region12
      $region11: #{inverse_haar_transform.1} parent=5 // pred_region
        %s106 = ssub.s32 %s13, 1
      $region12: #{inverse_haar_transform.1} parent=5 // pred_fallthru
        _
      %p107 = scmp.lt.s32.totalorder %s13, 2
      // Predicated region
      $region13: #{inverse_haar_transform.1} parent=5 // pred_check
        %p108 = pneg %p107
      $region14: #{inverse_haar_transform.1} parent=5 // pred_check_branch
        %110 = sbr.rel (%p108) target = $region16
      $region15: #{inverse_haar_transform.1} parent=5 // pred_region
        // Predicated region
        $region17: #{inverse_haar_transform.1} parent=15 // pred_check
          %p111 = pneg %p56
        $region18: #{inverse_haar_transform.1} parent=15 // pred_check_branch
          %113 = sbr.rel (%p111) target = $region20
        $region19: #{inverse_haar_transform.1} parent=15 // pred_region
          %s114 = sand.u32 %s46, 1
          %s115 = scalar_lea.sflag [#allocation3], %s114
          %s116 = sand.u32 %s46, 1
          %s117 = smul.addr %s116, 128
          %s118 = scalar_lea.vmem [#allocation2], %s117
          %s119 = smul.u32 2, %s21
          %s120 = smul.u32 2, %s22
          %s122 = ssub.s32 2048, 2048
          %123 = vsyncadd %s115, %s122
          %s124 = smul.addr %s119, 2
          %s125 = sadd.s32 %s120, %s124
          %s126 = smul.addr %s20, 16
          %s127 = sadd.s32 %s125, %s126
          %s128 = smul.addr %s127, 128
          %s129 = scalar_lea.hbm %s0, %s128
          %s130 = sshll.u32 %s118, 4
          %s131 = int_to_ptr.vmem [resolvable:$true] %s130
          %136 = dma.hbm_to_vmem [thread:$0]  %s129, 2048, %s131, %s115, 128, 128, 8
        $region20: #{inverse_haar_transform.1} parent=15 // pred_fallthru
          _
      $region16: #{inverse_haar_transform.1} parent=5 // pred_fallthru
        _
      %p137 = scmp.le.s32.totalorder 1, %s13
      %p138 = scmp.lt.s32.totalorder %s13, 3
      %p139 = pnand %p137, %p138
      %p140 = pneg %p139
      // Predicated region
      $region21: #{inverse_haar_transform.1} parent=5 // pred_check
        _
      $region22: #{inverse_haar_transform.1} parent=5 // pred_check_branch
        %142 = sbr.rel (%p139) target = $region24
      $region23: #{inverse_haar_transform.1} parent=5 // pred_region
        %s143 = ssub.s32 %s13, 1
        %s144 = sand.u32 %s49, 1
        %s145 = scalar_lea.sflag [#allocation3], %s144
        %s146 = sand.u32 %s49, 1
        %s147 = smul.addr %s146, 128
        %s148 = scalar_lea.vmem [#allocation2], %s147
        // Predicated region
        $region25: #{inverse_haar_transform.1} parent=23 // pred_check
          %p149 = pneg %p62
        $region26: #{inverse_haar_transform.1} parent=23 // pred_check_branch
          %151 = sbr.rel (%p149) target = $region28
        $region27: #{inverse_haar_transform.1} parent=23 // pred_region
          %152 = dma.done %s145, 2048
        $region28: #{inverse_haar_transform.1} parent=23 // pred_fallthru
          _
        %s153 = sand.u32 %s49, 1
        %s154 = scalar_lea.sflag [#allocation3], %s153
        %s155 = sand.u32 %s49, 1
        %s156 = smul.addr %s155, 128
        %s157 = scalar_lea.vmem [#allocation2], %s156
        %p158 = pneg %p62
        %p159 = pneg %p59
        %p160 = pneg %p92
        %p161 = pneg %p89
        %s162 = sand.u32 %s79, 1
        %s163 = scalar_lea.sflag [#allocation4], %s162
        %s164 = sand.u32 %s79, 1
        %s165 = smul.addr %s164, 64
        %s166 = scalar_lea.vmem [#allocation5], %s165
        %s167 = smul.u32 2, %s24
        %s168 = smul.u32 2, %s25
        %s169 = smul.u32 2, %s24
        %s170 = smul.u32 4, %s25
        %v171 = vld [vmem:[%s148] sm:$0xff]
        %v172 = vld [vmem:[%s148 + $0x8] sm:$0xff]
        %v173 = vld [vmem:[%s148 + $0x10] sm:$0xff]
        %v174 = vld [vmem:[%s148 + $0x18] sm:$0xff]
        %s175 = scalar_lea.vmem %s148, 32 [#allocation2]
        %v176 = vld [vmem:[%s175] sm:$0xff]
        %v177 = vld [vmem:[%s175 + $0x8] sm:$0xff]
        %v178 = vld [vmem:[%s175 + $0x10] sm:$0xff]
        %v179 = vld [vmem:[%s175 + $0x18] sm:$0xff]
        %s180 = scalar_lea.vmem %s148, 64 [#allocation2]
        %v181 = vld [vmem:[%s180] sm:$0xff]
        %v182 = vld [vmem:[%s180 + $0x8] sm:$0xff]
        %v183 = vld [vmem:[%s180 + $0x10] sm:$0xff]
        %v184 = vld [vmem:[%s180 + $0x18] sm:$0xff]
        %s185 = scalar_lea.vmem %s148, 96 [#allocation2]
        %v186 = vld [vmem:[%s185] sm:$0xff]
        %v187 = vld [vmem:[%s185 + $0x8] sm:$0xff]
        %v188 = vld [vmem:[%s185 + $0x10] sm:$0xff]
        %v189 = vld [vmem:[%s185 + $0x18] sm:$0xff]
        %v190 = vadd.f32 %v171, %v176
        %v191 = vadd.f32 %v172, %v177
        %v192 = vadd.f32 %v173, %v178
        %v193 = vadd.f32 %v174, %v179
        %v194 = vsub.f32 %v171, %v176
        %v195 = vsub.f32 %v172, %v177
        %v196 = vsub.f32 %v173, %v178
        %v197 = vsub.f32 %v174, %v179
        %v198 = vadd.f32 %v181, %v186
        %v199 = vadd.f32 %v182, %v187
        %v200 = vadd.f32 %v183, %v188
        %v201 = vadd.f32 %v184, %v189
        %v202 = vsub.f32 %v181, %v186
        %v203 = vsub.f32 %v182, %v187
        %v204 = vsub.f32 %v183, %v188
        %v205 = vsub.f32 %v184, %v189
        %v206 = vadd.f32 %v190, %v198
        %v207 = vadd.f32 %v191, %v199
        %v208 = vadd.f32 %v192, %v200
        %v209 = vadd.f32 %v193, %v201
        %v210 = vmul.f32 %v206, 0.5
        %v211 = vmul.f32 %v207, 0.5
        %v212 = vmul.f32 %v208, 0.5
        %v213 = vmul.f32 %v209, 0.5
        %v214 = vsub.f32 %v190, %v198
        %v215 = vsub.f32 %v191, %v199
        %v216 = vsub.f32 %v192, %v200
        %v217 = vsub.f32 %v193, %v201
        %v218 = vmul.f32 %v214, 0.5
        %v219 = vmul.f32 %v215, 0.5
        %v220 = vmul.f32 %v216, 0.5
        %v221 = vmul.f32 %v217, 0.5
        %v222 = vadd.f32 %v194, %v202
        %v223 = vadd.f32 %v195, %v203
        %v224 = vadd.f32 %v196, %v204
        %v225 = vadd.f32 %v197, %v205
        %v226 = vmul.f32 %v222, 0.5
        %v227 = vmul.f32 %v223, 0.5
        %v228 = vmul.f32 %v224, 0.5
        %v229 = vmul.f32 %v225, 0.5
        %v230 = vsub.f32 %v194, %v202
        %v231 = vsub.f32 %v195, %v203
        %v232 = vsub.f32 %v196, %v204
        %v233 = vsub.f32 %v197, %v205
        %v234 = vmul.f32 %v230, 0.5
        %v235 = vmul.f32 %v231, 0.5
        %v236 = vmul.f32 %v232, 0.5
        %v237 = vmul.f32 %v233, 0.5
        %v238 = vlaneseq
        %v239 = vshrl.u32 %v238, 7
        %v240 = vsub.s32 0, %v239
        %v241 = vrot.slane %v210, %v240
        %243 = vbcast.lane.b32.xlu0 %v241, 256
        %v244 = vpop.permute.xlu0 %243
        %s246 = sor.u32 256, 8
        %247 = vbcast.lane.b32.xlu0 %v241, %s246
        %v248 = vpop.permute.xlu0 %247
        %v249 = vlaneseq
        %v250 = vshrl.u32 %v249, 7
        %v251 = vsub.s32 1, %v250
        %v252 = vrot.slane %v210, %v251
        %254 = vbcast.lane.b32.xlu0 %v252, 256
        %v255 = vpop.permute.xlu0 %254
        %s257 = sor.u32 256, 8
        %258 = vbcast.lane.b32.xlu0 %v252, %s257
        %v259 = vpop.permute.xlu0 %258
        %v260 = vlaneseq
        %v261 = vshrl.u32 %v260, 7
        %v262 = vsub.s32 2, %v261
        %v263 = vrot.slane %v210, %v262
        %265 = vbcast.lane.b32.xlu0 %v263, 256
        %v266 = vpop.permute.xlu0 %265
        %s268 = sor.u32 256, 8
        %269 = vbcast.lane.b32.xlu0 %v263, %s268
        %v270 = vpop.permute.xlu0 %269
        %v271 = vlaneseq
        %v272 = vshrl.u32 %v271, 7
        %v273 = vsub.s32 3, %v272
        %v274 = vrot.slane %v210, %v273
        %276 = vbcast.lane.b32.xlu0 %v274, 256
        %v277 = vpop.permute.xlu0 %276
        %s279 = sor.u32 256, 8
        %280 = vbcast.lane.b32.xlu0 %v274, %s279
        %v281 = vpop.permute.xlu0 %280
        %v282 = vlaneseq
        %v283 = vshrl.u32 %v282, 7
        %v284 = vsub.s32 4, %v283
        %v285 = vrot.slane %v210, %v284
        %287 = vbcast.lane.b32.xlu0 %v285, 256
        %v288 = vpop.permute.xlu0 %287
        %s290 = sor.u32 256, 8
        %291 = vbcast.lane.b32.xlu0 %v285, %s290
        %v292 = vpop.permute.xlu0 %291
        %v293 = vlaneseq
        %v294 = vshrl.u32 %v293, 7
        %v295 = vsub.s32 5, %v294
        %v296 = vrot.slane %v210, %v295
        %298 = vbcast.lane.b32.xlu0 %v296, 256
        %v299 = vpop.permute.xlu0 %298
        %s301 = sor.u32 256, 8
        %302 = vbcast.lane.b32.xlu0 %v296, %s301
        %v303 = vpop.permute.xlu0 %302
        %v304 = vlaneseq
        %v305 = vshrl.u32 %v304, 7
        %v306 = vsub.s32 6, %v305
        %v307 = vrot.slane %v210, %v306
        %309 = vbcast.lane.b32.xlu0 %v307, 256
        %v310 = vpop.permute.xlu0 %309
        %s312 = sor.u32 256, 8
        %313 = vbcast.lane.b32.xlu0 %v307, %s312
        %v314 = vpop.permute.xlu0 %313
        %v315 = vlaneseq
        %v316 = vshrl.u32 %v315, 7
        %v317 = vsub.s32 7, %v316
        %v318 = vrot.slane %v210, %v317
        %320 = vbcast.lane.b32.xlu0 %v318, 256
        %v321 = vpop.permute.xlu0 %320
        %s323 = sor.u32 256, 8
        %324 = vbcast.lane.b32.xlu0 %v318, %s323
        %v325 = vpop.permute.xlu0 %324
        %v326 = vlaneseq
        %v327 = vshrl.u32 %v326, 7
        %v328 = vsub.s32 0, %v327
        %v329 = vrot.slane %v211, %v328
        %331 = vbcast.lane.b32.xlu0 %v329, 256
        %v332 = vpop.permute.xlu0 %331
        %s334 = sor.u32 256, 8
        %335 = vbcast.lane.b32.xlu0 %v329, %s334
        %v336 = vpop.permute.xlu0 %335
        %v337 = vlaneseq
        %v338 = vshrl.u32 %v337, 7
        %v339 = vsub.s32 1, %v338
        %v340 = vrot.slane %v211, %v339
        %342 = vbcast.lane.b32.xlu0 %v340, 256
        %v343 = vpop.permute.xlu0 %342
        %s345 = sor.u32 256, 8
        %346 = vbcast.lane.b32.xlu0 %v340, %s345
        %v347 = vpop.permute.xlu0 %346
        %v348 = vlaneseq
        %v349 = vshrl.u32 %v348, 7
        %v350 = vsub.s32 2, %v349
        %v351 = vrot.slane %v211, %v350
        %353 = vbcast.lane.b32.xlu0 %v351, 256
        %v354 = vpop.permute.xlu0 %353
        %s356 = sor.u32 256, 8
        %357 = vbcast.lane.b32.xlu0 %v351, %s356
        %v358 = vpop.permute.xlu0 %357
        %v359 = vlaneseq
        %v360 = vshrl.u32 %v359, 7
        %v361 = vsub.s32 3, %v360
        %v362 = vrot.slane %v211, %v361
        %364 = vbcast.lane.b32.xlu0 %v362, 256
        %v365 = vpop.permute.xlu0 %364
        %s367 = sor.u32 256, 8
        %368 = vbcast.lane.b32.xlu0 %v362, %s367
        %v369 = vpop.permute.xlu0 %368
        %v370 = vlaneseq
        %v371 = vshrl.u32 %v370, 7
        %v372 = vsub.s32 4, %v371
        %v373 = vrot.slane %v211, %v372
        %375 = vbcast.lane.b32.xlu0 %v373, 256
        %v376 = vpop.permute.xlu0 %375
        %s378 = sor.u32 256, 8
        %379 = vbcast.lane.b32.xlu0 %v373, %s378
        %v380 = vpop.permute.xlu0 %379
        %v381 = vlaneseq
        %v382 = vshrl.u32 %v381, 7
        %v383 = vsub.s32 5, %v382
        %v384 = vrot.slane %v211, %v383
        %386 = vbcast.lane.b32.xlu0 %v384, 256
        %v387 = vpop.permute.xlu0 %386
        %s389 = sor.u32 256, 8
        %390 = vbcast.lane.b32.xlu0 %v384, %s389
        %v391 = vpop.permute.xlu0 %390
        %v392 = vlaneseq
        %v393 = vshrl.u32 %v392, 7
        %v394 = vsub.s32 6, %v393
        %v395 = vrot.slane %v211, %v394
        %397 = vbcast.lane.b32.xlu0 %v395, 256
        %v398 = vpop.permute.xlu0 %397
        %s400 = sor.u32 256, 8
        %401 = vbcast.lane.b32.xlu0 %v395, %s400
        %v402 = vpop.permute.xlu0 %401
        %v403 = vlaneseq
        %v404 = vshrl.u32 %v403, 7
        %v405 = vsub.s32 7, %v404
        %v406 = vrot.slane %v211, %v405
        %408 = vbcast.lane.b32.xlu0 %v406, 256
        %v409 = vpop.permute.xlu0 %408
        %s411 = sor.u32 256, 8
        %412 = vbcast.lane.b32.xlu0 %v406, %s411
        %v413 = vpop.permute.xlu0 %412
        %v414 = vlaneseq
        %v415 = vshrl.u32 %v414, 7
        %v416 = vsub.s32 0, %v415
        %v417 = vrot.slane %v212, %v416
        %419 = vbcast.lane.b32.xlu0 %v417, 256
        %v420 = vpop.permute.xlu0 %419
        %s422 = sor.u32 256, 8
        %423 = vbcast.lane.b32.xlu0 %v417, %s422
        %v424 = vpop.permute.xlu0 %423
        %v425 = vlaneseq
        %v426 = vshrl.u32 %v425, 7
        %v427 = vsub.s32 1, %v426
        %v428 = vrot.slane %v212, %v427
        %430 = vbcast.lane.b32.xlu0 %v428, 256
        %v431 = vpop.permute.xlu0 %430
        %s433 = sor.u32 256, 8
        %434 = vbcast.lane.b32.xlu0 %v428, %s433
        %v435 = vpop.permute.xlu0 %434
        %v436 = vlaneseq
        %v437 = vshrl.u32 %v436, 7
        %v438 = vsub.s32 2, %v437
        %v439 = vrot.slane %v212, %v438
        %441 = vbcast.lane.b32.xlu0 %v439, 256
        %v442 = vpop.permute.xlu0 %441
        %s444 = sor.u32 256, 8
        %445 = vbcast.lane.b32.xlu0 %v439, %s444
        %v446 = vpop.permute.xlu0 %445
        %v447 = vlaneseq
        %v448 = vshrl.u32 %v447, 7
        %v449 = vsub.s32 3, %v448
        %v450 = vrot.slane %v212, %v449
        %452 = vbcast.lane.b32.xlu0 %v450, 256
        %v453 = vpop.permute.xlu0 %452
        %s455 = sor.u32 256, 8
        %456 = vbcast.lane.b32.xlu0 %v450, %s455
        %v457 = vpop.permute.xlu0 %456
        %v458 = vlaneseq
        %v459 = vshrl.u32 %v458, 7
        %v460 = vsub.s32 4, %v459
        %v461 = vrot.slane %v212, %v460
        %463 = vbcast.lane.b32.xlu0 %v461, 256
        %v464 = vpop.permute.xlu0 %463
        %s466 = sor.u32 256, 8
        %467 = vbcast.lane.b32.xlu0 %v461, %s466
        %v468 = vpop.permute.xlu0 %467
        %v469 = vlaneseq
        %v470 = vshrl.u32 %v469, 7
        %v471 = vsub.s32 5, %v470
        %v472 = vrot.slane %v212, %v471
        %474 = vbcast.lane.b32.xlu0 %v472, 256
        %v475 = vpop.permute.xlu0 %474
        %s477 = sor.u32 256, 8
        %478 = vbcast.lane.b32.xlu0 %v472, %s477
        %v479 = vpop.permute.xlu0 %478
        %v480 = vlaneseq
        %v481 = vshrl.u32 %v480, 7
        %v482 = vsub.s32 6, %v481
        %v483 = vrot.slane %v212, %v482
        %485 = vbcast.lane.b32.xlu0 %v483, 256
        %v486 = vpop.permute.xlu0 %485
        %s488 = sor.u32 256, 8
        %489 = vbcast.lane.b32.xlu0 %v483, %s488
        %v490 = vpop.permute.xlu0 %489
        %v491 = vlaneseq
        %v492 = vshrl.u32 %v491, 7
        %v493 = vsub.s32 7, %v492
        %v494 = vrot.slane %v212, %v493
        %496 = vbcast.lane.b32.xlu0 %v494, 256
        %v497 = vpop.permute.xlu0 %496
        %s499 = sor.u32 256, 8
        %500 = vbcast.lane.b32.xlu0 %v494, %s499
        %v501 = vpop.permute.xlu0 %500
        %v502 = vlaneseq
        %v503 = vshrl.u32 %v502, 7
        %v504 = vsub.s32 0, %v503
        %v505 = vrot.slane %v213, %v504
        %507 = vbcast.lane.b32.xlu0 %v505, 256
        %v508 = vpop.permute.xlu0 %507
        %s510 = sor.u32 256, 8
        %511 = vbcast.lane.b32.xlu0 %v505, %s510
        %v512 = vpop.permute.xlu0 %511
        %v513 = vlaneseq
        %v514 = vshrl.u32 %v513, 7
        %v515 = vsub.s32 1, %v514
        %v516 = vrot.slane %v213, %v515
        %518 = vbcast.lane.b32.xlu0 %v516, 256
        %v519 = vpop.permute.xlu0 %518
        %s521 = sor.u32 256, 8
        %522 = vbcast.lane.b32.xlu0 %v516, %s521
        %v523 = vpop.permute.xlu0 %522
        %v524 = vlaneseq
        %v525 = vshrl.u32 %v524, 7
        %v526 = vsub.s32 2, %v525
        %v527 = vrot.slane %v213, %v526
        %529 = vbcast.lane.b32.xlu0 %v527, 256
        %v530 = vpop.permute.xlu0 %529
        %s532 = sor.u32 256, 8
        %533 = vbcast.lane.b32.xlu0 %v527, %s532
        %v534 = vpop.permute.xlu0 %533
        %v535 = vlaneseq
        %v536 = vshrl.u32 %v535, 7
        %v537 = vsub.s32 3, %v536
        %v538 = vrot.slane %v213, %v537
        %540 = vbcast.lane.b32.xlu0 %v538, 256
        %v541 = vpop.permute.xlu0 %540
        %s543 = sor.u32 256, 8
        %544 = vbcast.lane.b32.xlu0 %v538, %s543
        %v545 = vpop.permute.xlu0 %544
        %v546 = vlaneseq
        %v547 = vshrl.u32 %v546, 7
        %v548 = vsub.s32 4, %v547
        %v549 = vrot.slane %v213, %v548
        %551 = vbcast.lane.b32.xlu0 %v549, 256
        %v552 = vpop.permute.xlu0 %551
        %s554 = sor.u32 256, 8
        %555 = vbcast.lane.b32.xlu0 %v549, %s554
        %v556 = vpop.permute.xlu0 %555
        %v557 = vlaneseq
        %v558 = vshrl.u32 %v557, 7
        %v559 = vsub.s32 5, %v558
        %v560 = vrot.slane %v213, %v559
        %562 = vbcast.lane.b32.xlu0 %v560, 256
        %v563 = vpop.permute.xlu0 %562
        %s565 = sor.u32 256, 8
        %566 = vbcast.lane.b32.xlu0 %v560, %s565
        %v567 = vpop.permute.xlu0 %566
        %v568 = vlaneseq
        %v569 = vshrl.u32 %v568, 7
        %v570 = vsub.s32 6, %v569
        %v571 = vrot.slane %v213, %v570
        %573 = vbcast.lane.b32.xlu0 %v571, 256
        %v574 = vpop.permute.xlu0 %573
        %s576 = sor.u32 256, 8
        %577 = vbcast.lane.b32.xlu0 %v571, %s576
        %v578 = vpop.permute.xlu0 %577
        %v579 = vlaneseq
        %v580 = vshrl.u32 %v579, 7
        %v581 = vsub.s32 7, %v580
        %v582 = vrot.slane %v213, %v581
        %584 = vbcast.lane.b32.xlu0 %v582, 256
        %v585 = vpop.permute.xlu0 %584
        %s587 = sor.u32 256, 8
        %588 = vbcast.lane.b32.xlu0 %v582, %s587
        %v589 = vpop.permute.xlu0 %588
        %v590 = vlaneseq
        %v591 = vshrl.u32 %v590, 7
        %v592 = vsub.s32 0, %v591
        %v593 = vrot.slane %v218, %v592
        %595 = vbcast.lane.b32.xlu0 %v593, 256
        %v596 = vpop.permute.xlu0 %595
        %s598 = sor.u32 256, 8
        %599 = vbcast.lane.b32.xlu0 %v593, %s598
        %v600 = vpop.permute.xlu0 %599
        %v601 = vlaneseq
        %v602 = vshrl.u32 %v601, 7
        %v603 = vsub.s32 1, %v602
        %v604 = vrot.slane %v218, %v603
        %606 = vbcast.lane.b32.xlu0 %v604, 256
        %v607 = vpop.permute.xlu0 %606
        %s609 = sor.u32 256, 8
        %610 = vbcast.lane.b32.xlu0 %v604, %s609
        %v611 = vpop.permute.xlu0 %610
        %v612 = vlaneseq
        %v613 = vshrl.u32 %v612, 7
        %v614 = vsub.s32 2, %v613
        %v615 = vrot.slane %v218, %v614
        %617 = vbcast.lane.b32.xlu0 %v615, 256
        %v618 = vpop.permute.xlu0 %617
        %s620 = sor.u32 256, 8
        %621 = vbcast.lane.b32.xlu0 %v615, %s620
        %v622 = vpop.permute.xlu0 %621
        %v623 = vlaneseq
        %v624 = vshrl.u32 %v623, 7
        %v625 = vsub.s32 3, %v624
        %v626 = vrot.slane %v218, %v625
        %628 = vbcast.lane.b32.xlu0 %v626, 256
        %v629 = vpop.permute.xlu0 %628
        %s631 = sor.u32 256, 8
        %632 = vbcast.lane.b32.xlu0 %v626, %s631
        %v633 = vpop.permute.xlu0 %632
        %v634 = vlaneseq
        %v635 = vshrl.u32 %v634, 7
        %v636 = vsub.s32 4, %v635
        %v637 = vrot.slane %v218, %v636
        %639 = vbcast.lane.b32.xlu0 %v637, 256
        %v640 = vpop.permute.xlu0 %639
        %s642 = sor.u32 256, 8
        %643 = vbcast.lane.b32.xlu0 %v637, %s642
        %v644 = vpop.permute.xlu0 %643
        %v645 = vlaneseq
        %v646 = vshrl.u32 %v645, 7
        %v647 = vsub.s32 5, %v646
        %v648 = vrot.slane %v218, %v647
        %650 = vbcast.lane.b32.xlu0 %v648, 256
        %v651 = vpop.permute.xlu0 %650
        %s653 = sor.u32 256, 8
        %654 = vbcast.lane.b32.xlu0 %v648, %s653
        %v655 = vpop.permute.xlu0 %654
        %v656 = vlaneseq
        %v657 = vshrl.u32 %v656, 7
        %v658 = vsub.s32 6, %v657
        %v659 = vrot.slane %v218, %v658
        %661 = vbcast.lane.b32.xlu0 %v659, 256
        %v662 = vpop.permute.xlu0 %661
        %s664 = sor.u32 256, 8
        %665 = vbcast.lane.b32.xlu0 %v659, %s664
        %v666 = vpop.permute.xlu0 %665
        %v667 = vlaneseq
        %v668 = vshrl.u32 %v667, 7
        %v669 = vsub.s32 7, %v668
        %v670 = vrot.slane %v218, %v669
        %672 = vbcast.lane.b32.xlu0 %v670, 256
        %v673 = vpop.permute.xlu0 %672
        %s675 = sor.u32 256, 8
        %676 = vbcast.lane.b32.xlu0 %v670, %s675
        %v677 = vpop.permute.xlu0 %676
        %v678 = vlaneseq
        %v679 = vshrl.u32 %v678, 7
        %v680 = vsub.s32 0, %v679
        %v681 = vrot.slane %v219, %v680
        %683 = vbcast.lane.b32.xlu0 %v681, 256
        %v684 = vpop.permute.xlu0 %683
        %s686 = sor.u32 256, 8
        %687 = vbcast.lane.b32.xlu0 %v681, %s686
        %v688 = vpop.permute.xlu0 %687
        %v689 = vlaneseq
        %v690 = vshrl.u32 %v689, 7
        %v691 = vsub.s32 1, %v690
        %v692 = vrot.slane %v219, %v691
        %694 = vbcast.lane.b32.xlu0 %v692, 256
        %v695 = vpop.permute.xlu0 %694
        %s697 = sor.u32 256, 8
        %698 = vbcast.lane.b32.xlu0 %v692, %s697
        %v699 = vpop.permute.xlu0 %698
        %v700 = vlaneseq
        %v701 = vshrl.u32 %v700, 7
        %v702 = vsub.s32 2, %v701
        %v703 = vrot.slane %v219, %v702
        %705 = vbcast.lane.b32.xlu0 %v703, 256
        %v706 = vpop.permute.xlu0 %705
        %s708 = sor.u32 256, 8
        %709 = vbcast.lane.b32.xlu0 %v703, %s708
        %v710 = vpop.permute.xlu0 %709
        %v711 = vlaneseq
        %v712 = vshrl.u32 %v711, 7
        %v713 = vsub.s32 3, %v712
        %v714 = vrot.slane %v219, %v713
        %716 = vbcast.lane.b32.xlu0 %v714, 256
        %v717 = vpop.permute.xlu0 %716
        %s719 = sor.u32 256, 8
        %720 = vbcast.lane.b32.xlu0 %v714, %s719
        %v721 = vpop.permute.xlu0 %720
        %v722 = vlaneseq
        %v723 = vshrl.u32 %v722, 7
        %v724 = vsub.s32 4, %v723
        %v725 = vrot.slane %v219, %v724
        %727 = vbcast.lane.b32.xlu0 %v725, 256
        %v728 = vpop.permute.xlu0 %727
        %s730 = sor.u32 256, 8
        %731 = vbcast.lane.b32.xlu0 %v725, %s730
        %v732 = vpop.permute.xlu0 %731
        %v733 = vlaneseq
        %v734 = vshrl.u32 %v733, 7
        %v735 = vsub.s32 5, %v734
        %v736 = vrot.slane %v219, %v735
        %738 = vbcast.lane.b32.xlu0 %v736, 256
        %v739 = vpop.permute.xlu0 %738
        %s741 = sor.u32 256, 8
        %742 = vbcast.lane.b32.xlu0 %v736, %s741
        %v743 = vpop.permute.xlu0 %742
        %v744 = vlaneseq
        %v745 = vshrl.u32 %v744, 7
        %v746 = vsub.s32 6, %v745
        %v747 = vrot.slane %v219, %v746
        %749 = vbcast.lane.b32.xlu0 %v747, 256
        %v750 = vpop.permute.xlu0 %749
        %s752 = sor.u32 256, 8
        %753 = vbcast.lane.b32.xlu0 %v747, %s752
        %v754 = vpop.permute.xlu0 %753
        %v755 = vlaneseq
        %v756 = vshrl.u32 %v755, 7
        %v757 = vsub.s32 7, %v756
        %v758 = vrot.slane %v219, %v757
        %760 = vbcast.lane.b32.xlu0 %v758, 256
        %v761 = vpop.permute.xlu0 %760
        %s763 = sor.u32 256, 8
        %764 = vbcast.lane.b32.xlu0 %v758, %s763
        %v765 = vpop.permute.xlu0 %764
        %v766 = vlaneseq
        %v767 = vshrl.u32 %v766, 7
        %v768 = vsub.s32 0, %v767
        %v769 = vrot.slane %v220, %v768
        %771 = vbcast.lane.b32.xlu0 %v769, 256
        %v772 = vpop.permute.xlu0 %771
        %s774 = sor.u32 256, 8
        %775 = vbcast.lane.b32.xlu0 %v769, %s774
        %v776 = vpop.permute.xlu0 %775
        %v777 = vlaneseq
        %v778 = vshrl.u32 %v777, 7
        %v779 = vsub.s32 1, %v778
        %v780 = vrot.slane %v220, %v779
        %782 = vbcast.lane.b32.xlu0 %v780, 256
        %v783 = vpop.permute.xlu0 %782
        %s785 = sor.u32 256, 8
        %786 = vbcast.lane.b32.xlu0 %v780, %s785
        %v787 = vpop.permute.xlu0 %786
        %v788 = vlaneseq
        %v789 = vshrl.u32 %v788, 7
        %v790 = vsub.s32 2, %v789
        %v791 = vrot.slane %v220, %v790
        %793 = vbcast.lane.b32.xlu0 %v791, 256
        %v794 = vpop.permute.xlu0 %793
        %s796 = sor.u32 256, 8
        %797 = vbcast.lane.b32.xlu0 %v791, %s796
        %v798 = vpop.permute.xlu0 %797
        %v799 = vlaneseq
        %v800 = vshrl.u32 %v799, 7
        %v801 = vsub.s32 3, %v800
        %v802 = vrot.slane %v220, %v801
        %804 = vbcast.lane.b32.xlu0 %v802, 256
        %v805 = vpop.permute.xlu0 %804
        %s807 = sor.u32 256, 8
        %808 = vbcast.lane.b32.xlu0 %v802, %s807
        %v809 = vpop.permute.xlu0 %808
        %v810 = vlaneseq
        %v811 = vshrl.u32 %v810, 7
        %v812 = vsub.s32 4, %v811
        %v813 = vrot.slane %v220, %v812
        %815 = vbcast.lane.b32.xlu0 %v813, 256
        %v816 = vpop.permute.xlu0 %815
        %s818 = sor.u32 256, 8
        %819 = vbcast.lane.b32.xlu0 %v813, %s818
        %v820 = vpop.permute.xlu0 %819
        %v821 = vlaneseq
        %v822 = vshrl.u32 %v821, 7
        %v823 = vsub.s32 5, %v822
        %v824 = vrot.slane %v220, %v823
        %826 = vbcast.lane.b32.xlu0 %v824, 256
        %v827 = vpop.permute.xlu0 %826
        %s829 = sor.u32 256, 8
        %830 = vbcast.lane.b32.xlu0 %v824, %s829
        %v831 = vpop.permute.xlu0 %830
        %v832 = vlaneseq
        %v833 = vshrl.u32 %v832, 7
        %v834 = vsub.s32 6, %v833
        %v835 = vrot.slane %v220, %v834
        %837 = vbcast.lane.b32.xlu0 %v835, 256
        %v838 = vpop.permute.xlu0 %837
        %s840 = sor.u32 256, 8
        %841 = vbcast.lane.b32.xlu0 %v835, %s840
        %v842 = vpop.permute.xlu0 %841
        %v843 = vlaneseq
        %v844 = vshrl.u32 %v843, 7
        %v845 = vsub.s32 7, %v844
        %v846 = vrot.slane %v220, %v845
        %848 = vbcast.lane.b32.xlu0 %v846, 256
        %v849 = vpop.permute.xlu0 %848
        %s851 = sor.u32 256, 8
        %852 = vbcast.lane.b32.xlu0 %v846, %s851
        %v853 = vpop.permute.xlu0 %852
        %v854 = vlaneseq
        %v855 = vshrl.u32 %v854, 7
        %v856 = vsub.s32 0, %v855
        %v857 = vrot.slane %v221, %v856
        %859 = vbcast.lane.b32.xlu0 %v857, 256
        %v860 = vpop.permute.xlu0 %859
        %s862 = sor.u32 256, 8
        %863 = vbcast.lane.b32.xlu0 %v857, %s862
        %v864 = vpop.permute.xlu0 %863
        %v865 = vlaneseq
        %v866 = vshrl.u32 %v865, 7
        %v867 = vsub.s32 1, %v866
        %v868 = vrot.slane %v221, %v867
        %870 = vbcast.lane.b32.xlu0 %v868, 256
        %v871 = vpop.permute.xlu0 %870
        %s873 = sor.u32 256, 8
        %874 = vbcast.lane.b32.xlu0 %v868, %s873
        %v875 = vpop.permute.xlu0 %874
        %v876 = vlaneseq
        %v877 = vshrl.u32 %v876, 7
        %v878 = vsub.s32 2, %v877
        %v879 = vrot.slane %v221, %v878
        %881 = vbcast.lane.b32.xlu0 %v879, 256
        %v882 = vpop.permute.xlu0 %881
        %s884 = sor.u32 256, 8
        %885 = vbcast.lane.b32.xlu0 %v879, %s884
        %v886 = vpop.permute.xlu0 %885
        %v887 = vlaneseq
        %v888 = vshrl.u32 %v887, 7
        %v889 = vsub.s32 3, %v888
        %v890 = vrot.slane %v221, %v889
        %892 = vbcast.lane.b32.xlu0 %v890, 256
        %v893 = vpop.permute.xlu0 %892
        %s895 = sor.u32 256, 8
        %896 = vbcast.lane.b32.xlu0 %v890, %s895
        %v897 = vpop.permute.xlu0 %896
        %v898 = vlaneseq
        %v899 = vshrl.u32 %v898, 7
        %v900 = vsub.s32 4, %v899
        %v901 = vrot.slane %v221, %v900
        %903 = vbcast.lane.b32.xlu0 %v901, 256
        %v904 = vpop.permute.xlu0 %903
        %s906 = sor.u32 256, 8
        %907 = vbcast.lane.b32.xlu0 %v901, %s906
        %v908 = vpop.permute.xlu0 %907
        %v909 = vlaneseq
        %v910 = vshrl.u32 %v909, 7
        %v911 = vsub.s32 5, %v910
        %v912 = vrot.slane %v221, %v911
        %914 = vbcast.lane.b32.xlu0 %v912, 256
        %v915 = vpop.permute.xlu0 %914
        %s917 = sor.u32 256, 8
        %918 = vbcast.lane.b32.xlu0 %v912, %s917
        %v919 = vpop.permute.xlu0 %918
        %v920 = vlaneseq
        %v921 = vshrl.u32 %v920, 7
        %v922 = vsub.s32 6, %v921
        %v923 = vrot.slane %v221, %v922
        %925 = vbcast.lane.b32.xlu0 %v923, 256
        %v926 = vpop.permute.xlu0 %925
        %s928 = sor.u32 256, 8
        %929 = vbcast.lane.b32.xlu0 %v923, %s928
        %v930 = vpop.permute.xlu0 %929
        %v931 = vlaneseq
        %v932 = vshrl.u32 %v931, 7
        %v933 = vsub.s32 7, %v932
        %v934 = vrot.slane %v221, %v933
        %936 = vbcast.lane.b32.xlu0 %v934, 256
        %v937 = vpop.permute.xlu0 %936
        %s939 = sor.u32 256, 8
        %940 = vbcast.lane.b32.xlu0 %v934, %s939
        %v941 = vpop.permute.xlu0 %940
        %vm942 = vcmask 7168
        %v943 = vsel %vm942, %v244, %v596
        %v944 = vsel %vm942, %v248, %v600
        %v945 = vsel %vm942, %v255, %v607
        %v946 = vsel %vm942, %v259, %v611
        %v947 = vsel %vm942, %v266, %v618
        %v948 = vsel %vm942, %v270, %v622
        %v949 = vsel %vm942, %v277, %v629
        %v950 = vsel %vm942, %v281, %v633
        %v951 = vsel %vm942, %v288, %v640
        %v952 = vsel %vm942, %v292, %v644
        %v953 = vsel %vm942, %v299, %v651
        %v954 = vsel %vm942, %v303, %v655
        %v955 = vsel %vm942, %v310, %v662
        %v956 = vsel %vm942, %v314, %v666
        %v957 = vsel %vm942, %v321, %v673
        %v958 = vsel %vm942, %v325, %v677
        %v959 = vsel %vm942, %v332, %v684
        %v960 = vsel %vm942, %v336, %v688
        %v961 = vsel %vm942, %v343, %v695
        %v962 = vsel %vm942, %v347, %v699
        %v963 = vsel %vm942, %v354, %v706
        %v964 = vsel %vm942, %v358, %v710
        %v965 = vsel %vm942, %v365, %v717
        %v966 = vsel %vm942, %v369, %v721
        %v967 = vsel %vm942, %v376, %v728
        %v968 = vsel %vm942, %v380, %v732
        %v969 = vsel %vm942, %v387, %v739
        %v970 = vsel %vm942, %v391, %v743
        %v971 = vsel %vm942, %v398, %v750
        %v972 = vsel %vm942, %v402, %v754
        %v973 = vsel %vm942, %v409, %v761
        %v974 = vsel %vm942, %v413, %v765
        %v975 = vsel %vm942, %v420, %v772
        %v976 = vsel %vm942, %v424, %v776
        %v977 = vsel %vm942, %v431, %v783
        %v978 = vsel %vm942, %v435, %v787
        %v979 = vsel %vm942, %v442, %v794
        %v980 = vsel %vm942, %v446, %v798
        %v981 = vsel %vm942, %v453, %v805
        %v982 = vsel %vm942, %v457, %v809
        %v983 = vsel %vm942, %v464, %v816
        %v984 = vsel %vm942, %v468, %v820
        %v985 = vsel %vm942, %v475, %v827
        %v986 = vsel %vm942, %v479, %v831
        %v987 = vsel %vm942, %v486, %v838
        %v988 = vsel %vm942, %v490, %v842
        %v989 = vsel %vm942, %v497, %v849
        %v990 = vsel %vm942, %v501, %v853
        %v991 = vsel %vm942, %v508, %v860
        %v992 = vsel %vm942, %v512, %v864
        %v993 = vsel %vm942, %v519, %v871
        %v994 = vsel %vm942, %v523, %v875
        %v995 = vsel %vm942, %v530, %v882
        %v996 = vsel %vm942, %v534, %v886
        %v997 = vsel %vm942, %v541, %v893
        %v998 = vsel %vm942, %v545, %v897
        %v999 = vsel %vm942, %v552, %v904
        %v1000 = vsel %vm942, %v556, %v908
        %v1001 = vsel %vm942, %v563, %v915
        %v1002 = vsel %vm942, %v567, %v919
        %v1003 = vsel %vm942, %v574, %v926
        %v1004 = vsel %vm942, %v578, %v930
        %v1005 = vsel %vm942, %v585, %v937
        %v1006 = vsel %vm942, %v589, %v941
        %v1007 = vlaneseq
        %v1008 = vshrl.u32 %v1007, 7
        %v1009 = vsub.s32 0, %v1008
        %v1010 = vrot.slane %v226, %v1009
        %1012 = vbcast.lane.b32.xlu0 %v1010, 256
        %v1013 = vpop.permute.xlu0 %1012
        %s1015 = sor.u32 256, 8
        %1016 = vbcast.lane.b32.xlu0 %v1010, %s1015
        %v1017 = vpop.permute.xlu0 %1016
        %v1018 = vlaneseq
        %v1019 = vshrl.u32 %v1018, 7
        %v1020 = vsub.s32 1, %v1019
        %v1021 = vrot.slane %v226, %v1020
        %1023 = vbcast.lane.b32.xlu0 %v1021, 256
        %v1024 = vpop.permute.xlu0 %1023
        %s1026 = sor.u32 256, 8
        %1027 = vbcast.lane.b32.xlu0 %v1021, %s1026
        %v1028 = vpop.permute.xlu0 %1027
        %v1029 = vlaneseq
        %v1030 = vshrl.u32 %v1029, 7
        %v1031 = vsub.s32 2, %v1030
        %v1032 = vrot.slane %v226, %v1031
        %1034 = vbcast.lane.b32.xlu0 %v1032, 256
        %v1035 = vpop.permute.xlu0 %1034
        %s1037 = sor.u32 256, 8
        %1038 = vbcast.lane.b32.xlu0 %v1032, %s1037
        %v1039 = vpop.permute.xlu0 %1038
        %v1040 = vlaneseq
        %v1041 = vshrl.u32 %v1040, 7
        %v1042 = vsub.s32 3, %v1041
        %v1043 = vrot.slane %v226, %v1042
        %1045 = vbcast.lane.b32.xlu0 %v1043, 256
        %v1046 = vpop.permute.xlu0 %1045
        %s1048 = sor.u32 256, 8
        %1049 = vbcast.lane.b32.xlu0 %v1043, %s1048
        %v1050 = vpop.permute.xlu0 %1049
        %v1051 = vlaneseq
        %v1052 = vshrl.u32 %v1051, 7
        %v1053 = vsub.s32 4, %v1052
        %v1054 = vrot.slane %v226, %v1053
        %1056 = vbcast.lane.b32.xlu0 %v1054, 256
        %v1057 = vpop.permute.xlu0 %1056
        %s1059 = sor.u32 256, 8
        %1060 = vbcast.lane.b32.xlu0 %v1054, %s1059
        %v1061 = vpop.permute.xlu0 %1060
        %v1062 = vlaneseq
        %v1063 = vshrl.u32 %v1062, 7
        %v1064 = vsub.s32 5, %v1063
        %v1065 = vrot.slane %v226, %v1064
        %1067 = vbcast.lane.b32.xlu0 %v1065, 256
        %v1068 = vpop.permute.xlu0 %1067
        %s1070 = sor.u32 256, 8
        %1071 = vbcast.lane.b32.xlu0 %v1065, %s1070
        %v1072 = vpop.permute.xlu0 %1071
        %v1073 = vlaneseq
        %v1074 = vshrl.u32 %v1073, 7
        %v1075 = vsub.s32 6, %v1074
        %v1076 = vrot.slane %v226, %v1075
        %1078 = vbcast.lane.b32.xlu0 %v1076, 256
        %v1079 = vpop.permute.xlu0 %1078
        %s1081 = sor.u32 256, 8
        %1082 = vbcast.lane.b32.xlu0 %v1076, %s1081
        %v1083 = vpop.permute.xlu0 %1082
        %v1084 = vlaneseq
        %v1085 = vshrl.u32 %v1084, 7
        %v1086 = vsub.s32 7, %v1085
        %v1087 = vrot.slane %v226, %v1086
        %1089 = vbcast.lane.b32.xlu0 %v1087, 256
        %v1090 = vpop.permute.xlu0 %1089
        %s1092 = sor.u32 256, 8
        %1093 = vbcast.lane.b32.xlu0 %v1087, %s1092
        %v1094 = vpop.permute.xlu0 %1093
        %v1095 = vlaneseq
        %v1096 = vshrl.u32 %v1095, 7
        %v1097 = vsub.s32 0, %v1096
        %v1098 = vrot.slane %v227, %v1097
        %1100 = vbcast.lane.b32.xlu0 %v1098, 256
        %v1101 = vpop.permute.xlu0 %1100
        %s1103 = sor.u32 256, 8
        %1104 = vbcast.lane.b32.xlu0 %v1098, %s1103
        %v1105 = vpop.permute.xlu0 %1104
        %v1106 = vlaneseq
        %v1107 = vshrl.u32 %v1106, 7
        %v1108 = vsub.s32 1, %v1107
        %v1109 = vrot.slane %v227, %v1108
        %1111 = vbcast.lane.b32.xlu0 %v1109, 256
        %v1112 = vpop.permute.xlu0 %1111
        %s1114 = sor.u32 256, 8
        %1115 = vbcast.lane.b32.xlu0 %v1109, %s1114
        %v1116 = vpop.permute.xlu0 %1115
        %v1117 = vlaneseq
        %v1118 = vshrl.u32 %v1117, 7
        %v1119 = vsub.s32 2, %v1118
        %v1120 = vrot.slane %v227, %v1119
        %1122 = vbcast.lane.b32.xlu0 %v1120, 256
        %v1123 = vpop.permute.xlu0 %1122
        %s1125 = sor.u32 256, 8
        %1126 = vbcast.lane.b32.xlu0 %v1120, %s1125
        %v1127 = vpop.permute.xlu0 %1126
        %v1128 = vlaneseq
        %v1129 = vshrl.u32 %v1128, 7
        %v1130 = vsub.s32 3, %v1129
        %v1131 = vrot.slane %v227, %v1130
        %1133 = vbcast.lane.b32.xlu0 %v1131, 256
        %v1134 = vpop.permute.xlu0 %1133
        %s1136 = sor.u32 256, 8
        %1137 = vbcast.lane.b32.xlu0 %v1131, %s1136
        %v1138 = vpop.permute.xlu0 %1137
        %v1139 = vlaneseq
        %v1140 = vshrl.u32 %v1139, 7
        %v1141 = vsub.s32 4, %v1140
        %v1142 = vrot.slane %v227, %v1141
        %1144 = vbcast.lane.b32.xlu0 %v1142, 256
        %v1145 = vpop.permute.xlu0 %1144
        %s1147 = sor.u32 256, 8
        %1148 = vbcast.lane.b32.xlu0 %v1142, %s1147
        %v1149 = vpop.permute.xlu0 %1148
        %v1150 = vlaneseq
        %v1151 = vshrl.u32 %v1150, 7
        %v1152 = vsub.s32 5, %v1151
        %v1153 = vrot.slane %v227, %v1152
        %1155 = vbcast.lane.b32.xlu0 %v1153, 256
        %v1156 = vpop.permute.xlu0 %1155
        %s1158 = sor.u32 256, 8
        %1159 = vbcast.lane.b32.xlu0 %v1153, %s1158
        %v1160 = vpop.permute.xlu0 %1159
        %v1161 = vlaneseq
        %v1162 = vshrl.u32 %v1161, 7
        %v1163 = vsub.s32 6, %v1162
        %v1164 = vrot.slane %v227, %v1163
        %1166 = vbcast.lane.b32.xlu0 %v1164, 256
        %v1167 = vpop.permute.xlu0 %1166
        %s1169 = sor.u32 256, 8
        %1170 = vbcast.lane.b32.xlu0 %v1164, %s1169
        %v1171 = vpop.permute.xlu0 %1170
        %v1172 = vlaneseq
        %v1173 = vshrl.u32 %v1172, 7
        %v1174 = vsub.s32 7, %v1173
        %v1175 = vrot.slane %v227, %v1174
        %1177 = vbcast.lane.b32.xlu0 %v1175, 256
        %v1178 = vpop.permute.xlu0 %1177
        %s1180 = sor.u32 256, 8
        %1181 = vbcast.lane.b32.xlu0 %v1175, %s1180
        %v1182 = vpop.permute.xlu0 %1181
        %v1183 = vlaneseq
        %v1184 = vshrl.u32 %v1183, 7
        %v1185 = vsub.s32 0, %v1184
        %v1186 = vrot.slane %v228, %v1185
        %1188 = vbcast.lane.b32.xlu0 %v1186, 256
        %v1189 = vpop.permute.xlu0 %1188
        %s1191 = sor.u32 256, 8
        %1192 = vbcast.lane.b32.xlu0 %v1186, %s1191
        %v1193 = vpop.permute.xlu0 %1192
        %v1194 = vlaneseq
        %v1195 = vshrl.u32 %v1194, 7
        %v1196 = vsub.s32 1, %v1195
        %v1197 = vrot.slane %v228, %v1196
        %1199 = vbcast.lane.b32.xlu0 %v1197, 256
        %v1200 = vpop.permute.xlu0 %1199
        %s1202 = sor.u32 256, 8
        %1203 = vbcast.lane.b32.xlu0 %v1197, %s1202
        %v1204 = vpop.permute.xlu0 %1203
        %v1205 = vlaneseq
        %v1206 = vshrl.u32 %v1205, 7
        %v1207 = vsub.s32 2, %v1206
        %v1208 = vrot.slane %v228, %v1207
        %1210 = vbcast.lane.b32.xlu0 %v1208, 256
        %v1211 = vpop.permute.xlu0 %1210
        %s1213 = sor.u32 256, 8
        %1214 = vbcast.lane.b32.xlu0 %v1208, %s1213
        %v1215 = vpop.permute.xlu0 %1214
        %v1216 = vlaneseq
        %v1217 = vshrl.u32 %v1216, 7
        %v1218 = vsub.s32 3, %v1217
        %v1219 = vrot.slane %v228, %v1218
        %1221 = vbcast.lane.b32.xlu0 %v1219, 256
        %v1222 = vpop.permute.xlu0 %1221
        %s1224 = sor.u32 256, 8
        %1225 = vbcast.lane.b32.xlu0 %v1219, %s1224
        %v1226 = vpop.permute.xlu0 %1225
        %v1227 = vlaneseq
        %v1228 = vshrl.u32 %v1227, 7
        %v1229 = vsub.s32 4, %v1228
        %v1230 = vrot.slane %v228, %v1229
        %1232 = vbcast.lane.b32.xlu0 %v1230, 256
        %v1233 = vpop.permute.xlu0 %1232
        %s1235 = sor.u32 256, 8
        %1236 = vbcast.lane.b32.xlu0 %v1230, %s1235
        %v1237 = vpop.permute.xlu0 %1236
        %v1238 = vlaneseq
        %v1239 = vshrl.u32 %v1238, 7
        %v1240 = vsub.s32 5, %v1239
        %v1241 = vrot.slane %v228, %v1240
        %1243 = vbcast.lane.b32.xlu0 %v1241, 256
        %v1244 = vpop.permute.xlu0 %1243
        %s1246 = sor.u32 256, 8
        %1247 = vbcast.lane.b32.xlu0 %v1241, %s1246
        %v1248 = vpop.permute.xlu0 %1247
        %v1249 = vlaneseq
        %v1250 = vshrl.u32 %v1249, 7
        %v1251 = vsub.s32 6, %v1250
        %v1252 = vrot.slane %v228, %v1251
        %1254 = vbcast.lane.b32.xlu0 %v1252, 256
        %v1255 = vpop.permute.xlu0 %1254
        %s1257 = sor.u32 256, 8
        %1258 = vbcast.lane.b32.xlu0 %v1252, %s1257
        %v1259 = vpop.permute.xlu0 %1258
        %v1260 = vlaneseq
        %v1261 = vshrl.u32 %v1260, 7
        %v1262 = vsub.s32 7, %v1261
        %v1263 = vrot.slane %v228, %v1262
        %1265 = vbcast.lane.b32.xlu0 %v1263, 256
        %v1266 = vpop.permute.xlu0 %1265
        %s1268 = sor.u32 256, 8
        %1269 = vbcast.lane.b32.xlu0 %v1263, %s1268
        %v1270 = vpop.permute.xlu0 %1269
        %v1271 = vlaneseq
        %v1272 = vshrl.u32 %v1271, 7
        %v1273 = vsub.s32 0, %v1272
        %v1274 = vrot.slane %v229, %v1273
        %1276 = vbcast.lane.b32.xlu0 %v1274, 256
        %v1277 = vpop.permute.xlu0 %1276
        %s1279 = sor.u32 256, 8
        %1280 = vbcast.lane.b32.xlu0 %v1274, %s1279
        %v1281 = vpop.permute.xlu0 %1280
        %v1282 = vlaneseq
        %v1283 = vshrl.u32 %v1282, 7
        %v1284 = vsub.s32 1, %v1283
        %v1285 = vrot.slane %v229, %v1284
        %1287 = vbcast.lane.b32.xlu0 %v1285, 256
        %v1288 = vpop.permute.xlu0 %1287
        %s1290 = sor.u32 256, 8
        %1291 = vbcast.lane.b32.xlu0 %v1285, %s1290
        %v1292 = vpop.permute.xlu0 %1291
        %v1293 = vlaneseq
        %v1294 = vshrl.u32 %v1293, 7
        %v1295 = vsub.s32 2, %v1294
        %v1296 = vrot.slane %v229, %v1295
        %1298 = vbcast.lane.b32.xlu0 %v1296, 256
        %v1299 = vpop.permute.xlu0 %1298
        %s1301 = sor.u32 256, 8
        %1302 = vbcast.lane.b32.xlu0 %v1296, %s1301
        %v1303 = vpop.permute.xlu0 %1302
        %v1304 = vlaneseq
        %v1305 = vshrl.u32 %v1304, 7
        %v1306 = vsub.s32 3, %v1305
        %v1307 = vrot.slane %v229, %v1306
        %1309 = vbcast.lane.b32.xlu0 %v1307, 256
        %v1310 = vpop.permute.xlu0 %1309
        %s1312 = sor.u32 256, 8
        %1313 = vbcast.lane.b32.xlu0 %v1307, %s1312
        %v1314 = vpop.permute.xlu0 %1313
        %v1315 = vlaneseq
        %v1316 = vshrl.u32 %v1315, 7
        %v1317 = vsub.s32 4, %v1316
        %v1318 = vrot.slane %v229, %v1317
        %1320 = vbcast.lane.b32.xlu0 %v1318, 256
        %v1321 = vpop.permute.xlu0 %1320
        %s1323 = sor.u32 256, 8
        %1324 = vbcast.lane.b32.xlu0 %v1318, %s1323
        %v1325 = vpop.permute.xlu0 %1324
        %v1326 = vlaneseq
        %v1327 = vshrl.u32 %v1326, 7
        %v1328 = vsub.s32 5, %v1327
        %v1329 = vrot.slane %v229, %v1328
        %1331 = vbcast.lane.b32.xlu0 %v1329, 256
        %v1332 = vpop.permute.xlu0 %1331
        %s1334 = sor.u32 256, 8
        %1335 = vbcast.lane.b32.xlu0 %v1329, %s1334
        %v1336 = vpop.permute.xlu0 %1335
        %v1337 = vlaneseq
        %v1338 = vshrl.u32 %v1337, 7
        %v1339 = vsub.s32 6, %v1338
        %v1340 = vrot.slane %v229, %v1339
        %1342 = vbcast.lane.b32.xlu0 %v1340, 256
        %v1343 = vpop.permute.xlu0 %1342
        %s1345 = sor.u32 256, 8
        %1346 = vbcast.lane.b32.xlu0 %v1340, %s1345
        %v1347 = vpop.permute.xlu0 %1346
        %v1348 = vlaneseq
        %v1349 = vshrl.u32 %v1348, 7
        %v1350 = vsub.s32 7, %v1349
        %v1351 = vrot.slane %v229, %v1350
        %1353 = vbcast.lane.b32.xlu0 %v1351, 256
        %v1354 = vpop.permute.xlu0 %1353
        %s1356 = sor.u32 256, 8
        %1357 = vbcast.lane.b32.xlu0 %v1351, %s1356
        %v1358 = vpop.permute.xlu0 %1357
        %v1359 = vlaneseq
        %v1360 = vshrl.u32 %v1359, 7
        %v1361 = vsub.s32 0, %v1360
        %v1362 = vrot.slane %v234, %v1361
        %1364 = vbcast.lane.b32.xlu0 %v1362, 256
        %v1365 = vpop.permute.xlu0 %1364
        %s1367 = sor.u32 256, 8
        %1368 = vbcast.lane.b32.xlu0 %v1362, %s1367
        %v1369 = vpop.permute.xlu0 %1368
        %v1370 = vlaneseq
        %v1371 = vshrl.u32 %v1370, 7
        %v1372 = vsub.s32 1, %v1371
        %v1373 = vrot.slane %v234, %v1372
        %1375 = vbcast.lane.b32.xlu0 %v1373, 256
        %v1376 = vpop.permute.xlu0 %1375
        %s1378 = sor.u32 256, 8
        %1379 = vbcast.lane.b32.xlu0 %v1373, %s1378
        %v1380 = vpop.permute.xlu0 %1379
        %v1381 = vlaneseq
        %v1382 = vshrl.u32 %v1381, 7
        %v1383 = vsub.s32 2, %v1382
        %v1384 = vrot.slane %v234, %v1383
        %1386 = vbcast.lane.b32.xlu0 %v1384, 256
        %v1387 = vpop.permute.xlu0 %1386
        %s1389 = sor.u32 256, 8
        %1390 = vbcast.lane.b32.xlu0 %v1384, %s1389
        %v1391 = vpop.permute.xlu0 %1390
        %v1392 = vlaneseq
        %v1393 = vshrl.u32 %v1392, 7
        %v1394 = vsub.s32 3, %v1393
        %v1395 = vrot.slane %v234, %v1394
        %1397 = vbcast.lane.b32.xlu0 %v1395, 256
        %v1398 = vpop.permute.xlu0 %1397
        %s1400 = sor.u32 256, 8
        %1401 = vbcast.lane.b32.xlu0 %v1395, %s1400
        %v1402 = vpop.permute.xlu0 %1401
        %v1403 = vlaneseq
        %v1404 = vshrl.u32 %v1403, 7
        %v1405 = vsub.s32 4, %v1404
        %v1406 = vrot.slane %v234, %v1405
        %1408 = vbcast.lane.b32.xlu0 %v1406, 256
        %v1409 = vpop.permute.xlu0 %1408
        %s1411 = sor.u32 256, 8
        %1412 = vbcast.lane.b32.xlu0 %v1406, %s1411
        %v1413 = vpop.permute.xlu0 %1412
        %v1414 = vlaneseq
        %v1415 = vshrl.u32 %v1414, 7
        %v1416 = vsub.s32 5, %v1415
        %v1417 = vrot.slane %v234, %v1416
        %1419 = vbcast.lane.b32.xlu0 %v1417, 256
        %v1420 = vpop.permute.xlu0 %1419
        %s1422 = sor.u32 256, 8
        %1423 = vbcast.lane.b32.xlu0 %v1417, %s1422
        %v1424 = vpop.permute.xlu0 %1423
        %v1425 = vlaneseq
        %v1426 = vshrl.u32 %v1425, 7
        %v1427 = vsub.s32 6, %v1426
        %v1428 = vrot.slane %v234, %v1427
        %1430 = vbcast.lane.b32.xlu0 %v1428, 256
        %v1431 = vpop.permute.xlu0 %1430
        %s1433 = sor.u32 256, 8
        %1434 = vbcast.lane.b32.xlu0 %v1428, %s1433
        %v1435 = vpop.permute.xlu0 %1434
        %v1436 = vlaneseq
        %v1437 = vshrl.u32 %v1436, 7
        %v1438 = vsub.s32 7, %v1437
        %v1439 = vrot.slane %v234, %v1438
        %1441 = vbcast.lane.b32.xlu0 %v1439, 256
        %v1442 = vpop.permute.xlu0 %1441
        %s1444 = sor.u32 256, 8
        %1445 = vbcast.lane.b32.xlu0 %v1439, %s1444
        %v1446 = vpop.permute.xlu0 %1445
        %v1447 = vlaneseq
        %v1448 = vshrl.u32 %v1447, 7
        %v1449 = vsub.s32 0, %v1448
        %v1450 = vrot.slane %v235, %v1449
        %1452 = vbcast.lane.b32.xlu0 %v1450, 256
        %v1453 = vpop.permute.xlu0 %1452
        %s1455 = sor.u32 256, 8
        %1456 = vbcast.lane.b32.xlu0 %v1450, %s1455
        %v1457 = vpop.permute.xlu0 %1456
        %v1458 = vlaneseq
        %v1459 = vshrl.u32 %v1458, 7
        %v1460 = vsub.s32 1, %v1459
        %v1461 = vrot.slane %v235, %v1460
        %1463 = vbcast.lane.b32.xlu0 %v1461, 256
        %v1464 = vpop.permute.xlu0 %1463
        %s1466 = sor.u32 256, 8
        %1467 = vbcast.lane.b32.xlu0 %v1461, %s1466
        %v1468 = vpop.permute.xlu0 %1467
        %v1469 = vlaneseq
        %v1470 = vshrl.u32 %v1469, 7
        %v1471 = vsub.s32 2, %v1470
        %v1472 = vrot.slane %v235, %v1471
        %1474 = vbcast.lane.b32.xlu0 %v1472, 256
        %v1475 = vpop.permute.xlu0 %1474
        %s1477 = sor.u32 256, 8
        %1478 = vbcast.lane.b32.xlu0 %v1472, %s1477
        %v1479 = vpop.permute.xlu0 %1478
        %v1480 = vlaneseq
        %v1481 = vshrl.u32 %v1480, 7
        %v1482 = vsub.s32 3, %v1481
        %v1483 = vrot.slane %v235, %v1482
        %1485 = vbcast.lane.b32.xlu0 %v1483, 256
        %v1486 = vpop.permute.xlu0 %1485
        %s1488 = sor.u32 256, 8
        %1489 = vbcast.lane.b32.xlu0 %v1483, %s1488
        %v1490 = vpop.permute.xlu0 %1489
        %v1491 = vlaneseq
        %v1492 = vshrl.u32 %v1491, 7
        %v1493 = vsub.s32 4, %v1492
        %v1494 = vrot.slane %v235, %v1493
        %1496 = vbcast.lane.b32.xlu0 %v1494, 256
        %v1497 = vpop.permute.xlu0 %1496
        %s1499 = sor.u32 256, 8
        %1500 = vbcast.lane.b32.xlu0 %v1494, %s1499
        %v1501 = vpop.permute.xlu0 %1500
        %v1502 = vlaneseq
        %v1503 = vshrl.u32 %v1502, 7
        %v1504 = vsub.s32 5, %v1503
        %v1505 = vrot.slane %v235, %v1504
        %1507 = vbcast.lane.b32.xlu0 %v1505, 256
        %v1508 = vpop.permute.xlu0 %1507
        %s1510 = sor.u32 256, 8
        %1511 = vbcast.lane.b32.xlu0 %v1505, %s1510
        %v1512 = vpop.permute.xlu0 %1511
        %v1513 = vlaneseq
        %v1514 = vshrl.u32 %v1513, 7
        %v1515 = vsub.s32 6, %v1514
        %v1516 = vrot.slane %v235, %v1515
        %1518 = vbcast.lane.b32.xlu0 %v1516, 256
        %v1519 = vpop.permute.xlu0 %1518
        %s1521 = sor.u32 256, 8
        %1522 = vbcast.lane.b32.xlu0 %v1516, %s1521
        %v1523 = vpop.permute.xlu0 %1522
        %v1524 = vlaneseq
        %v1525 = vshrl.u32 %v1524, 7
        %v1526 = vsub.s32 7, %v1525
        %v1527 = vrot.slane %v235, %v1526
        %1529 = vbcast.lane.b32.xlu0 %v1527, 256
        %v1530 = vpop.permute.xlu0 %1529
        %s1532 = sor.u32 256, 8
        %1533 = vbcast.lane.b32.xlu0 %v1527, %s1532
        %v1534 = vpop.permute.xlu0 %1533
        %v1535 = vlaneseq
        %v1536 = vshrl.u32 %v1535, 7
        %v1537 = vsub.s32 0, %v1536
        %v1538 = vrot.slane %v236, %v1537
        %1540 = vbcast.lane.b32.xlu0 %v1538, 256
        %v1541 = vpop.permute.xlu0 %1540
        %s1543 = sor.u32 256, 8
        %1544 = vbcast.lane.b32.xlu0 %v1538, %s1543
        %v1545 = vpop.permute.xlu0 %1544
        %v1546 = vlaneseq
        %v1547 = vshrl.u32 %v1546, 7
        %v1548 = vsub.s32 1, %v1547
        %v1549 = vrot.slane %v236, %v1548
        %1551 = vbcast.lane.b32.xlu0 %v1549, 256
        %v1552 = vpop.permute.xlu0 %1551
        %s1554 = sor.u32 256, 8
        %1555 = vbcast.lane.b32.xlu0 %v1549, %s1554
        %v1556 = vpop.permute.xlu0 %1555
        %v1557 = vlaneseq
        %v1558 = vshrl.u32 %v1557, 7
        %v1559 = vsub.s32 2, %v1558
        %v1560 = vrot.slane %v236, %v1559
        %1562 = vbcast.lane.b32.xlu0 %v1560, 256
        %v1563 = vpop.permute.xlu0 %1562
        %s1565 = sor.u32 256, 8
        %1566 = vbcast.lane.b32.xlu0 %v1560, %s1565
        %v1567 = vpop.permute.xlu0 %1566
        %v1568 = vlaneseq
        %v1569 = vshrl.u32 %v1568, 7
        %v1570 = vsub.s32 3, %v1569
        %v1571 = vrot.slane %v236, %v1570
        %1573 = vbcast.lane.b32.xlu0 %v1571, 256
        %v1574 = vpop.permute.xlu0 %1573
        %s1576 = sor.u32 256, 8
        %1577 = vbcast.lane.b32.xlu0 %v1571, %s1576
        %v1578 = vpop.permute.xlu0 %1577
        %v1579 = vlaneseq
        %v1580 = vshrl.u32 %v1579, 7
        %v1581 = vsub.s32 4, %v1580
        %v1582 = vrot.slane %v236, %v1581
        %1584 = vbcast.lane.b32.xlu0 %v1582, 256
        %v1585 = vpop.permute.xlu0 %1584
        %s1587 = sor.u32 256, 8
        %1588 = vbcast.lane.b32.xlu0 %v1582, %s1587
        %v1589 = vpop.permute.xlu0 %1588
        %v1590 = vlaneseq
        %v1591 = vshrl.u32 %v1590, 7
        %v1592 = vsub.s32 5, %v1591
        %v1593 = vrot.slane %v236, %v1592
        %1595 = vbcast.lane.b32.xlu0 %v1593, 256
        %v1596 = vpop.permute.xlu0 %1595
        %s1598 = sor.u32 256, 8
        %1599 = vbcast.lane.b32.xlu0 %v1593, %s1598
        %v1600 = vpop.permute.xlu0 %1599
        %v1601 = vlaneseq
        %v1602 = vshrl.u32 %v1601, 7
        %v1603 = vsub.s32 6, %v1602
        %v1604 = vrot.slane %v236, %v1603
        %1606 = vbcast.lane.b32.xlu0 %v1604, 256
        %v1607 = vpop.permute.xlu0 %1606
        %s1609 = sor.u32 256, 8
        %1610 = vbcast.lane.b32.xlu0 %v1604, %s1609
        %v1611 = vpop.permute.xlu0 %1610
        %v1612 = vlaneseq
        %v1613 = vshrl.u32 %v1612, 7
        %v1614 = vsub.s32 7, %v1613
        %v1615 = vrot.slane %v236, %v1614
        %1617 = vbcast.lane.b32.xlu0 %v1615, 256
        %v1618 = vpop.permute.xlu0 %1617
        %s1620 = sor.u32 256, 8
        %1621 = vbcast.lane.b32.xlu0 %v1615, %s1620
        %v1622 = vpop.permute.xlu0 %1621
        %v1623 = vlaneseq
        %v1624 = vshrl.u32 %v1623, 7
        %v1625 = vsub.s32 0, %v1624
        %v1626 = vrot.slane %v237, %v1625
        %1628 = vbcast.lane.b32.xlu0 %v1626, 256
        %v1629 = vpop.permute.xlu0 %1628
        %s1631 = sor.u32 256, 8
        %1632 = vbcast.lane.b32.xlu0 %v1626, %s1631
        %v1633 = vpop.permute.xlu0 %1632
        %v1634 = vlaneseq
        %v1635 = vshrl.u32 %v1634, 7
        %v1636 = vsub.s32 1, %v1635
        %v1637 = vrot.slane %v237, %v1636
        %1639 = vbcast.lane.b32.xlu0 %v1637, 256
        %v1640 = vpop.permute.xlu0 %1639
        %s1642 = sor.u32 256, 8
        %1643 = vbcast.lane.b32.xlu0 %v1637, %s1642
        %v1644 = vpop.permute.xlu0 %1643
        %v1645 = vlaneseq
        %v1646 = vshrl.u32 %v1645, 7
        %v1647 = vsub.s32 2, %v1646
        %v1648 = vrot.slane %v237, %v1647
        %1650 = vbcast.lane.b32.xlu0 %v1648, 256
        %v1651 = vpop.permute.xlu0 %1650
        %s1653 = sor.u32 256, 8
        %1654 = vbcast.lane.b32.xlu0 %v1648, %s1653
        %v1655 = vpop.permute.xlu0 %1654
        %v1656 = vlaneseq
        %v1657 = vshrl.u32 %v1656, 7
        %v1658 = vsub.s32 3, %v1657
        %v1659 = vrot.slane %v237, %v1658
        %1661 = vbcast.lane.b32.xlu0 %v1659, 256
        %v1662 = vpop.permute.xlu0 %1661
        %s1664 = sor.u32 256, 8
        %1665 = vbcast.lane.b32.xlu0 %v1659, %s1664
        %v1666 = vpop.permute.xlu0 %1665
        %v1667 = vlaneseq
        %v1668 = vshrl.u32 %v1667, 7
        %v1669 = vsub.s32 4, %v1668
        %v1670 = vrot.slane %v237, %v1669
        %1672 = vbcast.lane.b32.xlu0 %v1670, 256
        %v1673 = vpop.permute.xlu0 %1672
        %s1675 = sor.u32 256, 8
        %1676 = vbcast.lane.b32.xlu0 %v1670, %s1675
        %v1677 = vpop.permute.xlu0 %1676
        %v1678 = vlaneseq
        %v1679 = vshrl.u32 %v1678, 7
        %v1680 = vsub.s32 5, %v1679
        %v1681 = vrot.slane %v237, %v1680
        %1683 = vbcast.lane.b32.xlu0 %v1681, 256
        %v1684 = vpop.permute.xlu0 %1683
        %s1686 = sor.u32 256, 8
        %1687 = vbcast.lane.b32.xlu0 %v1681, %s1686
        %v1688 = vpop.permute.xlu0 %1687
        %v1689 = vlaneseq
        %v1690 = vshrl.u32 %v1689, 7
        %v1691 = vsub.s32 6, %v1690
        %v1692 = vrot.slane %v237, %v1691
        %1694 = vbcast.lane.b32.xlu0 %v1692, 256
        %v1695 = vpop.permute.xlu0 %1694
        %s1697 = sor.u32 256, 8
        %1698 = vbcast.lane.b32.xlu0 %v1692, %s1697
        %v1699 = vpop.permute.xlu0 %1698
        %v1700 = vlaneseq
        %v1701 = vshrl.u32 %v1700, 7
        %v1702 = vsub.s32 7, %v1701
        %v1703 = vrot.slane %v237, %v1702
        %1705 = vbcast.lane.b32.xlu0 %v1703, 256
        %v1706 = vpop.permute.xlu0 %1705
        %s1708 = sor.u32 256, 8
        %1709 = vbcast.lane.b32.xlu0 %v1703, %s1708
        %v1710 = vpop.permute.xlu0 %1709
        %v1711 = vsel %vm942, %v1013, %v1365
        %v1712 = vsel %vm942, %v1017, %v1369
        %v1713 = vsel %vm942, %v1024, %v1376
        %v1714 = vsel %vm942, %v1028, %v1380
        %v1715 = vsel %vm942, %v1035, %v1387
        %v1716 = vsel %vm942, %v1039, %v1391
        %v1717 = vsel %vm942, %v1046, %v1398
        %v1718 = vsel %vm942, %v1050, %v1402
        %v1719 = vsel %vm942, %v1057, %v1409
        %v1720 = vsel %vm942, %v1061, %v1413
        %v1721 = vsel %vm942, %v1068, %v1420
        %v1722 = vsel %vm942, %v1072, %v1424
        %v1723 = vsel %vm942, %v1079, %v1431
        %v1724 = vsel %vm942, %v1083, %v1435
        %v1725 = vsel %vm942, %v1090, %v1442
        %v1726 = vsel %vm942, %v1094, %v1446
        %v1727 = vsel %vm942, %v1101, %v1453
        %v1728 = vsel %vm942, %v1105, %v1457
        %v1729 = vsel %vm942, %v1112, %v1464
        %v1730 = vsel %vm942, %v1116, %v1468
        %v1731 = vsel %vm942, %v1123, %v1475
        %v1732 = vsel %vm942, %v1127, %v1479
        %v1733 = vsel %vm942, %v1134, %v1486
        %v1734 = vsel %vm942, %v1138, %v1490
        %v1735 = vsel %vm942, %v1145, %v1497
        %v1736 = vsel %vm942, %v1149, %v1501
        %v1737 = vsel %vm942, %v1156, %v1508
        %v1738 = vsel %vm942, %v1160, %v1512
        %v1739 = vsel %vm942, %v1167, %v1519
        %v1740 = vsel %vm942, %v1171, %v1523
        %v1741 = vsel %vm942, %v1178, %v1530
        %v1742 = vsel %vm942, %v1182, %v1534
        %v1743 = vsel %vm942, %v1189, %v1541
        %v1744 = vsel %vm942, %v1193, %v1545
        %v1745 = vsel %vm942, %v1200, %v1552
        %v1746 = vsel %vm942, %v1204, %v1556
        %v1747 = vsel %vm942, %v1211, %v1563
        %v1748 = vsel %vm942, %v1215, %v1567
        %v1749 = vsel %vm942, %v1222, %v1574
        %v1750 = vsel %vm942, %v1226, %v1578
        %v1751 = vsel %vm942, %v1233, %v1585
        %v1752 = vsel %vm942, %v1237, %v1589
        %v1753 = vsel %vm942, %v1244, %v1596
        %v1754 = vsel %vm942, %v1248, %v1600
        %v1755 = vsel %vm942, %v1255, %v1607
        %v1756 = vsel %vm942, %v1259, %v1611
        %v1757 = vsel %vm942, %v1266, %v1618
        %v1758 = vsel %vm942, %v1270, %v1622
        %v1759 = vsel %vm942, %v1277, %v1629
        %v1760 = vsel %vm942, %v1281, %v1633
        %v1761 = vsel %vm942, %v1288, %v1640
        %v1762 = vsel %vm942, %v1292, %v1644
        %v1763 = vsel %vm942, %v1299, %v1651
        %v1764 = vsel %vm942, %v1303, %v1655
        %v1765 = vsel %vm942, %v1310, %v1662
        %v1766 = vsel %vm942, %v1314, %v1666
        %v1767 = vsel %vm942, %v1321, %v1673
        %v1768 = vsel %vm942, %v1325, %v1677
        %v1769 = vsel %vm942, %v1332, %v1684
        %v1770 = vsel %vm942, %v1336, %v1688
        %v1771 = vsel %vm942, %v1343, %v1695
        %v1772 = vsel %vm942, %v1347, %v1699
        %v1773 = vsel %vm942, %v1354, %v1706
        %v1774 = vsel %vm942, %v1358, %v1710
        %v1775 = vcombine.high %v943, 0.0
        %v1777 = vunpack.c.l.s4 1983009808
        %v1778 = vunpack.c.0.s8 %v1777
        %v1779 = vlaneseq
        %v1780 = vshrl.u32 %v1779, 7
        %v1781 = vsub.s32 %v1778, %v1780
        %v1782 = vrot.slane %v943, %v1781
        %v1784 = vunpack.c.l.s4 1983009808
        %v1785 = vunpack.c.0.s8 %v1784
        %v1786 = vlaneseq
        %v1787 = vshrl.u32 %v1786, 7
        %v1788 = vsub.s32 %v1785, %v1787
        %v1789 = vrot.slane %v1775, %v1788
        %v1790 = vcombine.high %v1782, 0.0
        %v1792 = vunpack.c.l.s4 1934713408
        %v1793 = vunpack.c.0.s8 %v1792
        %v1794 = vlaneseq
        %v1795 = vshrl.u32 %v1794, 7
        %v1796 = vsub.s32 %v1793, %v1795
        %v1797 = vrot.slane %v1782, %v1796
        %v1799 = vunpack.c.l.s4 1934713408
        %v1800 = vunpack.c.0.s8 %v1799
        %v1801 = vlaneseq
        %v1802 = vshrl.u32 %v1801, 7
        %v1803 = vsub.s32 %v1800, %v1802
        %v1804 = vrot.slane %v1790, %v1803
        %v1805 = vcombine.high %v1789, 0.0
        %v1807 = vunpack.c.l.s4 1934713408
        %v1808 = vunpack.c.0.s8 %v1807
        %v1809 = vlaneseq
        %v1810 = vshrl.u32 %v1809, 7
        %v1811 = vsub.s32 %v1808, %v1810
        %v1812 = vrot.slane %v1789, %v1811
        %v1814 = vunpack.c.l.s4 1934713408
        %v1815 = vunpack.c.0.s8 %v1814
        %v1816 = vlaneseq
        %v1817 = vshrl.u32 %v1816, 7
        %v1818 = vsub.s32 %v1815, %v1817
        %v1819 = vrot.slane %v1805, %v1818
        %v1820 = vcombine.high %v1797, 0.0
        %v1821 = vcombine.high %v1804, 0.0
        %v1822 = vcombine.high %v1812, 0.0
        %v1823 = vcombine.high %v1819, 0.0
        %v1824 = vcombine.high %v944, 0.0
        %v1826 = vunpack.c.l.s4 1983009808
        %v1827 = vunpack.c.0.s8 %v1826
        %v1828 = vlaneseq
        %v1829 = vshrl.u32 %v1828, 7
        %v1830 = vsub.s32 %v1827, %v1829
        %v1831 = vrot.slane %v944, %v1830
        %v1833 = vunpack.c.l.s4 1983009808
        %v1834 = vunpack.c.0.s8 %v1833
        %v1835 = vlaneseq
        %v1836 = vshrl.u32 %v1835, 7
        %v1837 = vsub.s32 %v1834, %v1836
        %v1838 = vrot.slane %v1824, %v1837
        %v1839 = vcombine.high %v1831, 0.0
        %v1841 = vunpack.c.l.s4 1934713408
        %v1842 = vunpack.c.0.s8 %v1841
        %v1843 = vlaneseq
        %v1844 = vshrl.u32 %v1843, 7
        %v1845 = vsub.s32 %v1842, %v1844
        %v1846 = vrot.slane %v1831, %v1845
        %v1848 = vunpack.c.l.s4 1934713408
        %v1849 = vunpack.c.0.s8 %v1848
        %v1850 = vlaneseq
        %v1851 = vshrl.u32 %v1850, 7
        %v1852 = vsub.s32 %v1849, %v1851
        %v1853 = vrot.slane %v1839, %v1852
        %v1854 = vcombine.high %v1838, 0.0
        %v1856 = vunpack.c.l.s4 1934713408
        %v1857 = vunpack.c.0.s8 %v1856
        %v1858 = vlaneseq
        %v1859 = vshrl.u32 %v1858, 7
        %v1860 = vsub.s32 %v1857, %v1859
        %v1861 = vrot.slane %v1838, %v1860
        %v1863 = vunpack.c.l.s4 1934713408
        %v1864 = vunpack.c.0.s8 %v1863
        %v1865 = vlaneseq
        %v1866 = vshrl.u32 %v1865, 7
        %v1867 = vsub.s32 %v1864, %v1866
        %v1868 = vrot.slane %v1854, %v1867
        %v1869 = vcombine.high %v1846, 0.0
        %v1870 = vcombine.high %v1853, 0.0
        %v1871 = vcombine.high %v1861, 0.0
        %v1872 = vcombine.high %v1868, 0.0
        %v1873 = vcombine.high %v945, 0.0
        %v1875 = vunpack.c.l.s4 1983009808
        %v1876 = vunpack.c.0.s8 %v1875
        %v1877 = vlaneseq
        %v1878 = vshrl.u32 %v1877, 7
        %v1879 = vsub.s32 %v1876, %v1878
        %v1880 = vrot.slane %v945, %v1879
        %v1882 = vunpack.c.l.s4 1983009808
        %v1883 = vunpack.c.0.s8 %v1882
        %v1884 = vlaneseq
        %v1885 = vshrl.u32 %v1884, 7
        %v1886 = vsub.s32 %v1883, %v1885
        %v1887 = vrot.slane %v1873, %v1886
        %v1888 = vcombine.high %v1880, 0.0
        %v1890 = vunpack.c.l.s4 1934713408
        %v1891 = vunpack.c.0.s8 %v1890
        %v1892 = vlaneseq
        %v1893 = vshrl.u32 %v1892, 7
        %v1894 = vsub.s32 %v1891, %v1893
        %v1895 = vrot.slane %v1880, %v1894
        %v1897 = vunpack.c.l.s4 1934713408
        %v1898 = vunpack.c.0.s8 %v1897
        %v1899 = vlaneseq
        %v1900 = vshrl.u32 %v1899, 7
        %v1901 = vsub.s32 %v1898, %v1900
        %v1902 = vrot.slane %v1888, %v1901
        %v1903 = vcombine.high %v1887, 0.0
        %v1905 = vunpack.c.l.s4 1934713408
        %v1906 = vunpack.c.0.s8 %v1905
        %v1907 = vlaneseq
        %v1908 = vshrl.u32 %v1907, 7
        %v1909 = vsub.s32 %v1906, %v1908
        %v1910 = vrot.slane %v1887, %v1909
        %v1912 = vunpack.c.l.s4 1934713408
        %v1913 = vunpack.c.0.s8 %v1912
        %v1914 = vlaneseq
        %v1915 = vshrl.u32 %v1914, 7
        %v1916 = vsub.s32 %v1913, %v1915
        %v1917 = vrot.slane %v1903, %v1916
        %v1918 = vcombine.high %v1895, 0.0
        %v1919 = vcombine.high %v1902, 0.0
        %v1920 = vcombine.high %v1910, 0.0
        %v1921 = vcombine.high %v1917, 0.0
        %v1922 = vcombine.high %v946, 0.0
        %v1924 = vunpack.c.l.s4 1983009808
        %v1925 = vunpack.c.0.s8 %v1924
        %v1926 = vlaneseq
        %v1927 = vshrl.u32 %v1926, 7
        %v1928 = vsub.s32 %v1925, %v1927
        %v1929 = vrot.slane %v946, %v1928
        %v1931 = vunpack.c.l.s4 1983009808
        %v1932 = vunpack.c.0.s8 %v1931
        %v1933 = vlaneseq
        %v1934 = vshrl.u32 %v1933, 7
        %v1935 = vsub.s32 %v1932, %v1934
        %v1936 = vrot.slane %v1922, %v1935
        %v1937 = vcombine.high %v1929, 0.0
        %v1939 = vunpack.c.l.s4 1934713408
        %v1940 = vunpack.c.0.s8 %v1939
        %v1941 = vlaneseq
        %v1942 = vshrl.u32 %v1941, 7
        %v1943 = vsub.s32 %v1940, %v1942
        %v1944 = vrot.slane %v1929, %v1943
        %v1946 = vunpack.c.l.s4 1934713408
        %v1947 = vunpack.c.0.s8 %v1946
        %v1948 = vlaneseq
        %v1949 = vshrl.u32 %v1948, 7
        %v1950 = vsub.s32 %v1947, %v1949
        %v1951 = vrot.slane %v1937, %v1950
        %v1952 = vcombine.high %v1936, 0.0
        %v1954 = vunpack.c.l.s4 1934713408
        %v1955 = vunpack.c.0.s8 %v1954
        %v1956 = vlaneseq
        %v1957 = vshrl.u32 %v1956, 7
        %v1958 = vsub.s32 %v1955, %v1957
        %v1959 = vrot.slane %v1936, %v1958
        %v1961 = vunpack.c.l.s4 1934713408
        %v1962 = vunpack.c.0.s8 %v1961
        %v1963 = vlaneseq
        %v1964 = vshrl.u32 %v1963, 7
        %v1965 = vsub.s32 %v1962, %v1964
        %v1966 = vrot.slane %v1952, %v1965
        %v1967 = vcombine.high %v1944, 0.0
        %v1968 = vcombine.high %v1951, 0.0
        %v1969 = vcombine.high %v1959, 0.0
        %v1970 = vcombine.high %v1966, 0.0
        %v1971 = vcombine.high %v947, 0.0
        %v1973 = vunpack.c.l.s4 1983009808
        %v1974 = vunpack.c.0.s8 %v1973
        %v1975 = vlaneseq
        %v1976 = vshrl.u32 %v1975, 7
        %v1977 = vsub.s32 %v1974, %v1976
        %v1978 = vrot.slane %v947, %v1977
        %v1980 = vunpack.c.l.s4 1983009808
        %v1981 = vunpack.c.0.s8 %v1980
        %v1982 = vlaneseq
        %v1983 = vshrl.u32 %v1982, 7
        %v1984 = vsub.s32 %v1981, %v1983
        %v1985 = vrot.slane %v1971, %v1984
        %v1986 = vcombine.high %v1978, 0.0
        %v1988 = vunpack.c.l.s4 1934713408
        %v1989 = vunpack.c.0.s8 %v1988
        %v1990 = vlaneseq
        %v1991 = vshrl.u32 %v1990, 7
        %v1992 = vsub.s32 %v1989, %v1991
        %v1993 = vrot.slane %v1978, %v1992
        %v1995 = vunpack.c.l.s4 1934713408
        %v1996 = vunpack.c.0.s8 %v1995
        %v1997 = vlaneseq
        %v1998 = vshrl.u32 %v1997, 7
        %v1999 = vsub.s32 %v1996, %v1998
        %v2000 = vrot.slane %v1986, %v1999
        %v2001 = vcombine.high %v1985, 0.0
        %v2003 = vunpack.c.l.s4 1934713408
        %v2004 = vunpack.c.0.s8 %v2003
        %v2005 = vlaneseq
        %v2006 = vshrl.u32 %v2005, 7
        %v2007 = vsub.s32 %v2004, %v2006
        %v2008 = vrot.slane %v1985, %v2007
        %v2010 = vunpack.c.l.s4 1934713408
        %v2011 = vunpack.c.0.s8 %v2010
        %v2012 = vlaneseq
        %v2013 = vshrl.u32 %v2012, 7
        %v2014 = vsub.s32 %v2011, %v2013
        %v2015 = vrot.slane %v2001, %v2014
        %v2016 = vcombine.high %v1993, 0.0
        %v2017 = vcombine.high %v2000, 0.0
        %v2018 = vcombine.high %v2008, 0.0
        %v2019 = vcombine.high %v2015, 0.0
        %v2020 = vcombine.high %v948, 0.0
        %v2022 = vunpack.c.l.s4 1983009808
        %v2023 = vunpack.c.0.s8 %v2022
        %v2024 = vlaneseq
        %v2025 = vshrl.u32 %v2024, 7
        %v2026 = vsub.s32 %v2023, %v2025
        %v2027 = vrot.slane %v948, %v2026
        %v2029 = vunpack.c.l.s4 1983009808
        %v2030 = vunpack.c.0.s8 %v2029
        %v2031 = vlaneseq
        %v2032 = vshrl.u32 %v2031, 7
        %v2033 = vsub.s32 %v2030, %v2032
        %v2034 = vrot.slane %v2020, %v2033
        %v2035 = vcombine.high %v2027, 0.0
        %v2037 = vunpack.c.l.s4 1934713408
        %v2038 = vunpack.c.0.s8 %v2037
        %v2039 = vlaneseq
        %v2040 = vshrl.u32 %v2039, 7
        %v2041 = vsub.s32 %v2038, %v2040
        %v2042 = vrot.slane %v2027, %v2041
        %v2044 = vunpack.c.l.s4 1934713408
        %v2045 = vunpack.c.0.s8 %v2044
        %v2046 = vlaneseq
        %v2047 = vshrl.u32 %v2046, 7
        %v2048 = vsub.s32 %v2045, %v2047
        %v2049 = vrot.slane %v2035, %v2048
        %v2050 = vcombine.high %v2034, 0.0
        %v2052 = vunpack.c.l.s4 1934713408
        %v2053 = vunpack.c.0.s8 %v2052
        %v2054 = vlaneseq
        %v2055 = vshrl.u32 %v2054, 7
        %v2056 = vsub.s32 %v2053, %v2055
        %v2057 = vrot.slane %v2034, %v2056
        %v2059 = vunpack.c.l.s4 1934713408
        %v2060 = vunpack.c.0.s8 %v2059
        %v2061 = vlaneseq
        %v2062 = vshrl.u32 %v2061, 7
        %v2063 = vsub.s32 %v2060, %v2062
        %v2064 = vrot.slane %v2050, %v2063
        %v2065 = vcombine.high %v2042, 0.0
        %v2066 = vcombine.high %v2049, 0.0
        %v2067 = vcombine.high %v2057, 0.0
        %v2068 = vcombine.high %v2064, 0.0
        %v2069 = vcombine.high %v949, 0.0
        %v2071 = vunpack.c.l.s4 1983009808
        %v2072 = vunpack.c.0.s8 %v2071
        %v2073 = vlaneseq
        %v2074 = vshrl.u32 %v2073, 7
        %v2075 = vsub.s32 %v2072, %v2074
        %v2076 = vrot.slane %v949, %v2075
        %v2078 = vunpack.c.l.s4 1983009808
        %v2079 = vunpack.c.0.s8 %v2078
        %v2080 = vlaneseq
        %v2081 = vshrl.u32 %v2080, 7
        %v2082 = vsub.s32 %v2079, %v2081
        %v2083 = vrot.slane %v2069, %v2082
        %v2084 = vcombine.high %v2076, 0.0
        %v2086 = vunpack.c.l.s4 1934713408
        %v2087 = vunpack.c.0.s8 %v2086
        %v2088 = vlaneseq
        %v2089 = vshrl.u32 %v2088, 7
        %v2090 = vsub.s32 %v2087, %v2089
        %v2091 = vrot.slane %v2076, %v2090
        %v2093 = vunpack.c.l.s4 1934713408
        %v2094 = vunpack.c.0.s8 %v2093
        %v2095 = vlaneseq
        %v2096 = vshrl.u32 %v2095, 7
        %v2097 = vsub.s32 %v2094, %v2096
        %v2098 = vrot.slane %v2084, %v2097
        %v2099 = vcombine.high %v2083, 0.0
        %v2101 = vunpack.c.l.s4 1934713408
        %v2102 = vunpack.c.0.s8 %v2101
        %v2103 = vlaneseq
        %v2104 = vshrl.u32 %v2103, 7
        %v2105 = vsub.s32 %v2102, %v2104
        %v2106 = vrot.slane %v2083, %v2105
        %v2108 = vunpack.c.l.s4 1934713408
        %v2109 = vunpack.c.0.s8 %v2108
        %v2110 = vlaneseq
        %v2111 = vshrl.u32 %v2110, 7
        %v2112 = vsub.s32 %v2109, %v2111
        %v2113 = vrot.slane %v2099, %v2112
        %v2114 = vcombine.high %v2091, 0.0
        %v2115 = vcombine.high %v2098, 0.0
        %v2116 = vcombine.high %v2106, 0.0
        %v2117 = vcombine.high %v2113, 0.0
        %v2118 = vcombine.high %v950, 0.0
        %v2120 = vunpack.c.l.s4 1983009808
        %v2121 = vunpack.c.0.s8 %v2120
        %v2122 = vlaneseq
        %v2123 = vshrl.u32 %v2122, 7
        %v2124 = vsub.s32 %v2121, %v2123
        %v2125 = vrot.slane %v950, %v2124
        %v2127 = vunpack.c.l.s4 1983009808
        %v2128 = vunpack.c.0.s8 %v2127
        %v2129 = vlaneseq
        %v2130 = vshrl.u32 %v2129, 7
        %v2131 = vsub.s32 %v2128, %v2130
        %v2132 = vrot.slane %v2118, %v2131
        %v2133 = vcombine.high %v2125, 0.0
        %v2135 = vunpack.c.l.s4 1934713408
        %v2136 = vunpack.c.0.s8 %v2135
        %v2137 = vlaneseq
        %v2138 = vshrl.u32 %v2137, 7
        %v2139 = vsub.s32 %v2136, %v2138
        %v2140 = vrot.slane %v2125, %v2139
        %v2142 = vunpack.c.l.s4 1934713408
        %v2143 = vunpack.c.0.s8 %v2142
        %v2144 = vlaneseq
        %v2145 = vshrl.u32 %v2144, 7
        %v2146 = vsub.s32 %v2143, %v2145
        %v2147 = vrot.slane %v2133, %v2146
        %v2148 = vcombine.high %v2132, 0.0
        %v2150 = vunpack.c.l.s4 1934713408
        %v2151 = vunpack.c.0.s8 %v2150
        %v2152 = vlaneseq
        %v2153 = vshrl.u32 %v2152, 7
        %v2154 = vsub.s32 %v2151, %v2153
        %v2155 = vrot.slane %v2132, %v2154
        %v2157 = vunpack.c.l.s4 1934713408
        %v2158 = vunpack.c.0.s8 %v2157
        %v2159 = vlaneseq
        %v2160 = vshrl.u32 %v2159, 7
        %v2161 = vsub.s32 %v2158, %v2160
        %v2162 = vrot.slane %v2148, %v2161
        %v2163 = vcombine.high %v2140, 0.0
        %v2164 = vcombine.high %v2147, 0.0
        %v2165 = vcombine.high %v2155, 0.0
        %v2166 = vcombine.high %v2162, 0.0
        %v2167 = vcombine.high %v951, 0.0
        %v2169 = vunpack.c.l.s4 1983009808
        %v2170 = vunpack.c.0.s8 %v2169
        %v2171 = vlaneseq
        %v2172 = vshrl.u32 %v2171, 7
        %v2173 = vsub.s32 %v2170, %v2172
        %v2174 = vrot.slane %v951, %v2173
        %v2176 = vunpack.c.l.s4 1983009808
        %v2177 = vunpack.c.0.s8 %v2176
        %v2178 = vlaneseq
        %v2179 = vshrl.u32 %v2178, 7
        %v2180 = vsub.s32 %v2177, %v2179
        %v2181 = vrot.slane %v2167, %v2180
        %v2182 = vcombine.high %v2174, 0.0
        %v2184 = vunpack.c.l.s4 1934713408
        %v2185 = vunpack.c.0.s8 %v2184
        %v2186 = vlaneseq
        %v2187 = vshrl.u32 %v2186, 7
        %v2188 = vsub.s32 %v2185, %v2187
        %v2189 = vrot.slane %v2174, %v2188
        %v2191 = vunpack.c.l.s4 1934713408
        %v2192 = vunpack.c.0.s8 %v2191
        %v2193 = vlaneseq
        %v2194 = vshrl.u32 %v2193, 7
        %v2195 = vsub.s32 %v2192, %v2194
        %v2196 = vrot.slane %v2182, %v2195
        %v2197 = vcombine.high %v2181, 0.0
        %v2199 = vunpack.c.l.s4 1934713408
        %v2200 = vunpack.c.0.s8 %v2199
        %v2201 = vlaneseq
        %v2202 = vshrl.u32 %v2201, 7
        %v2203 = vsub.s32 %v2200, %v2202
        %v2204 = vrot.slane %v2181, %v2203
        %v2206 = vunpack.c.l.s4 1934713408
        %v2207 = vunpack.c.0.s8 %v2206
        %v2208 = vlaneseq
        %v2209 = vshrl.u32 %v2208, 7
        %v2210 = vsub.s32 %v2207, %v2209
        %v2211 = vrot.slane %v2197, %v2210
        %v2212 = vcombine.high %v2189, 0.0
        %v2213 = vcombine.high %v2196, 0.0
        %v2214 = vcombine.high %v2204, 0.0
        %v2215 = vcombine.high %v2211, 0.0
        %v2216 = vcombine.high %v952, 0.0
        %v2218 = vunpack.c.l.s4 1983009808
        %v2219 = vunpack.c.0.s8 %v2218
        %v2220 = vlaneseq
        %v2221 = vshrl.u32 %v2220, 7
        %v2222 = vsub.s32 %v2219, %v2221
        %v2223 = vrot.slane %v952, %v2222
        %v2225 = vunpack.c.l.s4 1983009808
        %v2226 = vunpack.c.0.s8 %v2225
        %v2227 = vlaneseq
        %v2228 = vshrl.u32 %v2227, 7
        %v2229 = vsub.s32 %v2226, %v2228
        %v2230 = vrot.slane %v2216, %v2229
        %v2231 = vcombine.high %v2223, 0.0
        %v2233 = vunpack.c.l.s4 1934713408
        %v2234 = vunpack.c.0.s8 %v2233
        %v2235 = vlaneseq
        %v2236 = vshrl.u32 %v2235, 7
        %v2237 = vsub.s32 %v2234, %v2236
        %v2238 = vrot.slane %v2223, %v2237
        %v2240 = vunpack.c.l.s4 1934713408
        %v2241 = vunpack.c.0.s8 %v2240
        %v2242 = vlaneseq
        %v2243 = vshrl.u32 %v2242, 7
        %v2244 = vsub.s32 %v2241, %v2243
        %v2245 = vrot.slane %v2231, %v2244
        %v2246 = vcombine.high %v2230, 0.0
        %v2248 = vunpack.c.l.s4 1934713408
        %v2249 = vunpack.c.0.s8 %v2248
        %v2250 = vlaneseq
        %v2251 = vshrl.u32 %v2250, 7
        %v2252 = vsub.s32 %v2249, %v2251
        %v2253 = vrot.slane %v2230, %v2252
        %v2255 = vunpack.c.l.s4 1934713408
        %v2256 = vunpack.c.0.s8 %v2255
        %v2257 = vlaneseq
        %v2258 = vshrl.u32 %v2257, 7
        %v2259 = vsub.s32 %v2256, %v2258
        %v2260 = vrot.slane %v2246, %v2259
        %v2261 = vcombine.high %v2238, 0.0
        %v2262 = vcombine.high %v2245, 0.0
        %v2263 = vcombine.high %v2253, 0.0
        %v2264 = vcombine.high %v2260, 0.0
        %v2265 = vcombine.high %v953, 0.0
        %v2267 = vunpack.c.l.s4 1983009808
        %v2268 = vunpack.c.0.s8 %v2267
        %v2269 = vlaneseq
        %v2270 = vshrl.u32 %v2269, 7
        %v2271 = vsub.s32 %v2268, %v2270
        %v2272 = vrot.slane %v953, %v2271
        %v2274 = vunpack.c.l.s4 1983009808
        %v2275 = vunpack.c.0.s8 %v2274
        %v2276 = vlaneseq
        %v2277 = vshrl.u32 %v2276, 7
        %v2278 = vsub.s32 %v2275, %v2277
        %v2279 = vrot.slane %v2265, %v2278
        %v2280 = vcombine.high %v2272, 0.0
        %v2282 = vunpack.c.l.s4 1934713408
        %v2283 = vunpack.c.0.s8 %v2282
        %v2284 = vlaneseq
        %v2285 = vshrl.u32 %v2284, 7
        %v2286 = vsub.s32 %v2283, %v2285
        %v2287 = vrot.slane %v2272, %v2286
        %v2289 = vunpack.c.l.s4 1934713408
        %v2290 = vunpack.c.0.s8 %v2289
        %v2291 = vlaneseq
        %v2292 = vshrl.u32 %v2291, 7
        %v2293 = vsub.s32 %v2290, %v2292
        %v2294 = vrot.slane %v2280, %v2293
        %v2295 = vcombine.high %v2279, 0.0
        %v2297 = vunpack.c.l.s4 1934713408
        %v2298 = vunpack.c.0.s8 %v2297
        %v2299 = vlaneseq
        %v2300 = vshrl.u32 %v2299, 7
        %v2301 = vsub.s32 %v2298, %v2300
        %v2302 = vrot.slane %v2279, %v2301
        %v2304 = vunpack.c.l.s4 1934713408
        %v2305 = vunpack.c.0.s8 %v2304
        %v2306 = vlaneseq
        %v2307 = vshrl.u32 %v2306, 7
        %v2308 = vsub.s32 %v2305, %v2307
        %v2309 = vrot.slane %v2295, %v2308
        %v2310 = vcombine.high %v2287, 0.0
        %v2311 = vcombine.high %v2294, 0.0
        %v2312 = vcombine.high %v2302, 0.0
        %v2313 = vcombine.high %v2309, 0.0
        %v2314 = vcombine.high %v954, 0.0
        %v2316 = vunpack.c.l.s4 1983009808
        %v2317 = vunpack.c.0.s8 %v2316
        %v2318 = vlaneseq
        %v2319 = vshrl.u32 %v2318, 7
        %v2320 = vsub.s32 %v2317, %v2319
        %v2321 = vrot.slane %v954, %v2320
        %v2323 = vunpack.c.l.s4 1983009808
        %v2324 = vunpack.c.0.s8 %v2323
        %v2325 = vlaneseq
        %v2326 = vshrl.u32 %v2325, 7
        %v2327 = vsub.s32 %v2324, %v2326
        %v2328 = vrot.slane %v2314, %v2327
        %v2329 = vcombine.high %v2321, 0.0
        %v2331 = vunpack.c.l.s4 1934713408
        %v2332 = vunpack.c.0.s8 %v2331
        %v2333 = vlaneseq
        %v2334 = vshrl.u32 %v2333, 7
        %v2335 = vsub.s32 %v2332, %v2334
        %v2336 = vrot.slane %v2321, %v2335
        %v2338 = vunpack.c.l.s4 1934713408
        %v2339 = vunpack.c.0.s8 %v2338
        %v2340 = vlaneseq
        %v2341 = vshrl.u32 %v2340, 7
        %v2342 = vsub.s32 %v2339, %v2341
        %v2343 = vrot.slane %v2329, %v2342
        %v2344 = vcombine.high %v2328, 0.0
        %v2346 = vunpack.c.l.s4 1934713408
        %v2347 = vunpack.c.0.s8 %v2346
        %v2348 = vlaneseq
        %v2349 = vshrl.u32 %v2348, 7
        %v2350 = vsub.s32 %v2347, %v2349
        %v2351 = vrot.slane %v2328, %v2350
        %v2353 = vunpack.c.l.s4 1934713408
        %v2354 = vunpack.c.0.s8 %v2353
        %v2355 = vlaneseq
        %v2356 = vshrl.u32 %v2355, 7
        %v2357 = vsub.s32 %v2354, %v2356
        %v2358 = vrot.slane %v2344, %v2357
        %v2359 = vcombine.high %v2336, 0.0
        %v2360 = vcombine.high %v2343, 0.0
        %v2361 = vcombine.high %v2351, 0.0
        %v2362 = vcombine.high %v2358, 0.0
        %v2363 = vcombine.high %v955, 0.0
        %v2365 = vunpack.c.l.s4 1983009808
        %v2366 = vunpack.c.0.s8 %v2365
        %v2367 = vlaneseq
        %v2368 = vshrl.u32 %v2367, 7
        %v2369 = vsub.s32 %v2366, %v2368
        %v2370 = vrot.slane %v955, %v2369
        %v2372 = vunpack.c.l.s4 1983009808
        %v2373 = vunpack.c.0.s8 %v2372
        %v2374 = vlaneseq
        %v2375 = vshrl.u32 %v2374, 7
        %v2376 = vsub.s32 %v2373, %v2375
        %v2377 = vrot.slane %v2363, %v2376
        %v2378 = vcombine.high %v2370, 0.0
        %v2380 = vunpack.c.l.s4 1934713408
        %v2381 = vunpack.c.0.s8 %v2380
        %v2382 = vlaneseq
        %v2383 = vshrl.u32 %v2382, 7
        %v2384 = vsub.s32 %v2381, %v2383
        %v2385 = vrot.slane %v2370, %v2384
        %v2387 = vunpack.c.l.s4 1934713408
        %v2388 = vunpack.c.0.s8 %v2387
        %v2389 = vlaneseq
        %v2390 = vshrl.u32 %v2389, 7
        %v2391 = vsub.s32 %v2388, %v2390
        %v2392 = vrot.slane %v2378, %v2391
        %v2393 = vcombine.high %v2377, 0.0
        %v2395 = vunpack.c.l.s4 1934713408
        %v2396 = vunpack.c.0.s8 %v2395
        %v2397 = vlaneseq
        %v2398 = vshrl.u32 %v2397, 7
        %v2399 = vsub.s32 %v2396, %v2398
        %v2400 = vrot.slane %v2377, %v2399
        %v2402 = vunpack.c.l.s4 1934713408
        %v2403 = vunpack.c.0.s8 %v2402
        %v2404 = vlaneseq
        %v2405 = vshrl.u32 %v2404, 7
        %v2406 = vsub.s32 %v2403, %v2405
        %v2407 = vrot.slane %v2393, %v2406
        %v2408 = vcombine.high %v2385, 0.0
        %v2409 = vcombine.high %v2392, 0.0
        %v2410 = vcombine.high %v2400, 0.0
        %v2411 = vcombine.high %v2407, 0.0
        %v2412 = vcombine.high %v956, 0.0
        %v2414 = vunpack.c.l.s4 1983009808
        %v2415 = vunpack.c.0.s8 %v2414
        %v2416 = vlaneseq
        %v2417 = vshrl.u32 %v2416, 7
        %v2418 = vsub.s32 %v2415, %v2417
        %v2419 = vrot.slane %v956, %v2418
        %v2421 = vunpack.c.l.s4 1983009808
        %v2422 = vunpack.c.0.s8 %v2421
        %v2423 = vlaneseq
        %v2424 = vshrl.u32 %v2423, 7
        %v2425 = vsub.s32 %v2422, %v2424
        %v2426 = vrot.slane %v2412, %v2425
        %v2427 = vcombine.high %v2419, 0.0
        %v2429 = vunpack.c.l.s4 1934713408
        %v2430 = vunpack.c.0.s8 %v2429
        %v2431 = vlaneseq
        %v2432 = vshrl.u32 %v2431, 7
        %v2433 = vsub.s32 %v2430, %v2432
        %v2434 = vrot.slane %v2419, %v2433
        %v2436 = vunpack.c.l.s4 1934713408
        %v2437 = vunpack.c.0.s8 %v2436
        %v2438 = vlaneseq
        %v2439 = vshrl.u32 %v2438, 7
        %v2440 = vsub.s32 %v2437, %v2439
        %v2441 = vrot.slane %v2427, %v2440
        %v2442 = vcombine.high %v2426, 0.0
        %v2444 = vunpack.c.l.s4 1934713408
        %v2445 = vunpack.c.0.s8 %v2444
        %v2446 = vlaneseq
        %v2447 = vshrl.u32 %v2446, 7
        %v2448 = vsub.s32 %v2445, %v2447
        %v2449 = vrot.slane %v2426, %v2448
        %v2451 = vunpack.c.l.s4 1934713408
        %v2452 = vunpack.c.0.s8 %v2451
        %v2453 = vlaneseq
        %v2454 = vshrl.u32 %v2453, 7
        %v2455 = vsub.s32 %v2452, %v2454
        %v2456 = vrot.slane %v2442, %v2455
        %v2457 = vcombine.high %v2434, 0.0
        %v2458 = vcombine.high %v2441, 0.0
        %v2459 = vcombine.high %v2449, 0.0
        %v2460 = vcombine.high %v2456, 0.0
        %v2461 = vcombine.high %v957, 0.0
        %v2463 = vunpack.c.l.s4 1983009808
        %v2464 = vunpack.c.0.s8 %v2463
        %v2465 = vlaneseq
        %v2466 = vshrl.u32 %v2465, 7
        %v2467 = vsub.s32 %v2464, %v2466
        %v2468 = vrot.slane %v957, %v2467
        %v2470 = vunpack.c.l.s4 1983009808
        %v2471 = vunpack.c.0.s8 %v2470
        %v2472 = vlaneseq
        %v2473 = vshrl.u32 %v2472, 7
        %v2474 = vsub.s32 %v2471, %v2473
        %v2475 = vrot.slane %v2461, %v2474
        %v2476 = vcombine.high %v2468, 0.0
        %v2478 = vunpack.c.l.s4 1934713408
        %v2479 = vunpack.c.0.s8 %v2478
        %v2480 = vlaneseq
        %v2481 = vshrl.u32 %v2480, 7
        %v2482 = vsub.s32 %v2479, %v2481
        %v2483 = vrot.slane %v2468, %v2482
        %v2485 = vunpack.c.l.s4 1934713408
        %v2486 = vunpack.c.0.s8 %v2485
        %v2487 = vlaneseq
        %v2488 = vshrl.u32 %v2487, 7
        %v2489 = vsub.s32 %v2486, %v2488
        %v2490 = vrot.slane %v2476, %v2489
        %v2491 = vcombine.high %v2475, 0.0
        %v2493 = vunpack.c.l.s4 1934713408
        %v2494 = vunpack.c.0.s8 %v2493
        %v2495 = vlaneseq
        %v2496 = vshrl.u32 %v2495, 7
        %v2497 = vsub.s32 %v2494, %v2496
        %v2498 = vrot.slane %v2475, %v2497
        %v2500 = vunpack.c.l.s4 1934713408
        %v2501 = vunpack.c.0.s8 %v2500
        %v2502 = vlaneseq
        %v2503 = vshrl.u32 %v2502, 7
        %v2504 = vsub.s32 %v2501, %v2503
        %v2505 = vrot.slane %v2491, %v2504
        %v2506 = vcombine.high %v2483, 0.0
        %v2507 = vcombine.high %v2490, 0.0
        %v2508 = vcombine.high %v2498, 0.0
        %v2509 = vcombine.high %v2505, 0.0
        %v2510 = vcombine.high %v958, 0.0
        %v2512 = vunpack.c.l.s4 1983009808
        %v2513 = vunpack.c.0.s8 %v2512
        %v2514 = vlaneseq
        %v2515 = vshrl.u32 %v2514, 7
        %v2516 = vsub.s32 %v2513, %v2515
        %v2517 = vrot.slane %v958, %v2516
        %v2519 = vunpack.c.l.s4 1983009808
        %v2520 = vunpack.c.0.s8 %v2519
        %v2521 = vlaneseq
        %v2522 = vshrl.u32 %v2521, 7
        %v2523 = vsub.s32 %v2520, %v2522
        %v2524 = vrot.slane %v2510, %v2523
        %v2525 = vcombine.high %v2517, 0.0
        %v2527 = vunpack.c.l.s4 1934713408
        %v2528 = vunpack.c.0.s8 %v2527
        %v2529 = vlaneseq
        %v2530 = vshrl.u32 %v2529, 7
        %v2531 = vsub.s32 %v2528, %v2530
        %v2532 = vrot.slane %v2517, %v2531
        %v2534 = vunpack.c.l.s4 1934713408
        %v2535 = vunpack.c.0.s8 %v2534
        %v2536 = vlaneseq
        %v2537 = vshrl.u32 %v2536, 7
        %v2538 = vsub.s32 %v2535, %v2537
        %v2539 = vrot.slane %v2525, %v2538
        %v2540 = vcombine.high %v2524, 0.0
        %v2542 = vunpack.c.l.s4 1934713408
        %v2543 = vunpack.c.0.s8 %v2542
        %v2544 = vlaneseq
        %v2545 = vshrl.u32 %v2544, 7
        %v2546 = vsub.s32 %v2543, %v2545
        %v2547 = vrot.slane %v2524, %v2546
        %v2549 = vunpack.c.l.s4 1934713408
        %v2550 = vunpack.c.0.s8 %v2549
        %v2551 = vlaneseq
        %v2552 = vshrl.u32 %v2551, 7
        %v2553 = vsub.s32 %v2550, %v2552
        %v2554 = vrot.slane %v2540, %v2553
        %v2555 = vcombine.high %v2532, 0.0
        %v2556 = vcombine.high %v2539, 0.0
        %v2557 = vcombine.high %v2547, 0.0
        %v2558 = vcombine.high %v2554, 0.0
        %v2559 = vcombine.high %v959, 0.0
        %v2561 = vunpack.c.l.s4 1983009808
        %v2562 = vunpack.c.0.s8 %v2561
        %v2563 = vlaneseq
        %v2564 = vshrl.u32 %v2563, 7
        %v2565 = vsub.s32 %v2562, %v2564
        %v2566 = vrot.slane %v959, %v2565
        %v2568 = vunpack.c.l.s4 1983009808
        %v2569 = vunpack.c.0.s8 %v2568
        %v2570 = vlaneseq
        %v2571 = vshrl.u32 %v2570, 7
        %v2572 = vsub.s32 %v2569, %v2571
        %v2573 = vrot.slane %v2559, %v2572
        %v2574 = vcombine.high %v2566, 0.0
        %v2576 = vunpack.c.l.s4 1934713408
        %v2577 = vunpack.c.0.s8 %v2576
        %v2578 = vlaneseq
        %v2579 = vshrl.u32 %v2578, 7
        %v2580 = vsub.s32 %v2577, %v2579
        %v2581 = vrot.slane %v2566, %v2580
        %v2583 = vunpack.c.l.s4 1934713408
        %v2584 = vunpack.c.0.s8 %v2583
        %v2585 = vlaneseq
        %v2586 = vshrl.u32 %v2585, 7
        %v2587 = vsub.s32 %v2584, %v2586
        %v2588 = vrot.slane %v2574, %v2587
        %v2589 = vcombine.high %v2573, 0.0
        %v2591 = vunpack.c.l.s4 1934713408
        %v2592 = vunpack.c.0.s8 %v2591
        %v2593 = vlaneseq
        %v2594 = vshrl.u32 %v2593, 7
        %v2595 = vsub.s32 %v2592, %v2594
        %v2596 = vrot.slane %v2573, %v2595
        %v2598 = vunpack.c.l.s4 1934713408
        %v2599 = vunpack.c.0.s8 %v2598
        %v2600 = vlaneseq
        %v2601 = vshrl.u32 %v2600, 7
        %v2602 = vsub.s32 %v2599, %v2601
        %v2603 = vrot.slane %v2589, %v2602
        %v2604 = vcombine.high %v2581, 0.0
        %v2605 = vcombine.high %v2588, 0.0
        %v2606 = vcombine.high %v2596, 0.0
        %v2607 = vcombine.high %v2603, 0.0
        %v2608 = vcombine.high %v960, 0.0
        %v2610 = vunpack.c.l.s4 1983009808
        %v2611 = vunpack.c.0.s8 %v2610
        %v2612 = vlaneseq
        %v2613 = vshrl.u32 %v2612, 7
        %v2614 = vsub.s32 %v2611, %v2613
        %v2615 = vrot.slane %v960, %v2614
        %v2617 = vunpack.c.l.s4 1983009808
        %v2618 = vunpack.c.0.s8 %v2617
        %v2619 = vlaneseq
        %v2620 = vshrl.u32 %v2619, 7
        %v2621 = vsub.s32 %v2618, %v2620
        %v2622 = vrot.slane %v2608, %v2621
        %v2623 = vcombine.high %v2615, 0.0
        %v2625 = vunpack.c.l.s4 1934713408
        %v2626 = vunpack.c.0.s8 %v2625
        %v2627 = vlaneseq
        %v2628 = vshrl.u32 %v2627, 7
        %v2629 = vsub.s32 %v2626, %v2628
        %v2630 = vrot.slane %v2615, %v2629
        %v2632 = vunpack.c.l.s4 1934713408
        %v2633 = vunpack.c.0.s8 %v2632
        %v2634 = vlaneseq
        %v2635 = vshrl.u32 %v2634, 7
        %v2636 = vsub.s32 %v2633, %v2635
        %v2637 = vrot.slane %v2623, %v2636
        %v2638 = vcombine.high %v2622, 0.0
        %v2640 = vunpack.c.l.s4 1934713408
        %v2641 = vunpack.c.0.s8 %v2640
        %v2642 = vlaneseq
        %v2643 = vshrl.u32 %v2642, 7
        %v2644 = vsub.s32 %v2641, %v2643
        %v2645 = vrot.slane %v2622, %v2644
        %v2647 = vunpack.c.l.s4 1934713408
        %v2648 = vunpack.c.0.s8 %v2647
        %v2649 = vlaneseq
        %v2650 = vshrl.u32 %v2649, 7
        %v2651 = vsub.s32 %v2648, %v2650
        %v2652 = vrot.slane %v2638, %v2651
        %v2653 = vcombine.high %v2630, 0.0
        %v2654 = vcombine.high %v2637, 0.0
        %v2655 = vcombine.high %v2645, 0.0
        %v2656 = vcombine.high %v2652, 0.0
        %v2657 = vcombine.high %v961, 0.0
        %v2659 = vunpack.c.l.s4 1983009808
        %v2660 = vunpack.c.0.s8 %v2659
        %v2661 = vlaneseq
        %v2662 = vshrl.u32 %v2661, 7
        %v2663 = vsub.s32 %v2660, %v2662
        %v2664 = vrot.slane %v961, %v2663
        %v2666 = vunpack.c.l.s4 1983009808
        %v2667 = vunpack.c.0.s8 %v2666
        %v2668 = vlaneseq
        %v2669 = vshrl.u32 %v2668, 7
        %v2670 = vsub.s32 %v2667, %v2669
        %v2671 = vrot.slane %v2657, %v2670
        %v2672 = vcombine.high %v2664, 0.0
        %v2674 = vunpack.c.l.s4 1934713408
        %v2675 = vunpack.c.0.s8 %v2674
        %v2676 = vlaneseq
        %v2677 = vshrl.u32 %v2676, 7
        %v2678 = vsub.s32 %v2675, %v2677
        %v2679 = vrot.slane %v2664, %v2678
        %v2681 = vunpack.c.l.s4 1934713408
        %v2682 = vunpack.c.0.s8 %v2681
        %v2683 = vlaneseq
        %v2684 = vshrl.u32 %v2683, 7
        %v2685 = vsub.s32 %v2682, %v2684
        %v2686 = vrot.slane %v2672, %v2685
        %v2687 = vcombine.high %v2671, 0.0
        %v2689 = vunpack.c.l.s4 1934713408
        %v2690 = vunpack.c.0.s8 %v2689
        %v2691 = vlaneseq
        %v2692 = vshrl.u32 %v2691, 7
        %v2693 = vsub.s32 %v2690, %v2692
        %v2694 = vrot.slane %v2671, %v2693
        %v2696 = vunpack.c.l.s4 1934713408
        %v2697 = vunpack.c.0.s8 %v2696
        %v2698 = vlaneseq
        %v2699 = vshrl.u32 %v2698, 7
        %v2700 = vsub.s32 %v2697, %v2699
        %v2701 = vrot.slane %v2687, %v2700
        %v2702 = vcombine.high %v2679, 0.0
        %v2703 = vcombine.high %v2686, 0.0
        %v2704 = vcombine.high %v2694, 0.0
        %v2705 = vcombine.high %v2701, 0.0
        %v2706 = vcombine.high %v962, 0.0
        %v2708 = vunpack.c.l.s4 1983009808
        %v2709 = vunpack.c.0.s8 %v2708
        %v2710 = vlaneseq
        %v2711 = vshrl.u32 %v2710, 7
        %v2712 = vsub.s32 %v2709, %v2711
        %v2713 = vrot.slane %v962, %v2712
        %v2715 = vunpack.c.l.s4 1983009808
        %v2716 = vunpack.c.0.s8 %v2715
        %v2717 = vlaneseq
        %v2718 = vshrl.u32 %v2717, 7
        %v2719 = vsub.s32 %v2716, %v2718
        %v2720 = vrot.slane %v2706, %v2719
        %v2721 = vcombine.high %v2713, 0.0
        %v2723 = vunpack.c.l.s4 1934713408
        %v2724 = vunpack.c.0.s8 %v2723
        %v2725 = vlaneseq
        %v2726 = vshrl.u32 %v2725, 7
        %v2727 = vsub.s32 %v2724, %v2726
        %v2728 = vrot.slane %v2713, %v2727
        %v2730 = vunpack.c.l.s4 1934713408
        %v2731 = vunpack.c.0.s8 %v2730
        %v2732 = vlaneseq
        %v2733 = vshrl.u32 %v2732, 7
        %v2734 = vsub.s32 %v2731, %v2733
        %v2735 = vrot.slane %v2721, %v2734
        %v2736 = vcombine.high %v2720, 0.0
        %v2738 = vunpack.c.l.s4 1934713408
        %v2739 = vunpack.c.0.s8 %v2738
        %v2740 = vlaneseq
        %v2741 = vshrl.u32 %v2740, 7
        %v2742 = vsub.s32 %v2739, %v2741
        %v2743 = vrot.slane %v2720, %v2742
        %v2745 = vunpack.c.l.s4 1934713408
        %v2746 = vunpack.c.0.s8 %v2745
        %v2747 = vlaneseq
        %v2748 = vshrl.u32 %v2747, 7
        %v2749 = vsub.s32 %v2746, %v2748
        %v2750 = vrot.slane %v2736, %v2749
        %v2751 = vcombine.high %v2728, 0.0
        %v2752 = vcombine.high %v2735, 0.0
        %v2753 = vcombine.high %v2743, 0.0
        %v2754 = vcombine.high %v2750, 0.0
        %v2755 = vcombine.high %v963, 0.0
        %v2757 = vunpack.c.l.s4 1983009808
        %v2758 = vunpack.c.0.s8 %v2757
        %v2759 = vlaneseq
        %v2760 = vshrl.u32 %v2759, 7
        %v2761 = vsub.s32 %v2758, %v2760
        %v2762 = vrot.slane %v963, %v2761
        %v2764 = vunpack.c.l.s4 1983009808
        %v2765 = vunpack.c.0.s8 %v2764
        %v2766 = vlaneseq
        %v2767 = vshrl.u32 %v2766, 7
        %v2768 = vsub.s32 %v2765, %v2767
        %v2769 = vrot.slane %v2755, %v2768
        %v2770 = vcombine.high %v2762, 0.0
        %v2772 = vunpack.c.l.s4 1934713408
        %v2773 = vunpack.c.0.s8 %v2772
        %v2774 = vlaneseq
        %v2775 = vshrl.u32 %v2774, 7
        %v2776 = vsub.s32 %v2773, %v2775
        %v2777 = vrot.slane %v2762, %v2776
        %v2779 = vunpack.c.l.s4 1934713408
        %v2780 = vunpack.c.0.s8 %v2779
        %v2781 = vlaneseq
        %v2782 = vshrl.u32 %v2781, 7
        %v2783 = vsub.s32 %v2780, %v2782
        %v2784 = vrot.slane %v2770, %v2783
        %v2785 = vcombine.high %v2769, 0.0
        %v2787 = vunpack.c.l.s4 1934713408
        %v2788 = vunpack.c.0.s8 %v2787
        %v2789 = vlaneseq
        %v2790 = vshrl.u32 %v2789, 7
        %v2791 = vsub.s32 %v2788, %v2790
        %v2792 = vrot.slane %v2769, %v2791
        %v2794 = vunpack.c.l.s4 1934713408
        %v2795 = vunpack.c.0.s8 %v2794
        %v2796 = vlaneseq
        %v2797 = vshrl.u32 %v2796, 7
        %v2798 = vsub.s32 %v2795, %v2797
        %v2799 = vrot.slane %v2785, %v2798
        %v2800 = vcombine.high %v2777, 0.0
        %v2801 = vcombine.high %v2784, 0.0
        %v2802 = vcombine.high %v2792, 0.0
        %v2803 = vcombine.high %v2799, 0.0
        %v2804 = vcombine.high %v964, 0.0
        %v2806 = vunpack.c.l.s4 1983009808
        %v2807 = vunpack.c.0.s8 %v2806
        %v2808 = vlaneseq
        %v2809 = vshrl.u32 %v2808, 7
        %v2810 = vsub.s32 %v2807, %v2809
        %v2811 = vrot.slane %v964, %v2810
        %v2813 = vunpack.c.l.s4 1983009808
        %v2814 = vunpack.c.0.s8 %v2813
        %v2815 = vlaneseq
        %v2816 = vshrl.u32 %v2815, 7
        %v2817 = vsub.s32 %v2814, %v2816
        %v2818 = vrot.slane %v2804, %v2817
        %v2819 = vcombine.high %v2811, 0.0
        %v2821 = vunpack.c.l.s4 1934713408
        %v2822 = vunpack.c.0.s8 %v2821
        %v2823 = vlaneseq
        %v2824 = vshrl.u32 %v2823, 7
        %v2825 = vsub.s32 %v2822, %v2824
        %v2826 = vrot.slane %v2811, %v2825
        %v2828 = vunpack.c.l.s4 1934713408
        %v2829 = vunpack.c.0.s8 %v2828
        %v2830 = vlaneseq
        %v2831 = vshrl.u32 %v2830, 7
        %v2832 = vsub.s32 %v2829, %v2831
        %v2833 = vrot.slane %v2819, %v2832
        %v2834 = vcombine.high %v2818, 0.0
        %v2836 = vunpack.c.l.s4 1934713408
        %v2837 = vunpack.c.0.s8 %v2836
        %v2838 = vlaneseq
        %v2839 = vshrl.u32 %v2838, 7
        %v2840 = vsub.s32 %v2837, %v2839
        %v2841 = vrot.slane %v2818, %v2840
        %v2843 = vunpack.c.l.s4 1934713408
        %v2844 = vunpack.c.0.s8 %v2843
        %v2845 = vlaneseq
        %v2846 = vshrl.u32 %v2845, 7
        %v2847 = vsub.s32 %v2844, %v2846
        %v2848 = vrot.slane %v2834, %v2847
        %v2849 = vcombine.high %v2826, 0.0
        %v2850 = vcombine.high %v2833, 0.0
        %v2851 = vcombine.high %v2841, 0.0
        %v2852 = vcombine.high %v2848, 0.0
        %v2853 = vcombine.high %v965, 0.0
        %v2855 = vunpack.c.l.s4 1983009808
        %v2856 = vunpack.c.0.s8 %v2855
        %v2857 = vlaneseq
        %v2858 = vshrl.u32 %v2857, 7
        %v2859 = vsub.s32 %v2856, %v2858
        %v2860 = vrot.slane %v965, %v2859
        %v2862 = vunpack.c.l.s4 1983009808
        %v2863 = vunpack.c.0.s8 %v2862
        %v2864 = vlaneseq
        %v2865 = vshrl.u32 %v2864, 7
        %v2866 = vsub.s32 %v2863, %v2865
        %v2867 = vrot.slane %v2853, %v2866
        %v2868 = vcombine.high %v2860, 0.0
        %v2870 = vunpack.c.l.s4 1934713408
        %v2871 = vunpack.c.0.s8 %v2870
        %v2872 = vlaneseq
        %v2873 = vshrl.u32 %v2872, 7
        %v2874 = vsub.s32 %v2871, %v2873
        %v2875 = vrot.slane %v2860, %v2874
        %v2877 = vunpack.c.l.s4 1934713408
        %v2878 = vunpack.c.0.s8 %v2877
        %v2879 = vlaneseq
        %v2880 = vshrl.u32 %v2879, 7
        %v2881 = vsub.s32 %v2878, %v2880
        %v2882 = vrot.slane %v2868, %v2881
        %v2883 = vcombine.high %v2867, 0.0
        %v2885 = vunpack.c.l.s4 1934713408
        %v2886 = vunpack.c.0.s8 %v2885
        %v2887 = vlaneseq
        %v2888 = vshrl.u32 %v2887, 7
        %v2889 = vsub.s32 %v2886, %v2888
        %v2890 = vrot.slane %v2867, %v2889
        %v2892 = vunpack.c.l.s4 1934713408
        %v2893 = vunpack.c.0.s8 %v2892
        %v2894 = vlaneseq
        %v2895 = vshrl.u32 %v2894, 7
        %v2896 = vsub.s32 %v2893, %v2895
        %v2897 = vrot.slane %v2883, %v2896
        %v2898 = vcombine.high %v2875, 0.0
        %v2899 = vcombine.high %v2882, 0.0
        %v2900 = vcombine.high %v2890, 0.0
        %v2901 = vcombine.high %v2897, 0.0
        %v2902 = vcombine.high %v966, 0.0
        %v2904 = vunpack.c.l.s4 1983009808
        %v2905 = vunpack.c.0.s8 %v2904
        %v2906 = vlaneseq
        %v2907 = vshrl.u32 %v2906, 7
        %v2908 = vsub.s32 %v2905, %v2907
        %v2909 = vrot.slane %v966, %v2908
        %v2911 = vunpack.c.l.s4 1983009808
        %v2912 = vunpack.c.0.s8 %v2911
        %v2913 = vlaneseq
        %v2914 = vshrl.u32 %v2913, 7
        %v2915 = vsub.s32 %v2912, %v2914
        %v2916 = vrot.slane %v2902, %v2915
        %v2917 = vcombine.high %v2909, 0.0
        %v2919 = vunpack.c.l.s4 1934713408
        %v2920 = vunpack.c.0.s8 %v2919
        %v2921 = vlaneseq
        %v2922 = vshrl.u32 %v2921, 7
        %v2923 = vsub.s32 %v2920, %v2922
        %v2924 = vrot.slane %v2909, %v2923
        %v2926 = vunpack.c.l.s4 1934713408
        %v2927 = vunpack.c.0.s8 %v2926
        %v2928 = vlaneseq
        %v2929 = vshrl.u32 %v2928, 7
        %v2930 = vsub.s32 %v2927, %v2929
        %v2931 = vrot.slane %v2917, %v2930
        %v2932 = vcombine.high %v2916, 0.0
        %v2934 = vunpack.c.l.s4 1934713408
        %v2935 = vunpack.c.0.s8 %v2934
        %v2936 = vlaneseq
        %v2937 = vshrl.u32 %v2936, 7
        %v2938 = vsub.s32 %v2935, %v2937
        %v2939 = vrot.slane %v2916, %v2938
        %v2941 = vunpack.c.l.s4 1934713408
        %v2942 = vunpack.c.0.s8 %v2941
        %v2943 = vlaneseq
        %v2944 = vshrl.u32 %v2943, 7
        %v2945 = vsub.s32 %v2942, %v2944
        %v2946 = vrot.slane %v2932, %v2945
        %v2947 = vcombine.high %v2924, 0.0
        %v2948 = vcombine.high %v2931, 0.0
        %v2949 = vcombine.high %v2939, 0.0
        %v2950 = vcombine.high %v2946, 0.0
        %v2951 = vcombine.high %v967, 0.0
        %v2953 = vunpack.c.l.s4 1983009808
        %v2954 = vunpack.c.0.s8 %v2953
        %v2955 = vlaneseq
        %v2956 = vshrl.u32 %v2955, 7
        %v2957 = vsub.s32 %v2954, %v2956
        %v2958 = vrot.slane %v967, %v2957
        %v2960 = vunpack.c.l.s4 1983009808
        %v2961 = vunpack.c.0.s8 %v2960
        %v2962 = vlaneseq
        %v2963 = vshrl.u32 %v2962, 7
        %v2964 = vsub.s32 %v2961, %v2963
        %v2965 = vrot.slane %v2951, %v2964
        %v2966 = vcombine.high %v2958, 0.0
        %v2968 = vunpack.c.l.s4 1934713408
        %v2969 = vunpack.c.0.s8 %v2968
        %v2970 = vlaneseq
        %v2971 = vshrl.u32 %v2970, 7
        %v2972 = vsub.s32 %v2969, %v2971
        %v2973 = vrot.slane %v2958, %v2972
        %v2975 = vunpack.c.l.s4 1934713408
        %v2976 = vunpack.c.0.s8 %v2975
        %v2977 = vlaneseq
        %v2978 = vshrl.u32 %v2977, 7
        %v2979 = vsub.s32 %v2976, %v2978
        %v2980 = vrot.slane %v2966, %v2979
        %v2981 = vcombine.high %v2965, 0.0
        %v2983 = vunpack.c.l.s4 1934713408
        %v2984 = vunpack.c.0.s8 %v2983
        %v2985 = vlaneseq
        %v2986 = vshrl.u32 %v2985, 7
        %v2987 = vsub.s32 %v2984, %v2986
        %v2988 = vrot.slane %v2965, %v2987
        %v2990 = vunpack.c.l.s4 1934713408
        %v2991 = vunpack.c.0.s8 %v2990
        %v2992 = vlaneseq
        %v2993 = vshrl.u32 %v2992, 7
        %v2994 = vsub.s32 %v2991, %v2993
        %v2995 = vrot.slane %v2981, %v2994
        %v2996 = vcombine.high %v2973, 0.0
        %v2997 = vcombine.high %v2980, 0.0
        %v2998 = vcombine.high %v2988, 0.0
        %v2999 = vcombine.high %v2995, 0.0
        %v3000 = vcombine.high %v968, 0.0
        %v3002 = vunpack.c.l.s4 1983009808
        %v3003 = vunpack.c.0.s8 %v3002
        %v3004 = vlaneseq
        %v3005 = vshrl.u32 %v3004, 7
        %v3006 = vsub.s32 %v3003, %v3005
        %v3007 = vrot.slane %v968, %v3006
        %v3009 = vunpack.c.l.s4 1983009808
        %v3010 = vunpack.c.0.s8 %v3009
        %v3011 = vlaneseq
        %v3012 = vshrl.u32 %v3011, 7
        %v3013 = vsub.s32 %v3010, %v3012
        %v3014 = vrot.slane %v3000, %v3013
        %v3015 = vcombine.high %v3007, 0.0
        %v3017 = vunpack.c.l.s4 1934713408
        %v3018 = vunpack.c.0.s8 %v3017
        %v3019 = vlaneseq
        %v3020 = vshrl.u32 %v3019, 7
        %v3021 = vsub.s32 %v3018, %v3020
        %v3022 = vrot.slane %v3007, %v3021
        %v3024 = vunpack.c.l.s4 1934713408
        %v3025 = vunpack.c.0.s8 %v3024
        %v3026 = vlaneseq
        %v3027 = vshrl.u32 %v3026, 7
        %v3028 = vsub.s32 %v3025, %v3027
        %v3029 = vrot.slane %v3015, %v3028
        %v3030 = vcombine.high %v3014, 0.0
        %v3032 = vunpack.c.l.s4 1934713408
        %v3033 = vunpack.c.0.s8 %v3032
        %v3034 = vlaneseq
        %v3035 = vshrl.u32 %v3034, 7
        %v3036 = vsub.s32 %v3033, %v3035
        %v3037 = vrot.slane %v3014, %v3036
        %v3039 = vunpack.c.l.s4 1934713408
        %v3040 = vunpack.c.0.s8 %v3039
        %v3041 = vlaneseq
        %v3042 = vshrl.u32 %v3041, 7
        %v3043 = vsub.s32 %v3040, %v3042
        %v3044 = vrot.slane %v3030, %v3043
        %v3045 = vcombine.high %v3022, 0.0
        %v3046 = vcombine.high %v3029, 0.0
        %v3047 = vcombine.high %v3037, 0.0
        %v3048 = vcombine.high %v3044, 0.0
        %v3049 = vcombine.high %v969, 0.0
        %v3051 = vunpack.c.l.s4 1983009808
        %v3052 = vunpack.c.0.s8 %v3051
        %v3053 = vlaneseq
        %v3054 = vshrl.u32 %v3053, 7
        %v3055 = vsub.s32 %v3052, %v3054
        %v3056 = vrot.slane %v969, %v3055
        %v3058 = vunpack.c.l.s4 1983009808
        %v3059 = vunpack.c.0.s8 %v3058
        %v3060 = vlaneseq
        %v3061 = vshrl.u32 %v3060, 7
        %v3062 = vsub.s32 %v3059, %v3061
        %v3063 = vrot.slane %v3049, %v3062
        %v3064 = vcombine.high %v3056, 0.0
        %v3066 = vunpack.c.l.s4 1934713408
        %v3067 = vunpack.c.0.s8 %v3066
        %v3068 = vlaneseq
        %v3069 = vshrl.u32 %v3068, 7
        %v3070 = vsub.s32 %v3067, %v3069
        %v3071 = vrot.slane %v3056, %v3070
        %v3073 = vunpack.c.l.s4 1934713408
        %v3074 = vunpack.c.0.s8 %v3073
        %v3075 = vlaneseq
        %v3076 = vshrl.u32 %v3075, 7
        %v3077 = vsub.s32 %v3074, %v3076
        %v3078 = vrot.slane %v3064, %v3077
        %v3079 = vcombine.high %v3063, 0.0
        %v3081 = vunpack.c.l.s4 1934713408
        %v3082 = vunpack.c.0.s8 %v3081
        %v3083 = vlaneseq
        %v3084 = vshrl.u32 %v3083, 7
        %v3085 = vsub.s32 %v3082, %v3084
        %v3086 = vrot.slane %v3063, %v3085
        %v3088 = vunpack.c.l.s4 1934713408
        %v3089 = vunpack.c.0.s8 %v3088
        %v3090 = vlaneseq
        %v3091 = vshrl.u32 %v3090, 7
        %v3092 = vsub.s32 %v3089, %v3091
        %v3093 = vrot.slane %v3079, %v3092
        %v3094 = vcombine.high %v3071, 0.0
        %v3095 = vcombine.high %v3078, 0.0
        %v3096 = vcombine.high %v3086, 0.0
        %v3097 = vcombine.high %v3093, 0.0
        %v3098 = vcombine.high %v970, 0.0
        %v3100 = vunpack.c.l.s4 1983009808
        %v3101 = vunpack.c.0.s8 %v3100
        %v3102 = vlaneseq
        %v3103 = vshrl.u32 %v3102, 7
        %v3104 = vsub.s32 %v3101, %v3103
        %v3105 = vrot.slane %v970, %v3104
        %v3107 = vunpack.c.l.s4 1983009808
        %v3108 = vunpack.c.0.s8 %v3107
        %v3109 = vlaneseq
        %v3110 = vshrl.u32 %v3109, 7
        %v3111 = vsub.s32 %v3108, %v3110
        %v3112 = vrot.slane %v3098, %v3111
        %v3113 = vcombine.high %v3105, 0.0
        %v3115 = vunpack.c.l.s4 1934713408
        %v3116 = vunpack.c.0.s8 %v3115
        %v3117 = vlaneseq
        %v3118 = vshrl.u32 %v3117, 7
        %v3119 = vsub.s32 %v3116, %v3118
        %v3120 = vrot.slane %v3105, %v3119
        %v3122 = vunpack.c.l.s4 1934713408
        %v3123 = vunpack.c.0.s8 %v3122
        %v3124 = vlaneseq
        %v3125 = vshrl.u32 %v3124, 7
        %v3126 = vsub.s32 %v3123, %v3125
        %v3127 = vrot.slane %v3113, %v3126
        %v3128 = vcombine.high %v3112, 0.0
        %v3130 = vunpack.c.l.s4 1934713408
        %v3131 = vunpack.c.0.s8 %v3130
        %v3132 = vlaneseq
        %v3133 = vshrl.u32 %v3132, 7
        %v3134 = vsub.s32 %v3131, %v3133
        %v3135 = vrot.slane %v3112, %v3134
        %v3137 = vunpack.c.l.s4 1934713408
        %v3138 = vunpack.c.0.s8 %v3137
        %v3139 = vlaneseq
        %v3140 = vshrl.u32 %v3139, 7
        %v3141 = vsub.s32 %v3138, %v3140
        %v3142 = vrot.slane %v3128, %v3141
        %v3143 = vcombine.high %v3120, 0.0
        %v3144 = vcombine.high %v3127, 0.0
        %v3145 = vcombine.high %v3135, 0.0
        %v3146 = vcombine.high %v3142, 0.0
        %v3147 = vcombine.high %v971, 0.0
        %v3149 = vunpack.c.l.s4 1983009808
        %v3150 = vunpack.c.0.s8 %v3149
        %v3151 = vlaneseq
        %v3152 = vshrl.u32 %v3151, 7
        %v3153 = vsub.s32 %v3150, %v3152
        %v3154 = vrot.slane %v971, %v3153
        %v3156 = vunpack.c.l.s4 1983009808
        %v3157 = vunpack.c.0.s8 %v3156
        %v3158 = vlaneseq
        %v3159 = vshrl.u32 %v3158, 7
        %v3160 = vsub.s32 %v3157, %v3159
        %v3161 = vrot.slane %v3147, %v3160
        %v3162 = vcombine.high %v3154, 0.0
        %v3164 = vunpack.c.l.s4 1934713408
        %v3165 = vunpack.c.0.s8 %v3164
        %v3166 = vlaneseq
        %v3167 = vshrl.u32 %v3166, 7
        %v3168 = vsub.s32 %v3165, %v3167
        %v3169 = vrot.slane %v3154, %v3168
        %v3171 = vunpack.c.l.s4 1934713408
        %v3172 = vunpack.c.0.s8 %v3171
        %v3173 = vlaneseq
        %v3174 = vshrl.u32 %v3173, 7
        %v3175 = vsub.s32 %v3172, %v3174
        %v3176 = vrot.slane %v3162, %v3175
        %v3177 = vcombine.high %v3161, 0.0
        %v3179 = vunpack.c.l.s4 1934713408
        %v3180 = vunpack.c.0.s8 %v3179
        %v3181 = vlaneseq
        %v3182 = vshrl.u32 %v3181, 7
        %v3183 = vsub.s32 %v3180, %v3182
        %v3184 = vrot.slane %v3161, %v3183
        %v3186 = vunpack.c.l.s4 1934713408
        %v3187 = vunpack.c.0.s8 %v3186
        %v3188 = vlaneseq
        %v3189 = vshrl.u32 %v3188, 7
        %v3190 = vsub.s32 %v3187, %v3189
        %v3191 = vrot.slane %v3177, %v3190
        %v3192 = vcombine.high %v3169, 0.0
        %v3193 = vcombine.high %v3176, 0.0
        %v3194 = vcombine.high %v3184, 0.0
        %v3195 = vcombine.high %v3191, 0.0
        %v3196 = vcombine.high %v972, 0.0
        %v3198 = vunpack.c.l.s4 1983009808
        %v3199 = vunpack.c.0.s8 %v3198
        %v3200 = vlaneseq
        %v3201 = vshrl.u32 %v3200, 7
        %v3202 = vsub.s32 %v3199, %v3201
        %v3203 = vrot.slane %v972, %v3202
        %v3205 = vunpack.c.l.s4 1983009808
        %v3206 = vunpack.c.0.s8 %v3205
        %v3207 = vlaneseq
        %v3208 = vshrl.u32 %v3207, 7
        %v3209 = vsub.s32 %v3206, %v3208
        %v3210 = vrot.slane %v3196, %v3209
        %v3211 = vcombine.high %v3203, 0.0
        %v3213 = vunpack.c.l.s4 1934713408
        %v3214 = vunpack.c.0.s8 %v3213
        %v3215 = vlaneseq
        %v3216 = vshrl.u32 %v3215, 7
        %v3217 = vsub.s32 %v3214, %v3216
        %v3218 = vrot.slane %v3203, %v3217
        %v3220 = vunpack.c.l.s4 1934713408
        %v3221 = vunpack.c.0.s8 %v3220
        %v3222 = vlaneseq
        %v3223 = vshrl.u32 %v3222, 7
        %v3224 = vsub.s32 %v3221, %v3223
        %v3225 = vrot.slane %v3211, %v3224
        %v3226 = vcombine.high %v3210, 0.0
        %v3228 = vunpack.c.l.s4 1934713408
        %v3229 = vunpack.c.0.s8 %v3228
        %v3230 = vlaneseq
        %v3231 = vshrl.u32 %v3230, 7
        %v3232 = vsub.s32 %v3229, %v3231
        %v3233 = vrot.slane %v3210, %v3232
        %v3235 = vunpack.c.l.s4 1934713408
        %v3236 = vunpack.c.0.s8 %v3235
        %v3237 = vlaneseq
        %v3238 = vshrl.u32 %v3237, 7
        %v3239 = vsub.s32 %v3236, %v3238
        %v3240 = vrot.slane %v3226, %v3239
        %v3241 = vcombine.high %v3218, 0.0
        %v3242 = vcombine.high %v3225, 0.0
        %v3243 = vcombine.high %v3233, 0.0
        %v3244 = vcombine.high %v3240, 0.0
        %v3245 = vcombine.high %v973, 0.0
        %v3247 = vunpack.c.l.s4 1983009808
        %v3248 = vunpack.c.0.s8 %v3247
        %v3249 = vlaneseq
        %v3250 = vshrl.u32 %v3249, 7
        %v3251 = vsub.s32 %v3248, %v3250
        %v3252 = vrot.slane %v973, %v3251
        %v3254 = vunpack.c.l.s4 1983009808
        %v3255 = vunpack.c.0.s8 %v3254
        %v3256 = vlaneseq
        %v3257 = vshrl.u32 %v3256, 7
        %v3258 = vsub.s32 %v3255, %v3257
        %v3259 = vrot.slane %v3245, %v3258
        %v3260 = vcombine.high %v3252, 0.0
        %v3262 = vunpack.c.l.s4 1934713408
        %v3263 = vunpack.c.0.s8 %v3262
        %v3264 = vlaneseq
        %v3265 = vshrl.u32 %v3264, 7
        %v3266 = vsub.s32 %v3263, %v3265
        %v3267 = vrot.slane %v3252, %v3266
        %v3269 = vunpack.c.l.s4 1934713408
        %v3270 = vunpack.c.0.s8 %v3269
        %v3271 = vlaneseq
        %v3272 = vshrl.u32 %v3271, 7
        %v3273 = vsub.s32 %v3270, %v3272
        %v3274 = vrot.slane %v3260, %v3273
        %v3275 = vcombine.high %v3259, 0.0
        %v3277 = vunpack.c.l.s4 1934713408
        %v3278 = vunpack.c.0.s8 %v3277
        %v3279 = vlaneseq
        %v3280 = vshrl.u32 %v3279, 7
        %v3281 = vsub.s32 %v3278, %v3280
        %v3282 = vrot.slane %v3259, %v3281
        %v3284 = vunpack.c.l.s4 1934713408
        %v3285 = vunpack.c.0.s8 %v3284
        %v3286 = vlaneseq
        %v3287 = vshrl.u32 %v3286, 7
        %v3288 = vsub.s32 %v3285, %v3287
        %v3289 = vrot.slane %v3275, %v3288
        %v3290 = vcombine.high %v3267, 0.0
        %v3291 = vcombine.high %v3274, 0.0
        %v3292 = vcombine.high %v3282, 0.0
        %v3293 = vcombine.high %v3289, 0.0
        %v3294 = vcombine.high %v974, 0.0
        %v3296 = vunpack.c.l.s4 1983009808
        %v3297 = vunpack.c.0.s8 %v3296
        %v3298 = vlaneseq
        %v3299 = vshrl.u32 %v3298, 7
        %v3300 = vsub.s32 %v3297, %v3299
        %v3301 = vrot.slane %v974, %v3300
        %v3303 = vunpack.c.l.s4 1983009808
        %v3304 = vunpack.c.0.s8 %v3303
        %v3305 = vlaneseq
        %v3306 = vshrl.u32 %v3305, 7
        %v3307 = vsub.s32 %v3304, %v3306
        %v3308 = vrot.slane %v3294, %v3307
        %v3309 = vcombine.high %v3301, 0.0
        %v3311 = vunpack.c.l.s4 1934713408
        %v3312 = vunpack.c.0.s8 %v3311
        %v3313 = vlaneseq
        %v3314 = vshrl.u32 %v3313, 7
        %v3315 = vsub.s32 %v3312, %v3314
        %v3316 = vrot.slane %v3301, %v3315
        %v3318 = vunpack.c.l.s4 1934713408
        %v3319 = vunpack.c.0.s8 %v3318
        %v3320 = vlaneseq
        %v3321 = vshrl.u32 %v3320, 7
        %v3322 = vsub.s32 %v3319, %v3321
        %v3323 = vrot.slane %v3309, %v3322
        %v3324 = vcombine.high %v3308, 0.0
        %v3326 = vunpack.c.l.s4 1934713408
        %v3327 = vunpack.c.0.s8 %v3326
        %v3328 = vlaneseq
        %v3329 = vshrl.u32 %v3328, 7
        %v3330 = vsub.s32 %v3327, %v3329
        %v3331 = vrot.slane %v3308, %v3330
        %v3333 = vunpack.c.l.s4 1934713408
        %v3334 = vunpack.c.0.s8 %v3333
        %v3335 = vlaneseq
        %v3336 = vshrl.u32 %v3335, 7
        %v3337 = vsub.s32 %v3334, %v3336
        %v3338 = vrot.slane %v3324, %v3337
        %v3339 = vcombine.high %v3316, 0.0
        %v3340 = vcombine.high %v3323, 0.0
        %v3341 = vcombine.high %v3331, 0.0
        %v3342 = vcombine.high %v3338, 0.0
        %v3343 = vcombine.high %v975, 0.0
        %v3345 = vunpack.c.l.s4 1983009808
        %v3346 = vunpack.c.0.s8 %v3345
        %v3347 = vlaneseq
        %v3348 = vshrl.u32 %v3347, 7
        %v3349 = vsub.s32 %v3346, %v3348
        %v3350 = vrot.slane %v975, %v3349
        %v3352 = vunpack.c.l.s4 1983009808
        %v3353 = vunpack.c.0.s8 %v3352
        %v3354 = vlaneseq
        %v3355 = vshrl.u32 %v3354, 7
        %v3356 = vsub.s32 %v3353, %v3355
        %v3357 = vrot.slane %v3343, %v3356
        %v3358 = vcombine.high %v3350, 0.0
        %v3360 = vunpack.c.l.s4 1934713408
        %v3361 = vunpack.c.0.s8 %v3360
        %v3362 = vlaneseq
        %v3363 = vshrl.u32 %v3362, 7
        %v3364 = vsub.s32 %v3361, %v3363
        %v3365 = vrot.slane %v3350, %v3364
        %v3367 = vunpack.c.l.s4 1934713408
        %v3368 = vunpack.c.0.s8 %v3367
        %v3369 = vlaneseq
        %v3370 = vshrl.u32 %v3369, 7
        %v3371 = vsub.s32 %v3368, %v3370
        %v3372 = vrot.slane %v3358, %v3371
        %v3373 = vcombine.high %v3357, 0.0
        %v3375 = vunpack.c.l.s4 1934713408
        %v3376 = vunpack.c.0.s8 %v3375
        %v3377 = vlaneseq
        %v3378 = vshrl.u32 %v3377, 7
        %v3379 = vsub.s32 %v3376, %v3378
        %v3380 = vrot.slane %v3357, %v3379
        %v3382 = vunpack.c.l.s4 1934713408
        %v3383 = vunpack.c.0.s8 %v3382
        %v3384 = vlaneseq
        %v3385 = vshrl.u32 %v3384, 7
        %v3386 = vsub.s32 %v3383, %v3385
        %v3387 = vrot.slane %v3373, %v3386
        %v3388 = vcombine.high %v3365, 0.0
        %v3389 = vcombine.high %v3372, 0.0
        %v3390 = vcombine.high %v3380, 0.0
        %v3391 = vcombine.high %v3387, 0.0
        %v3392 = vcombine.high %v976, 0.0
        %v3394 = vunpack.c.l.s4 1983009808
        %v3395 = vunpack.c.0.s8 %v3394
        %v3396 = vlaneseq
        %v3397 = vshrl.u32 %v3396, 7
        %v3398 = vsub.s32 %v3395, %v3397
        %v3399 = vrot.slane %v976, %v3398
        %v3401 = vunpack.c.l.s4 1983009808
        %v3402 = vunpack.c.0.s8 %v3401
        %v3403 = vlaneseq
        %v3404 = vshrl.u32 %v3403, 7
        %v3405 = vsub.s32 %v3402, %v3404
        %v3406 = vrot.slane %v3392, %v3405
        %v3407 = vcombine.high %v3399, 0.0
        %v3409 = vunpack.c.l.s4 1934713408
        %v3410 = vunpack.c.0.s8 %v3409
        %v3411 = vlaneseq
        %v3412 = vshrl.u32 %v3411, 7
        %v3413 = vsub.s32 %v3410, %v3412
        %v3414 = vrot.slane %v3399, %v3413
        %v3416 = vunpack.c.l.s4 1934713408
        %v3417 = vunpack.c.0.s8 %v3416
        %v3418 = vlaneseq
        %v3419 = vshrl.u32 %v3418, 7
        %v3420 = vsub.s32 %v3417, %v3419
        %v3421 = vrot.slane %v3407, %v3420
        %v3422 = vcombine.high %v3406, 0.0
        %v3424 = vunpack.c.l.s4 1934713408
        %v3425 = vunpack.c.0.s8 %v3424
        %v3426 = vlaneseq
        %v3427 = vshrl.u32 %v3426, 7
        %v3428 = vsub.s32 %v3425, %v3427
        %v3429 = vrot.slane %v3406, %v3428
        %v3431 = vunpack.c.l.s4 1934713408
        %v3432 = vunpack.c.0.s8 %v3431
        %v3433 = vlaneseq
        %v3434 = vshrl.u32 %v3433, 7
        %v3435 = vsub.s32 %v3432, %v3434
        %v3436 = vrot.slane %v3422, %v3435
        %v3437 = vcombine.high %v3414, 0.0
        %v3438 = vcombine.high %v3421, 0.0
        %v3439 = vcombine.high %v3429, 0.0
        %v3440 = vcombine.high %v3436, 0.0
        %v3441 = vcombine.high %v977, 0.0
        %v3443 = vunpack.c.l.s4 1983009808
        %v3444 = vunpack.c.0.s8 %v3443
        %v3445 = vlaneseq
        %v3446 = vshrl.u32 %v3445, 7
        %v3447 = vsub.s32 %v3444, %v3446
        %v3448 = vrot.slane %v977, %v3447
        %v3450 = vunpack.c.l.s4 1983009808
        %v3451 = vunpack.c.0.s8 %v3450
        %v3452 = vlaneseq
        %v3453 = vshrl.u32 %v3452, 7
        %v3454 = vsub.s32 %v3451, %v3453
        %v3455 = vrot.slane %v3441, %v3454
        %v3456 = vcombine.high %v3448, 0.0
        %v3458 = vunpack.c.l.s4 1934713408
        %v3459 = vunpack.c.0.s8 %v3458
        %v3460 = vlaneseq
        %v3461 = vshrl.u32 %v3460, 7
        %v3462 = vsub.s32 %v3459, %v3461
        %v3463 = vrot.slane %v3448, %v3462
        %v3465 = vunpack.c.l.s4 1934713408
        %v3466 = vunpack.c.0.s8 %v3465
        %v3467 = vlaneseq
        %v3468 = vshrl.u32 %v3467, 7
        %v3469 = vsub.s32 %v3466, %v3468
        %v3470 = vrot.slane %v3456, %v3469
        %v3471 = vcombine.high %v3455, 0.0
        %v3473 = vunpack.c.l.s4 1934713408
        %v3474 = vunpack.c.0.s8 %v3473
        %v3475 = vlaneseq
        %v3476 = vshrl.u32 %v3475, 7
        %v3477 = vsub.s32 %v3474, %v3476
        %v3478 = vrot.slane %v3455, %v3477
        %v3480 = vunpack.c.l.s4 1934713408
        %v3481 = vunpack.c.0.s8 %v3480
        %v3482 = vlaneseq
        %v3483 = vshrl.u32 %v3482, 7
        %v3484 = vsub.s32 %v3481, %v3483
        %v3485 = vrot.slane %v3471, %v3484
        %v3486 = vcombine.high %v3463, 0.0
        %v3487 = vcombine.high %v3470, 0.0
        %v3488 = vcombine.high %v3478, 0.0
        %v3489 = vcombine.high %v3485, 0.0
        %v3490 = vcombine.high %v978, 0.0
        %v3492 = vunpack.c.l.s4 1983009808
        %v3493 = vunpack.c.0.s8 %v3492
        %v3494 = vlaneseq
        %v3495 = vshrl.u32 %v3494, 7
        %v3496 = vsub.s32 %v3493, %v3495
        %v3497 = vrot.slane %v978, %v3496
        %v3499 = vunpack.c.l.s4 1983009808
        %v3500 = vunpack.c.0.s8 %v3499
        %v3501 = vlaneseq
        %v3502 = vshrl.u32 %v3501, 7
        %v3503 = vsub.s32 %v3500, %v3502
        %v3504 = vrot.slane %v3490, %v3503
        %v3505 = vcombine.high %v3497, 0.0
        %v3507 = vunpack.c.l.s4 1934713408
        %v3508 = vunpack.c.0.s8 %v3507
        %v3509 = vlaneseq
        %v3510 = vshrl.u32 %v3509, 7
        %v3511 = vsub.s32 %v3508, %v3510
        %v3512 = vrot.slane %v3497, %v3511
        %v3514 = vunpack.c.l.s4 1934713408
        %v3515 = vunpack.c.0.s8 %v3514
        %v3516 = vlaneseq
        %v3517 = vshrl.u32 %v3516, 7
        %v3518 = vsub.s32 %v3515, %v3517
        %v3519 = vrot.slane %v3505, %v3518
        %v3520 = vcombine.high %v3504, 0.0
        %v3522 = vunpack.c.l.s4 1934713408
        %v3523 = vunpack.c.0.s8 %v3522
        %v3524 = vlaneseq
        %v3525 = vshrl.u32 %v3524, 7
        %v3526 = vsub.s32 %v3523, %v3525
        %v3527 = vrot.slane %v3504, %v3526
        %v3529 = vunpack.c.l.s4 1934713408
        %v3530 = vunpack.c.0.s8 %v3529
        %v3531 = vlaneseq
        %v3532 = vshrl.u32 %v3531, 7
        %v3533 = vsub.s32 %v3530, %v3532
        %v3534 = vrot.slane %v3520, %v3533
        %v3535 = vcombine.high %v3512, 0.0
        %v3536 = vcombine.high %v3519, 0.0
        %v3537 = vcombine.high %v3527, 0.0
        %v3538 = vcombine.high %v3534, 0.0
        %v3539 = vcombine.high %v979, 0.0
        %v3541 = vunpack.c.l.s4 1983009808
        %v3542 = vunpack.c.0.s8 %v3541
        %v3543 = vlaneseq
        %v3544 = vshrl.u32 %v3543, 7
        %v3545 = vsub.s32 %v3542, %v3544
        %v3546 = vrot.slane %v979, %v3545
        %v3548 = vunpack.c.l.s4 1983009808
        %v3549 = vunpack.c.0.s8 %v3548
        %v3550 = vlaneseq
        %v3551 = vshrl.u32 %v3550, 7
        %v3552 = vsub.s32 %v3549, %v3551
        %v3553 = vrot.slane %v3539, %v3552
        %v3554 = vcombine.high %v3546, 0.0
        %v3556 = vunpack.c.l.s4 1934713408
        %v3557 = vunpack.c.0.s8 %v3556
        %v3558 = vlaneseq
        %v3559 = vshrl.u32 %v3558, 7
        %v3560 = vsub.s32 %v3557, %v3559
        %v3561 = vrot.slane %v3546, %v3560
        %v3563 = vunpack.c.l.s4 1934713408
        %v3564 = vunpack.c.0.s8 %v3563
        %v3565 = vlaneseq
        %v3566 = vshrl.u32 %v3565, 7
        %v3567 = vsub.s32 %v3564, %v3566
        %v3568 = vrot.slane %v3554, %v3567
        %v3569 = vcombine.high %v3553, 0.0
        %v3571 = vunpack.c.l.s4 1934713408
        %v3572 = vunpack.c.0.s8 %v3571
        %v3573 = vlaneseq
        %v3574 = vshrl.u32 %v3573, 7
        %v3575 = vsub.s32 %v3572, %v3574
        %v3576 = vrot.slane %v3553, %v3575
        %v3578 = vunpack.c.l.s4 1934713408
        %v3579 = vunpack.c.0.s8 %v3578
        %v3580 = vlaneseq
        %v3581 = vshrl.u32 %v3580, 7
        %v3582 = vsub.s32 %v3579, %v3581
        %v3583 = vrot.slane %v3569, %v3582
        %v3584 = vcombine.high %v3561, 0.0
        %v3585 = vcombine.high %v3568, 0.0
        %v3586 = vcombine.high %v3576, 0.0
        %v3587 = vcombine.high %v3583, 0.0
        %v3588 = vcombine.high %v980, 0.0
        %v3590 = vunpack.c.l.s4 1983009808
        %v3591 = vunpack.c.0.s8 %v3590
        %v3592 = vlaneseq
        %v3593 = vshrl.u32 %v3592, 7
        %v3594 = vsub.s32 %v3591, %v3593
        %v3595 = vrot.slane %v980, %v3594
        %v3597 = vunpack.c.l.s4 1983009808
        %v3598 = vunpack.c.0.s8 %v3597
        %v3599 = vlaneseq
        %v3600 = vshrl.u32 %v3599, 7
        %v3601 = vsub.s32 %v3598, %v3600
        %v3602 = vrot.slane %v3588, %v3601
        %v3603 = vcombine.high %v3595, 0.0
        %v3605 = vunpack.c.l.s4 1934713408
        %v3606 = vunpack.c.0.s8 %v3605
        %v3607 = vlaneseq
        %v3608 = vshrl.u32 %v3607, 7
        %v3609 = vsub.s32 %v3606, %v3608
        %v3610 = vrot.slane %v3595, %v3609
        %v3612 = vunpack.c.l.s4 1934713408
        %v3613 = vunpack.c.0.s8 %v3612
        %v3614 = vlaneseq
        %v3615 = vshrl.u32 %v3614, 7
        %v3616 = vsub.s32 %v3613, %v3615
        %v3617 = vrot.slane %v3603, %v3616
        %v3618 = vcombine.high %v3602, 0.0
        %v3620 = vunpack.c.l.s4 1934713408
        %v3621 = vunpack.c.0.s8 %v3620
        %v3622 = vlaneseq
        %v3623 = vshrl.u32 %v3622, 7
        %v3624 = vsub.s32 %v3621, %v3623
        %v3625 = vrot.slane %v3602, %v3624
        %v3627 = vunpack.c.l.s4 1934713408
        %v3628 = vunpack.c.0.s8 %v3627
        %v3629 = vlaneseq
        %v3630 = vshrl.u32 %v3629, 7
        %v3631 = vsub.s32 %v3628, %v3630
        %v3632 = vrot.slane %v3618, %v3631
        %v3633 = vcombine.high %v3610, 0.0
        %v3634 = vcombine.high %v3617, 0.0
        %v3635 = vcombine.high %v3625, 0.0
        %v3636 = vcombine.high %v3632, 0.0
        %v3637 = vcombine.high %v981, 0.0
        %v3639 = vunpack.c.l.s4 1983009808
        %v3640 = vunpack.c.0.s8 %v3639
        %v3641 = vlaneseq
        %v3642 = vshrl.u32 %v3641, 7
        %v3643 = vsub.s32 %v3640, %v3642
        %v3644 = vrot.slane %v981, %v3643
        %v3646 = vunpack.c.l.s4 1983009808
        %v3647 = vunpack.c.0.s8 %v3646
        %v3648 = vlaneseq
        %v3649 = vshrl.u32 %v3648, 7
        %v3650 = vsub.s32 %v3647, %v3649
        %v3651 = vrot.slane %v3637, %v3650
        %v3652 = vcombine.high %v3644, 0.0
        %v3654 = vunpack.c.l.s4 1934713408
        %v3655 = vunpack.c.0.s8 %v3654
        %v3656 = vlaneseq
        %v3657 = vshrl.u32 %v3656, 7
        %v3658 = vsub.s32 %v3655, %v3657
        %v3659 = vrot.slane %v3644, %v3658
        %v3661 = vunpack.c.l.s4 1934713408
        %v3662 = vunpack.c.0.s8 %v3661
        %v3663 = vlaneseq
        %v3664 = vshrl.u32 %v3663, 7
        %v3665 = vsub.s32 %v3662, %v3664
        %v3666 = vrot.slane %v3652, %v3665
        %v3667 = vcombine.high %v3651, 0.0
        %v3669 = vunpack.c.l.s4 1934713408
        %v3670 = vunpack.c.0.s8 %v3669
        %v3671 = vlaneseq
        %v3672 = vshrl.u32 %v3671, 7
        %v3673 = vsub.s32 %v3670, %v3672
        %v3674 = vrot.slane %v3651, %v3673
        %v3676 = vunpack.c.l.s4 1934713408
        %v3677 = vunpack.c.0.s8 %v3676
        %v3678 = vlaneseq
        %v3679 = vshrl.u32 %v3678, 7
        %v3680 = vsub.s32 %v3677, %v3679
        %v3681 = vrot.slane %v3667, %v3680
        %v3682 = vcombine.high %v3659, 0.0
        %v3683 = vcombine.high %v3666, 0.0
        %v3684 = vcombine.high %v3674, 0.0
        %v3685 = vcombine.high %v3681, 0.0
        %v3686 = vcombine.high %v982, 0.0
        %v3688 = vunpack.c.l.s4 1983009808
        %v3689 = vunpack.c.0.s8 %v3688
        %v3690 = vlaneseq
        %v3691 = vshrl.u32 %v3690, 7
        %v3692 = vsub.s32 %v3689, %v3691
        %v3693 = vrot.slane %v982, %v3692
        %v3695 = vunpack.c.l.s4 1983009808
        %v3696 = vunpack.c.0.s8 %v3695
        %v3697 = vlaneseq
        %v3698 = vshrl.u32 %v3697, 7
        %v3699 = vsub.s32 %v3696, %v3698
        %v3700 = vrot.slane %v3686, %v3699
        %v3701 = vcombine.high %v3693, 0.0
        %v3703 = vunpack.c.l.s4 1934713408
        %v3704 = vunpack.c.0.s8 %v3703
        %v3705 = vlaneseq
        %v3706 = vshrl.u32 %v3705, 7
        %v3707 = vsub.s32 %v3704, %v3706
        %v3708 = vrot.slane %v3693, %v3707
        %v3710 = vunpack.c.l.s4 1934713408
        %v3711 = vunpack.c.0.s8 %v3710
        %v3712 = vlaneseq
        %v3713 = vshrl.u32 %v3712, 7
        %v3714 = vsub.s32 %v3711, %v3713
        %v3715 = vrot.slane %v3701, %v3714
        %v3716 = vcombine.high %v3700, 0.0
        %v3718 = vunpack.c.l.s4 1934713408
        %v3719 = vunpack.c.0.s8 %v3718
        %v3720 = vlaneseq
        %v3721 = vshrl.u32 %v3720, 7
        %v3722 = vsub.s32 %v3719, %v3721
        %v3723 = vrot.slane %v3700, %v3722
        %v3725 = vunpack.c.l.s4 1934713408
        %v3726 = vunpack.c.0.s8 %v3725
        %v3727 = vlaneseq
        %v3728 = vshrl.u32 %v3727, 7
        %v3729 = vsub.s32 %v3726, %v3728
        %v3730 = vrot.slane %v3716, %v3729
        %v3731 = vcombine.high %v3708, 0.0
        %v3732 = vcombine.high %v3715, 0.0
        %v3733 = vcombine.high %v3723, 0.0
        %v3734 = vcombine.high %v3730, 0.0
        %v3735 = vcombine.high %v983, 0.0
        %v3737 = vunpack.c.l.s4 1983009808
        %v3738 = vunpack.c.0.s8 %v3737
        %v3739 = vlaneseq
        %v3740 = vshrl.u32 %v3739, 7
        %v3741 = vsub.s32 %v3738, %v3740
        %v3742 = vrot.slane %v983, %v3741
        %v3744 = vunpack.c.l.s4 1983009808
        %v3745 = vunpack.c.0.s8 %v3744
        %v3746 = vlaneseq
        %v3747 = vshrl.u32 %v3746, 7
        %v3748 = vsub.s32 %v3745, %v3747
        %v3749 = vrot.slane %v3735, %v3748
        %v3750 = vcombine.high %v3742, 0.0
        %v3752 = vunpack.c.l.s4 1934713408
        %v3753 = vunpack.c.0.s8 %v3752
        %v3754 = vlaneseq
        %v3755 = vshrl.u32 %v3754, 7
        %v3756 = vsub.s32 %v3753, %v3755
        %v3757 = vrot.slane %v3742, %v3756
        %v3759 = vunpack.c.l.s4 1934713408
        %v3760 = vunpack.c.0.s8 %v3759
        %v3761 = vlaneseq
        %v3762 = vshrl.u32 %v3761, 7
        %v3763 = vsub.s32 %v3760, %v3762
        %v3764 = vrot.slane %v3750, %v3763
        %v3765 = vcombine.high %v3749, 0.0
        %v3767 = vunpack.c.l.s4 1934713408
        %v3768 = vunpack.c.0.s8 %v3767
        %v3769 = vlaneseq
        %v3770 = vshrl.u32 %v3769, 7
        %v3771 = vsub.s32 %v3768, %v3770
        %v3772 = vrot.slane %v3749, %v3771
        %v3774 = vunpack.c.l.s4 1934713408
        %v3775 = vunpack.c.0.s8 %v3774
        %v3776 = vlaneseq
        %v3777 = vshrl.u32 %v3776, 7
        %v3778 = vsub.s32 %v3775, %v3777
        %v3779 = vrot.slane %v3765, %v3778
        %v3780 = vcombine.high %v3757, 0.0
        %v3781 = vcombine.high %v3764, 0.0
        %v3782 = vcombine.high %v3772, 0.0
        %v3783 = vcombine.high %v3779, 0.0
        %v3784 = vcombine.high %v984, 0.0
        %v3786 = vunpack.c.l.s4 1983009808
        %v3787 = vunpack.c.0.s8 %v3786
        %v3788 = vlaneseq
        %v3789 = vshrl.u32 %v3788, 7
        %v3790 = vsub.s32 %v3787, %v3789
        %v3791 = vrot.slane %v984, %v3790
        %v3793 = vunpack.c.l.s4 1983009808
        %v3794 = vunpack.c.0.s8 %v3793
        %v3795 = vlaneseq
        %v3796 = vshrl.u32 %v3795, 7
        %v3797 = vsub.s32 %v3794, %v3796
        %v3798 = vrot.slane %v3784, %v3797
        %v3799 = vcombine.high %v3791, 0.0
        %v3801 = vunpack.c.l.s4 1934713408
        %v3802 = vunpack.c.0.s8 %v3801
        %v3803 = vlaneseq
        %v3804 = vshrl.u32 %v3803, 7
        %v3805 = vsub.s32 %v3802, %v3804
        %v3806 = vrot.slane %v3791, %v3805
        %v3808 = vunpack.c.l.s4 1934713408
        %v3809 = vunpack.c.0.s8 %v3808
        %v3810 = vlaneseq
        %v3811 = vshrl.u32 %v3810, 7
        %v3812 = vsub.s32 %v3809, %v3811
        %v3813 = vrot.slane %v3799, %v3812
        %v3814 = vcombine.high %v3798, 0.0
        %v3816 = vunpack.c.l.s4 1934713408
        %v3817 = vunpack.c.0.s8 %v3816
        %v3818 = vlaneseq
        %v3819 = vshrl.u32 %v3818, 7
        %v3820 = vsub.s32 %v3817, %v3819
        %v3821 = vrot.slane %v3798, %v3820
        %v3823 = vunpack.c.l.s4 1934713408
        %v3824 = vunpack.c.0.s8 %v3823
        %v3825 = vlaneseq
        %v3826 = vshrl.u32 %v3825, 7
        %v3827 = vsub.s32 %v3824, %v3826
        %v3828 = vrot.slane %v3814, %v3827
        %v3829 = vcombine.high %v3806, 0.0
        %v3830 = vcombine.high %v3813, 0.0
        %v3831 = vcombine.high %v3821, 0.0
        %v3832 = vcombine.high %v3828, 0.0
        %v3833 = vcombine.high %v985, 0.0
        %v3835 = vunpack.c.l.s4 1983009808
        %v3836 = vunpack.c.0.s8 %v3835
        %v3837 = vlaneseq
        %v3838 = vshrl.u32 %v3837, 7
        %v3839 = vsub.s32 %v3836, %v3838
        %v3840 = vrot.slane %v985, %v3839
        %v3842 = vunpack.c.l.s4 1983009808
        %v3843 = vunpack.c.0.s8 %v3842
        %v3844 = vlaneseq
        %v3845 = vshrl.u32 %v3844, 7
        %v3846 = vsub.s32 %v3843, %v3845
        %v3847 = vrot.slane %v3833, %v3846
        %v3848 = vcombine.high %v3840, 0.0
        %v3850 = vunpack.c.l.s4 1934713408
        %v3851 = vunpack.c.0.s8 %v3850
        %v3852 = vlaneseq
        %v3853 = vshrl.u32 %v3852, 7
        %v3854 = vsub.s32 %v3851, %v3853
        %v3855 = vrot.slane %v3840, %v3854
        %v3857 = vunpack.c.l.s4 1934713408
        %v3858 = vunpack.c.0.s8 %v3857
        %v3859 = vlaneseq
        %v3860 = vshrl.u32 %v3859, 7
        %v3861 = vsub.s32 %v3858, %v3860
        %v3862 = vrot.slane %v3848, %v3861
        %v3863 = vcombine.high %v3847, 0.0
        %v3865 = vunpack.c.l.s4 1934713408
        %v3866 = vunpack.c.0.s8 %v3865
        %v3867 = vlaneseq
        %v3868 = vshrl.u32 %v3867, 7
        %v3869 = vsub.s32 %v3866, %v3868
        %v3870 = vrot.slane %v3847, %v3869
        %v3872 = vunpack.c.l.s4 1934713408
        %v3873 = vunpack.c.0.s8 %v3872
        %v3874 = vlaneseq
        %v3875 = vshrl.u32 %v3874, 7
        %v3876 = vsub.s32 %v3873, %v3875
        %v3877 = vrot.slane %v3863, %v3876
        %v3878 = vcombine.high %v3855, 0.0
        %v3879 = vcombine.high %v3862, 0.0
        %v3880 = vcombine.high %v3870, 0.0
        %v3881 = vcombine.high %v3877, 0.0
        %v3882 = vcombine.high %v986, 0.0
        %v3884 = vunpack.c.l.s4 1983009808
        %v3885 = vunpack.c.0.s8 %v3884
        %v3886 = vlaneseq
        %v3887 = vshrl.u32 %v3886, 7
        %v3888 = vsub.s32 %v3885, %v3887
        %v3889 = vrot.slane %v986, %v3888
        %v3891 = vunpack.c.l.s4 1983009808
        %v3892 = vunpack.c.0.s8 %v3891
        %v3893 = vlaneseq
        %v3894 = vshrl.u32 %v3893, 7
        %v3895 = vsub.s32 %v3892, %v3894
        %v3896 = vrot.slane %v3882, %v3895
        %v3897 = vcombine.high %v3889, 0.0
        %v3899 = vunpack.c.l.s4 1934713408
        %v3900 = vunpack.c.0.s8 %v3899
        %v3901 = vlaneseq
        %v3902 = vshrl.u32 %v3901, 7
        %v3903 = vsub.s32 %v3900, %v3902
        %v3904 = vrot.slane %v3889, %v3903
        %v3906 = vunpack.c.l.s4 1934713408
        %v3907 = vunpack.c.0.s8 %v3906
        %v3908 = vlaneseq
        %v3909 = vshrl.u32 %v3908, 7
        %v3910 = vsub.s32 %v3907, %v3909
        %v3911 = vrot.slane %v3897, %v3910
        %v3912 = vcombine.high %v3896, 0.0
        %v3914 = vunpack.c.l.s4 1934713408
        %v3915 = vunpack.c.0.s8 %v3914
        %v3916 = vlaneseq
        %v3917 = vshrl.u32 %v3916, 7
        %v3918 = vsub.s32 %v3915, %v3917
        %v3919 = vrot.slane %v3896, %v3918
        %v3921 = vunpack.c.l.s4 1934713408
        %v3922 = vunpack.c.0.s8 %v3921
        %v3923 = vlaneseq
        %v3924 = vshrl.u32 %v3923, 7
        %v3925 = vsub.s32 %v3922, %v3924
        %v3926 = vrot.slane %v3912, %v3925
        %v3927 = vcombine.high %v3904, 0.0
        %v3928 = vcombine.high %v3911, 0.0
        %v3929 = vcombine.high %v3919, 0.0
        %v3930 = vcombine.high %v3926, 0.0
        %v3931 = vcombine.high %v987, 0.0
        %v3933 = vunpack.c.l.s4 1983009808
        %v3934 = vunpack.c.0.s8 %v3933
        %v3935 = vlaneseq
        %v3936 = vshrl.u32 %v3935, 7
        %v3937 = vsub.s32 %v3934, %v3936
        %v3938 = vrot.slane %v987, %v3937
        %v3940 = vunpack.c.l.s4 1983009808
        %v3941 = vunpack.c.0.s8 %v3940
        %v3942 = vlaneseq
        %v3943 = vshrl.u32 %v3942, 7
        %v3944 = vsub.s32 %v3941, %v3943
        %v3945 = vrot.slane %v3931, %v3944
        %v3946 = vcombine.high %v3938, 0.0
        %v3948 = vunpack.c.l.s4 1934713408
        %v3949 = vunpack.c.0.s8 %v3948
        %v3950 = vlaneseq
        %v3951 = vshrl.u32 %v3950, 7
        %v3952 = vsub.s32 %v3949, %v3951
        %v3953 = vrot.slane %v3938, %v3952
        %v3955 = vunpack.c.l.s4 1934713408
        %v3956 = vunpack.c.0.s8 %v3955
        %v3957 = vlaneseq
        %v3958 = vshrl.u32 %v3957, 7
        %v3959 = vsub.s32 %v3956, %v3958
        %v3960 = vrot.slane %v3946, %v3959
        %v3961 = vcombine.high %v3945, 0.0
        %v3963 = vunpack.c.l.s4 1934713408
        %v3964 = vunpack.c.0.s8 %v3963
        %v3965 = vlaneseq
        %v3966 = vshrl.u32 %v3965, 7
        %v3967 = vsub.s32 %v3964, %v3966
        %v3968 = vrot.slane %v3945, %v3967
        %v3970 = vunpack.c.l.s4 1934713408
        %v3971 = vunpack.c.0.s8 %v3970
        %v3972 = vlaneseq
        %v3973 = vshrl.u32 %v3972, 7
        %v3974 = vsub.s32 %v3971, %v3973
        %v3975 = vrot.slane %v3961, %v3974
        %v3976 = vcombine.high %v3953, 0.0
        %v3977 = vcombine.high %v3960, 0.0
        %v3978 = vcombine.high %v3968, 0.0
        %v3979 = vcombine.high %v3975, 0.0
        %v3980 = vcombine.high %v988, 0.0
        %v3982 = vunpack.c.l.s4 1983009808
        %v3983 = vunpack.c.0.s8 %v3982
        %v3984 = vlaneseq
        %v3985 = vshrl.u32 %v3984, 7
        %v3986 = vsub.s32 %v3983, %v3985
        %v3987 = vrot.slane %v988, %v3986
        %v3989 = vunpack.c.l.s4 1983009808
        %v3990 = vunpack.c.0.s8 %v3989
        %v3991 = vlaneseq
        %v3992 = vshrl.u32 %v3991, 7
        %v3993 = vsub.s32 %v3990, %v3992
        %v3994 = vrot.slane %v3980, %v3993
        %v3995 = vcombine.high %v3987, 0.0
        %v3997 = vunpack.c.l.s4 1934713408
        %v3998 = vunpack.c.0.s8 %v3997
        %v3999 = vlaneseq
        %v4000 = vshrl.u32 %v3999, 7
        %v4001 = vsub.s32 %v3998, %v4000
        %v4002 = vrot.slane %v3987, %v4001
        %v4004 = vunpack.c.l.s4 1934713408
        %v4005 = vunpack.c.0.s8 %v4004
        %v4006 = vlaneseq
        %v4007 = vshrl.u32 %v4006, 7
        %v4008 = vsub.s32 %v4005, %v4007
        %v4009 = vrot.slane %v3995, %v4008
        %v4010 = vcombine.high %v3994, 0.0
        %v4012 = vunpack.c.l.s4 1934713408
        %v4013 = vunpack.c.0.s8 %v4012
        %v4014 = vlaneseq
        %v4015 = vshrl.u32 %v4014, 7
        %v4016 = vsub.s32 %v4013, %v4015
        %v4017 = vrot.slane %v3994, %v4016
        %v4019 = vunpack.c.l.s4 1934713408
        %v4020 = vunpack.c.0.s8 %v4019
        %v4021 = vlaneseq
        %v4022 = vshrl.u32 %v4021, 7
        %v4023 = vsub.s32 %v4020, %v4022
        %v4024 = vrot.slane %v4010, %v4023
        %v4025 = vcombine.high %v4002, 0.0
        %v4026 = vcombine.high %v4009, 0.0
        %v4027 = vcombine.high %v4017, 0.0
        %v4028 = vcombine.high %v4024, 0.0
        %v4029 = vcombine.high %v989, 0.0
        %v4031 = vunpack.c.l.s4 1983009808
        %v4032 = vunpack.c.0.s8 %v4031
        %v4033 = vlaneseq
        %v4034 = vshrl.u32 %v4033, 7
        %v4035 = vsub.s32 %v4032, %v4034
        %v4036 = vrot.slane %v989, %v4035
        %v4038 = vunpack.c.l.s4 1983009808
        %v4039 = vunpack.c.0.s8 %v4038
        %v4040 = vlaneseq
        %v4041 = vshrl.u32 %v4040, 7
        %v4042 = vsub.s32 %v4039, %v4041
        %v4043 = vrot.slane %v4029, %v4042
        %v4044 = vcombine.high %v4036, 0.0
        %v4046 = vunpack.c.l.s4 1934713408
        %v4047 = vunpack.c.0.s8 %v4046
        %v4048 = vlaneseq
        %v4049 = vshrl.u32 %v4048, 7
        %v4050 = vsub.s32 %v4047, %v4049
        %v4051 = vrot.slane %v4036, %v4050
        %v4053 = vunpack.c.l.s4 1934713408
        %v4054 = vunpack.c.0.s8 %v4053
        %v4055 = vlaneseq
        %v4056 = vshrl.u32 %v4055, 7
        %v4057 = vsub.s32 %v4054, %v4056
        %v4058 = vrot.slane %v4044, %v4057
        %v4059 = vcombine.high %v4043, 0.0
        %v4061 = vunpack.c.l.s4 1934713408
        %v4062 = vunpack.c.0.s8 %v4061
        %v4063 = vlaneseq
        %v4064 = vshrl.u32 %v4063, 7
        %v4065 = vsub.s32 %v4062, %v4064
        %v4066 = vrot.slane %v4043, %v4065
        %v4068 = vunpack.c.l.s4 1934713408
        %v4069 = vunpack.c.0.s8 %v4068
        %v4070 = vlaneseq
        %v4071 = vshrl.u32 %v4070, 7
        %v4072 = vsub.s32 %v4069, %v4071
        %v4073 = vrot.slane %v4059, %v4072
        %v4074 = vcombine.high %v4051, 0.0
        %v4075 = vcombine.high %v4058, 0.0
        %v4076 = vcombine.high %v4066, 0.0
        %v4077 = vcombine.high %v4073, 0.0
        %v4078 = vcombine.high %v990, 0.0
        %v4080 = vunpack.c.l.s4 1983009808
        %v4081 = vunpack.c.0.s8 %v4080
        %v4082 = vlaneseq
        %v4083 = vshrl.u32 %v4082, 7
        %v4084 = vsub.s32 %v4081, %v4083
        %v4085 = vrot.slane %v990, %v4084
        %v4087 = vunpack.c.l.s4 1983009808
        %v4088 = vunpack.c.0.s8 %v4087
        %v4089 = vlaneseq
        %v4090 = vshrl.u32 %v4089, 7
        %v4091 = vsub.s32 %v4088, %v4090
        %v4092 = vrot.slane %v4078, %v4091
        %v4093 = vcombine.high %v4085, 0.0
        %v4095 = vunpack.c.l.s4 1934713408
        %v4096 = vunpack.c.0.s8 %v4095
        %v4097 = vlaneseq
        %v4098 = vshrl.u32 %v4097, 7
        %v4099 = vsub.s32 %v4096, %v4098
        %v4100 = vrot.slane %v4085, %v4099
        %v4102 = vunpack.c.l.s4 1934713408
        %v4103 = vunpack.c.0.s8 %v4102
        %v4104 = vlaneseq
        %v4105 = vshrl.u32 %v4104, 7
        %v4106 = vsub.s32 %v4103, %v4105
        %v4107 = vrot.slane %v4093, %v4106
        %v4108 = vcombine.high %v4092, 0.0
        %v4110 = vunpack.c.l.s4 1934713408
        %v4111 = vunpack.c.0.s8 %v4110
        %v4112 = vlaneseq
        %v4113 = vshrl.u32 %v4112, 7
        %v4114 = vsub.s32 %v4111, %v4113
        %v4115 = vrot.slane %v4092, %v4114
        %v4117 = vunpack.c.l.s4 1934713408
        %v4118 = vunpack.c.0.s8 %v4117
        %v4119 = vlaneseq
        %v4120 = vshrl.u32 %v4119, 7
        %v4121 = vsub.s32 %v4118, %v4120
        %v4122 = vrot.slane %v4108, %v4121
        %v4123 = vcombine.high %v4100, 0.0
        %v4124 = vcombine.high %v4107, 0.0
        %v4125 = vcombine.high %v4115, 0.0
        %v4126 = vcombine.high %v4122, 0.0
        %v4127 = vcombine.high %v991, 0.0
        %v4129 = vunpack.c.l.s4 1983009808
        %v4130 = vunpack.c.0.s8 %v4129
        %v4131 = vlaneseq
        %v4132 = vshrl.u32 %v4131, 7
        %v4133 = vsub.s32 %v4130, %v4132
        %v4134 = vrot.slane %v991, %v4133
        %v4136 = vunpack.c.l.s4 1983009808
        %v4137 = vunpack.c.0.s8 %v4136
        %v4138 = vlaneseq
        %v4139 = vshrl.u32 %v4138, 7
        %v4140 = vsub.s32 %v4137, %v4139
        %v4141 = vrot.slane %v4127, %v4140
        %v4142 = vcombine.high %v4134, 0.0
        %v4144 = vunpack.c.l.s4 1934713408
        %v4145 = vunpack.c.0.s8 %v4144
        %v4146 = vlaneseq
        %v4147 = vshrl.u32 %v4146, 7
        %v4148 = vsub.s32 %v4145, %v4147
        %v4149 = vrot.slane %v4134, %v4148
        %v4151 = vunpack.c.l.s4 1934713408
        %v4152 = vunpack.c.0.s8 %v4151
        %v4153 = vlaneseq
        %v4154 = vshrl.u32 %v4153, 7
        %v4155 = vsub.s32 %v4152, %v4154
        %v4156 = vrot.slane %v4142, %v4155
        %v4157 = vcombine.high %v4141, 0.0
        %v4159 = vunpack.c.l.s4 1934713408
        %v4160 = vunpack.c.0.s8 %v4159
        %v4161 = vlaneseq
        %v4162 = vshrl.u32 %v4161, 7
        %v4163 = vsub.s32 %v4160, %v4162
        %v4164 = vrot.slane %v4141, %v4163
        %v4166 = vunpack.c.l.s4 1934713408
        %v4167 = vunpack.c.0.s8 %v4166
        %v4168 = vlaneseq
        %v4169 = vshrl.u32 %v4168, 7
        %v4170 = vsub.s32 %v4167, %v4169
        %v4171 = vrot.slane %v4157, %v4170
        %v4172 = vcombine.high %v4149, 0.0
        %v4173 = vcombine.high %v4156, 0.0
        %v4174 = vcombine.high %v4164, 0.0
        %v4175 = vcombine.high %v4171, 0.0
        %v4176 = vcombine.high %v992, 0.0
        %v4178 = vunpack.c.l.s4 1983009808
        %v4179 = vunpack.c.0.s8 %v4178
        %v4180 = vlaneseq
        %v4181 = vshrl.u32 %v4180, 7
        %v4182 = vsub.s32 %v4179, %v4181
        %v4183 = vrot.slane %v992, %v4182
        %v4185 = vunpack.c.l.s4 1983009808
        %v4186 = vunpack.c.0.s8 %v4185
        %v4187 = vlaneseq
        %v4188 = vshrl.u32 %v4187, 7
        %v4189 = vsub.s32 %v4186, %v4188
        %v4190 = vrot.slane %v4176, %v4189
        %v4191 = vcombine.high %v4183, 0.0
        %v4193 = vunpack.c.l.s4 1934713408
        %v4194 = vunpack.c.0.s8 %v4193
        %v4195 = vlaneseq
        %v4196 = vshrl.u32 %v4195, 7
        %v4197 = vsub.s32 %v4194, %v4196
        %v4198 = vrot.slane %v4183, %v4197
        %v4200 = vunpack.c.l.s4 1934713408
        %v4201 = vunpack.c.0.s8 %v4200
        %v4202 = vlaneseq
        %v4203 = vshrl.u32 %v4202, 7
        %v4204 = vsub.s32 %v4201, %v4203
        %v4205 = vrot.slane %v4191, %v4204
        %v4206 = vcombine.high %v4190, 0.0
        %v4208 = vunpack.c.l.s4 1934713408
        %v4209 = vunpack.c.0.s8 %v4208
        %v4210 = vlaneseq
        %v4211 = vshrl.u32 %v4210, 7
        %v4212 = vsub.s32 %v4209, %v4211
        %v4213 = vrot.slane %v4190, %v4212
        %v4215 = vunpack.c.l.s4 1934713408
        %v4216 = vunpack.c.0.s8 %v4215
        %v4217 = vlaneseq
        %v4218 = vshrl.u32 %v4217, 7
        %v4219 = vsub.s32 %v4216, %v4218
        %v4220 = vrot.slane %v4206, %v4219
        %v4221 = vcombine.high %v4198, 0.0
        %v4222 = vcombine.high %v4205, 0.0
        %v4223 = vcombine.high %v4213, 0.0
        %v4224 = vcombine.high %v4220, 0.0
        %v4225 = vcombine.high %v993, 0.0
        %v4227 = vunpack.c.l.s4 1983009808
        %v4228 = vunpack.c.0.s8 %v4227
        %v4229 = vlaneseq
        %v4230 = vshrl.u32 %v4229, 7
        %v4231 = vsub.s32 %v4228, %v4230
        %v4232 = vrot.slane %v993, %v4231
        %v4234 = vunpack.c.l.s4 1983009808
        %v4235 = vunpack.c.0.s8 %v4234
        %v4236 = vlaneseq
        %v4237 = vshrl.u32 %v4236, 7
        %v4238 = vsub.s32 %v4235, %v4237
        %v4239 = vrot.slane %v4225, %v4238
        %v4240 = vcombine.high %v4232, 0.0
        %v4242 = vunpack.c.l.s4 1934713408
        %v4243 = vunpack.c.0.s8 %v4242
        %v4244 = vlaneseq
        %v4245 = vshrl.u32 %v4244, 7
        %v4246 = vsub.s32 %v4243, %v4245
        %v4247 = vrot.slane %v4232, %v4246
        %v4249 = vunpack.c.l.s4 1934713408
        %v4250 = vunpack.c.0.s8 %v4249
        %v4251 = vlaneseq
        %v4252 = vshrl.u32 %v4251, 7
        %v4253 = vsub.s32 %v4250, %v4252
        %v4254 = vrot.slane %v4240, %v4253
        %v4255 = vcombine.high %v4239, 0.0
        %v4257 = vunpack.c.l.s4 1934713408
        %v4258 = vunpack.c.0.s8 %v4257
        %v4259 = vlaneseq
        %v4260 = vshrl.u32 %v4259, 7
        %v4261 = vsub.s32 %v4258, %v4260
        %v4262 = vrot.slane %v4239, %v4261
        %v4264 = vunpack.c.l.s4 1934713408
        %v4265 = vunpack.c.0.s8 %v4264
        %v4266 = vlaneseq
        %v4267 = vshrl.u32 %v4266, 7
        %v4268 = vsub.s32 %v4265, %v4267
        %v4269 = vrot.slane %v4255, %v4268
        %v4270 = vcombine.high %v4247, 0.0
        %v4271 = vcombine.high %v4254, 0.0
        %v4272 = vcombine.high %v4262, 0.0
        %v4273 = vcombine.high %v4269, 0.0
        %v4274 = vcombine.high %v994, 0.0
        %v4276 = vunpack.c.l.s4 1983009808
        %v4277 = vunpack.c.0.s8 %v4276
        %v4278 = vlaneseq
        %v4279 = vshrl.u32 %v4278, 7
        %v4280 = vsub.s32 %v4277, %v4279
        %v4281 = vrot.slane %v994, %v4280
        %v4283 = vunpack.c.l.s4 1983009808
        %v4284 = vunpack.c.0.s8 %v4283
        %v4285 = vlaneseq
        %v4286 = vshrl.u32 %v4285, 7
        %v4287 = vsub.s32 %v4284, %v4286
        %v4288 = vrot.slane %v4274, %v4287
        %v4289 = vcombine.high %v4281, 0.0
        %v4291 = vunpack.c.l.s4 1934713408
        %v4292 = vunpack.c.0.s8 %v4291
        %v4293 = vlaneseq
        %v4294 = vshrl.u32 %v4293, 7
        %v4295 = vsub.s32 %v4292, %v4294
        %v4296 = vrot.slane %v4281, %v4295
        %v4298 = vunpack.c.l.s4 1934713408
        %v4299 = vunpack.c.0.s8 %v4298
        %v4300 = vlaneseq
        %v4301 = vshrl.u32 %v4300, 7
        %v4302 = vsub.s32 %v4299, %v4301
        %v4303 = vrot.slane %v4289, %v4302
        %v4304 = vcombine.high %v4288, 0.0
        %v4306 = vunpack.c.l.s4 1934713408
        %v4307 = vunpack.c.0.s8 %v4306
        %v4308 = vlaneseq
        %v4309 = vshrl.u32 %v4308, 7
        %v4310 = vsub.s32 %v4307, %v4309
        %v4311 = vrot.slane %v4288, %v4310
        %v4313 = vunpack.c.l.s4 1934713408
        %v4314 = vunpack.c.0.s8 %v4313
        %v4315 = vlaneseq
        %v4316 = vshrl.u32 %v4315, 7
        %v4317 = vsub.s32 %v4314, %v4316
        %v4318 = vrot.slane %v4304, %v4317
        %v4319 = vcombine.high %v4296, 0.0
        %v4320 = vcombine.high %v4303, 0.0
        %v4321 = vcombine.high %v4311, 0.0
        %v4322 = vcombine.high %v4318, 0.0
        %v4323 = vcombine.high %v995, 0.0
        %v4325 = vunpack.c.l.s4 1983009808
        %v4326 = vunpack.c.0.s8 %v4325
        %v4327 = vlaneseq
        %v4328 = vshrl.u32 %v4327, 7
        %v4329 = vsub.s32 %v4326, %v4328
        %v4330 = vrot.slane %v995, %v4329
        %v4332 = vunpack.c.l.s4 1983009808
        %v4333 = vunpack.c.0.s8 %v4332
        %v4334 = vlaneseq
        %v4335 = vshrl.u32 %v4334, 7
        %v4336 = vsub.s32 %v4333, %v4335
        %v4337 = vrot.slane %v4323, %v4336
        %v4338 = vcombine.high %v4330, 0.0
        %v4340 = vunpack.c.l.s4 1934713408
        %v4341 = vunpack.c.0.s8 %v4340
        %v4342 = vlaneseq
        %v4343 = vshrl.u32 %v4342, 7
        %v4344 = vsub.s32 %v4341, %v4343
        %v4345 = vrot.slane %v4330, %v4344
        %v4347 = vunpack.c.l.s4 1934713408
        %v4348 = vunpack.c.0.s8 %v4347
        %v4349 = vlaneseq
        %v4350 = vshrl.u32 %v4349, 7
        %v4351 = vsub.s32 %v4348, %v4350
        %v4352 = vrot.slane %v4338, %v4351
        %v4353 = vcombine.high %v4337, 0.0
        %v4355 = vunpack.c.l.s4 1934713408
        %v4356 = vunpack.c.0.s8 %v4355
        %v4357 = vlaneseq
        %v4358 = vshrl.u32 %v4357, 7
        %v4359 = vsub.s32 %v4356, %v4358
        %v4360 = vrot.slane %v4337, %v4359
        %v4362 = vunpack.c.l.s4 1934713408
        %v4363 = vunpack.c.0.s8 %v4362
        %v4364 = vlaneseq
        %v4365 = vshrl.u32 %v4364, 7
        %v4366 = vsub.s32 %v4363, %v4365
        %v4367 = vrot.slane %v4353, %v4366
        %v4368 = vcombine.high %v4345, 0.0
        %v4369 = vcombine.high %v4352, 0.0
        %v4370 = vcombine.high %v4360, 0.0
        %v4371 = vcombine.high %v4367, 0.0
        %v4372 = vcombine.high %v996, 0.0
        %v4374 = vunpack.c.l.s4 1983009808
        %v4375 = vunpack.c.0.s8 %v4374
        %v4376 = vlaneseq
        %v4377 = vshrl.u32 %v4376, 7
        %v4378 = vsub.s32 %v4375, %v4377
        %v4379 = vrot.slane %v996, %v4378
        %v4381 = vunpack.c.l.s4 1983009808
        %v4382 = vunpack.c.0.s8 %v4381
        %v4383 = vlaneseq
        %v4384 = vshrl.u32 %v4383, 7
        %v4385 = vsub.s32 %v4382, %v4384
        %v4386 = vrot.slane %v4372, %v4385
        %v4387 = vcombine.high %v4379, 0.0
        %v4389 = vunpack.c.l.s4 1934713408
        %v4390 = vunpack.c.0.s8 %v4389
        %v4391 = vlaneseq
        %v4392 = vshrl.u32 %v4391, 7
        %v4393 = vsub.s32 %v4390, %v4392
        %v4394 = vrot.slane %v4379, %v4393
        %v4396 = vunpack.c.l.s4 1934713408
        %v4397 = vunpack.c.0.s8 %v4396
        %v4398 = vlaneseq
        %v4399 = vshrl.u32 %v4398, 7
        %v4400 = vsub.s32 %v4397, %v4399
        %v4401 = vrot.slane %v4387, %v4400
        %v4402 = vcombine.high %v4386, 0.0
        %v4404 = vunpack.c.l.s4 1934713408
        %v4405 = vunpack.c.0.s8 %v4404
        %v4406 = vlaneseq
        %v4407 = vshrl.u32 %v4406, 7
        %v4408 = vsub.s32 %v4405, %v4407
        %v4409 = vrot.slane %v4386, %v4408
        %v4411 = vunpack.c.l.s4 1934713408
        %v4412 = vunpack.c.0.s8 %v4411
        %v4413 = vlaneseq
        %v4414 = vshrl.u32 %v4413, 7
        %v4415 = vsub.s32 %v4412, %v4414
        %v4416 = vrot.slane %v4402, %v4415
        %v4417 = vcombine.high %v4394, 0.0
        %v4418 = vcombine.high %v4401, 0.0
        %v4419 = vcombine.high %v4409, 0.0
        %v4420 = vcombine.high %v4416, 0.0
        %v4421 = vcombine.high %v997, 0.0
        %v4423 = vunpack.c.l.s4 1983009808
        %v4424 = vunpack.c.0.s8 %v4423
        %v4425 = vlaneseq
        %v4426 = vshrl.u32 %v4425, 7
        %v4427 = vsub.s32 %v4424, %v4426
        %v4428 = vrot.slane %v997, %v4427
        %v4430 = vunpack.c.l.s4 1983009808
        %v4431 = vunpack.c.0.s8 %v4430
        %v4432 = vlaneseq
        %v4433 = vshrl.u32 %v4432, 7
        %v4434 = vsub.s32 %v4431, %v4433
        %v4435 = vrot.slane %v4421, %v4434
        %v4436 = vcombine.high %v4428, 0.0
        %v4438 = vunpack.c.l.s4 1934713408
        %v4439 = vunpack.c.0.s8 %v4438
        %v4440 = vlaneseq
        %v4441 = vshrl.u32 %v4440, 7
        %v4442 = vsub.s32 %v4439, %v4441
        %v4443 = vrot.slane %v4428, %v4442
        %v4445 = vunpack.c.l.s4 1934713408
        %v4446 = vunpack.c.0.s8 %v4445
        %v4447 = vlaneseq
        %v4448 = vshrl.u32 %v4447, 7
        %v4449 = vsub.s32 %v4446, %v4448
        %v4450 = vrot.slane %v4436, %v4449
        %v4451 = vcombine.high %v4435, 0.0
        %v4453 = vunpack.c.l.s4 1934713408
        %v4454 = vunpack.c.0.s8 %v4453
        %v4455 = vlaneseq
        %v4456 = vshrl.u32 %v4455, 7
        %v4457 = vsub.s32 %v4454, %v4456
        %v4458 = vrot.slane %v4435, %v4457
        %v4460 = vunpack.c.l.s4 1934713408
        %v4461 = vunpack.c.0.s8 %v4460
        %v4462 = vlaneseq
        %v4463 = vshrl.u32 %v4462, 7
        %v4464 = vsub.s32 %v4461, %v4463
        %v4465 = vrot.slane %v4451, %v4464
        %v4466 = vcombine.high %v4443, 0.0
        %v4467 = vcombine.high %v4450, 0.0
        %v4468 = vcombine.high %v4458, 0.0
        %v4469 = vcombine.high %v4465, 0.0
        %v4470 = vcombine.high %v998, 0.0
        %v4472 = vunpack.c.l.s4 1983009808
        %v4473 = vunpack.c.0.s8 %v4472
        %v4474 = vlaneseq
        %v4475 = vshrl.u32 %v4474, 7
        %v4476 = vsub.s32 %v4473, %v4475
        %v4477 = vrot.slane %v998, %v4476
        %v4479 = vunpack.c.l.s4 1983009808
        %v4480 = vunpack.c.0.s8 %v4479
        %v4481 = vlaneseq
        %v4482 = vshrl.u32 %v4481, 7
        %v4483 = vsub.s32 %v4480, %v4482
        %v4484 = vrot.slane %v4470, %v4483
        %v4485 = vcombine.high %v4477, 0.0
        %v4487 = vunpack.c.l.s4 1934713408
        %v4488 = vunpack.c.0.s8 %v4487
        %v4489 = vlaneseq
        %v4490 = vshrl.u32 %v4489, 7
        %v4491 = vsub.s32 %v4488, %v4490
        %v4492 = vrot.slane %v4477, %v4491
        %v4494 = vunpack.c.l.s4 1934713408
        %v4495 = vunpack.c.0.s8 %v4494
        %v4496 = vlaneseq
        %v4497 = vshrl.u32 %v4496, 7
        %v4498 = vsub.s32 %v4495, %v4497
        %v4499 = vrot.slane %v4485, %v4498
        %v4500 = vcombine.high %v4484, 0.0
        %v4502 = vunpack.c.l.s4 1934713408
        %v4503 = vunpack.c.0.s8 %v4502
        %v4504 = vlaneseq
        %v4505 = vshrl.u32 %v4504, 7
        %v4506 = vsub.s32 %v4503, %v4505
        %v4507 = vrot.slane %v4484, %v4506
        %v4509 = vunpack.c.l.s4 1934713408
        %v4510 = vunpack.c.0.s8 %v4509
        %v4511 = vlaneseq
        %v4512 = vshrl.u32 %v4511, 7
        %v4513 = vsub.s32 %v4510, %v4512
        %v4514 = vrot.slane %v4500, %v4513
        %v4515 = vcombine.high %v4492, 0.0
        %v4516 = vcombine.high %v4499, 0.0
        %v4517 = vcombine.high %v4507, 0.0
        %v4518 = vcombine.high %v4514, 0.0
        %v4519 = vcombine.high %v999, 0.0
        %v4521 = vunpack.c.l.s4 1983009808
        %v4522 = vunpack.c.0.s8 %v4521
        %v4523 = vlaneseq
        %v4524 = vshrl.u32 %v4523, 7
        %v4525 = vsub.s32 %v4522, %v4524
        %v4526 = vrot.slane %v999, %v4525
        %v4528 = vunpack.c.l.s4 1983009808
        %v4529 = vunpack.c.0.s8 %v4528
        %v4530 = vlaneseq
        %v4531 = vshrl.u32 %v4530, 7
        %v4532 = vsub.s32 %v4529, %v4531
        %v4533 = vrot.slane %v4519, %v4532
        %v4534 = vcombine.high %v4526, 0.0
        %v4536 = vunpack.c.l.s4 1934713408
        %v4537 = vunpack.c.0.s8 %v4536
        %v4538 = vlaneseq
        %v4539 = vshrl.u32 %v4538, 7
        %v4540 = vsub.s32 %v4537, %v4539
        %v4541 = vrot.slane %v4526, %v4540
        %v4543 = vunpack.c.l.s4 1934713408
        %v4544 = vunpack.c.0.s8 %v4543
        %v4545 = vlaneseq
        %v4546 = vshrl.u32 %v4545, 7
        %v4547 = vsub.s32 %v4544, %v4546
        %v4548 = vrot.slane %v4534, %v4547
        %v4549 = vcombine.high %v4533, 0.0
        %v4551 = vunpack.c.l.s4 1934713408
        %v4552 = vunpack.c.0.s8 %v4551
        %v4553 = vlaneseq
        %v4554 = vshrl.u32 %v4553, 7
        %v4555 = vsub.s32 %v4552, %v4554
        %v4556 = vrot.slane %v4533, %v4555
        %v4558 = vunpack.c.l.s4 1934713408
        %v4559 = vunpack.c.0.s8 %v4558
        %v4560 = vlaneseq
        %v4561 = vshrl.u32 %v4560, 7
        %v4562 = vsub.s32 %v4559, %v4561
        %v4563 = vrot.slane %v4549, %v4562
        %v4564 = vcombine.high %v4541, 0.0
        %v4565 = vcombine.high %v4548, 0.0
        %v4566 = vcombine.high %v4556, 0.0
        %v4567 = vcombine.high %v4563, 0.0
        %v4568 = vcombine.high %v1000, 0.0
        %v4570 = vunpack.c.l.s4 1983009808
        %v4571 = vunpack.c.0.s8 %v4570
        %v4572 = vlaneseq
        %v4573 = vshrl.u32 %v4572, 7
        %v4574 = vsub.s32 %v4571, %v4573
        %v4575 = vrot.slane %v1000, %v4574
        %v4577 = vunpack.c.l.s4 1983009808
        %v4578 = vunpack.c.0.s8 %v4577
        %v4579 = vlaneseq
        %v4580 = vshrl.u32 %v4579, 7
        %v4581 = vsub.s32 %v4578, %v4580
        %v4582 = vrot.slane %v4568, %v4581
        %v4583 = vcombine.high %v4575, 0.0
        %v4585 = vunpack.c.l.s4 1934713408
        %v4586 = vunpack.c.0.s8 %v4585
        %v4587 = vlaneseq
        %v4588 = vshrl.u32 %v4587, 7
        %v4589 = vsub.s32 %v4586, %v4588
        %v4590 = vrot.slane %v4575, %v4589
        %v4592 = vunpack.c.l.s4 1934713408
        %v4593 = vunpack.c.0.s8 %v4592
        %v4594 = vlaneseq
        %v4595 = vshrl.u32 %v4594, 7
        %v4596 = vsub.s32 %v4593, %v4595
        %v4597 = vrot.slane %v4583, %v4596
        %v4598 = vcombine.high %v4582, 0.0
        %v4600 = vunpack.c.l.s4 1934713408
        %v4601 = vunpack.c.0.s8 %v4600
        %v4602 = vlaneseq
        %v4603 = vshrl.u32 %v4602, 7
        %v4604 = vsub.s32 %v4601, %v4603
        %v4605 = vrot.slane %v4582, %v4604
        %v4607 = vunpack.c.l.s4 1934713408
        %v4608 = vunpack.c.0.s8 %v4607
        %v4609 = vlaneseq
        %v4610 = vshrl.u32 %v4609, 7
        %v4611 = vsub.s32 %v4608, %v4610
        %v4612 = vrot.slane %v4598, %v4611
        %v4613 = vcombine.high %v4590, 0.0
        %v4614 = vcombine.high %v4597, 0.0
        %v4615 = vcombine.high %v4605, 0.0
        %v4616 = vcombine.high %v4612, 0.0
        %v4617 = vcombine.high %v1001, 0.0
        %v4619 = vunpack.c.l.s4 1983009808
        %v4620 = vunpack.c.0.s8 %v4619
        %v4621 = vlaneseq
        %v4622 = vshrl.u32 %v4621, 7
        %v4623 = vsub.s32 %v4620, %v4622
        %v4624 = vrot.slane %v1001, %v4623
        %v4626 = vunpack.c.l.s4 1983009808
        %v4627 = vunpack.c.0.s8 %v4626
        %v4628 = vlaneseq
        %v4629 = vshrl.u32 %v4628, 7
        %v4630 = vsub.s32 %v4627, %v4629
        %v4631 = vrot.slane %v4617, %v4630
        %v4632 = vcombine.high %v4624, 0.0
        %v4634 = vunpack.c.l.s4 1934713408
        %v4635 = vunpack.c.0.s8 %v4634
        %v4636 = vlaneseq
        %v4637 = vshrl.u32 %v4636, 7
        %v4638 = vsub.s32 %v4635, %v4637
        %v4639 = vrot.slane %v4624, %v4638
        %v4641 = vunpack.c.l.s4 1934713408
        %v4642 = vunpack.c.0.s8 %v4641
        %v4643 = vlaneseq
        %v4644 = vshrl.u32 %v4643, 7
        %v4645 = vsub.s32 %v4642, %v4644
        %v4646 = vrot.slane %v4632, %v4645
        %v4647 = vcombine.high %v4631, 0.0
        %v4649 = vunpack.c.l.s4 1934713408
        %v4650 = vunpack.c.0.s8 %v4649
        %v4651 = vlaneseq
        %v4652 = vshrl.u32 %v4651, 7
        %v4653 = vsub.s32 %v4650, %v4652
        %v4654 = vrot.slane %v4631, %v4653
        %v4656 = vunpack.c.l.s4 1934713408
        %v4657 = vunpack.c.0.s8 %v4656
        %v4658 = vlaneseq
        %v4659 = vshrl.u32 %v4658, 7
        %v4660 = vsub.s32 %v4657, %v4659
        %v4661 = vrot.slane %v4647, %v4660
        %v4662 = vcombine.high %v4639, 0.0
        %v4663 = vcombine.high %v4646, 0.0
        %v4664 = vcombine.high %v4654, 0.0
        %v4665 = vcombine.high %v4661, 0.0
        %v4666 = vcombine.high %v1002, 0.0
        %v4668 = vunpack.c.l.s4 1983009808
        %v4669 = vunpack.c.0.s8 %v4668
        %v4670 = vlaneseq
        %v4671 = vshrl.u32 %v4670, 7
        %v4672 = vsub.s32 %v4669, %v4671
        %v4673 = vrot.slane %v1002, %v4672
        %v4675 = vunpack.c.l.s4 1983009808
        %v4676 = vunpack.c.0.s8 %v4675
        %v4677 = vlaneseq
        %v4678 = vshrl.u32 %v4677, 7
        %v4679 = vsub.s32 %v4676, %v4678
        %v4680 = vrot.slane %v4666, %v4679
        %v4681 = vcombine.high %v4673, 0.0
        %v4683 = vunpack.c.l.s4 1934713408
        %v4684 = vunpack.c.0.s8 %v4683
        %v4685 = vlaneseq
        %v4686 = vshrl.u32 %v4685, 7
        %v4687 = vsub.s32 %v4684, %v4686
        %v4688 = vrot.slane %v4673, %v4687
        %v4690 = vunpack.c.l.s4 1934713408
        %v4691 = vunpack.c.0.s8 %v4690
        %v4692 = vlaneseq
        %v4693 = vshrl.u32 %v4692, 7
        %v4694 = vsub.s32 %v4691, %v4693
        %v4695 = vrot.slane %v4681, %v4694
        %v4696 = vcombine.high %v4680, 0.0
        %v4698 = vunpack.c.l.s4 1934713408
        %v4699 = vunpack.c.0.s8 %v4698
        %v4700 = vlaneseq
        %v4701 = vshrl.u32 %v4700, 7
        %v4702 = vsub.s32 %v4699, %v4701
        %v4703 = vrot.slane %v4680, %v4702
        %v4705 = vunpack.c.l.s4 1934713408
        %v4706 = vunpack.c.0.s8 %v4705
        %v4707 = vlaneseq
        %v4708 = vshrl.u32 %v4707, 7
        %v4709 = vsub.s32 %v4706, %v4708
        %v4710 = vrot.slane %v4696, %v4709
        %v4711 = vcombine.high %v4688, 0.0
        %v4712 = vcombine.high %v4695, 0.0
        %v4713 = vcombine.high %v4703, 0.0
        %v4714 = vcombine.high %v4710, 0.0
        %v4715 = vcombine.high %v1003, 0.0
        %v4717 = vunpack.c.l.s4 1983009808
        %v4718 = vunpack.c.0.s8 %v4717
        %v4719 = vlaneseq
        %v4720 = vshrl.u32 %v4719, 7
        %v4721 = vsub.s32 %v4718, %v4720
        %v4722 = vrot.slane %v1003, %v4721
        %v4724 = vunpack.c.l.s4 1983009808
        %v4725 = vunpack.c.0.s8 %v4724
        %v4726 = vlaneseq
        %v4727 = vshrl.u32 %v4726, 7
        %v4728 = vsub.s32 %v4725, %v4727
        %v4729 = vrot.slane %v4715, %v4728
        %v4730 = vcombine.high %v4722, 0.0
        %v4732 = vunpack.c.l.s4 1934713408
        %v4733 = vunpack.c.0.s8 %v4732
        %v4734 = vlaneseq
        %v4735 = vshrl.u32 %v4734, 7
        %v4736 = vsub.s32 %v4733, %v4735
        %v4737 = vrot.slane %v4722, %v4736
        %v4739 = vunpack.c.l.s4 1934713408
        %v4740 = vunpack.c.0.s8 %v4739
        %v4741 = vlaneseq
        %v4742 = vshrl.u32 %v4741, 7
        %v4743 = vsub.s32 %v4740, %v4742
        %v4744 = vrot.slane %v4730, %v4743
        %v4745 = vcombine.high %v4729, 0.0
        %v4747 = vunpack.c.l.s4 1934713408
        %v4748 = vunpack.c.0.s8 %v4747
        %v4749 = vlaneseq
        %v4750 = vshrl.u32 %v4749, 7
        %v4751 = vsub.s32 %v4748, %v4750
        %v4752 = vrot.slane %v4729, %v4751
        %v4754 = vunpack.c.l.s4 1934713408
        %v4755 = vunpack.c.0.s8 %v4754
        %v4756 = vlaneseq
        %v4757 = vshrl.u32 %v4756, 7
        %v4758 = vsub.s32 %v4755, %v4757
        %v4759 = vrot.slane %v4745, %v4758
        %v4760 = vcombine.high %v4737, 0.0
        %v4761 = vcombine.high %v4744, 0.0
        %v4762 = vcombine.high %v4752, 0.0
        %v4763 = vcombine.high %v4759, 0.0
        %v4764 = vcombine.high %v1004, 0.0
        %v4766 = vunpack.c.l.s4 1983009808
        %v4767 = vunpack.c.0.s8 %v4766
        %v4768 = vlaneseq
        %v4769 = vshrl.u32 %v4768, 7
        %v4770 = vsub.s32 %v4767, %v4769
        %v4771 = vrot.slane %v1004, %v4770
        %v4773 = vunpack.c.l.s4 1983009808
        %v4774 = vunpack.c.0.s8 %v4773
        %v4775 = vlaneseq
        %v4776 = vshrl.u32 %v4775, 7
        %v4777 = vsub.s32 %v4774, %v4776
        %v4778 = vrot.slane %v4764, %v4777
        %v4779 = vcombine.high %v4771, 0.0
        %v4781 = vunpack.c.l.s4 1934713408
        %v4782 = vunpack.c.0.s8 %v4781
        %v4783 = vlaneseq
        %v4784 = vshrl.u32 %v4783, 7
        %v4785 = vsub.s32 %v4782, %v4784
        %v4786 = vrot.slane %v4771, %v4785
        %v4788 = vunpack.c.l.s4 1934713408
        %v4789 = vunpack.c.0.s8 %v4788
        %v4790 = vlaneseq
        %v4791 = vshrl.u32 %v4790, 7
        %v4792 = vsub.s32 %v4789, %v4791
        %v4793 = vrot.slane %v4779, %v4792
        %v4794 = vcombine.high %v4778, 0.0
        %v4796 = vunpack.c.l.s4 1934713408
        %v4797 = vunpack.c.0.s8 %v4796
        %v4798 = vlaneseq
        %v4799 = vshrl.u32 %v4798, 7
        %v4800 = vsub.s32 %v4797, %v4799
        %v4801 = vrot.slane %v4778, %v4800
        %v4803 = vunpack.c.l.s4 1934713408
        %v4804 = vunpack.c.0.s8 %v4803
        %v4805 = vlaneseq
        %v4806 = vshrl.u32 %v4805, 7
        %v4807 = vsub.s32 %v4804, %v4806
        %v4808 = vrot.slane %v4794, %v4807
        %v4809 = vcombine.high %v4786, 0.0
        %v4810 = vcombine.high %v4793, 0.0
        %v4811 = vcombine.high %v4801, 0.0
        %v4812 = vcombine.high %v4808, 0.0
        %v4813 = vcombine.high %v1005, 0.0
        %v4815 = vunpack.c.l.s4 1983009808
        %v4816 = vunpack.c.0.s8 %v4815
        %v4817 = vlaneseq
        %v4818 = vshrl.u32 %v4817, 7
        %v4819 = vsub.s32 %v4816, %v4818
        %v4820 = vrot.slane %v1005, %v4819
        %v4822 = vunpack.c.l.s4 1983009808
        %v4823 = vunpack.c.0.s8 %v4822
        %v4824 = vlaneseq
        %v4825 = vshrl.u32 %v4824, 7
        %v4826 = vsub.s32 %v4823, %v4825
        %v4827 = vrot.slane %v4813, %v4826
        %v4828 = vcombine.high %v4820, 0.0
        %v4830 = vunpack.c.l.s4 1934713408
        %v4831 = vunpack.c.0.s8 %v4830
        %v4832 = vlaneseq
        %v4833 = vshrl.u32 %v4832, 7
        %v4834 = vsub.s32 %v4831, %v4833
        %v4835 = vrot.slane %v4820, %v4834
        %v4837 = vunpack.c.l.s4 1934713408
        %v4838 = vunpack.c.0.s8 %v4837
        %v4839 = vlaneseq
        %v4840 = vshrl.u32 %v4839, 7
        %v4841 = vsub.s32 %v4838, %v4840
        %v4842 = vrot.slane %v4828, %v4841
        %v4843 = vcombine.high %v4827, 0.0
        %v4845 = vunpack.c.l.s4 1934713408
        %v4846 = vunpack.c.0.s8 %v4845
        %v4847 = vlaneseq
        %v4848 = vshrl.u32 %v4847, 7
        %v4849 = vsub.s32 %v4846, %v4848
        %v4850 = vrot.slane %v4827, %v4849
        %v4852 = vunpack.c.l.s4 1934713408
        %v4853 = vunpack.c.0.s8 %v4852
        %v4854 = vlaneseq
        %v4855 = vshrl.u32 %v4854, 7
        %v4856 = vsub.s32 %v4853, %v4855
        %v4857 = vrot.slane %v4843, %v4856
        %v4858 = vcombine.high %v4835, 0.0
        %v4859 = vcombine.high %v4842, 0.0
        %v4860 = vcombine.high %v4850, 0.0
        %v4861 = vcombine.high %v4857, 0.0
        %v4862 = vcombine.high %v1006, 0.0
        %v4864 = vunpack.c.l.s4 1983009808
        %v4865 = vunpack.c.0.s8 %v4864
        %v4866 = vlaneseq
        %v4867 = vshrl.u32 %v4866, 7
        %v4868 = vsub.s32 %v4865, %v4867
        %v4869 = vrot.slane %v1006, %v4868
        %v4871 = vunpack.c.l.s4 1983009808
        %v4872 = vunpack.c.0.s8 %v4871
        %v4873 = vlaneseq
        %v4874 = vshrl.u32 %v4873, 7
        %v4875 = vsub.s32 %v4872, %v4874
        %v4876 = vrot.slane %v4862, %v4875
        %v4877 = vcombine.high %v4869, 0.0
        %v4879 = vunpack.c.l.s4 1934713408
        %v4880 = vunpack.c.0.s8 %v4879
        %v4881 = vlaneseq
        %v4882 = vshrl.u32 %v4881, 7
        %v4883 = vsub.s32 %v4880, %v4882
        %v4884 = vrot.slane %v4869, %v4883
        %v4886 = vunpack.c.l.s4 1934713408
        %v4887 = vunpack.c.0.s8 %v4886
        %v4888 = vlaneseq
        %v4889 = vshrl.u32 %v4888, 7
        %v4890 = vsub.s32 %v4887, %v4889
        %v4891 = vrot.slane %v4877, %v4890
        %v4892 = vcombine.high %v4876, 0.0
        %v4894 = vunpack.c.l.s4 1934713408
        %v4895 = vunpack.c.0.s8 %v4894
        %v4896 = vlaneseq
        %v4897 = vshrl.u32 %v4896, 7
        %v4898 = vsub.s32 %v4895, %v4897
        %v4899 = vrot.slane %v4876, %v4898
        %v4901 = vunpack.c.l.s4 1934713408
        %v4902 = vunpack.c.0.s8 %v4901
        %v4903 = vlaneseq
        %v4904 = vshrl.u32 %v4903, 7
        %v4905 = vsub.s32 %v4902, %v4904
        %v4906 = vrot.slane %v4892, %v4905
        %v4907 = vcombine.high %v4884, 0.0
        %v4908 = vcombine.high %v4891, 0.0
        %v4909 = vcombine.high %v4899, 0.0
        %v4910 = vcombine.high %v4906, 0.0
        %4943 = vrot.lane.b32.xlu0 %v1820, 2
        %v4944 = vpop.permute.xlu0 %4943
        %4945 = vrot.lane.b32.xlu0 %v1918, 2
        %v4946 = vpop.permute.xlu0 %4945
        %4947 = vrot.lane.b32.xlu0 %v2016, 2
        %v4948 = vpop.permute.xlu0 %4947
        %4949 = vrot.lane.b32.xlu0 %v2114, 2
        %v4950 = vpop.permute.xlu0 %4949
        %4951 = vrot.lane.b32.xlu0 %v2212, 2
        %v4952 = vpop.permute.xlu0 %4951
        %4953 = vrot.lane.b32.xlu0 %v2310, 2
        %v4954 = vpop.permute.xlu0 %4953
        %4955 = vrot.lane.b32.xlu0 %v2408, 2
        %v4956 = vpop.permute.xlu0 %4955
        %4957 = vrot.lane.b32.xlu0 %v2506, 2
        %v4958 = vpop.permute.xlu0 %4957
        %4959 = vrot.lane.b32.xlu0 %v2604, 2
        %v4960 = vpop.permute.xlu0 %4959
        %4961 = vrot.lane.b32.xlu0 %v2702, 2
        %v4962 = vpop.permute.xlu0 %4961
        %4963 = vrot.lane.b32.xlu0 %v2800, 2
        %v4964 = vpop.permute.xlu0 %4963
        %4965 = vrot.lane.b32.xlu0 %v2898, 2
        %v4966 = vpop.permute.xlu0 %4965
        %4967 = vrot.lane.b32.xlu0 %v2996, 2
        %v4968 = vpop.permute.xlu0 %4967
        %4969 = vrot.lane.b32.xlu0 %v3094, 2
        %v4970 = vpop.permute.xlu0 %4969
        %4971 = vrot.lane.b32.xlu0 %v3192, 2
        %v4972 = vpop.permute.xlu0 %4971
        %4973 = vrot.lane.b32.xlu0 %v3290, 2
        %v4974 = vpop.permute.xlu0 %4973
        %4975 = vrot.lane.b32.xlu0 %v3388, 2
        %v4976 = vpop.permute.xlu0 %4975
        %4977 = vrot.lane.b32.xlu0 %v3486, 2
        %v4978 = vpop.permute.xlu0 %4977
        %4979 = vrot.lane.b32.xlu0 %v3584, 2
        %v4980 = vpop.permute.xlu0 %4979
        %4981 = vrot.lane.b32.xlu0 %v3682, 2
        %v4982 = vpop.permute.xlu0 %4981
        %4983 = vrot.lane.b32.xlu0 %v3780, 2
        %v4984 = vpop.permute.xlu0 %4983
        %4985 = vrot.lane.b32.xlu0 %v3878, 2
        %v4986 = vpop.permute.xlu0 %4985
        %4987 = vrot.lane.b32.xlu0 %v3976, 2
        %v4988 = vpop.permute.xlu0 %4987
        %4989 = vrot.lane.b32.xlu0 %v4074, 2
        %v4990 = vpop.permute.xlu0 %4989
        %4991 = vrot.lane.b32.xlu0 %v4172, 2
        %v4992 = vpop.permute.xlu0 %4991
        %4993 = vrot.lane.b32.xlu0 %v4270, 2
        %v4994 = vpop.permute.xlu0 %4993
        %4995 = vrot.lane.b32.xlu0 %v4368, 2
        %v4996 = vpop.permute.xlu0 %4995
        %4997 = vrot.lane.b32.xlu0 %v4466, 2
        %v4998 = vpop.permute.xlu0 %4997
        %4999 = vrot.lane.b32.xlu0 %v4564, 2
        %v5000 = vpop.permute.xlu0 %4999
        %5001 = vrot.lane.b32.xlu0 %v4662, 2
        %v5002 = vpop.permute.xlu0 %5001
        %5003 = vrot.lane.b32.xlu0 %v4760, 2
        %v5004 = vpop.permute.xlu0 %5003
        %5005 = vrot.lane.b32.xlu0 %v4858, 2
        %v5006 = vpop.permute.xlu0 %5005
        %5071 = vrot.lane.b32.xlu0 %v1804, 4
        %v5072 = vpop.permute.xlu0 %5071
        %5073 = vrot.lane.b32.xlu0 %v1902, 4
        %v5074 = vpop.permute.xlu0 %5073
        %5075 = vrot.lane.b32.xlu0 %v2000, 4
        %v5076 = vpop.permute.xlu0 %5075
        %5077 = vrot.lane.b32.xlu0 %v2098, 4
        %v5078 = vpop.permute.xlu0 %5077
        %5079 = vrot.lane.b32.xlu0 %v2196, 4
        %v5080 = vpop.permute.xlu0 %5079
        %5081 = vrot.lane.b32.xlu0 %v2294, 4
        %v5082 = vpop.permute.xlu0 %5081
        %5083 = vrot.lane.b32.xlu0 %v2392, 4
        %v5084 = vpop.permute.xlu0 %5083
        %5085 = vrot.lane.b32.xlu0 %v2490, 4
        %v5086 = vpop.permute.xlu0 %5085
        %5087 = vrot.lane.b32.xlu0 %v2588, 4
        %v5088 = vpop.permute.xlu0 %5087
        %5089 = vrot.lane.b32.xlu0 %v2686, 4
        %v5090 = vpop.permute.xlu0 %5089
        %5091 = vrot.lane.b32.xlu0 %v2784, 4
        %v5092 = vpop.permute.xlu0 %5091
        %5093 = vrot.lane.b32.xlu0 %v2882, 4
        %v5094 = vpop.permute.xlu0 %5093
        %5095 = vrot.lane.b32.xlu0 %v2980, 4
        %v5096 = vpop.permute.xlu0 %5095
        %5097 = vrot.lane.b32.xlu0 %v3078, 4
        %v5098 = vpop.permute.xlu0 %5097
        %5099 = vrot.lane.b32.xlu0 %v3176, 4
        %v5100 = vpop.permute.xlu0 %5099
        %5101 = vrot.lane.b32.xlu0 %v3274, 4
        %v5102 = vpop.permute.xlu0 %5101
        %5103 = vrot.lane.b32.xlu0 %v3372, 4
        %v5104 = vpop.permute.xlu0 %5103
        %5105 = vrot.lane.b32.xlu0 %v3470, 4
        %v5106 = vpop.permute.xlu0 %5105
        %5107 = vrot.lane.b32.xlu0 %v3568, 4
        %v5108 = vpop.permute.xlu0 %5107
        %5109 = vrot.lane.b32.xlu0 %v3666, 4
        %v5110 = vpop.permute.xlu0 %5109
        %5111 = vrot.lane.b32.xlu0 %v3764, 4
        %v5112 = vpop.permute.xlu0 %5111
        %5113 = vrot.lane.b32.xlu0 %v3862, 4
        %v5114 = vpop.permute.xlu0 %5113
        %5115 = vrot.lane.b32.xlu0 %v3960, 4
        %v5116 = vpop.permute.xlu0 %5115
        %5117 = vrot.lane.b32.xlu0 %v4058, 4
        %v5118 = vpop.permute.xlu0 %5117
        %5119 = vrot.lane.b32.xlu0 %v4156, 4
        %v5120 = vpop.permute.xlu0 %5119
        %5121 = vrot.lane.b32.xlu0 %v4254, 4
        %v5122 = vpop.permute.xlu0 %5121
        %5123 = vrot.lane.b32.xlu0 %v4352, 4
        %v5124 = vpop.permute.xlu0 %5123
        %5125 = vrot.lane.b32.xlu0 %v4450, 4
        %v5126 = vpop.permute.xlu0 %5125
        %5127 = vrot.lane.b32.xlu0 %v4548, 4
        %v5128 = vpop.permute.xlu0 %5127
        %5129 = vrot.lane.b32.xlu0 %v4646, 4
        %v5130 = vpop.permute.xlu0 %5129
        %5131 = vrot.lane.b32.xlu0 %v4744, 4
        %v5132 = vpop.permute.xlu0 %5131
        %5133 = vrot.lane.b32.xlu0 %v4842, 4
        %v5134 = vpop.permute.xlu0 %5133
        %5199 = vrot.lane.b32.xlu0 %v1821, 6
        %v5200 = vpop.permute.xlu0 %5199
        %5201 = vrot.lane.b32.xlu0 %v1919, 6
        %v5202 = vpop.permute.xlu0 %5201
        %5203 = vrot.lane.b32.xlu0 %v2017, 6
        %v5204 = vpop.permute.xlu0 %5203
        %5205 = vrot.lane.b32.xlu0 %v2115, 6
        %v5206 = vpop.permute.xlu0 %5205
        %5207 = vrot.lane.b32.xlu0 %v2213, 6
        %v5208 = vpop.permute.xlu0 %5207
        %5209 = vrot.lane.b32.xlu0 %v2311, 6
        %v5210 = vpop.permute.xlu0 %5209
        %5211 = vrot.lane.b32.xlu0 %v2409, 6
        %v5212 = vpop.permute.xlu0 %5211
        %5213 = vrot.lane.b32.xlu0 %v2507, 6
        %v5214 = vpop.permute.xlu0 %5213
        %5215 = vrot.lane.b32.xlu0 %v2605, 6
        %v5216 = vpop.permute.xlu0 %5215
        %5217 = vrot.lane.b32.xlu0 %v2703, 6
        %v5218 = vpop.permute.xlu0 %5217
        %5219 = vrot.lane.b32.xlu0 %v2801, 6
        %v5220 = vpop.permute.xlu0 %5219
        %5221 = vrot.lane.b32.xlu0 %v2899, 6
        %v5222 = vpop.permute.xlu0 %5221
        %5223 = vrot.lane.b32.xlu0 %v2997, 6
        %v5224 = vpop.permute.xlu0 %5223
        %5225 = vrot.lane.b32.xlu0 %v3095, 6
        %v5226 = vpop.permute.xlu0 %5225
        %5227 = vrot.lane.b32.xlu0 %v3193, 6
        %v5228 = vpop.permute.xlu0 %5227
        %5229 = vrot.lane.b32.xlu0 %v3291, 6
        %v5230 = vpop.permute.xlu0 %5229
        %5231 = vrot.lane.b32.xlu0 %v3389, 6
        %v5232 = vpop.permute.xlu0 %5231
        %5233 = vrot.lane.b32.xlu0 %v3487, 6
        %v5234 = vpop.permute.xlu0 %5233
        %5235 = vrot.lane.b32.xlu0 %v3585, 6
        %v5236 = vpop.permute.xlu0 %5235
        %5237 = vrot.lane.b32.xlu0 %v3683, 6
        %v5238 = vpop.permute.xlu0 %5237
        %5239 = vrot.lane.b32.xlu0 %v3781, 6
        %v5240 = vpop.permute.xlu0 %5239
        %5241 = vrot.lane.b32.xlu0 %v3879, 6
        %v5242 = vpop.permute.xlu0 %5241
        %5243 = vrot.lane.b32.xlu0 %v3977, 6
        %v5244 = vpop.permute.xlu0 %5243
        %5245 = vrot.lane.b32.xlu0 %v4075, 6
        %v5246 = vpop.permute.xlu0 %5245
        %5247 = vrot.lane.b32.xlu0 %v4173, 6
        %v5248 = vpop.permute.xlu0 %5247
        %5249 = vrot.lane.b32.xlu0 %v4271, 6
        %v5250 = vpop.permute.xlu0 %5249
        %5251 = vrot.lane.b32.xlu0 %v4369, 6
        %v5252 = vpop.permute.xlu0 %5251
        %5253 = vrot.lane.b32.xlu0 %v4467, 6
        %v5254 = vpop.permute.xlu0 %5253
        %5255 = vrot.lane.b32.xlu0 %v4565, 6
        %v5256 = vpop.permute.xlu0 %5255
        %5257 = vrot.lane.b32.xlu0 %v4663, 6
        %v5258 = vpop.permute.xlu0 %5257
        %5259 = vrot.lane.b32.xlu0 %v4761, 6
        %v5260 = vpop.permute.xlu0 %5259
        %5261 = vrot.lane.b32.xlu0 %v4859, 6
        %v5262 = vpop.permute.xlu0 %5261
        %5327 = vrot.lane.b32.xlu0 %v1812, 8
        %v5328 = vpop.permute.xlu0 %5327
        %5329 = vrot.lane.b32.xlu0 %v1910, 8
        %v5330 = vpop.permute.xlu0 %5329
        %5331 = vrot.lane.b32.xlu0 %v2008, 8
        %v5332 = vpop.permute.xlu0 %5331
        %5333 = vrot.lane.b32.xlu0 %v2106, 8
        %v5334 = vpop.permute.xlu0 %5333
        %5335 = vrot.lane.b32.xlu0 %v2204, 8
        %v5336 = vpop.permute.xlu0 %5335
        %5337 = vrot.lane.b32.xlu0 %v2302, 8
        %v5338 = vpop.permute.xlu0 %5337
        %5339 = vrot.lane.b32.xlu0 %v2400, 8
        %v5340 = vpop.permute.xlu0 %5339
        %5341 = vrot.lane.b32.xlu0 %v2498, 8
        %v5342 = vpop.permute.xlu0 %5341
        %5343 = vrot.lane.b32.xlu0 %v2596, 8
        %v5344 = vpop.permute.xlu0 %5343
        %5345 = vrot.lane.b32.xlu0 %v2694, 8
        %v5346 = vpop.permute.xlu0 %5345
        %5347 = vrot.lane.b32.xlu0 %v2792, 8
        %v5348 = vpop.permute.xlu0 %5347
        %5349 = vrot.lane.b32.xlu0 %v2890, 8
        %v5350 = vpop.permute.xlu0 %5349
        %5351 = vrot.lane.b32.xlu0 %v2988, 8
        %v5352 = vpop.permute.xlu0 %5351
        %5353 = vrot.lane.b32.xlu0 %v3086, 8
        %v5354 = vpop.permute.xlu0 %5353
        %5355 = vrot.lane.b32.xlu0 %v3184, 8
        %v5356 = vpop.permute.xlu0 %5355
        %5357 = vrot.lane.b32.xlu0 %v3282, 8
        %v5358 = vpop.permute.xlu0 %5357
        %5359 = vrot.lane.b32.xlu0 %v3380, 8
        %v5360 = vpop.permute.xlu0 %5359
        %5361 = vrot.lane.b32.xlu0 %v3478, 8
        %v5362 = vpop.permute.xlu0 %5361
        %5363 = vrot.lane.b32.xlu0 %v3576, 8
        %v5364 = vpop.permute.xlu0 %5363
        %5365 = vrot.lane.b32.xlu0 %v3674, 8
        %v5366 = vpop.permute.xlu0 %5365
        %5367 = vrot.lane.b32.xlu0 %v3772, 8
        %v5368 = vpop.permute.xlu0 %5367
        %5369 = vrot.lane.b32.xlu0 %v3870, 8
        %v5370 = vpop.permute.xlu0 %5369
        %5371 = vrot.lane.b32.xlu0 %v3968, 8
        %v5372 = vpop.permute.xlu0 %5371
        %5373 = vrot.lane.b32.xlu0 %v4066, 8
        %v5374 = vpop.permute.xlu0 %5373
        %5375 = vrot.lane.b32.xlu0 %v4164, 8
        %v5376 = vpop.permute.xlu0 %5375
        %5377 = vrot.lane.b32.xlu0 %v4262, 8
        %v5378 = vpop.permute.xlu0 %5377
        %5379 = vrot.lane.b32.xlu0 %v4360, 8
        %v5380 = vpop.permute.xlu0 %5379
        %5381 = vrot.lane.b32.xlu0 %v4458, 8
        %v5382 = vpop.permute.xlu0 %5381
        %5383 = vrot.lane.b32.xlu0 %v4556, 8
        %v5384 = vpop.permute.xlu0 %5383
        %5385 = vrot.lane.b32.xlu0 %v4654, 8
        %v5386 = vpop.permute.xlu0 %5385
        %5387 = vrot.lane.b32.xlu0 %v4752, 8
        %v5388 = vpop.permute.xlu0 %5387
        %5389 = vrot.lane.b32.xlu0 %v4850, 8
        %v5390 = vpop.permute.xlu0 %5389
        %5455 = vrot.lane.b32.xlu0 %v1822, 10
        %v5456 = vpop.permute.xlu0 %5455
        %5457 = vrot.lane.b32.xlu0 %v1920, 10
        %v5458 = vpop.permute.xlu0 %5457
        %5459 = vrot.lane.b32.xlu0 %v2018, 10
        %v5460 = vpop.permute.xlu0 %5459
        %5461 = vrot.lane.b32.xlu0 %v2116, 10
        %v5462 = vpop.permute.xlu0 %5461
        %5463 = vrot.lane.b32.xlu0 %v2214, 10
        %v5464 = vpop.permute.xlu0 %5463
        %5465 = vrot.lane.b32.xlu0 %v2312, 10
        %v5466 = vpop.permute.xlu0 %5465
        %5467 = vrot.lane.b32.xlu0 %v2410, 10
        %v5468 = vpop.permute.xlu0 %5467
        %5469 = vrot.lane.b32.xlu0 %v2508, 10
        %v5470 = vpop.permute.xlu0 %5469
        %5471 = vrot.lane.b32.xlu0 %v2606, 10
        %v5472 = vpop.permute.xlu0 %5471
        %5473 = vrot.lane.b32.xlu0 %v2704, 10
        %v5474 = vpop.permute.xlu0 %5473
        %5475 = vrot.lane.b32.xlu0 %v2802, 10
        %v5476 = vpop.permute.xlu0 %5475
        %5477 = vrot.lane.b32.xlu0 %v2900, 10
        %v5478 = vpop.permute.xlu0 %5477
        %5479 = vrot.lane.b32.xlu0 %v2998, 10
        %v5480 = vpop.permute.xlu0 %5479
        %5481 = vrot.lane.b32.xlu0 %v3096, 10
        %v5482 = vpop.permute.xlu0 %5481
        %5483 = vrot.lane.b32.xlu0 %v3194, 10
        %v5484 = vpop.permute.xlu0 %5483
        %5485 = vrot.lane.b32.xlu0 %v3292, 10
        %v5486 = vpop.permute.xlu0 %5485
        %5487 = vrot.lane.b32.xlu0 %v3390, 10
        %v5488 = vpop.permute.xlu0 %5487
        %5489 = vrot.lane.b32.xlu0 %v3488, 10
        %v5490 = vpop.permute.xlu0 %5489
        %5491 = vrot.lane.b32.xlu0 %v3586, 10
        %v5492 = vpop.permute.xlu0 %5491
        %5493 = vrot.lane.b32.xlu0 %v3684, 10
        %v5494 = vpop.permute.xlu0 %5493
        %5495 = vrot.lane.b32.xlu0 %v3782, 10
        %v5496 = vpop.permute.xlu0 %5495
        %5497 = vrot.lane.b32.xlu0 %v3880, 10
        %v5498 = vpop.permute.xlu0 %5497
        %5499 = vrot.lane.b32.xlu0 %v3978, 10
        %v5500 = vpop.permute.xlu0 %5499
        %5501 = vrot.lane.b32.xlu0 %v4076, 10
        %v5502 = vpop.permute.xlu0 %5501
        %5503 = vrot.lane.b32.xlu0 %v4174, 10
        %v5504 = vpop.permute.xlu0 %5503
        %5505 = vrot.lane.b32.xlu0 %v4272, 10
        %v5506 = vpop.permute.xlu0 %5505
        %5507 = vrot.lane.b32.xlu0 %v4370, 10
        %v5508 = vpop.permute.xlu0 %5507
        %5509 = vrot.lane.b32.xlu0 %v4468, 10
        %v5510 = vpop.permute.xlu0 %5509
        %5511 = vrot.lane.b32.xlu0 %v4566, 10
        %v5512 = vpop.permute.xlu0 %5511
        %5513 = vrot.lane.b32.xlu0 %v4664, 10
        %v5514 = vpop.permute.xlu0 %5513
        %5515 = vrot.lane.b32.xlu0 %v4762, 10
        %v5516 = vpop.permute.xlu0 %5515
        %5517 = vrot.lane.b32.xlu0 %v4860, 10
        %v5518 = vpop.permute.xlu0 %5517
        %5583 = vrot.lane.b32.xlu0 %v1819, 12
        %v5584 = vpop.permute.xlu0 %5583
        %5585 = vrot.lane.b32.xlu0 %v1917, 12
        %v5586 = vpop.permute.xlu0 %5585
        %5587 = vrot.lane.b32.xlu0 %v2015, 12
        %v5588 = vpop.permute.xlu0 %5587
        %5589 = vrot.lane.b32.xlu0 %v2113, 12
        %v5590 = vpop.permute.xlu0 %5589
        %5591 = vrot.lane.b32.xlu0 %v2211, 12
        %v5592 = vpop.permute.xlu0 %5591
        %5593 = vrot.lane.b32.xlu0 %v2309, 12
        %v5594 = vpop.permute.xlu0 %5593
        %5595 = vrot.lane.b32.xlu0 %v2407, 12
        %v5596 = vpop.permute.xlu0 %5595
        %5597 = vrot.lane.b32.xlu0 %v2505, 12
        %v5598 = vpop.permute.xlu0 %5597
        %5599 = vrot.lane.b32.xlu0 %v2603, 12
        %v5600 = vpop.permute.xlu0 %5599
        %5601 = vrot.lane.b32.xlu0 %v2701, 12
        %v5602 = vpop.permute.xlu0 %5601
        %5603 = vrot.lane.b32.xlu0 %v2799, 12
        %v5604 = vpop.permute.xlu0 %5603
        %5605 = vrot.lane.b32.xlu0 %v2897, 12
        %v5606 = vpop.permute.xlu0 %5605
        %5607 = vrot.lane.b32.xlu0 %v2995, 12
        %v5608 = vpop.permute.xlu0 %5607
        %5609 = vrot.lane.b32.xlu0 %v3093, 12
        %v5610 = vpop.permute.xlu0 %5609
        %5611 = vrot.lane.b32.xlu0 %v3191, 12
        %v5612 = vpop.permute.xlu0 %5611
        %5613 = vrot.lane.b32.xlu0 %v3289, 12
        %v5614 = vpop.permute.xlu0 %5613
        %5615 = vrot.lane.b32.xlu0 %v3387, 12
        %v5616 = vpop.permute.xlu0 %5615
        %5617 = vrot.lane.b32.xlu0 %v3485, 12
        %v5618 = vpop.permute.xlu0 %5617
        %5619 = vrot.lane.b32.xlu0 %v3583, 12
        %v5620 = vpop.permute.xlu0 %5619
        %5621 = vrot.lane.b32.xlu0 %v3681, 12
        %v5622 = vpop.permute.xlu0 %5621
        %5623 = vrot.lane.b32.xlu0 %v3779, 12
        %v5624 = vpop.permute.xlu0 %5623
        %5625 = vrot.lane.b32.xlu0 %v3877, 12
        %v5626 = vpop.permute.xlu0 %5625
        %5627 = vrot.lane.b32.xlu0 %v3975, 12
        %v5628 = vpop.permute.xlu0 %5627
        %5629 = vrot.lane.b32.xlu0 %v4073, 12
        %v5630 = vpop.permute.xlu0 %5629
        %5631 = vrot.lane.b32.xlu0 %v4171, 12
        %v5632 = vpop.permute.xlu0 %5631
        %5633 = vrot.lane.b32.xlu0 %v4269, 12
        %v5634 = vpop.permute.xlu0 %5633
        %5635 = vrot.lane.b32.xlu0 %v4367, 12
        %v5636 = vpop.permute.xlu0 %5635
        %5637 = vrot.lane.b32.xlu0 %v4465, 12
        %v5638 = vpop.permute.xlu0 %5637
        %5639 = vrot.lane.b32.xlu0 %v4563, 12
        %v5640 = vpop.permute.xlu0 %5639
        %5641 = vrot.lane.b32.xlu0 %v4661, 12
        %v5642 = vpop.permute.xlu0 %5641
        %5643 = vrot.lane.b32.xlu0 %v4759, 12
        %v5644 = vpop.permute.xlu0 %5643
        %5645 = vrot.lane.b32.xlu0 %v4857, 12
        %v5646 = vpop.permute.xlu0 %5645
        %5711 = vrot.lane.b32.xlu0 %v1823, 14
        %v5712 = vpop.permute.xlu0 %5711
        %5713 = vrot.lane.b32.xlu0 %v1921, 14
        %v5714 = vpop.permute.xlu0 %5713
        %5715 = vrot.lane.b32.xlu0 %v2019, 14
        %v5716 = vpop.permute.xlu0 %5715
        %5717 = vrot.lane.b32.xlu0 %v2117, 14
        %v5718 = vpop.permute.xlu0 %5717
        %5719 = vrot.lane.b32.xlu0 %v2215, 14
        %v5720 = vpop.permute.xlu0 %5719
        %5721 = vrot.lane.b32.xlu0 %v2313, 14
        %v5722 = vpop.permute.xlu0 %5721
        %5723 = vrot.lane.b32.xlu0 %v2411, 14
        %v5724 = vpop.permute.xlu0 %5723
        %5725 = vrot.lane.b32.xlu0 %v2509, 14
        %v5726 = vpop.permute.xlu0 %5725
        %5727 = vrot.lane.b32.xlu0 %v2607, 14
        %v5728 = vpop.permute.xlu0 %5727
        %5729 = vrot.lane.b32.xlu0 %v2705, 14
        %v5730 = vpop.permute.xlu0 %5729
        %5731 = vrot.lane.b32.xlu0 %v2803, 14
        %v5732 = vpop.permute.xlu0 %5731
        %5733 = vrot.lane.b32.xlu0 %v2901, 14
        %v5734 = vpop.permute.xlu0 %5733
        %5735 = vrot.lane.b32.xlu0 %v2999, 14
        %v5736 = vpop.permute.xlu0 %5735
        %5737 = vrot.lane.b32.xlu0 %v3097, 14
        %v5738 = vpop.permute.xlu0 %5737
        %5739 = vrot.lane.b32.xlu0 %v3195, 14
        %v5740 = vpop.permute.xlu0 %5739
        %5741 = vrot.lane.b32.xlu0 %v3293, 14
        %v5742 = vpop.permute.xlu0 %5741
        %5743 = vrot.lane.b32.xlu0 %v3391, 14
        %v5744 = vpop.permute.xlu0 %5743
        %5745 = vrot.lane.b32.xlu0 %v3489, 14
        %v5746 = vpop.permute.xlu0 %5745
        %5747 = vrot.lane.b32.xlu0 %v3587, 14
        %v5748 = vpop.permute.xlu0 %5747
        %5749 = vrot.lane.b32.xlu0 %v3685, 14
        %v5750 = vpop.permute.xlu0 %5749
        %5751 = vrot.lane.b32.xlu0 %v3783, 14
        %v5752 = vpop.permute.xlu0 %5751
        %5753 = vrot.lane.b32.xlu0 %v3881, 14
        %v5754 = vpop.permute.xlu0 %5753
        %5755 = vrot.lane.b32.xlu0 %v3979, 14
        %v5756 = vpop.permute.xlu0 %5755
        %5757 = vrot.lane.b32.xlu0 %v4077, 14
        %v5758 = vpop.permute.xlu0 %5757
        %5759 = vrot.lane.b32.xlu0 %v4175, 14
        %v5760 = vpop.permute.xlu0 %5759
        %5761 = vrot.lane.b32.xlu0 %v4273, 14
        %v5762 = vpop.permute.xlu0 %5761
        %5763 = vrot.lane.b32.xlu0 %v4371, 14
        %v5764 = vpop.permute.xlu0 %5763
        %5765 = vrot.lane.b32.xlu0 %v4469, 14
        %v5766 = vpop.permute.xlu0 %5765
        %5767 = vrot.lane.b32.xlu0 %v4567, 14
        %v5768 = vpop.permute.xlu0 %5767
        %5769 = vrot.lane.b32.xlu0 %v4665, 14
        %v5770 = vpop.permute.xlu0 %5769
        %5771 = vrot.lane.b32.xlu0 %v4763, 14
        %v5772 = vpop.permute.xlu0 %5771
        %5773 = vrot.lane.b32.xlu0 %v4861, 14
        %v5774 = vpop.permute.xlu0 %5773
        %5839 = vrot.lane.b32.xlu0 %v1846, 16
        %v5840 = vpop.permute.xlu0 %5839
        %5841 = vrot.lane.b32.xlu0 %v1944, 16
        %v5842 = vpop.permute.xlu0 %5841
        %5843 = vrot.lane.b32.xlu0 %v2042, 16
        %v5844 = vpop.permute.xlu0 %5843
        %5845 = vrot.lane.b32.xlu0 %v2140, 16
        %v5846 = vpop.permute.xlu0 %5845
        %5847 = vrot.lane.b32.xlu0 %v2238, 16
        %v5848 = vpop.permute.xlu0 %5847
        %5849 = vrot.lane.b32.xlu0 %v2336, 16
        %v5850 = vpop.permute.xlu0 %5849
        %5851 = vrot.lane.b32.xlu0 %v2434, 16
        %v5852 = vpop.permute.xlu0 %5851
        %5853 = vrot.lane.b32.xlu0 %v2532, 16
        %v5854 = vpop.permute.xlu0 %5853
        %5855 = vrot.lane.b32.xlu0 %v2630, 16
        %v5856 = vpop.permute.xlu0 %5855
        %5857 = vrot.lane.b32.xlu0 %v2728, 16
        %v5858 = vpop.permute.xlu0 %5857
        %5859 = vrot.lane.b32.xlu0 %v2826, 16
        %v5860 = vpop.permute.xlu0 %5859
        %5861 = vrot.lane.b32.xlu0 %v2924, 16
        %v5862 = vpop.permute.xlu0 %5861
        %5863 = vrot.lane.b32.xlu0 %v3022, 16
        %v5864 = vpop.permute.xlu0 %5863
        %5865 = vrot.lane.b32.xlu0 %v3120, 16
        %v5866 = vpop.permute.xlu0 %5865
        %5867 = vrot.lane.b32.xlu0 %v3218, 16
        %v5868 = vpop.permute.xlu0 %5867
        %5869 = vrot.lane.b32.xlu0 %v3316, 16
        %v5870 = vpop.permute.xlu0 %5869
        %5871 = vrot.lane.b32.xlu0 %v3414, 16
        %v5872 = vpop.permute.xlu0 %5871
        %5873 = vrot.lane.b32.xlu0 %v3512, 16
        %v5874 = vpop.permute.xlu0 %5873
        %5875 = vrot.lane.b32.xlu0 %v3610, 16
        %v5876 = vpop.permute.xlu0 %5875
        %5877 = vrot.lane.b32.xlu0 %v3708, 16
        %v5878 = vpop.permute.xlu0 %5877
        %5879 = vrot.lane.b32.xlu0 %v3806, 16
        %v5880 = vpop.permute.xlu0 %5879
        %5881 = vrot.lane.b32.xlu0 %v3904, 16
        %v5882 = vpop.permute.xlu0 %5881
        %5883 = vrot.lane.b32.xlu0 %v4002, 16
        %v5884 = vpop.permute.xlu0 %5883
        %5885 = vrot.lane.b32.xlu0 %v4100, 16
        %v5886 = vpop.permute.xlu0 %5885
        %5887 = vrot.lane.b32.xlu0 %v4198, 16
        %v5888 = vpop.permute.xlu0 %5887
        %5889 = vrot.lane.b32.xlu0 %v4296, 16
        %v5890 = vpop.permute.xlu0 %5889
        %5891 = vrot.lane.b32.xlu0 %v4394, 16
        %v5892 = vpop.permute.xlu0 %5891
        %5893 = vrot.lane.b32.xlu0 %v4492, 16
        %v5894 = vpop.permute.xlu0 %5893
        %5895 = vrot.lane.b32.xlu0 %v4590, 16
        %v5896 = vpop.permute.xlu0 %5895
        %5897 = vrot.lane.b32.xlu0 %v4688, 16
        %v5898 = vpop.permute.xlu0 %5897
        %5899 = vrot.lane.b32.xlu0 %v4786, 16
        %v5900 = vpop.permute.xlu0 %5899
        %5901 = vrot.lane.b32.xlu0 %v4884, 16
        %v5902 = vpop.permute.xlu0 %5901
        %5967 = vrot.lane.b32.xlu0 %v1869, 18
        %v5968 = vpop.permute.xlu0 %5967
        %5969 = vrot.lane.b32.xlu0 %v1967, 18
        %v5970 = vpop.permute.xlu0 %5969
        %5971 = vrot.lane.b32.xlu0 %v2065, 18
        %v5972 = vpop.permute.xlu0 %5971
        %5973 = vrot.lane.b32.xlu0 %v2163, 18
        %v5974 = vpop.permute.xlu0 %5973
        %5975 = vrot.lane.b32.xlu0 %v2261, 18
        %v5976 = vpop.permute.xlu0 %5975
        %5977 = vrot.lane.b32.xlu0 %v2359, 18
        %v5978 = vpop.permute.xlu0 %5977
        %5979 = vrot.lane.b32.xlu0 %v2457, 18
        %v5980 = vpop.permute.xlu0 %5979
        %5981 = vrot.lane.b32.xlu0 %v2555, 18
        %v5982 = vpop.permute.xlu0 %5981
        %5983 = vrot.lane.b32.xlu0 %v2653, 18
        %v5984 = vpop.permute.xlu0 %5983
        %5985 = vrot.lane.b32.xlu0 %v2751, 18
        %v5986 = vpop.permute.xlu0 %5985
        %5987 = vrot.lane.b32.xlu0 %v2849, 18
        %v5988 = vpop.permute.xlu0 %5987
        %5989 = vrot.lane.b32.xlu0 %v2947, 18
        %v5990 = vpop.permute.xlu0 %5989
        %5991 = vrot.lane.b32.xlu0 %v3045, 18
        %v5992 = vpop.permute.xlu0 %5991
        %5993 = vrot.lane.b32.xlu0 %v3143, 18
        %v5994 = vpop.permute.xlu0 %5993
        %5995 = vrot.lane.b32.xlu0 %v3241, 18
        %v5996 = vpop.permute.xlu0 %5995
        %5997 = vrot.lane.b32.xlu0 %v3339, 18
        %v5998 = vpop.permute.xlu0 %5997
        %5999 = vrot.lane.b32.xlu0 %v3437, 18
        %v6000 = vpop.permute.xlu0 %5999
        %6001 = vrot.lane.b32.xlu0 %v3535, 18
        %v6002 = vpop.permute.xlu0 %6001
        %6003 = vrot.lane.b32.xlu0 %v3633, 18
        %v6004 = vpop.permute.xlu0 %6003
        %6005 = vrot.lane.b32.xlu0 %v3731, 18
        %v6006 = vpop.permute.xlu0 %6005
        %6007 = vrot.lane.b32.xlu0 %v3829, 18
        %v6008 = vpop.permute.xlu0 %6007
        %6009 = vrot.lane.b32.xlu0 %v3927, 18
        %v6010 = vpop.permute.xlu0 %6009
        %6011 = vrot.lane.b32.xlu0 %v4025, 18
        %v6012 = vpop.permute.xlu0 %6011
        %6013 = vrot.lane.b32.xlu0 %v4123, 18
        %v6014 = vpop.permute.xlu0 %6013
        %6015 = vrot.lane.b32.xlu0 %v4221, 18
        %v6016 = vpop.permute.xlu0 %6015
        %6017 = vrot.lane.b32.xlu0 %v4319, 18
        %v6018 = vpop.permute.xlu0 %6017
        %6019 = vrot.lane.b32.xlu0 %v4417, 18
        %v6020 = vpop.permute.xlu0 %6019
        %6021 = vrot.lane.b32.xlu0 %v4515, 18
        %v6022 = vpop.permute.xlu0 %6021
        %6023 = vrot.lane.b32.xlu0 %v4613, 18
        %v6024 = vpop.permute.xlu0 %6023
        %6025 = vrot.lane.b32.xlu0 %v4711, 18
        %v6026 = vpop.permute.xlu0 %6025
        %6027 = vrot.lane.b32.xlu0 %v4809, 18
        %v6028 = vpop.permute.xlu0 %6027
        %6029 = vrot.lane.b32.xlu0 %v4907, 18
        %v6030 = vpop.permute.xlu0 %6029
        %6095 = vrot.lane.b32.xlu0 %v1853, 20
        %v6096 = vpop.permute.xlu0 %6095
        %6097 = vrot.lane.b32.xlu0 %v1951, 20
        %v6098 = vpop.permute.xlu0 %6097
        %6099 = vrot.lane.b32.xlu0 %v2049, 20
        %v6100 = vpop.permute.xlu0 %6099
        %6101 = vrot.lane.b32.xlu0 %v2147, 20
        %v6102 = vpop.permute.xlu0 %6101
        %6103 = vrot.lane.b32.xlu0 %v2245, 20
        %v6104 = vpop.permute.xlu0 %6103
        %6105 = vrot.lane.b32.xlu0 %v2343, 20
        %v6106 = vpop.permute.xlu0 %6105
        %6107 = vrot.lane.b32.xlu0 %v2441, 20
        %v6108 = vpop.permute.xlu0 %6107
        %6109 = vrot.lane.b32.xlu0 %v2539, 20
        %v6110 = vpop.permute.xlu0 %6109
        %6111 = vrot.lane.b32.xlu0 %v2637, 20
        %v6112 = vpop.permute.xlu0 %6111
        %6113 = vrot.lane.b32.xlu0 %v2735, 20
        %v6114 = vpop.permute.xlu0 %6113
        %6115 = vrot.lane.b32.xlu0 %v2833, 20
        %v6116 = vpop.permute.xlu0 %6115
        %6117 = vrot.lane.b32.xlu0 %v2931, 20
        %v6118 = vpop.permute.xlu0 %6117
        %6119 = vrot.lane.b32.xlu0 %v3029, 20
        %v6120 = vpop.permute.xlu0 %6119
        %6121 = vrot.lane.b32.xlu0 %v3127, 20
        %v6122 = vpop.permute.xlu0 %6121
        %6123 = vrot.lane.b32.xlu0 %v3225, 20
        %v6124 = vpop.permute.xlu0 %6123
        %6125 = vrot.lane.b32.xlu0 %v3323, 20
        %v6126 = vpop.permute.xlu0 %6125
        %6127 = vrot.lane.b32.xlu0 %v3421, 20
        %v6128 = vpop.permute.xlu0 %6127
        %6129 = vrot.lane.b32.xlu0 %v3519, 20
        %v6130 = vpop.permute.xlu0 %6129
        %6131 = vrot.lane.b32.xlu0 %v3617, 20
        %v6132 = vpop.permute.xlu0 %6131
        %6133 = vrot.lane.b32.xlu0 %v3715, 20
        %v6134 = vpop.permute.xlu0 %6133
        %6135 = vrot.lane.b32.xlu0 %v3813, 20
        %v6136 = vpop.permute.xlu0 %6135
        %6137 = vrot.lane.b32.xlu0 %v3911, 20
        %v6138 = vpop.permute.xlu0 %6137
        %6139 = vrot.lane.b32.xlu0 %v4009, 20
        %v6140 = vpop.permute.xlu0 %6139
        %6141 = vrot.lane.b32.xlu0 %v4107, 20
        %v6142 = vpop.permute.xlu0 %6141
        %6143 = vrot.lane.b32.xlu0 %v4205, 20
        %v6144 = vpop.permute.xlu0 %6143
        %6145 = vrot.lane.b32.xlu0 %v4303, 20
        %v6146 = vpop.permute.xlu0 %6145
        %6147 = vrot.lane.b32.xlu0 %v4401, 20
        %v6148 = vpop.permute.xlu0 %6147
        %6149 = vrot.lane.b32.xlu0 %v4499, 20
        %v6150 = vpop.permute.xlu0 %6149
        %6151 = vrot.lane.b32.xlu0 %v4597, 20
        %v6152 = vpop.permute.xlu0 %6151
        %6153 = vrot.lane.b32.xlu0 %v4695, 20
        %v6154 = vpop.permute.xlu0 %6153
        %6155 = vrot.lane.b32.xlu0 %v4793, 20
        %v6156 = vpop.permute.xlu0 %6155
        %6157 = vrot.lane.b32.xlu0 %v4891, 20
        %v6158 = vpop.permute.xlu0 %6157
        %6223 = vrot.lane.b32.xlu0 %v1870, 22
        %v6224 = vpop.permute.xlu0 %6223
        %6225 = vrot.lane.b32.xlu0 %v1968, 22
        %v6226 = vpop.permute.xlu0 %6225
        %6227 = vrot.lane.b32.xlu0 %v2066, 22
        %v6228 = vpop.permute.xlu0 %6227
        %6229 = vrot.lane.b32.xlu0 %v2164, 22
        %v6230 = vpop.permute.xlu0 %6229
        %6231 = vrot.lane.b32.xlu0 %v2262, 22
        %v6232 = vpop.permute.xlu0 %6231
        %6233 = vrot.lane.b32.xlu0 %v2360, 22
        %v6234 = vpop.permute.xlu0 %6233
        %6235 = vrot.lane.b32.xlu0 %v2458, 22
        %v6236 = vpop.permute.xlu0 %6235
        %6237 = vrot.lane.b32.xlu0 %v2556, 22
        %v6238 = vpop.permute.xlu0 %6237
        %6239 = vrot.lane.b32.xlu0 %v2654, 22
        %v6240 = vpop.permute.xlu0 %6239
        %6241 = vrot.lane.b32.xlu0 %v2752, 22
        %v6242 = vpop.permute.xlu0 %6241
        %6243 = vrot.lane.b32.xlu0 %v2850, 22
        %v6244 = vpop.permute.xlu0 %6243
        %6245 = vrot.lane.b32.xlu0 %v2948, 22
        %v6246 = vpop.permute.xlu0 %6245
        %6247 = vrot.lane.b32.xlu0 %v3046, 22
        %v6248 = vpop.permute.xlu0 %6247
        %6249 = vrot.lane.b32.xlu0 %v3144, 22
        %v6250 = vpop.permute.xlu0 %6249
        %6251 = vrot.lane.b32.xlu0 %v3242, 22
        %v6252 = vpop.permute.xlu0 %6251
        %6253 = vrot.lane.b32.xlu0 %v3340, 22
        %v6254 = vpop.permute.xlu0 %6253
        %6255 = vrot.lane.b32.xlu0 %v3438, 22
        %v6256 = vpop.permute.xlu0 %6255
        %6257 = vrot.lane.b32.xlu0 %v3536, 22
        %v6258 = vpop.permute.xlu0 %6257
        %6259 = vrot.lane.b32.xlu0 %v3634, 22
        %v6260 = vpop.permute.xlu0 %6259
        %6261 = vrot.lane.b32.xlu0 %v3732, 22
        %v6262 = vpop.permute.xlu0 %6261
        %6263 = vrot.lane.b32.xlu0 %v3830, 22
        %v6264 = vpop.permute.xlu0 %6263
        %6265 = vrot.lane.b32.xlu0 %v3928, 22
        %v6266 = vpop.permute.xlu0 %6265
        %6267 = vrot.lane.b32.xlu0 %v4026, 22
        %v6268 = vpop.permute.xlu0 %6267
        %6269 = vrot.lane.b32.xlu0 %v4124, 22
        %v6270 = vpop.permute.xlu0 %6269
        %6271 = vrot.lane.b32.xlu0 %v4222, 22
        %v6272 = vpop.permute.xlu0 %6271
        %6273 = vrot.lane.b32.xlu0 %v4320, 22
        %v6274 = vpop.permute.xlu0 %6273
        %6275 = vrot.lane.b32.xlu0 %v4418, 22
        %v6276 = vpop.permute.xlu0 %6275
        %6277 = vrot.lane.b32.xlu0 %v4516, 22
        %v6278 = vpop.permute.xlu0 %6277
        %6279 = vrot.lane.b32.xlu0 %v4614, 22
        %v6280 = vpop.permute.xlu0 %6279
        %6281 = vrot.lane.b32.xlu0 %v4712, 22
        %v6282 = vpop.permute.xlu0 %6281
        %6283 = vrot.lane.b32.xlu0 %v4810, 22
        %v6284 = vpop.permute.xlu0 %6283
        %6285 = vrot.lane.b32.xlu0 %v4908, 22
        %v6286 = vpop.permute.xlu0 %6285
        %6351 = vrot.lane.b32.xlu0 %v1861, 24
        %v6352 = vpop.permute.xlu0 %6351
        %6353 = vrot.lane.b32.xlu0 %v1959, 24
        %v6354 = vpop.permute.xlu0 %6353
        %6355 = vrot.lane.b32.xlu0 %v2057, 24
        %v6356 = vpop.permute.xlu0 %6355
        %6357 = vrot.lane.b32.xlu0 %v2155, 24
        %v6358 = vpop.permute.xlu0 %6357
        %6359 = vrot.lane.b32.xlu0 %v2253, 24
        %v6360 = vpop.permute.xlu0 %6359
        %6361 = vrot.lane.b32.xlu0 %v2351, 24
        %v6362 = vpop.permute.xlu0 %6361
        %6363 = vrot.lane.b32.xlu0 %v2449, 24
        %v6364 = vpop.permute.xlu0 %6363
        %6365 = vrot.lane.b32.xlu0 %v2547, 24
        %v6366 = vpop.permute.xlu0 %6365
        %6367 = vrot.lane.b32.xlu0 %v2645, 24
        %v6368 = vpop.permute.xlu0 %6367
        %6369 = vrot.lane.b32.xlu0 %v2743, 24
        %v6370 = vpop.permute.xlu0 %6369
        %6371 = vrot.lane.b32.xlu0 %v2841, 24
        %v6372 = vpop.permute.xlu0 %6371
        %6373 = vrot.lane.b32.xlu0 %v2939, 24
        %v6374 = vpop.permute.xlu0 %6373
        %6375 = vrot.lane.b32.xlu0 %v3037, 24
        %v6376 = vpop.permute.xlu0 %6375
        %6377 = vrot.lane.b32.xlu0 %v3135, 24
        %v6378 = vpop.permute.xlu0 %6377
        %6379 = vrot.lane.b32.xlu0 %v3233, 24
        %v6380 = vpop.permute.xlu0 %6379
        %6381 = vrot.lane.b32.xlu0 %v3331, 24
        %v6382 = vpop.permute.xlu0 %6381
        %6383 = vrot.lane.b32.xlu0 %v3429, 24
        %v6384 = vpop.permute.xlu0 %6383
        %6385 = vrot.lane.b32.xlu0 %v3527, 24
        %v6386 = vpop.permute.xlu0 %6385
        %6387 = vrot.lane.b32.xlu0 %v3625, 24
        %v6388 = vpop.permute.xlu0 %6387
        %6389 = vrot.lane.b32.xlu0 %v3723, 24
        %v6390 = vpop.permute.xlu0 %6389
        %6391 = vrot.lane.b32.xlu0 %v3821, 24
        %v6392 = vpop.permute.xlu0 %6391
        %6393 = vrot.lane.b32.xlu0 %v3919, 24
        %v6394 = vpop.permute.xlu0 %6393
        %6395 = vrot.lane.b32.xlu0 %v4017, 24
        %v6396 = vpop.permute.xlu0 %6395
        %6397 = vrot.lane.b32.xlu0 %v4115, 24
        %v6398 = vpop.permute.xlu0 %6397
        %6399 = vrot.lane.b32.xlu0 %v4213, 24
        %v6400 = vpop.permute.xlu0 %6399
        %6401 = vrot.lane.b32.xlu0 %v4311, 24
        %v6402 = vpop.permute.xlu0 %6401
        %6403 = vrot.lane.b32.xlu0 %v4409, 24
        %v6404 = vpop.permute.xlu0 %6403
        %6405 = vrot.lane.b32.xlu0 %v4507, 24
        %v6406 = vpop.permute.xlu0 %6405
        %6407 = vrot.lane.b32.xlu0 %v4605, 24
        %v6408 = vpop.permute.xlu0 %6407
        %6409 = vrot.lane.b32.xlu0 %v4703, 24
        %v6410 = vpop.permute.xlu0 %6409
        %6411 = vrot.lane.b32.xlu0 %v4801, 24
        %v6412 = vpop.permute.xlu0 %6411
        %6413 = vrot.lane.b32.xlu0 %v4899, 24
        %v6414 = vpop.permute.xlu0 %6413
        %6479 = vrot.lane.b32.xlu0 %v1871, 26
        %v6480 = vpop.permute.xlu0 %6479
        %6481 = vrot.lane.b32.xlu0 %v1969, 26
        %v6482 = vpop.permute.xlu0 %6481
        %6483 = vrot.lane.b32.xlu0 %v2067, 26
        %v6484 = vpop.permute.xlu0 %6483
        %6485 = vrot.lane.b32.xlu0 %v2165, 26
        %v6486 = vpop.permute.xlu0 %6485
        %6487 = vrot.lane.b32.xlu0 %v2263, 26
        %v6488 = vpop.permute.xlu0 %6487
        %6489 = vrot.lane.b32.xlu0 %v2361, 26
        %v6490 = vpop.permute.xlu0 %6489
        %6491 = vrot.lane.b32.xlu0 %v2459, 26
        %v6492 = vpop.permute.xlu0 %6491
        %6493 = vrot.lane.b32.xlu0 %v2557, 26
        %v6494 = vpop.permute.xlu0 %6493
        %6495 = vrot.lane.b32.xlu0 %v2655, 26
        %v6496 = vpop.permute.xlu0 %6495
        %6497 = vrot.lane.b32.xlu0 %v2753, 26
        %v6498 = vpop.permute.xlu0 %6497
        %6499 = vrot.lane.b32.xlu0 %v2851, 26
        %v6500 = vpop.permute.xlu0 %6499
        %6501 = vrot.lane.b32.xlu0 %v2949, 26
        %v6502 = vpop.permute.xlu0 %6501
        %6503 = vrot.lane.b32.xlu0 %v3047, 26
        %v6504 = vpop.permute.xlu0 %6503
        %6505 = vrot.lane.b32.xlu0 %v3145, 26
        %v6506 = vpop.permute.xlu0 %6505
        %6507 = vrot.lane.b32.xlu0 %v3243, 26
        %v6508 = vpop.permute.xlu0 %6507
        %6509 = vrot.lane.b32.xlu0 %v3341, 26
        %v6510 = vpop.permute.xlu0 %6509
        %6511 = vrot.lane.b32.xlu0 %v3439, 26
        %v6512 = vpop.permute.xlu0 %6511
        %6513 = vrot.lane.b32.xlu0 %v3537, 26
        %v6514 = vpop.permute.xlu0 %6513
        %6515 = vrot.lane.b32.xlu0 %v3635, 26
        %v6516 = vpop.permute.xlu0 %6515
        %6517 = vrot.lane.b32.xlu0 %v3733, 26
        %v6518 = vpop.permute.xlu0 %6517
        %6519 = vrot.lane.b32.xlu0 %v3831, 26
        %v6520 = vpop.permute.xlu0 %6519
        %6521 = vrot.lane.b32.xlu0 %v3929, 26
        %v6522 = vpop.permute.xlu0 %6521
        %6523 = vrot.lane.b32.xlu0 %v4027, 26
        %v6524 = vpop.permute.xlu0 %6523
        %6525 = vrot.lane.b32.xlu0 %v4125, 26
        %v6526 = vpop.permute.xlu0 %6525
        %6527 = vrot.lane.b32.xlu0 %v4223, 26
        %v6528 = vpop.permute.xlu0 %6527
        %6529 = vrot.lane.b32.xlu0 %v4321, 26
        %v6530 = vpop.permute.xlu0 %6529
        %6531 = vrot.lane.b32.xlu0 %v4419, 26
        %v6532 = vpop.permute.xlu0 %6531
        %6533 = vrot.lane.b32.xlu0 %v4517, 26
        %v6534 = vpop.permute.xlu0 %6533
        %6535 = vrot.lane.b32.xlu0 %v4615, 26
        %v6536 = vpop.permute.xlu0 %6535
        %6537 = vrot.lane.b32.xlu0 %v4713, 26
        %v6538 = vpop.permute.xlu0 %6537
        %6539 = vrot.lane.b32.xlu0 %v4811, 26
        %v6540 = vpop.permute.xlu0 %6539
        %6541 = vrot.lane.b32.xlu0 %v4909, 26
        %v6542 = vpop.permute.xlu0 %6541
        %6607 = vrot.lane.b32.xlu0 %v1868, 28
        %v6608 = vpop.permute.xlu0 %6607
        %6609 = vrot.lane.b32.xlu0 %v1966, 28
        %v6610 = vpop.permute.xlu0 %6609
        %6611 = vrot.lane.b32.xlu0 %v2064, 28
        %v6612 = vpop.permute.xlu0 %6611
        %6613 = vrot.lane.b32.xlu0 %v2162, 28
        %v6614 = vpop.permute.xlu0 %6613
        %6615 = vrot.lane.b32.xlu0 %v2260, 28
        %v6616 = vpop.permute.xlu0 %6615
        %6617 = vrot.lane.b32.xlu0 %v2358, 28
        %v6618 = vpop.permute.xlu0 %6617
        %6619 = vrot.lane.b32.xlu0 %v2456, 28
        %v6620 = vpop.permute.xlu0 %6619
        %6621 = vrot.lane.b32.xlu0 %v2554, 28
        %v6622 = vpop.permute.xlu0 %6621
        %6623 = vrot.lane.b32.xlu0 %v2652, 28
        %v6624 = vpop.permute.xlu0 %6623
        %6625 = vrot.lane.b32.xlu0 %v2750, 28
        %v6626 = vpop.permute.xlu0 %6625
        %6627 = vrot.lane.b32.xlu0 %v2848, 28
        %v6628 = vpop.permute.xlu0 %6627
        %6629 = vrot.lane.b32.xlu0 %v2946, 28
        %v6630 = vpop.permute.xlu0 %6629
        %6631 = vrot.lane.b32.xlu0 %v3044, 28
        %v6632 = vpop.permute.xlu0 %6631
        %6633 = vrot.lane.b32.xlu0 %v3142, 28
        %v6634 = vpop.permute.xlu0 %6633
        %6635 = vrot.lane.b32.xlu0 %v3240, 28
        %v6636 = vpop.permute.xlu0 %6635
        %6637 = vrot.lane.b32.xlu0 %v3338, 28
        %v6638 = vpop.permute.xlu0 %6637
        %6639 = vrot.lane.b32.xlu0 %v3436, 28
        %v6640 = vpop.permute.xlu0 %6639
        %6641 = vrot.lane.b32.xlu0 %v3534, 28
        %v6642 = vpop.permute.xlu0 %6641
        %6643 = vrot.lane.b32.xlu0 %v3632, 28
        %v6644 = vpop.permute.xlu0 %6643
        %6645 = vrot.lane.b32.xlu0 %v3730, 28
        %v6646 = vpop.permute.xlu0 %6645
        %6647 = vrot.lane.b32.xlu0 %v3828, 28
        %v6648 = vpop.permute.xlu0 %6647
        %6649 = vrot.lane.b32.xlu0 %v3926, 28
        %v6650 = vpop.permute.xlu0 %6649
        %6651 = vrot.lane.b32.xlu0 %v4024, 28
        %v6652 = vpop.permute.xlu0 %6651
        %6653 = vrot.lane.b32.xlu0 %v4122, 28
        %v6654 = vpop.permute.xlu0 %6653
        %6655 = vrot.lane.b32.xlu0 %v4220, 28
        %v6656 = vpop.permute.xlu0 %6655
        %6657 = vrot.lane.b32.xlu0 %v4318, 28
        %v6658 = vpop.permute.xlu0 %6657
        %6659 = vrot.lane.b32.xlu0 %v4416, 28
        %v6660 = vpop.permute.xlu0 %6659
        %6661 = vrot.lane.b32.xlu0 %v4514, 28
        %v6662 = vpop.permute.xlu0 %6661
        %6663 = vrot.lane.b32.xlu0 %v4612, 28
        %v6664 = vpop.permute.xlu0 %6663
        %6665 = vrot.lane.b32.xlu0 %v4710, 28
        %v6666 = vpop.permute.xlu0 %6665
        %6667 = vrot.lane.b32.xlu0 %v4808, 28
        %v6668 = vpop.permute.xlu0 %6667
        %6669 = vrot.lane.b32.xlu0 %v4906, 28
        %v6670 = vpop.permute.xlu0 %6669
        %6735 = vrot.lane.b32.xlu0 %v1872, 30
        %v6736 = vpop.permute.xlu0 %6735
        %6737 = vrot.lane.b32.xlu0 %v1970, 30
        %v6738 = vpop.permute.xlu0 %6737
        %6739 = vrot.lane.b32.xlu0 %v2068, 30
        %v6740 = vpop.permute.xlu0 %6739
        %6741 = vrot.lane.b32.xlu0 %v2166, 30
        %v6742 = vpop.permute.xlu0 %6741
        %6743 = vrot.lane.b32.xlu0 %v2264, 30
        %v6744 = vpop.permute.xlu0 %6743
        %6745 = vrot.lane.b32.xlu0 %v2362, 30
        %v6746 = vpop.permute.xlu0 %6745
        %6747 = vrot.lane.b32.xlu0 %v2460, 30
        %v6748 = vpop.permute.xlu0 %6747
        %6749 = vrot.lane.b32.xlu0 %v2558, 30
        %v6750 = vpop.permute.xlu0 %6749
        %6751 = vrot.lane.b32.xlu0 %v2656, 30
        %v6752 = vpop.permute.xlu0 %6751
        %6753 = vrot.lane.b32.xlu0 %v2754, 30
        %v6754 = vpop.permute.xlu0 %6753
        %6755 = vrot.lane.b32.xlu0 %v2852, 30
        %v6756 = vpop.permute.xlu0 %6755
        %6757 = vrot.lane.b32.xlu0 %v2950, 30
        %v6758 = vpop.permute.xlu0 %6757
        %6759 = vrot.lane.b32.xlu0 %v3048, 30
        %v6760 = vpop.permute.xlu0 %6759
        %6761 = vrot.lane.b32.xlu0 %v3146, 30
        %v6762 = vpop.permute.xlu0 %6761
        %6763 = vrot.lane.b32.xlu0 %v3244, 30
        %v6764 = vpop.permute.xlu0 %6763
        %6765 = vrot.lane.b32.xlu0 %v3342, 30
        %v6766 = vpop.permute.xlu0 %6765
        %6767 = vrot.lane.b32.xlu0 %v3440, 30
        %v6768 = vpop.permute.xlu0 %6767
        %6769 = vrot.lane.b32.xlu0 %v3538, 30
        %v6770 = vpop.permute.xlu0 %6769
        %6771 = vrot.lane.b32.xlu0 %v3636, 30
        %v6772 = vpop.permute.xlu0 %6771
        %6773 = vrot.lane.b32.xlu0 %v3734, 30
        %v6774 = vpop.permute.xlu0 %6773
        %6775 = vrot.lane.b32.xlu0 %v3832, 30
        %v6776 = vpop.permute.xlu0 %6775
        %6777 = vrot.lane.b32.xlu0 %v3930, 30
        %v6778 = vpop.permute.xlu0 %6777
        %6779 = vrot.lane.b32.xlu0 %v4028, 30
        %v6780 = vpop.permute.xlu0 %6779
        %6781 = vrot.lane.b32.xlu0 %v4126, 30
        %v6782 = vpop.permute.xlu0 %6781
        %6783 = vrot.lane.b32.xlu0 %v4224, 30
        %v6784 = vpop.permute.xlu0 %6783
        %6785 = vrot.lane.b32.xlu0 %v4322, 30
        %v6786 = vpop.permute.xlu0 %6785
        %6787 = vrot.lane.b32.xlu0 %v4420, 30
        %v6788 = vpop.permute.xlu0 %6787
        %6789 = vrot.lane.b32.xlu0 %v4518, 30
        %v6790 = vpop.permute.xlu0 %6789
        %6791 = vrot.lane.b32.xlu0 %v4616, 30
        %v6792 = vpop.permute.xlu0 %6791
        %6793 = vrot.lane.b32.xlu0 %v4714, 30
        %v6794 = vpop.permute.xlu0 %6793
        %6795 = vrot.lane.b32.xlu0 %v4812, 30
        %v6796 = vpop.permute.xlu0 %6795
        %6797 = vrot.lane.b32.xlu0 %v4910, 30
        %v6798 = vpop.permute.xlu0 %6797
        %vm6831 = vcmask 15360
        %v6832 = vsel %vm6831, %v1797, %v4944
        %v6833 = vsel %vm6831, %v1895, %v4946
        %v6834 = vsel %vm6831, %v1993, %v4948
        %v6835 = vsel %vm6831, %v2091, %v4950
        %v6836 = vsel %vm6831, %v2189, %v4952
        %v6837 = vsel %vm6831, %v2287, %v4954
        %v6838 = vsel %vm6831, %v2385, %v4956
        %v6839 = vsel %vm6831, %v2483, %v4958
        %v6840 = vsel %vm6831, %v2581, %v4960
        %v6841 = vsel %vm6831, %v2679, %v4962
        %v6842 = vsel %vm6831, %v2777, %v4964
        %v6843 = vsel %vm6831, %v2875, %v4966
        %v6844 = vsel %vm6831, %v2973, %v4968
        %v6845 = vsel %vm6831, %v3071, %v4970
        %v6846 = vsel %vm6831, %v3169, %v4972
        %v6847 = vsel %vm6831, %v3267, %v4974
        %v6848 = vsel %vm6831, %v3365, %v4976
        %v6849 = vsel %vm6831, %v3463, %v4978
        %v6850 = vsel %vm6831, %v3561, %v4980
        %v6851 = vsel %vm6831, %v3659, %v4982
        %v6852 = vsel %vm6831, %v3757, %v4984
        %v6853 = vsel %vm6831, %v3855, %v4986
        %v6854 = vsel %vm6831, %v3953, %v4988
        %v6855 = vsel %vm6831, %v4051, %v4990
        %v6856 = vsel %vm6831, %v4149, %v4992
        %v6857 = vsel %vm6831, %v4247, %v4994
        %v6858 = vsel %vm6831, %v4345, %v4996
        %v6859 = vsel %vm6831, %v4443, %v4998
        %v6860 = vsel %vm6831, %v4541, %v5000
        %v6861 = vsel %vm6831, %v4639, %v5002
        %v6862 = vsel %vm6831, %v4737, %v5004
        %v6863 = vsel %vm6831, %v4835, %v5006
        %vm6864 = vcmask 31744
        %v6865 = vsel %vm6864, %v6832, %v5072
        %v6866 = vsel %vm6864, %v6833, %v5074
        %v6867 = vsel %vm6864, %v6834, %v5076
        %v6868 = vsel %vm6864, %v6835, %v5078
        %v6869 = vsel %vm6864, %v6836, %v5080
        %v6870 = vsel %vm6864, %v6837, %v5082
        %v6871 = vsel %vm6864, %v6838, %v5084
        %v6872 = vsel %vm6864, %v6839, %v5086
        %v6873 = vsel %vm6864, %v6840, %v5088
        %v6874 = vsel %vm6864, %v6841, %v5090
        %v6875 = vsel %vm6864, %v6842, %v5092
        %v6876 = vsel %vm6864, %v6843, %v5094
        %v6877 = vsel %vm6864, %v6844, %v5096
        %v6878 = vsel %vm6864, %v6845, %v5098
        %v6879 = vsel %vm6864, %v6846, %v5100
        %v6880 = vsel %vm6864, %v6847, %v5102
        %v6881 = vsel %vm6864, %v6848, %v5104
        %v6882 = vsel %vm6864, %v6849, %v5106
        %v6883 = vsel %vm6864, %v6850, %v5108
        %v6884 = vsel %vm6864, %v6851, %v5110
        %v6885 = vsel %vm6864, %v6852, %v5112
        %v6886 = vsel %vm6864, %v6853, %v5114
        %v6887 = vsel %vm6864, %v6854, %v5116
        %v6888 = vsel %vm6864, %v6855, %v5118
        %v6889 = vsel %vm6864, %v6856, %v5120
        %v6890 = vsel %vm6864, %v6857, %v5122
        %v6891 = vsel %vm6864, %v6858, %v5124
        %v6892 = vsel %vm6864, %v6859, %v5126
        %v6893 = vsel %vm6864, %v6860, %v5128
        %v6894 = vsel %vm6864, %v6861, %v5130
        %v6895 = vsel %vm6864, %v6862, %v5132
        %v6896 = vsel %vm6864, %v6863, %v5134
        %vm6897 = vcmask 48128
        %v6898 = vsel %vm6897, %v6865, %v5200
        %v6899 = vsel %vm6897, %v6866, %v5202
        %v6900 = vsel %vm6897, %v6867, %v5204
        %v6901 = vsel %vm6897, %v6868, %v5206
        %v6902 = vsel %vm6897, %v6869, %v5208
        %v6903 = vsel %vm6897, %v6870, %v5210
        %v6904 = vsel %vm6897, %v6871, %v5212
        %v6905 = vsel %vm6897, %v6872, %v5214
        %v6906 = vsel %vm6897, %v6873, %v5216
        %v6907 = vsel %vm6897, %v6874, %v5218
        %v6908 = vsel %vm6897, %v6875, %v5220
        %v6909 = vsel %vm6897, %v6876, %v5222
        %v6910 = vsel %vm6897, %v6877, %v5224
        %v6911 = vsel %vm6897, %v6878, %v5226
        %v6912 = vsel %vm6897, %v6879, %v5228
        %v6913 = vsel %vm6897, %v6880, %v5230
        %v6914 = vsel %vm6897, %v6881, %v5232
        %v6915 = vsel %vm6897, %v6882, %v5234
        %v6916 = vsel %vm6897, %v6883, %v5236
        %v6917 = vsel %vm6897, %v6884, %v5238
        %v6918 = vsel %vm6897, %v6885, %v5240
        %v6919 = vsel %vm6897, %v6886, %v5242
        %v6920 = vsel %vm6897, %v6887, %v5244
        %v6921 = vsel %vm6897, %v6888, %v5246
        %v6922 = vsel %vm6897, %v6889, %v5248
        %v6923 = vsel %vm6897, %v6890, %v5250
        %v6924 = vsel %vm6897, %v6891, %v5252
        %v6925 = vsel %vm6897, %v6892, %v5254
        %v6926 = vsel %vm6897, %v6893, %v5256
        %v6927 = vsel %vm6897, %v6894, %v5258
        %v6928 = vsel %vm6897, %v6895, %v5260
        %v6929 = vsel %vm6897, %v6896, %v5262
        %vm6930 = vcmask 64512
        %v6931 = vsel %vm6930, %v6898, %v5328
        %v6932 = vsel %vm6930, %v6899, %v5330
        %v6933 = vsel %vm6930, %v6900, %v5332
        %v6934 = vsel %vm6930, %v6901, %v5334
        %v6935 = vsel %vm6930, %v6902, %v5336
        %v6936 = vsel %vm6930, %v6903, %v5338
        %v6937 = vsel %vm6930, %v6904, %v5340
        %v6938 = vsel %vm6930, %v6905, %v5342
        %v6939 = vsel %vm6930, %v6906, %v5344
        %v6940 = vsel %vm6930, %v6907, %v5346
        %v6941 = vsel %vm6930, %v6908, %v5348
        %v6942 = vsel %vm6930, %v6909, %v5350
        %v6943 = vsel %vm6930, %v6910, %v5352
        %v6944 = vsel %vm6930, %v6911, %v5354
        %v6945 = vsel %vm6930, %v6912, %v5356
        %v6946 = vsel %vm6930, %v6913, %v5358
        %v6947 = vsel %vm6930, %v6914, %v5360
        %v6948 = vsel %vm6930, %v6915, %v5362
        %v6949 = vsel %vm6930, %v6916, %v5364
        %v6950 = vsel %vm6930, %v6917, %v5366
        %v6951 = vsel %vm6930, %v6918, %v5368
        %v6952 = vsel %vm6930, %v6919, %v5370
        %v6953 = vsel %vm6930, %v6920, %v5372
        %v6954 = vsel %vm6930, %v6921, %v5374
        %v6955 = vsel %vm6930, %v6922, %v5376
        %v6956 = vsel %vm6930, %v6923, %v5378
        %v6957 = vsel %vm6930, %v6924, %v5380
        %v6958 = vsel %vm6930, %v6925, %v5382
        %v6959 = vsel %vm6930, %v6926, %v5384
        %v6960 = vsel %vm6930, %v6927, %v5386
        %v6961 = vsel %vm6930, %v6928, %v5388
        %v6962 = vsel %vm6930, %v6929, %v5390
        %vm6963 = vcmask 80896
        %v6964 = vsel %vm6963, %v6931, %v5456
        %v6965 = vsel %vm6963, %v6932, %v5458
        %v6966 = vsel %vm6963, %v6933, %v5460
        %v6967 = vsel %vm6963, %v6934, %v5462
        %v6968 = vsel %vm6963, %v6935, %v5464
        %v6969 = vsel %vm6963, %v6936, %v5466
        %v6970 = vsel %vm6963, %v6937, %v5468
        %v6971 = vsel %vm6963, %v6938, %v5470
        %v6972 = vsel %vm6963, %v6939, %v5472
        %v6973 = vsel %vm6963, %v6940, %v5474
        %v6974 = vsel %vm6963, %v6941, %v5476
        %v6975 = vsel %vm6963, %v6942, %v5478
        %v6976 = vsel %vm6963, %v6943, %v5480
        %v6977 = vsel %vm6963, %v6944, %v5482
        %v6978 = vsel %vm6963, %v6945, %v5484
        %v6979 = vsel %vm6963, %v6946, %v5486
        %v6980 = vsel %vm6963, %v6947, %v5488
        %v6981 = vsel %vm6963, %v6948, %v5490
        %v6982 = vsel %vm6963, %v6949, %v5492
        %v6983 = vsel %vm6963, %v6950, %v5494
        %v6984 = vsel %vm6963, %v6951, %v5496
        %v6985 = vsel %vm6963, %v6952, %v5498
        %v6986 = vsel %vm6963, %v6953, %v5500
        %v6987 = vsel %vm6963, %v6954, %v5502
        %v6988 = vsel %vm6963, %v6955, %v5504
        %v6989 = vsel %vm6963, %v6956, %v5506
        %v6990 = vsel %vm6963, %v6957, %v5508
        %v6991 = vsel %vm6963, %v6958, %v5510
        %v6992 = vsel %vm6963, %v6959, %v5512
        %v6993 = vsel %vm6963, %v6960, %v5514
        %v6994 = vsel %vm6963, %v6961, %v5516
        %v6995 = vsel %vm6963, %v6962, %v5518
        %vm6996 = vcmask 97280
        %v6997 = vsel %vm6996, %v6964, %v5584
        %v6998 = vsel %vm6996, %v6965, %v5586
        %v6999 = vsel %vm6996, %v6966, %v5588
        %v7000 = vsel %vm6996, %v6967, %v5590
        %v7001 = vsel %vm6996, %v6968, %v5592
        %v7002 = vsel %vm6996, %v6969, %v5594
        %v7003 = vsel %vm6996, %v6970, %v5596
        %v7004 = vsel %vm6996, %v6971, %v5598
        %v7005 = vsel %vm6996, %v6972, %v5600
        %v7006 = vsel %vm6996, %v6973, %v5602
        %v7007 = vsel %vm6996, %v6974, %v5604
        %v7008 = vsel %vm6996, %v6975, %v5606
        %v7009 = vsel %vm6996, %v6976, %v5608
        %v7010 = vsel %vm6996, %v6977, %v5610
        %v7011 = vsel %vm6996, %v6978, %v5612
        %v7012 = vsel %vm6996, %v6979, %v5614
        %v7013 = vsel %vm6996, %v6980, %v5616
        %v7014 = vsel %vm6996, %v6981, %v5618
        %v7015 = vsel %vm6996, %v6982, %v5620
        %v7016 = vsel %vm6996, %v6983, %v5622
        %v7017 = vsel %vm6996, %v6984, %v5624
        %v7018 = vsel %vm6996, %v6985, %v5626
        %v7019 = vsel %vm6996, %v6986, %v5628
        %v7020 = vsel %vm6996, %v6987, %v5630
        %v7021 = vsel %vm6996, %v6988, %v5632
        %v7022 = vsel %vm6996, %v6989, %v5634
        %v7023 = vsel %vm6996, %v6990, %v5636
        %v7024 = vsel %vm6996, %v6991, %v5638
        %v7025 = vsel %vm6996, %v6992, %v5640
        %v7026 = vsel %vm6996, %v6993, %v5642
        %v7027 = vsel %vm6996, %v6994, %v5644
        %v7028 = vsel %vm6996, %v6995, %v5646
        %vm7029 = vcmask 113664
        %v7030 = vsel %vm7029, %v6997, %v5712
        %v7031 = vsel %vm7029, %v6998, %v5714
        %v7032 = vsel %vm7029, %v6999, %v5716
        %v7033 = vsel %vm7029, %v7000, %v5718
        %v7034 = vsel %vm7029, %v7001, %v5720
        %v7035 = vsel %vm7029, %v7002, %v5722
        %v7036 = vsel %vm7029, %v7003, %v5724
        %v7037 = vsel %vm7029, %v7004, %v5726
        %v7038 = vsel %vm7029, %v7005, %v5728
        %v7039 = vsel %vm7029, %v7006, %v5730
        %v7040 = vsel %vm7029, %v7007, %v5732
        %v7041 = vsel %vm7029, %v7008, %v5734
        %v7042 = vsel %vm7029, %v7009, %v5736
        %v7043 = vsel %vm7029, %v7010, %v5738
        %v7044 = vsel %vm7029, %v7011, %v5740
        %v7045 = vsel %vm7029, %v7012, %v5742
        %v7046 = vsel %vm7029, %v7013, %v5744
        %v7047 = vsel %vm7029, %v7014, %v5746
        %v7048 = vsel %vm7029, %v7015, %v5748
        %v7049 = vsel %vm7029, %v7016, %v5750
        %v7050 = vsel %vm7029, %v7017, %v5752
        %v7051 = vsel %vm7029, %v7018, %v5754
        %v7052 = vsel %vm7029, %v7019, %v5756
        %v7053 = vsel %vm7029, %v7020, %v5758
        %v7054 = vsel %vm7029, %v7021, %v5760
        %v7055 = vsel %vm7029, %v7022, %v5762
        %v7056 = vsel %vm7029, %v7023, %v5764
        %v7057 = vsel %vm7029, %v7024, %v5766
        %v7058 = vsel %vm7029, %v7025, %v5768
        %v7059 = vsel %vm7029, %v7026, %v5770
        %v7060 = vsel %vm7029, %v7027, %v5772
        %v7061 = vsel %vm7029, %v7028, %v5774
        %vm7062 = vcmask 130048
        %v7063 = vsel %vm7062, %v7030, %v5840
        %v7064 = vsel %vm7062, %v7031, %v5842
        %v7065 = vsel %vm7062, %v7032, %v5844
        %v7066 = vsel %vm7062, %v7033, %v5846
        %v7067 = vsel %vm7062, %v7034, %v5848
        %v7068 = vsel %vm7062, %v7035, %v5850
        %v7069 = vsel %vm7062, %v7036, %v5852
        %v7070 = vsel %vm7062, %v7037, %v5854
        %v7071 = vsel %vm7062, %v7038, %v5856
        %v7072 = vsel %vm7062, %v7039, %v5858
        %v7073 = vsel %vm7062, %v7040, %v5860
        %v7074 = vsel %vm7062, %v7041, %v5862
        %v7075 = vsel %vm7062, %v7042, %v5864
        %v7076 = vsel %vm7062, %v7043, %v5866
        %v7077 = vsel %vm7062, %v7044, %v5868
        %v7078 = vsel %vm7062, %v7045, %v5870
        %v7079 = vsel %vm7062, %v7046, %v5872
        %v7080 = vsel %vm7062, %v7047, %v5874
        %v7081 = vsel %vm7062, %v7048, %v5876
        %v7082 = vsel %vm7062, %v7049, %v5878
        %v7083 = vsel %vm7062, %v7050, %v5880
        %v7084 = vsel %vm7062, %v7051, %v5882
        %v7085 = vsel %vm7062, %v7052, %v5884
        %v7086 = vsel %vm7062, %v7053, %v5886
        %v7087 = vsel %vm7062, %v7054, %v5888
        %v7088 = vsel %vm7062, %v7055, %v5890
        %v7089 = vsel %vm7062, %v7056, %v5892
        %v7090 = vsel %vm7062, %v7057, %v5894
        %v7091 = vsel %vm7062, %v7058, %v5896
        %v7092 = vsel %vm7062, %v7059, %v5898
        %v7093 = vsel %vm7062, %v7060, %v5900
        %v7094 = vsel %vm7062, %v7061, %v5902
        %vm7095 = vcmask 146432
        %v7096 = vsel %vm7095, %v7063, %v5968
        %v7097 = vsel %vm7095, %v7064, %v5970
        %v7098 = vsel %vm7095, %v7065, %v5972
        %v7099 = vsel %vm7095, %v7066, %v5974
        %v7100 = vsel %vm7095, %v7067, %v5976
        %v7101 = vsel %vm7095, %v7068, %v5978
        %v7102 = vsel %vm7095, %v7069, %v5980
        %v7103 = vsel %vm7095, %v7070, %v5982
        %v7104 = vsel %vm7095, %v7071, %v5984
        %v7105 = vsel %vm7095, %v7072, %v5986
        %v7106 = vsel %vm7095, %v7073, %v5988
        %v7107 = vsel %vm7095, %v7074, %v5990
        %v7108 = vsel %vm7095, %v7075, %v5992
        %v7109 = vsel %vm7095, %v7076, %v5994
        %v7110 = vsel %vm7095, %v7077, %v5996
        %v7111 = vsel %vm7095, %v7078, %v5998
        %v7112 = vsel %vm7095, %v7079, %v6000
        %v7113 = vsel %vm7095, %v7080, %v6002
        %v7114 = vsel %vm7095, %v7081, %v6004
        %v7115 = vsel %vm7095, %v7082, %v6006
        %v7116 = vsel %vm7095, %v7083, %v6008
        %v7117 = vsel %vm7095, %v7084, %v6010
        %v7118 = vsel %vm7095, %v7085, %v6012
        %v7119 = vsel %vm7095, %v7086, %v6014
        %v7120 = vsel %vm7095, %v7087, %v6016
        %v7121 = vsel %vm7095, %v7088, %v6018
        %v7122 = vsel %vm7095, %v7089, %v6020
        %v7123 = vsel %vm7095, %v7090, %v6022
        %v7124 = vsel %vm7095, %v7091, %v6024
        %v7125 = vsel %vm7095, %v7092, %v6026
        %v7126 = vsel %vm7095, %v7093, %v6028
        %v7127 = vsel %vm7095, %v7094, %v6030
        %vm7128 = vcmask 162816
        %v7129 = vsel %vm7128, %v7096, %v6096
        %v7130 = vsel %vm7128, %v7097, %v6098
        %v7131 = vsel %vm7128, %v7098, %v6100
        %v7132 = vsel %vm7128, %v7099, %v6102
        %v7133 = vsel %vm7128, %v7100, %v6104
        %v7134 = vsel %vm7128, %v7101, %v6106
        %v7135 = vsel %vm7128, %v7102, %v6108
        %v7136 = vsel %vm7128, %v7103, %v6110
        %v7137 = vsel %vm7128, %v7104, %v6112
        %v7138 = vsel %vm7128, %v7105, %v6114
        %v7139 = vsel %vm7128, %v7106, %v6116
        %v7140 = vsel %vm7128, %v7107, %v6118
        %v7141 = vsel %vm7128, %v7108, %v6120
        %v7142 = vsel %vm7128, %v7109, %v6122
        %v7143 = vsel %vm7128, %v7110, %v6124
        %v7144 = vsel %vm7128, %v7111, %v6126
        %v7145 = vsel %vm7128, %v7112, %v6128
        %v7146 = vsel %vm7128, %v7113, %v6130
        %v7147 = vsel %vm7128, %v7114, %v6132
        %v7148 = vsel %vm7128, %v7115, %v6134
        %v7149 = vsel %vm7128, %v7116, %v6136
        %v7150 = vsel %vm7128, %v7117, %v6138
        %v7151 = vsel %vm7128, %v7118, %v6140
        %v7152 = vsel %vm7128, %v7119, %v6142
        %v7153 = vsel %vm7128, %v7120, %v6144
        %v7154 = vsel %vm7128, %v7121, %v6146
        %v7155 = vsel %vm7128, %v7122, %v6148
        %v7156 = vsel %vm7128, %v7123, %v6150
        %v7157 = vsel %vm7128, %v7124, %v6152
        %v7158 = vsel %vm7128, %v7125, %v6154
        %v7159 = vsel %vm7128, %v7126, %v6156
        %v7160 = vsel %vm7128, %v7127, %v6158
        %vm7161 = vcmask 179200
        %v7162 = vsel %vm7161, %v7129, %v6224
        %v7163 = vsel %vm7161, %v7130, %v6226
        %v7164 = vsel %vm7161, %v7131, %v6228
        %v7165 = vsel %vm7161, %v7132, %v6230
        %v7166 = vsel %vm7161, %v7133, %v6232
        %v7167 = vsel %vm7161, %v7134, %v6234
        %v7168 = vsel %vm7161, %v7135, %v6236
        %v7169 = vsel %vm7161, %v7136, %v6238
        %v7170 = vsel %vm7161, %v7137, %v6240
        %v7171 = vsel %vm7161, %v7138, %v6242
        %v7172 = vsel %vm7161, %v7139, %v6244
        %v7173 = vsel %vm7161, %v7140, %v6246
        %v7174 = vsel %vm7161, %v7141, %v6248
        %v7175 = vsel %vm7161, %v7142, %v6250
        %v7176 = vsel %vm7161, %v7143, %v6252
        %v7177 = vsel %vm7161, %v7144, %v6254
        %v7178 = vsel %vm7161, %v7145, %v6256
        %v7179 = vsel %vm7161, %v7146, %v6258
        %v7180 = vsel %vm7161, %v7147, %v6260
        %v7181 = vsel %vm7161, %v7148, %v6262
        %v7182 = vsel %vm7161, %v7149, %v6264
        %v7183 = vsel %vm7161, %v7150, %v6266
        %v7184 = vsel %vm7161, %v7151, %v6268
        %v7185 = vsel %vm7161, %v7152, %v6270
        %v7186 = vsel %vm7161, %v7153, %v6272
        %v7187 = vsel %vm7161, %v7154, %v6274
        %v7188 = vsel %vm7161, %v7155, %v6276
        %v7189 = vsel %vm7161, %v7156, %v6278
        %v7190 = vsel %vm7161, %v7157, %v6280
        %v7191 = vsel %vm7161, %v7158, %v6282
        %v7192 = vsel %vm7161, %v7159, %v6284
        %v7193 = vsel %vm7161, %v7160, %v6286
        %vm7194 = vcmask 195584
        %v7195 = vsel %vm7194, %v7162, %v6352
        %v7196 = vsel %vm7194, %v7163, %v6354
        %v7197 = vsel %vm7194, %v7164, %v6356
        %v7198 = vsel %vm7194, %v7165, %v6358
        %v7199 = vsel %vm7194, %v7166, %v6360
        %v7200 = vsel %vm7194, %v7167, %v6362
        %v7201 = vsel %vm7194, %v7168, %v6364
        %v7202 = vsel %vm7194, %v7169, %v6366
        %v7203 = vsel %vm7194, %v7170, %v6368
        %v7204 = vsel %vm7194, %v7171, %v6370
        %v7205 = vsel %vm7194, %v7172, %v6372
        %v7206 = vsel %vm7194, %v7173, %v6374
        %v7207 = vsel %vm7194, %v7174, %v6376
        %v7208 = vsel %vm7194, %v7175, %v6378
        %v7209 = vsel %vm7194, %v7176, %v6380
        %v7210 = vsel %vm7194, %v7177, %v6382
        %v7211 = vsel %vm7194, %v7178, %v6384
        %v7212 = vsel %vm7194, %v7179, %v6386
        %v7213 = vsel %vm7194, %v7180, %v6388
        %v7214 = vsel %vm7194, %v7181, %v6390
        %v7215 = vsel %vm7194, %v7182, %v6392
        %v7216 = vsel %vm7194, %v7183, %v6394
        %v7217 = vsel %vm7194, %v7184, %v6396
        %v7218 = vsel %vm7194, %v7185, %v6398
        %v7219 = vsel %vm7194, %v7186, %v6400
        %v7220 = vsel %vm7194, %v7187, %v6402
        %v7221 = vsel %vm7194, %v7188, %v6404
        %v7222 = vsel %vm7194, %v7189, %v6406
        %v7223 = vsel %vm7194, %v7190, %v6408
        %v7224 = vsel %vm7194, %v7191, %v6410
        %v7225 = vsel %vm7194, %v7192, %v6412
        %v7226 = vsel %vm7194, %v7193, %v6414
        %vm7227 = vcmask 211968
        %v7228 = vsel %vm7227, %v7195, %v6480
        %v7229 = vsel %vm7227, %v7196, %v6482
        %v7230 = vsel %vm7227, %v7197, %v6484
        %v7231 = vsel %vm7227, %v7198, %v6486
        %v7232 = vsel %vm7227, %v7199, %v6488
        %v7233 = vsel %vm7227, %v7200, %v6490
        %v7234 = vsel %vm7227, %v7201, %v6492
        %v7235 = vsel %vm7227, %v7202, %v6494
        %v7236 = vsel %vm7227, %v7203, %v6496
        %v7237 = vsel %vm7227, %v7204, %v6498
        %v7238 = vsel %vm7227, %v7205, %v6500
        %v7239 = vsel %vm7227, %v7206, %v6502
        %v7240 = vsel %vm7227, %v7207, %v6504
        %v7241 = vsel %vm7227, %v7208, %v6506
        %v7242 = vsel %vm7227, %v7209, %v6508
        %v7243 = vsel %vm7227, %v7210, %v6510
        %v7244 = vsel %vm7227, %v7211, %v6512
        %v7245 = vsel %vm7227, %v7212, %v6514
        %v7246 = vsel %vm7227, %v7213, %v6516
        %v7247 = vsel %vm7227, %v7214, %v6518
        %v7248 = vsel %vm7227, %v7215, %v6520
        %v7249 = vsel %vm7227, %v7216, %v6522
        %v7250 = vsel %vm7227, %v7217, %v6524
        %v7251 = vsel %vm7227, %v7218, %v6526
        %v7252 = vsel %vm7227, %v7219, %v6528
        %v7253 = vsel %vm7227, %v7220, %v6530
        %v7254 = vsel %vm7227, %v7221, %v6532
        %v7255 = vsel %vm7227, %v7222, %v6534
        %v7256 = vsel %vm7227, %v7223, %v6536
        %v7257 = vsel %vm7227, %v7224, %v6538
        %v7258 = vsel %vm7227, %v7225, %v6540
        %v7259 = vsel %vm7227, %v7226, %v6542
        %vm7260 = vcmask 228352
        %v7261 = vsel %vm7260, %v7228, %v6608
        %v7262 = vsel %vm7260, %v7229, %v6610
        %v7263 = vsel %vm7260, %v7230, %v6612
        %v7264 = vsel %vm7260, %v7231, %v6614
        %v7265 = vsel %vm7260, %v7232, %v6616
        %v7266 = vsel %vm7260, %v7233, %v6618
        %v7267 = vsel %vm7260, %v7234, %v6620
        %v7268 = vsel %vm7260, %v7235, %v6622
        %v7269 = vsel %vm7260, %v7236, %v6624
        %v7270 = vsel %vm7260, %v7237, %v6626
        %v7271 = vsel %vm7260, %v7238, %v6628
        %v7272 = vsel %vm7260, %v7239, %v6630
        %v7273 = vsel %vm7260, %v7240, %v6632
        %v7274 = vsel %vm7260, %v7241, %v6634
        %v7275 = vsel %vm7260, %v7242, %v6636
        %v7276 = vsel %vm7260, %v7243, %v6638
        %v7277 = vsel %vm7260, %v7244, %v6640
        %v7278 = vsel %vm7260, %v7245, %v6642
        %v7279 = vsel %vm7260, %v7246, %v6644
        %v7280 = vsel %vm7260, %v7247, %v6646
        %v7281 = vsel %vm7260, %v7248, %v6648
        %v7282 = vsel %vm7260, %v7249, %v6650
        %v7283 = vsel %vm7260, %v7250, %v6652
        %v7284 = vsel %vm7260, %v7251, %v6654
        %v7285 = vsel %vm7260, %v7252, %v6656
        %v7286 = vsel %vm7260, %v7253, %v6658
        %v7287 = vsel %vm7260, %v7254, %v6660
        %v7288 = vsel %vm7260, %v7255, %v6662
        %v7289 = vsel %vm7260, %v7256, %v6664
        %v7290 = vsel %vm7260, %v7257, %v6666
        %v7291 = vsel %vm7260, %v7258, %v6668
        %v7292 = vsel %vm7260, %v7259, %v6670
        %vm7293 = vcmask 244736
        %v7294 = vsel %vm7293, %v7261, %v6736
        %v7295 = vsel %vm7293, %v7262, %v6738
        %v7296 = vsel %vm7293, %v7263, %v6740
        %v7297 = vsel %vm7293, %v7264, %v6742
        %v7298 = vsel %vm7293, %v7265, %v6744
        %v7299 = vsel %vm7293, %v7266, %v6746
        %v7300 = vsel %vm7293, %v7267, %v6748
        %v7301 = vsel %vm7293, %v7268, %v6750
        %v7302 = vsel %vm7293, %v7269, %v6752
        %v7303 = vsel %vm7293, %v7270, %v6754
        %v7304 = vsel %vm7293, %v7271, %v6756
        %v7305 = vsel %vm7293, %v7272, %v6758
        %v7306 = vsel %vm7293, %v7273, %v6760
        %v7307 = vsel %vm7293, %v7274, %v6762
        %v7308 = vsel %vm7293, %v7275, %v6764
        %v7309 = vsel %vm7293, %v7276, %v6766
        %v7310 = vsel %vm7293, %v7277, %v6768
        %v7311 = vsel %vm7293, %v7278, %v6770
        %v7312 = vsel %vm7293, %v7279, %v6772
        %v7313 = vsel %vm7293, %v7280, %v6774
        %v7314 = vsel %vm7293, %v7281, %v6776
        %v7315 = vsel %vm7293, %v7282, %v6778
        %v7316 = vsel %vm7293, %v7283, %v6780
        %v7317 = vsel %vm7293, %v7284, %v6782
        %v7318 = vsel %vm7293, %v7285, %v6784
        %v7319 = vsel %vm7293, %v7286, %v6786
        %v7320 = vsel %vm7293, %v7287, %v6788
        %v7321 = vsel %vm7293, %v7288, %v6790
        %v7322 = vsel %vm7293, %v7289, %v6792
        %v7323 = vsel %vm7293, %v7290, %v6794
        %v7324 = vsel %vm7293, %v7291, %v6796
        %v7325 = vsel %vm7293, %v7292, %v6798
        %v7326 = vcombine.high %v1711, 0.0
        %v7328 = vunpack.c.l.s4 1983009808
        %v7329 = vunpack.c.0.s8 %v7328
        %v7330 = vlaneseq
        %v7331 = vshrl.u32 %v7330, 7
        %v7332 = vsub.s32 %v7329, %v7331
        %v7333 = vrot.slane %v1711, %v7332
        %v7335 = vunpack.c.l.s4 1983009808
        %v7336 = vunpack.c.0.s8 %v7335
        %v7337 = vlaneseq
        %v7338 = vshrl.u32 %v7337, 7
        %v7339 = vsub.s32 %v7336, %v7338
        %v7340 = vrot.slane %v7326, %v7339
        %v7341 = vcombine.high %v7333, 0.0
        %v7343 = vunpack.c.l.s4 1934713408
        %v7344 = vunpack.c.0.s8 %v7343
        %v7345 = vlaneseq
        %v7346 = vshrl.u32 %v7345, 7
        %v7347 = vsub.s32 %v7344, %v7346
        %v7348 = vrot.slane %v7333, %v7347
        %v7350 = vunpack.c.l.s4 1934713408
        %v7351 = vunpack.c.0.s8 %v7350
        %v7352 = vlaneseq
        %v7353 = vshrl.u32 %v7352, 7
        %v7354 = vsub.s32 %v7351, %v7353
        %v7355 = vrot.slane %v7341, %v7354
        %v7356 = vcombine.high %v7340, 0.0
        %v7358 = vunpack.c.l.s4 1934713408
        %v7359 = vunpack.c.0.s8 %v7358
        %v7360 = vlaneseq
        %v7361 = vshrl.u32 %v7360, 7
        %v7362 = vsub.s32 %v7359, %v7361
        %v7363 = vrot.slane %v7340, %v7362
        %v7365 = vunpack.c.l.s4 1934713408
        %v7366 = vunpack.c.0.s8 %v7365
        %v7367 = vlaneseq
        %v7368 = vshrl.u32 %v7367, 7
        %v7369 = vsub.s32 %v7366, %v7368
        %v7370 = vrot.slane %v7356, %v7369
        %v7371 = vcombine.high %v7348, 0.0
        %v7372 = vcombine.high %v7355, 0.0
        %v7373 = vcombine.high %v7363, 0.0
        %v7374 = vcombine.high %v7370, 0.0
        %v7375 = vcombine.high %v1712, 0.0
        %v7377 = vunpack.c.l.s4 1983009808
        %v7378 = vunpack.c.0.s8 %v7377
        %v7379 = vlaneseq
        %v7380 = vshrl.u32 %v7379, 7
        %v7381 = vsub.s32 %v7378, %v7380
        %v7382 = vrot.slane %v1712, %v7381
        %v7384 = vunpack.c.l.s4 1983009808
        %v7385 = vunpack.c.0.s8 %v7384
        %v7386 = vlaneseq
        %v7387 = vshrl.u32 %v7386, 7
        %v7388 = vsub.s32 %v7385, %v7387
        %v7389 = vrot.slane %v7375, %v7388
        %v7390 = vcombine.high %v7382, 0.0
        %v7392 = vunpack.c.l.s4 1934713408
        %v7393 = vunpack.c.0.s8 %v7392
        %v7394 = vlaneseq
        %v7395 = vshrl.u32 %v7394, 7
        %v7396 = vsub.s32 %v7393, %v7395
        %v7397 = vrot.slane %v7382, %v7396
        %v7399 = vunpack.c.l.s4 1934713408
        %v7400 = vunpack.c.0.s8 %v7399
        %v7401 = vlaneseq
        %v7402 = vshrl.u32 %v7401, 7
        %v7403 = vsub.s32 %v7400, %v7402
        %v7404 = vrot.slane %v7390, %v7403
        %v7405 = vcombine.high %v7389, 0.0
        %v7407 = vunpack.c.l.s4 1934713408
        %v7408 = vunpack.c.0.s8 %v7407
        %v7409 = vlaneseq
        %v7410 = vshrl.u32 %v7409, 7
        %v7411 = vsub.s32 %v7408, %v7410
        %v7412 = vrot.slane %v7389, %v7411
        %v7414 = vunpack.c.l.s4 1934713408
        %v7415 = vunpack.c.0.s8 %v7414
        %v7416 = vlaneseq
        %v7417 = vshrl.u32 %v7416, 7
        %v7418 = vsub.s32 %v7415, %v7417
        %v7419 = vrot.slane %v7405, %v7418
        %v7420 = vcombine.high %v7397, 0.0
        %v7421 = vcombine.high %v7404, 0.0
        %v7422 = vcombine.high %v7412, 0.0
        %v7423 = vcombine.high %v7419, 0.0
        %v7424 = vcombine.high %v1713, 0.0
        %v7426 = vunpack.c.l.s4 1983009808
        %v7427 = vunpack.c.0.s8 %v7426
        %v7428 = vlaneseq
        %v7429 = vshrl.u32 %v7428, 7
        %v7430 = vsub.s32 %v7427, %v7429
        %v7431 = vrot.slane %v1713, %v7430
        %v7433 = vunpack.c.l.s4 1983009808
        %v7434 = vunpack.c.0.s8 %v7433
        %v7435 = vlaneseq
        %v7436 = vshrl.u32 %v7435, 7
        %v7437 = vsub.s32 %v7434, %v7436
        %v7438 = vrot.slane %v7424, %v7437
        %v7439 = vcombine.high %v7431, 0.0
        %v7441 = vunpack.c.l.s4 1934713408
        %v7442 = vunpack.c.0.s8 %v7441
        %v7443 = vlaneseq
        %v7444 = vshrl.u32 %v7443, 7
        %v7445 = vsub.s32 %v7442, %v7444
        %v7446 = vrot.slane %v7431, %v7445
        %v7448 = vunpack.c.l.s4 1934713408
        %v7449 = vunpack.c.0.s8 %v7448
        %v7450 = vlaneseq
        %v7451 = vshrl.u32 %v7450, 7
        %v7452 = vsub.s32 %v7449, %v7451
        %v7453 = vrot.slane %v7439, %v7452
        %v7454 = vcombine.high %v7438, 0.0
        %v7456 = vunpack.c.l.s4 1934713408
        %v7457 = vunpack.c.0.s8 %v7456
        %v7458 = vlaneseq
        %v7459 = vshrl.u32 %v7458, 7
        %v7460 = vsub.s32 %v7457, %v7459
        %v7461 = vrot.slane %v7438, %v7460
        %v7463 = vunpack.c.l.s4 1934713408
        %v7464 = vunpack.c.0.s8 %v7463
        %v7465 = vlaneseq
        %v7466 = vshrl.u32 %v7465, 7
        %v7467 = vsub.s32 %v7464, %v7466
        %v7468 = vrot.slane %v7454, %v7467
        %v7469 = vcombine.high %v7446, 0.0
        %v7470 = vcombine.high %v7453, 0.0
        %v7471 = vcombine.high %v7461, 0.0
        %v7472 = vcombine.high %v7468, 0.0
        %v7473 = vcombine.high %v1714, 0.0
        %v7475 = vunpack.c.l.s4 1983009808
        %v7476 = vunpack.c.0.s8 %v7475
        %v7477 = vlaneseq
        %v7478 = vshrl.u32 %v7477, 7
        %v7479 = vsub.s32 %v7476, %v7478
        %v7480 = vrot.slane %v1714, %v7479
        %v7482 = vunpack.c.l.s4 1983009808
        %v7483 = vunpack.c.0.s8 %v7482
        %v7484 = vlaneseq
        %v7485 = vshrl.u32 %v7484, 7
        %v7486 = vsub.s32 %v7483, %v7485
        %v7487 = vrot.slane %v7473, %v7486
        %v7488 = vcombine.high %v7480, 0.0
        %v7490 = vunpack.c.l.s4 1934713408
        %v7491 = vunpack.c.0.s8 %v7490
        %v7492 = vlaneseq
        %v7493 = vshrl.u32 %v7492, 7
        %v7494 = vsub.s32 %v7491, %v7493
        %v7495 = vrot.slane %v7480, %v7494
        %v7497 = vunpack.c.l.s4 1934713408
        %v7498 = vunpack.c.0.s8 %v7497
        %v7499 = vlaneseq
        %v7500 = vshrl.u32 %v7499, 7
        %v7501 = vsub.s32 %v7498, %v7500
        %v7502 = vrot.slane %v7488, %v7501
        %v7503 = vcombine.high %v7487, 0.0
        %v7505 = vunpack.c.l.s4 1934713408
        %v7506 = vunpack.c.0.s8 %v7505
        %v7507 = vlaneseq
        %v7508 = vshrl.u32 %v7507, 7
        %v7509 = vsub.s32 %v7506, %v7508
        %v7510 = vrot.slane %v7487, %v7509
        %v7512 = vunpack.c.l.s4 1934713408
        %v7513 = vunpack.c.0.s8 %v7512
        %v7514 = vlaneseq
        %v7515 = vshrl.u32 %v7514, 7
        %v7516 = vsub.s32 %v7513, %v7515
        %v7517 = vrot.slane %v7503, %v7516
        %v7518 = vcombine.high %v7495, 0.0
        %v7519 = vcombine.high %v7502, 0.0
        %v7520 = vcombine.high %v7510, 0.0
        %v7521 = vcombine.high %v7517, 0.0
        %v7522 = vcombine.high %v1715, 0.0
        %v7524 = vunpack.c.l.s4 1983009808
        %v7525 = vunpack.c.0.s8 %v7524
        %v7526 = vlaneseq
        %v7527 = vshrl.u32 %v7526, 7
        %v7528 = vsub.s32 %v7525, %v7527
        %v7529 = vrot.slane %v1715, %v7528
        %v7531 = vunpack.c.l.s4 1983009808
        %v7532 = vunpack.c.0.s8 %v7531
        %v7533 = vlaneseq
        %v7534 = vshrl.u32 %v7533, 7
        %v7535 = vsub.s32 %v7532, %v7534
        %v7536 = vrot.slane %v7522, %v7535
        %v7537 = vcombine.high %v7529, 0.0
        %v7539 = vunpack.c.l.s4 1934713408
        %v7540 = vunpack.c.0.s8 %v7539
        %v7541 = vlaneseq
        %v7542 = vshrl.u32 %v7541, 7
        %v7543 = vsub.s32 %v7540, %v7542
        %v7544 = vrot.slane %v7529, %v7543
        %v7546 = vunpack.c.l.s4 1934713408
        %v7547 = vunpack.c.0.s8 %v7546
        %v7548 = vlaneseq
        %v7549 = vshrl.u32 %v7548, 7
        %v7550 = vsub.s32 %v7547, %v7549
        %v7551 = vrot.slane %v7537, %v7550
        %v7552 = vcombine.high %v7536, 0.0
        %v7554 = vunpack.c.l.s4 1934713408
        %v7555 = vunpack.c.0.s8 %v7554
        %v7556 = vlaneseq
        %v7557 = vshrl.u32 %v7556, 7
        %v7558 = vsub.s32 %v7555, %v7557
        %v7559 = vrot.slane %v7536, %v7558
        %v7561 = vunpack.c.l.s4 1934713408
        %v7562 = vunpack.c.0.s8 %v7561
        %v7563 = vlaneseq
        %v7564 = vshrl.u32 %v7563, 7
        %v7565 = vsub.s32 %v7562, %v7564
        %v7566 = vrot.slane %v7552, %v7565
        %v7567 = vcombine.high %v7544, 0.0
        %v7568 = vcombine.high %v7551, 0.0
        %v7569 = vcombine.high %v7559, 0.0
        %v7570 = vcombine.high %v7566, 0.0
        %v7571 = vcombine.high %v1716, 0.0
        %v7573 = vunpack.c.l.s4 1983009808
        %v7574 = vunpack.c.0.s8 %v7573
        %v7575 = vlaneseq
        %v7576 = vshrl.u32 %v7575, 7
        %v7577 = vsub.s32 %v7574, %v7576
        %v7578 = vrot.slane %v1716, %v7577
        %v7580 = vunpack.c.l.s4 1983009808
        %v7581 = vunpack.c.0.s8 %v7580
        %v7582 = vlaneseq
        %v7583 = vshrl.u32 %v7582, 7
        %v7584 = vsub.s32 %v7581, %v7583
        %v7585 = vrot.slane %v7571, %v7584
        %v7586 = vcombine.high %v7578, 0.0
        %v7588 = vunpack.c.l.s4 1934713408
        %v7589 = vunpack.c.0.s8 %v7588
        %v7590 = vlaneseq
        %v7591 = vshrl.u32 %v7590, 7
        %v7592 = vsub.s32 %v7589, %v7591
        %v7593 = vrot.slane %v7578, %v7592
        %v7595 = vunpack.c.l.s4 1934713408
        %v7596 = vunpack.c.0.s8 %v7595
        %v7597 = vlaneseq
        %v7598 = vshrl.u32 %v7597, 7
        %v7599 = vsub.s32 %v7596, %v7598
        %v7600 = vrot.slane %v7586, %v7599
        %v7601 = vcombine.high %v7585, 0.0
        %v7603 = vunpack.c.l.s4 1934713408
        %v7604 = vunpack.c.0.s8 %v7603
        %v7605 = vlaneseq
        %v7606 = vshrl.u32 %v7605, 7
        %v7607 = vsub.s32 %v7604, %v7606
        %v7608 = vrot.slane %v7585, %v7607
        %v7610 = vunpack.c.l.s4 1934713408
        %v7611 = vunpack.c.0.s8 %v7610
        %v7612 = vlaneseq
        %v7613 = vshrl.u32 %v7612, 7
        %v7614 = vsub.s32 %v7611, %v7613
        %v7615 = vrot.slane %v7601, %v7614
        %v7616 = vcombine.high %v7593, 0.0
        %v7617 = vcombine.high %v7600, 0.0
        %v7618 = vcombine.high %v7608, 0.0
        %v7619 = vcombine.high %v7615, 0.0
        %v7620 = vcombine.high %v1717, 0.0
        %v7622 = vunpack.c.l.s4 1983009808
        %v7623 = vunpack.c.0.s8 %v7622
        %v7624 = vlaneseq
        %v7625 = vshrl.u32 %v7624, 7
        %v7626 = vsub.s32 %v7623, %v7625
        %v7627 = vrot.slane %v1717, %v7626
        %v7629 = vunpack.c.l.s4 1983009808
        %v7630 = vunpack.c.0.s8 %v7629
        %v7631 = vlaneseq
        %v7632 = vshrl.u32 %v7631, 7
        %v7633 = vsub.s32 %v7630, %v7632
        %v7634 = vrot.slane %v7620, %v7633
        %v7635 = vcombine.high %v7627, 0.0
        %v7637 = vunpack.c.l.s4 1934713408
        %v7638 = vunpack.c.0.s8 %v7637
        %v7639 = vlaneseq
        %v7640 = vshrl.u32 %v7639, 7
        %v7641 = vsub.s32 %v7638, %v7640
        %v7642 = vrot.slane %v7627, %v7641
        %v7644 = vunpack.c.l.s4 1934713408
        %v7645 = vunpack.c.0.s8 %v7644
        %v7646 = vlaneseq
        %v7647 = vshrl.u32 %v7646, 7
        %v7648 = vsub.s32 %v7645, %v7647
        %v7649 = vrot.slane %v7635, %v7648
        %v7650 = vcombine.high %v7634, 0.0
        %v7652 = vunpack.c.l.s4 1934713408
        %v7653 = vunpack.c.0.s8 %v7652
        %v7654 = vlaneseq
        %v7655 = vshrl.u32 %v7654, 7
        %v7656 = vsub.s32 %v7653, %v7655
        %v7657 = vrot.slane %v7634, %v7656
        %v7659 = vunpack.c.l.s4 1934713408
        %v7660 = vunpack.c.0.s8 %v7659
        %v7661 = vlaneseq
        %v7662 = vshrl.u32 %v7661, 7
        %v7663 = vsub.s32 %v7660, %v7662
        %v7664 = vrot.slane %v7650, %v7663
        %v7665 = vcombine.high %v7642, 0.0
        %v7666 = vcombine.high %v7649, 0.0
        %v7667 = vcombine.high %v7657, 0.0
        %v7668 = vcombine.high %v7664, 0.0
        %v7669 = vcombine.high %v1718, 0.0
        %v7671 = vunpack.c.l.s4 1983009808
        %v7672 = vunpack.c.0.s8 %v7671
        %v7673 = vlaneseq
        %v7674 = vshrl.u32 %v7673, 7
        %v7675 = vsub.s32 %v7672, %v7674
        %v7676 = vrot.slane %v1718, %v7675
        %v7678 = vunpack.c.l.s4 1983009808
        %v7679 = vunpack.c.0.s8 %v7678
        %v7680 = vlaneseq
        %v7681 = vshrl.u32 %v7680, 7
        %v7682 = vsub.s32 %v7679, %v7681
        %v7683 = vrot.slane %v7669, %v7682
        %v7684 = vcombine.high %v7676, 0.0
        %v7686 = vunpack.c.l.s4 1934713408
        %v7687 = vunpack.c.0.s8 %v7686
        %v7688 = vlaneseq
        %v7689 = vshrl.u32 %v7688, 7
        %v7690 = vsub.s32 %v7687, %v7689
        %v7691 = vrot.slane %v7676, %v7690
        %v7693 = vunpack.c.l.s4 1934713408
        %v7694 = vunpack.c.0.s8 %v7693
        %v7695 = vlaneseq
        %v7696 = vshrl.u32 %v7695, 7
        %v7697 = vsub.s32 %v7694, %v7696
        %v7698 = vrot.slane %v7684, %v7697
        %v7699 = vcombine.high %v7683, 0.0
        %v7701 = vunpack.c.l.s4 1934713408
        %v7702 = vunpack.c.0.s8 %v7701
        %v7703 = vlaneseq
        %v7704 = vshrl.u32 %v7703, 7
        %v7705 = vsub.s32 %v7702, %v7704
        %v7706 = vrot.slane %v7683, %v7705
        %v7708 = vunpack.c.l.s4 1934713408
        %v7709 = vunpack.c.0.s8 %v7708
        %v7710 = vlaneseq
        %v7711 = vshrl.u32 %v7710, 7
        %v7712 = vsub.s32 %v7709, %v7711
        %v7713 = vrot.slane %v7699, %v7712
        %v7714 = vcombine.high %v7691, 0.0
        %v7715 = vcombine.high %v7698, 0.0
        %v7716 = vcombine.high %v7706, 0.0
        %v7717 = vcombine.high %v7713, 0.0
        %v7718 = vcombine.high %v1719, 0.0
        %v7720 = vunpack.c.l.s4 1983009808
        %v7721 = vunpack.c.0.s8 %v7720
        %v7722 = vlaneseq
        %v7723 = vshrl.u32 %v7722, 7
        %v7724 = vsub.s32 %v7721, %v7723
        %v7725 = vrot.slane %v1719, %v7724
        %v7727 = vunpack.c.l.s4 1983009808
        %v7728 = vunpack.c.0.s8 %v7727
        %v7729 = vlaneseq
        %v7730 = vshrl.u32 %v7729, 7
        %v7731 = vsub.s32 %v7728, %v7730
        %v7732 = vrot.slane %v7718, %v7731
        %v7733 = vcombine.high %v7725, 0.0
        %v7735 = vunpack.c.l.s4 1934713408
        %v7736 = vunpack.c.0.s8 %v7735
        %v7737 = vlaneseq
        %v7738 = vshrl.u32 %v7737, 7
        %v7739 = vsub.s32 %v7736, %v7738
        %v7740 = vrot.slane %v7725, %v7739
        %v7742 = vunpack.c.l.s4 1934713408
        %v7743 = vunpack.c.0.s8 %v7742
        %v7744 = vlaneseq
        %v7745 = vshrl.u32 %v7744, 7
        %v7746 = vsub.s32 %v7743, %v7745
        %v7747 = vrot.slane %v7733, %v7746
        %v7748 = vcombine.high %v7732, 0.0
        %v7750 = vunpack.c.l.s4 1934713408
        %v7751 = vunpack.c.0.s8 %v7750
        %v7752 = vlaneseq
        %v7753 = vshrl.u32 %v7752, 7
        %v7754 = vsub.s32 %v7751, %v7753
        %v7755 = vrot.slane %v7732, %v7754
        %v7757 = vunpack.c.l.s4 1934713408
        %v7758 = vunpack.c.0.s8 %v7757
        %v7759 = vlaneseq
        %v7760 = vshrl.u32 %v7759, 7
        %v7761 = vsub.s32 %v7758, %v7760
        %v7762 = vrot.slane %v7748, %v7761
        %v7763 = vcombine.high %v7740, 0.0
        %v7764 = vcombine.high %v7747, 0.0
        %v7765 = vcombine.high %v7755, 0.0
        %v7766 = vcombine.high %v7762, 0.0
        %v7767 = vcombine.high %v1720, 0.0
        %v7769 = vunpack.c.l.s4 1983009808
        %v7770 = vunpack.c.0.s8 %v7769
        %v7771 = vlaneseq
        %v7772 = vshrl.u32 %v7771, 7
        %v7773 = vsub.s32 %v7770, %v7772
        %v7774 = vrot.slane %v1720, %v7773
        %v7776 = vunpack.c.l.s4 1983009808
        %v7777 = vunpack.c.0.s8 %v7776
        %v7778 = vlaneseq
        %v7779 = vshrl.u32 %v7778, 7
        %v7780 = vsub.s32 %v7777, %v7779
        %v7781 = vrot.slane %v7767, %v7780
        %v7782 = vcombine.high %v7774, 0.0
        %v7784 = vunpack.c.l.s4 1934713408
        %v7785 = vunpack.c.0.s8 %v7784
        %v7786 = vlaneseq
        %v7787 = vshrl.u32 %v7786, 7
        %v7788 = vsub.s32 %v7785, %v7787
        %v7789 = vrot.slane %v7774, %v7788
        %v7791 = vunpack.c.l.s4 1934713408
        %v7792 = vunpack.c.0.s8 %v7791
        %v7793 = vlaneseq
        %v7794 = vshrl.u32 %v7793, 7
        %v7795 = vsub.s32 %v7792, %v7794
        %v7796 = vrot.slane %v7782, %v7795
        %v7797 = vcombine.high %v7781, 0.0
        %v7799 = vunpack.c.l.s4 1934713408
        %v7800 = vunpack.c.0.s8 %v7799
        %v7801 = vlaneseq
        %v7802 = vshrl.u32 %v7801, 7
        %v7803 = vsub.s32 %v7800, %v7802
        %v7804 = vrot.slane %v7781, %v7803
        %v7806 = vunpack.c.l.s4 1934713408
        %v7807 = vunpack.c.0.s8 %v7806
        %v7808 = vlaneseq
        %v7809 = vshrl.u32 %v7808, 7
        %v7810 = vsub.s32 %v7807, %v7809
        %v7811 = vrot.slane %v7797, %v7810
        %v7812 = vcombine.high %v7789, 0.0
        %v7813 = vcombine.high %v7796, 0.0
        %v7814 = vcombine.high %v7804, 0.0
        %v7815 = vcombine.high %v7811, 0.0
        %v7816 = vcombine.high %v1721, 0.0
        %v7818 = vunpack.c.l.s4 1983009808
        %v7819 = vunpack.c.0.s8 %v7818
        %v7820 = vlaneseq
        %v7821 = vshrl.u32 %v7820, 7
        %v7822 = vsub.s32 %v7819, %v7821
        %v7823 = vrot.slane %v1721, %v7822
        %v7825 = vunpack.c.l.s4 1983009808
        %v7826 = vunpack.c.0.s8 %v7825
        %v7827 = vlaneseq
        %v7828 = vshrl.u32 %v7827, 7
        %v7829 = vsub.s32 %v7826, %v7828
        %v7830 = vrot.slane %v7816, %v7829
        %v7831 = vcombine.high %v7823, 0.0
        %v7833 = vunpack.c.l.s4 1934713408
        %v7834 = vunpack.c.0.s8 %v7833
        %v7835 = vlaneseq
        %v7836 = vshrl.u32 %v7835, 7
        %v7837 = vsub.s32 %v7834, %v7836
        %v7838 = vrot.slane %v7823, %v7837
        %v7840 = vunpack.c.l.s4 1934713408
        %v7841 = vunpack.c.0.s8 %v7840
        %v7842 = vlaneseq
        %v7843 = vshrl.u32 %v7842, 7
        %v7844 = vsub.s32 %v7841, %v7843
        %v7845 = vrot.slane %v7831, %v7844
        %v7846 = vcombine.high %v7830, 0.0
        %v7848 = vunpack.c.l.s4 1934713408
        %v7849 = vunpack.c.0.s8 %v7848
        %v7850 = vlaneseq
        %v7851 = vshrl.u32 %v7850, 7
        %v7852 = vsub.s32 %v7849, %v7851
        %v7853 = vrot.slane %v7830, %v7852
        %v7855 = vunpack.c.l.s4 1934713408
        %v7856 = vunpack.c.0.s8 %v7855
        %v7857 = vlaneseq
        %v7858 = vshrl.u32 %v7857, 7
        %v7859 = vsub.s32 %v7856, %v7858
        %v7860 = vrot.slane %v7846, %v7859
        %v7861 = vcombine.high %v7838, 0.0
        %v7862 = vcombine.high %v7845, 0.0
        %v7863 = vcombine.high %v7853, 0.0
        %v7864 = vcombine.high %v7860, 0.0
        %v7865 = vcombine.high %v1722, 0.0
        %v7867 = vunpack.c.l.s4 1983009808
        %v7868 = vunpack.c.0.s8 %v7867
        %v7869 = vlaneseq
        %v7870 = vshrl.u32 %v7869, 7
        %v7871 = vsub.s32 %v7868, %v7870
        %v7872 = vrot.slane %v1722, %v7871
        %v7874 = vunpack.c.l.s4 1983009808
        %v7875 = vunpack.c.0.s8 %v7874
        %v7876 = vlaneseq
        %v7877 = vshrl.u32 %v7876, 7
        %v7878 = vsub.s32 %v7875, %v7877
        %v7879 = vrot.slane %v7865, %v7878
        %v7880 = vcombine.high %v7872, 0.0
        %v7882 = vunpack.c.l.s4 1934713408
        %v7883 = vunpack.c.0.s8 %v7882
        %v7884 = vlaneseq
        %v7885 = vshrl.u32 %v7884, 7
        %v7886 = vsub.s32 %v7883, %v7885
        %v7887 = vrot.slane %v7872, %v7886
        %v7889 = vunpack.c.l.s4 1934713408
        %v7890 = vunpack.c.0.s8 %v7889
        %v7891 = vlaneseq
        %v7892 = vshrl.u32 %v7891, 7
        %v7893 = vsub.s32 %v7890, %v7892
        %v7894 = vrot.slane %v7880, %v7893
        %v7895 = vcombine.high %v7879, 0.0
        %v7897 = vunpack.c.l.s4 1934713408
        %v7898 = vunpack.c.0.s8 %v7897
        %v7899 = vlaneseq
        %v7900 = vshrl.u32 %v7899, 7
        %v7901 = vsub.s32 %v7898, %v7900
        %v7902 = vrot.slane %v7879, %v7901
        %v7904 = vunpack.c.l.s4 1934713408
        %v7905 = vunpack.c.0.s8 %v7904
        %v7906 = vlaneseq
        %v7907 = vshrl.u32 %v7906, 7
        %v7908 = vsub.s32 %v7905, %v7907
        %v7909 = vrot.slane %v7895, %v7908
        %v7910 = vcombine.high %v7887, 0.0
        %v7911 = vcombine.high %v7894, 0.0
        %v7912 = vcombine.high %v7902, 0.0
        %v7913 = vcombine.high %v7909, 0.0
        %v7914 = vcombine.high %v1723, 0.0
        %v7916 = vunpack.c.l.s4 1983009808
        %v7917 = vunpack.c.0.s8 %v7916
        %v7918 = vlaneseq
        %v7919 = vshrl.u32 %v7918, 7
        %v7920 = vsub.s32 %v7917, %v7919
        %v7921 = vrot.slane %v1723, %v7920
        %v7923 = vunpack.c.l.s4 1983009808
        %v7924 = vunpack.c.0.s8 %v7923
        %v7925 = vlaneseq
        %v7926 = vshrl.u32 %v7925, 7
        %v7927 = vsub.s32 %v7924, %v7926
        %v7928 = vrot.slane %v7914, %v7927
        %v7929 = vcombine.high %v7921, 0.0
        %v7931 = vunpack.c.l.s4 1934713408
        %v7932 = vunpack.c.0.s8 %v7931
        %v7933 = vlaneseq
        %v7934 = vshrl.u32 %v7933, 7
        %v7935 = vsub.s32 %v7932, %v7934
        %v7936 = vrot.slane %v7921, %v7935
        %v7938 = vunpack.c.l.s4 1934713408
        %v7939 = vunpack.c.0.s8 %v7938
        %v7940 = vlaneseq
        %v7941 = vshrl.u32 %v7940, 7
        %v7942 = vsub.s32 %v7939, %v7941
        %v7943 = vrot.slane %v7929, %v7942
        %v7944 = vcombine.high %v7928, 0.0
        %v7946 = vunpack.c.l.s4 1934713408
        %v7947 = vunpack.c.0.s8 %v7946
        %v7948 = vlaneseq
        %v7949 = vshrl.u32 %v7948, 7
        %v7950 = vsub.s32 %v7947, %v7949
        %v7951 = vrot.slane %v7928, %v7950
        %v7953 = vunpack.c.l.s4 1934713408
        %v7954 = vunpack.c.0.s8 %v7953
        %v7955 = vlaneseq
        %v7956 = vshrl.u32 %v7955, 7
        %v7957 = vsub.s32 %v7954, %v7956
        %v7958 = vrot.slane %v7944, %v7957
        %v7959 = vcombine.high %v7936, 0.0
        %v7960 = vcombine.high %v7943, 0.0
        %v7961 = vcombine.high %v7951, 0.0
        %v7962 = vcombine.high %v7958, 0.0
        %v7963 = vcombine.high %v1724, 0.0
        %v7965 = vunpack.c.l.s4 1983009808
        %v7966 = vunpack.c.0.s8 %v7965
        %v7967 = vlaneseq
        %v7968 = vshrl.u32 %v7967, 7
        %v7969 = vsub.s32 %v7966, %v7968
        %v7970 = vrot.slane %v1724, %v7969
        %v7972 = vunpack.c.l.s4 1983009808
        %v7973 = vunpack.c.0.s8 %v7972
        %v7974 = vlaneseq
        %v7975 = vshrl.u32 %v7974, 7
        %v7976 = vsub.s32 %v7973, %v7975
        %v7977 = vrot.slane %v7963, %v7976
        %v7978 = vcombine.high %v7970, 0.0
        %v7980 = vunpack.c.l.s4 1934713408
        %v7981 = vunpack.c.0.s8 %v7980
        %v7982 = vlaneseq
        %v7983 = vshrl.u32 %v7982, 7
        %v7984 = vsub.s32 %v7981, %v7983
        %v7985 = vrot.slane %v7970, %v7984
        %v7987 = vunpack.c.l.s4 1934713408
        %v7988 = vunpack.c.0.s8 %v7987
        %v7989 = vlaneseq
        %v7990 = vshrl.u32 %v7989, 7
        %v7991 = vsub.s32 %v7988, %v7990
        %v7992 = vrot.slane %v7978, %v7991
        %v7993 = vcombine.high %v7977, 0.0
        %v7995 = vunpack.c.l.s4 1934713408
        %v7996 = vunpack.c.0.s8 %v7995
        %v7997 = vlaneseq
        %v7998 = vshrl.u32 %v7997, 7
        %v7999 = vsub.s32 %v7996, %v7998
        %v8000 = vrot.slane %v7977, %v7999
        %v8002 = vunpack.c.l.s4 1934713408
        %v8003 = vunpack.c.0.s8 %v8002
        %v8004 = vlaneseq
        %v8005 = vshrl.u32 %v8004, 7
        %v8006 = vsub.s32 %v8003, %v8005
        %v8007 = vrot.slane %v7993, %v8006
        %v8008 = vcombine.high %v7985, 0.0
        %v8009 = vcombine.high %v7992, 0.0
        %v8010 = vcombine.high %v8000, 0.0
        %v8011 = vcombine.high %v8007, 0.0
        %v8012 = vcombine.high %v1725, 0.0
        %v8014 = vunpack.c.l.s4 1983009808
        %v8015 = vunpack.c.0.s8 %v8014
        %v8016 = vlaneseq
        %v8017 = vshrl.u32 %v8016, 7
        %v8018 = vsub.s32 %v8015, %v8017
        %v8019 = vrot.slane %v1725, %v8018
        %v8021 = vunpack.c.l.s4 1983009808
        %v8022 = vunpack.c.0.s8 %v8021
        %v8023 = vlaneseq
        %v8024 = vshrl.u32 %v8023, 7
        %v8025 = vsub.s32 %v8022, %v8024
        %v8026 = vrot.slane %v8012, %v8025
        %v8027 = vcombine.high %v8019, 0.0
        %v8029 = vunpack.c.l.s4 1934713408
        %v8030 = vunpack.c.0.s8 %v8029
        %v8031 = vlaneseq
        %v8032 = vshrl.u32 %v8031, 7
        %v8033 = vsub.s32 %v8030, %v8032
        %v8034 = vrot.slane %v8019, %v8033
        %v8036 = vunpack.c.l.s4 1934713408
        %v8037 = vunpack.c.0.s8 %v8036
        %v8038 = vlaneseq
        %v8039 = vshrl.u32 %v8038, 7
        %v8040 = vsub.s32 %v8037, %v8039
        %v8041 = vrot.slane %v8027, %v8040
        %v8042 = vcombine.high %v8026, 0.0
        %v8044 = vunpack.c.l.s4 1934713408
        %v8045 = vunpack.c.0.s8 %v8044
        %v8046 = vlaneseq
        %v8047 = vshrl.u32 %v8046, 7
        %v8048 = vsub.s32 %v8045, %v8047
        %v8049 = vrot.slane %v8026, %v8048
        %v8051 = vunpack.c.l.s4 1934713408
        %v8052 = vunpack.c.0.s8 %v8051
        %v8053 = vlaneseq
        %v8054 = vshrl.u32 %v8053, 7
        %v8055 = vsub.s32 %v8052, %v8054
        %v8056 = vrot.slane %v8042, %v8055
        %v8057 = vcombine.high %v8034, 0.0
        %v8058 = vcombine.high %v8041, 0.0
        %v8059 = vcombine.high %v8049, 0.0
        %v8060 = vcombine.high %v8056, 0.0
        %v8061 = vcombine.high %v1726, 0.0
        %v8063 = vunpack.c.l.s4 1983009808
        %v8064 = vunpack.c.0.s8 %v8063
        %v8065 = vlaneseq
        %v8066 = vshrl.u32 %v8065, 7
        %v8067 = vsub.s32 %v8064, %v8066
        %v8068 = vrot.slane %v1726, %v8067
        %v8070 = vunpack.c.l.s4 1983009808
        %v8071 = vunpack.c.0.s8 %v8070
        %v8072 = vlaneseq
        %v8073 = vshrl.u32 %v8072, 7
        %v8074 = vsub.s32 %v8071, %v8073
        %v8075 = vrot.slane %v8061, %v8074
        %v8076 = vcombine.high %v8068, 0.0
        %v8078 = vunpack.c.l.s4 1934713408
        %v8079 = vunpack.c.0.s8 %v8078
        %v8080 = vlaneseq
        %v8081 = vshrl.u32 %v8080, 7
        %v8082 = vsub.s32 %v8079, %v8081
        %v8083 = vrot.slane %v8068, %v8082
        %v8085 = vunpack.c.l.s4 1934713408
        %v8086 = vunpack.c.0.s8 %v8085
        %v8087 = vlaneseq
        %v8088 = vshrl.u32 %v8087, 7
        %v8089 = vsub.s32 %v8086, %v8088
        %v8090 = vrot.slane %v8076, %v8089
        %v8091 = vcombine.high %v8075, 0.0
        %v8093 = vunpack.c.l.s4 1934713408
        %v8094 = vunpack.c.0.s8 %v8093
        %v8095 = vlaneseq
        %v8096 = vshrl.u32 %v8095, 7
        %v8097 = vsub.s32 %v8094, %v8096
        %v8098 = vrot.slane %v8075, %v8097
        %v8100 = vunpack.c.l.s4 1934713408
        %v8101 = vunpack.c.0.s8 %v8100
        %v8102 = vlaneseq
        %v8103 = vshrl.u32 %v8102, 7
        %v8104 = vsub.s32 %v8101, %v8103
        %v8105 = vrot.slane %v8091, %v8104
        %v8106 = vcombine.high %v8083, 0.0
        %v8107 = vcombine.high %v8090, 0.0
        %v8108 = vcombine.high %v8098, 0.0
        %v8109 = vcombine.high %v8105, 0.0
        %v8110 = vcombine.high %v1727, 0.0
        %v8112 = vunpack.c.l.s4 1983009808
        %v8113 = vunpack.c.0.s8 %v8112
        %v8114 = vlaneseq
        %v8115 = vshrl.u32 %v8114, 7
        %v8116 = vsub.s32 %v8113, %v8115
        %v8117 = vrot.slane %v1727, %v8116
        %v8119 = vunpack.c.l.s4 1983009808
        %v8120 = vunpack.c.0.s8 %v8119
        %v8121 = vlaneseq
        %v8122 = vshrl.u32 %v8121, 7
        %v8123 = vsub.s32 %v8120, %v8122
        %v8124 = vrot.slane %v8110, %v8123
        %v8125 = vcombine.high %v8117, 0.0
        %v8127 = vunpack.c.l.s4 1934713408
        %v8128 = vunpack.c.0.s8 %v8127
        %v8129 = vlaneseq
        %v8130 = vshrl.u32 %v8129, 7
        %v8131 = vsub.s32 %v8128, %v8130
        %v8132 = vrot.slane %v8117, %v8131
        %v8134 = vunpack.c.l.s4 1934713408
        %v8135 = vunpack.c.0.s8 %v8134
        %v8136 = vlaneseq
        %v8137 = vshrl.u32 %v8136, 7
        %v8138 = vsub.s32 %v8135, %v8137
        %v8139 = vrot.slane %v8125, %v8138
        %v8140 = vcombine.high %v8124, 0.0
        %v8142 = vunpack.c.l.s4 1934713408
        %v8143 = vunpack.c.0.s8 %v8142
        %v8144 = vlaneseq
        %v8145 = vshrl.u32 %v8144, 7
        %v8146 = vsub.s32 %v8143, %v8145
        %v8147 = vrot.slane %v8124, %v8146
        %v8149 = vunpack.c.l.s4 1934713408
        %v8150 = vunpack.c.0.s8 %v8149
        %v8151 = vlaneseq
        %v8152 = vshrl.u32 %v8151, 7
        %v8153 = vsub.s32 %v8150, %v8152
        %v8154 = vrot.slane %v8140, %v8153
        %v8155 = vcombine.high %v8132, 0.0
        %v8156 = vcombine.high %v8139, 0.0
        %v8157 = vcombine.high %v8147, 0.0
        %v8158 = vcombine.high %v8154, 0.0
        %v8159 = vcombine.high %v1728, 0.0
        %v8161 = vunpack.c.l.s4 1983009808
        %v8162 = vunpack.c.0.s8 %v8161
        %v8163 = vlaneseq
        %v8164 = vshrl.u32 %v8163, 7
        %v8165 = vsub.s32 %v8162, %v8164
        %v8166 = vrot.slane %v1728, %v8165
        %v8168 = vunpack.c.l.s4 1983009808
        %v8169 = vunpack.c.0.s8 %v8168
        %v8170 = vlaneseq
        %v8171 = vshrl.u32 %v8170, 7
        %v8172 = vsub.s32 %v8169, %v8171
        %v8173 = vrot.slane %v8159, %v8172
        %v8174 = vcombine.high %v8166, 0.0
        %v8176 = vunpack.c.l.s4 1934713408
        %v8177 = vunpack.c.0.s8 %v8176
        %v8178 = vlaneseq
        %v8179 = vshrl.u32 %v8178, 7
        %v8180 = vsub.s32 %v8177, %v8179
        %v8181 = vrot.slane %v8166, %v8180
        %v8183 = vunpack.c.l.s4 1934713408
        %v8184 = vunpack.c.0.s8 %v8183
        %v8185 = vlaneseq
        %v8186 = vshrl.u32 %v8185, 7
        %v8187 = vsub.s32 %v8184, %v8186
        %v8188 = vrot.slane %v8174, %v8187
        %v8189 = vcombine.high %v8173, 0.0
        %v8191 = vunpack.c.l.s4 1934713408
        %v8192 = vunpack.c.0.s8 %v8191
        %v8193 = vlaneseq
        %v8194 = vshrl.u32 %v8193, 7
        %v8195 = vsub.s32 %v8192, %v8194
        %v8196 = vrot.slane %v8173, %v8195
        %v8198 = vunpack.c.l.s4 1934713408
        %v8199 = vunpack.c.0.s8 %v8198
        %v8200 = vlaneseq
        %v8201 = vshrl.u32 %v8200, 7
        %v8202 = vsub.s32 %v8199, %v8201
        %v8203 = vrot.slane %v8189, %v8202
        %v8204 = vcombine.high %v8181, 0.0
        %v8205 = vcombine.high %v8188, 0.0
        %v8206 = vcombine.high %v8196, 0.0
        %v8207 = vcombine.high %v8203, 0.0
        %v8208 = vcombine.high %v1729, 0.0
        %v8210 = vunpack.c.l.s4 1983009808
        %v8211 = vunpack.c.0.s8 %v8210
        %v8212 = vlaneseq
        %v8213 = vshrl.u32 %v8212, 7
        %v8214 = vsub.s32 %v8211, %v8213
        %v8215 = vrot.slane %v1729, %v8214
        %v8217 = vunpack.c.l.s4 1983009808
        %v8218 = vunpack.c.0.s8 %v8217
        %v8219 = vlaneseq
        %v8220 = vshrl.u32 %v8219, 7
        %v8221 = vsub.s32 %v8218, %v8220
        %v8222 = vrot.slane %v8208, %v8221
        %v8223 = vcombine.high %v8215, 0.0
        %v8225 = vunpack.c.l.s4 1934713408
        %v8226 = vunpack.c.0.s8 %v8225
        %v8227 = vlaneseq
        %v8228 = vshrl.u32 %v8227, 7
        %v8229 = vsub.s32 %v8226, %v8228
        %v8230 = vrot.slane %v8215, %v8229
        %v8232 = vunpack.c.l.s4 1934713408
        %v8233 = vunpack.c.0.s8 %v8232
        %v8234 = vlaneseq
        %v8235 = vshrl.u32 %v8234, 7
        %v8236 = vsub.s32 %v8233, %v8235
        %v8237 = vrot.slane %v8223, %v8236
        %v8238 = vcombine.high %v8222, 0.0
        %v8240 = vunpack.c.l.s4 1934713408
        %v8241 = vunpack.c.0.s8 %v8240
        %v8242 = vlaneseq
        %v8243 = vshrl.u32 %v8242, 7
        %v8244 = vsub.s32 %v8241, %v8243
        %v8245 = vrot.slane %v8222, %v8244
        %v8247 = vunpack.c.l.s4 1934713408
        %v8248 = vunpack.c.0.s8 %v8247
        %v8249 = vlaneseq
        %v8250 = vshrl.u32 %v8249, 7
        %v8251 = vsub.s32 %v8248, %v8250
        %v8252 = vrot.slane %v8238, %v8251
        %v8253 = vcombine.high %v8230, 0.0
        %v8254 = vcombine.high %v8237, 0.0
        %v8255 = vcombine.high %v8245, 0.0
        %v8256 = vcombine.high %v8252, 0.0
        %v8257 = vcombine.high %v1730, 0.0
        %v8259 = vunpack.c.l.s4 1983009808
        %v8260 = vunpack.c.0.s8 %v8259
        %v8261 = vlaneseq
        %v8262 = vshrl.u32 %v8261, 7
        %v8263 = vsub.s32 %v8260, %v8262
        %v8264 = vrot.slane %v1730, %v8263
        %v8266 = vunpack.c.l.s4 1983009808
        %v8267 = vunpack.c.0.s8 %v8266
        %v8268 = vlaneseq
        %v8269 = vshrl.u32 %v8268, 7
        %v8270 = vsub.s32 %v8267, %v8269
        %v8271 = vrot.slane %v8257, %v8270
        %v8272 = vcombine.high %v8264, 0.0
        %v8274 = vunpack.c.l.s4 1934713408
        %v8275 = vunpack.c.0.s8 %v8274
        %v8276 = vlaneseq
        %v8277 = vshrl.u32 %v8276, 7
        %v8278 = vsub.s32 %v8275, %v8277
        %v8279 = vrot.slane %v8264, %v8278
        %v8281 = vunpack.c.l.s4 1934713408
        %v8282 = vunpack.c.0.s8 %v8281
        %v8283 = vlaneseq
        %v8284 = vshrl.u32 %v8283, 7
        %v8285 = vsub.s32 %v8282, %v8284
        %v8286 = vrot.slane %v8272, %v8285
        %v8287 = vcombine.high %v8271, 0.0
        %v8289 = vunpack.c.l.s4 1934713408
        %v8290 = vunpack.c.0.s8 %v8289
        %v8291 = vlaneseq
        %v8292 = vshrl.u32 %v8291, 7
        %v8293 = vsub.s32 %v8290, %v8292
        %v8294 = vrot.slane %v8271, %v8293
        %v8296 = vunpack.c.l.s4 1934713408
        %v8297 = vunpack.c.0.s8 %v8296
        %v8298 = vlaneseq
        %v8299 = vshrl.u32 %v8298, 7
        %v8300 = vsub.s32 %v8297, %v8299
        %v8301 = vrot.slane %v8287, %v8300
        %v8302 = vcombine.high %v8279, 0.0
        %v8303 = vcombine.high %v8286, 0.0
        %v8304 = vcombine.high %v8294, 0.0
        %v8305 = vcombine.high %v8301, 0.0
        %v8306 = vcombine.high %v1731, 0.0
        %v8308 = vunpack.c.l.s4 1983009808
        %v8309 = vunpack.c.0.s8 %v8308
        %v8310 = vlaneseq
        %v8311 = vshrl.u32 %v8310, 7
        %v8312 = vsub.s32 %v8309, %v8311
        %v8313 = vrot.slane %v1731, %v8312
        %v8315 = vunpack.c.l.s4 1983009808
        %v8316 = vunpack.c.0.s8 %v8315
        %v8317 = vlaneseq
        %v8318 = vshrl.u32 %v8317, 7
        %v8319 = vsub.s32 %v8316, %v8318
        %v8320 = vrot.slane %v8306, %v8319
        %v8321 = vcombine.high %v8313, 0.0
        %v8323 = vunpack.c.l.s4 1934713408
        %v8324 = vunpack.c.0.s8 %v8323
        %v8325 = vlaneseq
        %v8326 = vshrl.u32 %v8325, 7
        %v8327 = vsub.s32 %v8324, %v8326
        %v8328 = vrot.slane %v8313, %v8327
        %v8330 = vunpack.c.l.s4 1934713408
        %v8331 = vunpack.c.0.s8 %v8330
        %v8332 = vlaneseq
        %v8333 = vshrl.u32 %v8332, 7
        %v8334 = vsub.s32 %v8331, %v8333
        %v8335 = vrot.slane %v8321, %v8334
        %v8336 = vcombine.high %v8320, 0.0
        %v8338 = vunpack.c.l.s4 1934713408
        %v8339 = vunpack.c.0.s8 %v8338
        %v8340 = vlaneseq
        %v8341 = vshrl.u32 %v8340, 7
        %v8342 = vsub.s32 %v8339, %v8341
        %v8343 = vrot.slane %v8320, %v8342
        %v8345 = vunpack.c.l.s4 1934713408
        %v8346 = vunpack.c.0.s8 %v8345
        %v8347 = vlaneseq
        %v8348 = vshrl.u32 %v8347, 7
        %v8349 = vsub.s32 %v8346, %v8348
        %v8350 = vrot.slane %v8336, %v8349
        %v8351 = vcombine.high %v8328, 0.0
        %v8352 = vcombine.high %v8335, 0.0
        %v8353 = vcombine.high %v8343, 0.0
        %v8354 = vcombine.high %v8350, 0.0
        %v8355 = vcombine.high %v1732, 0.0
        %v8357 = vunpack.c.l.s4 1983009808
        %v8358 = vunpack.c.0.s8 %v8357
        %v8359 = vlaneseq
        %v8360 = vshrl.u32 %v8359, 7
        %v8361 = vsub.s32 %v8358, %v8360
        %v8362 = vrot.slane %v1732, %v8361
        %v8364 = vunpack.c.l.s4 1983009808
        %v8365 = vunpack.c.0.s8 %v8364
        %v8366 = vlaneseq
        %v8367 = vshrl.u32 %v8366, 7
        %v8368 = vsub.s32 %v8365, %v8367
        %v8369 = vrot.slane %v8355, %v8368
        %v8370 = vcombine.high %v8362, 0.0
        %v8372 = vunpack.c.l.s4 1934713408
        %v8373 = vunpack.c.0.s8 %v8372
        %v8374 = vlaneseq
        %v8375 = vshrl.u32 %v8374, 7
        %v8376 = vsub.s32 %v8373, %v8375
        %v8377 = vrot.slane %v8362, %v8376
        %v8379 = vunpack.c.l.s4 1934713408
        %v8380 = vunpack.c.0.s8 %v8379
        %v8381 = vlaneseq
        %v8382 = vshrl.u32 %v8381, 7
        %v8383 = vsub.s32 %v8380, %v8382
        %v8384 = vrot.slane %v8370, %v8383
        %v8385 = vcombine.high %v8369, 0.0
        %v8387 = vunpack.c.l.s4 1934713408
        %v8388 = vunpack.c.0.s8 %v8387
        %v8389 = vlaneseq
        %v8390 = vshrl.u32 %v8389, 7
        %v8391 = vsub.s32 %v8388, %v8390
        %v8392 = vrot.slane %v8369, %v8391
        %v8394 = vunpack.c.l.s4 1934713408
        %v8395 = vunpack.c.0.s8 %v8394
        %v8396 = vlaneseq
        %v8397 = vshrl.u32 %v8396, 7
        %v8398 = vsub.s32 %v8395, %v8397
        %v8399 = vrot.slane %v8385, %v8398
        %v8400 = vcombine.high %v8377, 0.0
        %v8401 = vcombine.high %v8384, 0.0
        %v8402 = vcombine.high %v8392, 0.0
        %v8403 = vcombine.high %v8399, 0.0
        %v8404 = vcombine.high %v1733, 0.0
        %v8406 = vunpack.c.l.s4 1983009808
        %v8407 = vunpack.c.0.s8 %v8406
        %v8408 = vlaneseq
        %v8409 = vshrl.u32 %v8408, 7
        %v8410 = vsub.s32 %v8407, %v8409
        %v8411 = vrot.slane %v1733, %v8410
        %v8413 = vunpack.c.l.s4 1983009808
        %v8414 = vunpack.c.0.s8 %v8413
        %v8415 = vlaneseq
        %v8416 = vshrl.u32 %v8415, 7
        %v8417 = vsub.s32 %v8414, %v8416
        %v8418 = vrot.slane %v8404, %v8417
        %v8419 = vcombine.high %v8411, 0.0
        %v8421 = vunpack.c.l.s4 1934713408
        %v8422 = vunpack.c.0.s8 %v8421
        %v8423 = vlaneseq
        %v8424 = vshrl.u32 %v8423, 7
        %v8425 = vsub.s32 %v8422, %v8424
        %v8426 = vrot.slane %v8411, %v8425
        %v8428 = vunpack.c.l.s4 1934713408
        %v8429 = vunpack.c.0.s8 %v8428
        %v8430 = vlaneseq
        %v8431 = vshrl.u32 %v8430, 7
        %v8432 = vsub.s32 %v8429, %v8431
        %v8433 = vrot.slane %v8419, %v8432
        %v8434 = vcombine.high %v8418, 0.0
        %v8436 = vunpack.c.l.s4 1934713408
        %v8437 = vunpack.c.0.s8 %v8436
        %v8438 = vlaneseq
        %v8439 = vshrl.u32 %v8438, 7
        %v8440 = vsub.s32 %v8437, %v8439
        %v8441 = vrot.slane %v8418, %v8440
        %v8443 = vunpack.c.l.s4 1934713408
        %v8444 = vunpack.c.0.s8 %v8443
        %v8445 = vlaneseq
        %v8446 = vshrl.u32 %v8445, 7
        %v8447 = vsub.s32 %v8444, %v8446
        %v8448 = vrot.slane %v8434, %v8447
        %v8449 = vcombine.high %v8426, 0.0
        %v8450 = vcombine.high %v8433, 0.0
        %v8451 = vcombine.high %v8441, 0.0
        %v8452 = vcombine.high %v8448, 0.0
        %v8453 = vcombine.high %v1734, 0.0
        %v8455 = vunpack.c.l.s4 1983009808
        %v8456 = vunpack.c.0.s8 %v8455
        %v8457 = vlaneseq
        %v8458 = vshrl.u32 %v8457, 7
        %v8459 = vsub.s32 %v8456, %v8458
        %v8460 = vrot.slane %v1734, %v8459
        %v8462 = vunpack.c.l.s4 1983009808
        %v8463 = vunpack.c.0.s8 %v8462
        %v8464 = vlaneseq
        %v8465 = vshrl.u32 %v8464, 7
        %v8466 = vsub.s32 %v8463, %v8465
        %v8467 = vrot.slane %v8453, %v8466
        %v8468 = vcombine.high %v8460, 0.0
        %v8470 = vunpack.c.l.s4 1934713408
        %v8471 = vunpack.c.0.s8 %v8470
        %v8472 = vlaneseq
        %v8473 = vshrl.u32 %v8472, 7
        %v8474 = vsub.s32 %v8471, %v8473
        %v8475 = vrot.slane %v8460, %v8474
        %v8477 = vunpack.c.l.s4 1934713408
        %v8478 = vunpack.c.0.s8 %v8477
        %v8479 = vlaneseq
        %v8480 = vshrl.u32 %v8479, 7
        %v8481 = vsub.s32 %v8478, %v8480
        %v8482 = vrot.slane %v8468, %v8481
        %v8483 = vcombine.high %v8467, 0.0
        %v8485 = vunpack.c.l.s4 1934713408
        %v8486 = vunpack.c.0.s8 %v8485
        %v8487 = vlaneseq
        %v8488 = vshrl.u32 %v8487, 7
        %v8489 = vsub.s32 %v8486, %v8488
        %v8490 = vrot.slane %v8467, %v8489
        %v8492 = vunpack.c.l.s4 1934713408
        %v8493 = vunpack.c.0.s8 %v8492
        %v8494 = vlaneseq
        %v8495 = vshrl.u32 %v8494, 7
        %v8496 = vsub.s32 %v8493, %v8495
        %v8497 = vrot.slane %v8483, %v8496
        %v8498 = vcombine.high %v8475, 0.0
        %v8499 = vcombine.high %v8482, 0.0
        %v8500 = vcombine.high %v8490, 0.0
        %v8501 = vcombine.high %v8497, 0.0
        %v8502 = vcombine.high %v1735, 0.0
        %v8504 = vunpack.c.l.s4 1983009808
        %v8505 = vunpack.c.0.s8 %v8504
        %v8506 = vlaneseq
        %v8507 = vshrl.u32 %v8506, 7
        %v8508 = vsub.s32 %v8505, %v8507
        %v8509 = vrot.slane %v1735, %v8508
        %v8511 = vunpack.c.l.s4 1983009808
        %v8512 = vunpack.c.0.s8 %v8511
        %v8513 = vlaneseq
        %v8514 = vshrl.u32 %v8513, 7
        %v8515 = vsub.s32 %v8512, %v8514
        %v8516 = vrot.slane %v8502, %v8515
        %v8517 = vcombine.high %v8509, 0.0
        %v8519 = vunpack.c.l.s4 1934713408
        %v8520 = vunpack.c.0.s8 %v8519
        %v8521 = vlaneseq
        %v8522 = vshrl.u32 %v8521, 7
        %v8523 = vsub.s32 %v8520, %v8522
        %v8524 = vrot.slane %v8509, %v8523
        %v8526 = vunpack.c.l.s4 1934713408
        %v8527 = vunpack.c.0.s8 %v8526
        %v8528 = vlaneseq
        %v8529 = vshrl.u32 %v8528, 7
        %v8530 = vsub.s32 %v8527, %v8529
        %v8531 = vrot.slane %v8517, %v8530
        %v8532 = vcombine.high %v8516, 0.0
        %v8534 = vunpack.c.l.s4 1934713408
        %v8535 = vunpack.c.0.s8 %v8534
        %v8536 = vlaneseq
        %v8537 = vshrl.u32 %v8536, 7
        %v8538 = vsub.s32 %v8535, %v8537
        %v8539 = vrot.slane %v8516, %v8538
        %v8541 = vunpack.c.l.s4 1934713408
        %v8542 = vunpack.c.0.s8 %v8541
        %v8543 = vlaneseq
        %v8544 = vshrl.u32 %v8543, 7
        %v8545 = vsub.s32 %v8542, %v8544
        %v8546 = vrot.slane %v8532, %v8545
        %v8547 = vcombine.high %v8524, 0.0
        %v8548 = vcombine.high %v8531, 0.0
        %v8549 = vcombine.high %v8539, 0.0
        %v8550 = vcombine.high %v8546, 0.0
        %v8551 = vcombine.high %v1736, 0.0
        %v8553 = vunpack.c.l.s4 1983009808
        %v8554 = vunpack.c.0.s8 %v8553
        %v8555 = vlaneseq
        %v8556 = vshrl.u32 %v8555, 7
        %v8557 = vsub.s32 %v8554, %v8556
        %v8558 = vrot.slane %v1736, %v8557
        %v8560 = vunpack.c.l.s4 1983009808
        %v8561 = vunpack.c.0.s8 %v8560
        %v8562 = vlaneseq
        %v8563 = vshrl.u32 %v8562, 7
        %v8564 = vsub.s32 %v8561, %v8563
        %v8565 = vrot.slane %v8551, %v8564
        %v8566 = vcombine.high %v8558, 0.0
        %v8568 = vunpack.c.l.s4 1934713408
        %v8569 = vunpack.c.0.s8 %v8568
        %v8570 = vlaneseq
        %v8571 = vshrl.u32 %v8570, 7
        %v8572 = vsub.s32 %v8569, %v8571
        %v8573 = vrot.slane %v8558, %v8572
        %v8575 = vunpack.c.l.s4 1934713408
        %v8576 = vunpack.c.0.s8 %v8575
        %v8577 = vlaneseq
        %v8578 = vshrl.u32 %v8577, 7
        %v8579 = vsub.s32 %v8576, %v8578
        %v8580 = vrot.slane %v8566, %v8579
        %v8581 = vcombine.high %v8565, 0.0
        %v8583 = vunpack.c.l.s4 1934713408
        %v8584 = vunpack.c.0.s8 %v8583
        %v8585 = vlaneseq
        %v8586 = vshrl.u32 %v8585, 7
        %v8587 = vsub.s32 %v8584, %v8586
        %v8588 = vrot.slane %v8565, %v8587
        %v8590 = vunpack.c.l.s4 1934713408
        %v8591 = vunpack.c.0.s8 %v8590
        %v8592 = vlaneseq
        %v8593 = vshrl.u32 %v8592, 7
        %v8594 = vsub.s32 %v8591, %v8593
        %v8595 = vrot.slane %v8581, %v8594
        %v8596 = vcombine.high %v8573, 0.0
        %v8597 = vcombine.high %v8580, 0.0
        %v8598 = vcombine.high %v8588, 0.0
        %v8599 = vcombine.high %v8595, 0.0
        %v8600 = vcombine.high %v1737, 0.0
        %v8602 = vunpack.c.l.s4 1983009808
        %v8603 = vunpack.c.0.s8 %v8602
        %v8604 = vlaneseq
        %v8605 = vshrl.u32 %v8604, 7
        %v8606 = vsub.s32 %v8603, %v8605
        %v8607 = vrot.slane %v1737, %v8606
        %v8609 = vunpack.c.l.s4 1983009808
        %v8610 = vunpack.c.0.s8 %v8609
        %v8611 = vlaneseq
        %v8612 = vshrl.u32 %v8611, 7
        %v8613 = vsub.s32 %v8610, %v8612
        %v8614 = vrot.slane %v8600, %v8613
        %v8615 = vcombine.high %v8607, 0.0
        %v8617 = vunpack.c.l.s4 1934713408
        %v8618 = vunpack.c.0.s8 %v8617
        %v8619 = vlaneseq
        %v8620 = vshrl.u32 %v8619, 7
        %v8621 = vsub.s32 %v8618, %v8620
        %v8622 = vrot.slane %v8607, %v8621
        %v8624 = vunpack.c.l.s4 1934713408
        %v8625 = vunpack.c.0.s8 %v8624
        %v8626 = vlaneseq
        %v8627 = vshrl.u32 %v8626, 7
        %v8628 = vsub.s32 %v8625, %v8627
        %v8629 = vrot.slane %v8615, %v8628
        %v8630 = vcombine.high %v8614, 0.0
        %v8632 = vunpack.c.l.s4 1934713408
        %v8633 = vunpack.c.0.s8 %v8632
        %v8634 = vlaneseq
        %v8635 = vshrl.u32 %v8634, 7
        %v8636 = vsub.s32 %v8633, %v8635
        %v8637 = vrot.slane %v8614, %v8636
        %v8639 = vunpack.c.l.s4 1934713408
        %v8640 = vunpack.c.0.s8 %v8639
        %v8641 = vlaneseq
        %v8642 = vshrl.u32 %v8641, 7
        %v8643 = vsub.s32 %v8640, %v8642
        %v8644 = vrot.slane %v8630, %v8643
        %v8645 = vcombine.high %v8622, 0.0
        %v8646 = vcombine.high %v8629, 0.0
        %v8647 = vcombine.high %v8637, 0.0
        %v8648 = vcombine.high %v8644, 0.0
        %v8649 = vcombine.high %v1738, 0.0
        %v8651 = vunpack.c.l.s4 1983009808
        %v8652 = vunpack.c.0.s8 %v8651
        %v8653 = vlaneseq
        %v8654 = vshrl.u32 %v8653, 7
        %v8655 = vsub.s32 %v8652, %v8654
        %v8656 = vrot.slane %v1738, %v8655
        %v8658 = vunpack.c.l.s4 1983009808
        %v8659 = vunpack.c.0.s8 %v8658
        %v8660 = vlaneseq
        %v8661 = vshrl.u32 %v8660, 7
        %v8662 = vsub.s32 %v8659, %v8661
        %v8663 = vrot.slane %v8649, %v8662
        %v8664 = vcombine.high %v8656, 0.0
        %v8666 = vunpack.c.l.s4 1934713408
        %v8667 = vunpack.c.0.s8 %v8666
        %v8668 = vlaneseq
        %v8669 = vshrl.u32 %v8668, 7
        %v8670 = vsub.s32 %v8667, %v8669
        %v8671 = vrot.slane %v8656, %v8670
        %v8673 = vunpack.c.l.s4 1934713408
        %v8674 = vunpack.c.0.s8 %v8673
        %v8675 = vlaneseq
        %v8676 = vshrl.u32 %v8675, 7
        %v8677 = vsub.s32 %v8674, %v8676
        %v8678 = vrot.slane %v8664, %v8677
        %v8679 = vcombine.high %v8663, 0.0
        %v8681 = vunpack.c.l.s4 1934713408
        %v8682 = vunpack.c.0.s8 %v8681
        %v8683 = vlaneseq
        %v8684 = vshrl.u32 %v8683, 7
        %v8685 = vsub.s32 %v8682, %v8684
        %v8686 = vrot.slane %v8663, %v8685
        %v8688 = vunpack.c.l.s4 1934713408
        %v8689 = vunpack.c.0.s8 %v8688
        %v8690 = vlaneseq
        %v8691 = vshrl.u32 %v8690, 7
        %v8692 = vsub.s32 %v8689, %v8691
        %v8693 = vrot.slane %v8679, %v8692
        %v8694 = vcombine.high %v8671, 0.0
        %v8695 = vcombine.high %v8678, 0.0
        %v8696 = vcombine.high %v8686, 0.0
        %v8697 = vcombine.high %v8693, 0.0
        %v8698 = vcombine.high %v1739, 0.0
        %v8700 = vunpack.c.l.s4 1983009808
        %v8701 = vunpack.c.0.s8 %v8700
        %v8702 = vlaneseq
        %v8703 = vshrl.u32 %v8702, 7
        %v8704 = vsub.s32 %v8701, %v8703
        %v8705 = vrot.slane %v1739, %v8704
        %v8707 = vunpack.c.l.s4 1983009808
        %v8708 = vunpack.c.0.s8 %v8707
        %v8709 = vlaneseq
        %v8710 = vshrl.u32 %v8709, 7
        %v8711 = vsub.s32 %v8708, %v8710
        %v8712 = vrot.slane %v8698, %v8711
        %v8713 = vcombine.high %v8705, 0.0
        %v8715 = vunpack.c.l.s4 1934713408
        %v8716 = vunpack.c.0.s8 %v8715
        %v8717 = vlaneseq
        %v8718 = vshrl.u32 %v8717, 7
        %v8719 = vsub.s32 %v8716, %v8718
        %v8720 = vrot.slane %v8705, %v8719
        %v8722 = vunpack.c.l.s4 1934713408
        %v8723 = vunpack.c.0.s8 %v8722
        %v8724 = vlaneseq
        %v8725 = vshrl.u32 %v8724, 7
        %v8726 = vsub.s32 %v8723, %v8725
        %v8727 = vrot.slane %v8713, %v8726
        %v8728 = vcombine.high %v8712, 0.0
        %v8730 = vunpack.c.l.s4 1934713408
        %v8731 = vunpack.c.0.s8 %v8730
        %v8732 = vlaneseq
        %v8733 = vshrl.u32 %v8732, 7
        %v8734 = vsub.s32 %v8731, %v8733
        %v8735 = vrot.slane %v8712, %v8734
        %v8737 = vunpack.c.l.s4 1934713408
        %v8738 = vunpack.c.0.s8 %v8737
        %v8739 = vlaneseq
        %v8740 = vshrl.u32 %v8739, 7
        %v8741 = vsub.s32 %v8738, %v8740
        %v8742 = vrot.slane %v8728, %v8741
        %v8743 = vcombine.high %v8720, 0.0
        %v8744 = vcombine.high %v8727, 0.0
        %v8745 = vcombine.high %v8735, 0.0
        %v8746 = vcombine.high %v8742, 0.0
        %v8747 = vcombine.high %v1740, 0.0
        %v8749 = vunpack.c.l.s4 1983009808
        %v8750 = vunpack.c.0.s8 %v8749
        %v8751 = vlaneseq
        %v8752 = vshrl.u32 %v8751, 7
        %v8753 = vsub.s32 %v8750, %v8752
        %v8754 = vrot.slane %v1740, %v8753
        %v8756 = vunpack.c.l.s4 1983009808
        %v8757 = vunpack.c.0.s8 %v8756
        %v8758 = vlaneseq
        %v8759 = vshrl.u32 %v8758, 7
        %v8760 = vsub.s32 %v8757, %v8759
        %v8761 = vrot.slane %v8747, %v8760
        %v8762 = vcombine.high %v8754, 0.0
        %v8764 = vunpack.c.l.s4 1934713408
        %v8765 = vunpack.c.0.s8 %v8764
        %v8766 = vlaneseq
        %v8767 = vshrl.u32 %v8766, 7
        %v8768 = vsub.s32 %v8765, %v8767
        %v8769 = vrot.slane %v8754, %v8768
        %v8771 = vunpack.c.l.s4 1934713408
        %v8772 = vunpack.c.0.s8 %v8771
        %v8773 = vlaneseq
        %v8774 = vshrl.u32 %v8773, 7
        %v8775 = vsub.s32 %v8772, %v8774
        %v8776 = vrot.slane %v8762, %v8775
        %v8777 = vcombine.high %v8761, 0.0
        %v8779 = vunpack.c.l.s4 1934713408
        %v8780 = vunpack.c.0.s8 %v8779
        %v8781 = vlaneseq
        %v8782 = vshrl.u32 %v8781, 7
        %v8783 = vsub.s32 %v8780, %v8782
        %v8784 = vrot.slane %v8761, %v8783
        %v8786 = vunpack.c.l.s4 1934713408
        %v8787 = vunpack.c.0.s8 %v8786
        %v8788 = vlaneseq
        %v8789 = vshrl.u32 %v8788, 7
        %v8790 = vsub.s32 %v8787, %v8789
        %v8791 = vrot.slane %v8777, %v8790
        %v8792 = vcombine.high %v8769, 0.0
        %v8793 = vcombine.high %v8776, 0.0
        %v8794 = vcombine.high %v8784, 0.0
        %v8795 = vcombine.high %v8791, 0.0
        %v8796 = vcombine.high %v1741, 0.0
        %v8798 = vunpack.c.l.s4 1983009808
        %v8799 = vunpack.c.0.s8 %v8798
        %v8800 = vlaneseq
        %v8801 = vshrl.u32 %v8800, 7
        %v8802 = vsub.s32 %v8799, %v8801
        %v8803 = vrot.slane %v1741, %v8802
        %v8805 = vunpack.c.l.s4 1983009808
        %v8806 = vunpack.c.0.s8 %v8805
        %v8807 = vlaneseq
        %v8808 = vshrl.u32 %v8807, 7
        %v8809 = vsub.s32 %v8806, %v8808
        %v8810 = vrot.slane %v8796, %v8809
        %v8811 = vcombine.high %v8803, 0.0
        %v8813 = vunpack.c.l.s4 1934713408
        %v8814 = vunpack.c.0.s8 %v8813
        %v8815 = vlaneseq
        %v8816 = vshrl.u32 %v8815, 7
        %v8817 = vsub.s32 %v8814, %v8816
        %v8818 = vrot.slane %v8803, %v8817
        %v8820 = vunpack.c.l.s4 1934713408
        %v8821 = vunpack.c.0.s8 %v8820
        %v8822 = vlaneseq
        %v8823 = vshrl.u32 %v8822, 7
        %v8824 = vsub.s32 %v8821, %v8823
        %v8825 = vrot.slane %v8811, %v8824
        %v8826 = vcombine.high %v8810, 0.0
        %v8828 = vunpack.c.l.s4 1934713408
        %v8829 = vunpack.c.0.s8 %v8828
        %v8830 = vlaneseq
        %v8831 = vshrl.u32 %v8830, 7
        %v8832 = vsub.s32 %v8829, %v8831
        %v8833 = vrot.slane %v8810, %v8832
        %v8835 = vunpack.c.l.s4 1934713408
        %v8836 = vunpack.c.0.s8 %v8835
        %v8837 = vlaneseq
        %v8838 = vshrl.u32 %v8837, 7
        %v8839 = vsub.s32 %v8836, %v8838
        %v8840 = vrot.slane %v8826, %v8839
        %v8841 = vcombine.high %v8818, 0.0
        %v8842 = vcombine.high %v8825, 0.0
        %v8843 = vcombine.high %v8833, 0.0
        %v8844 = vcombine.high %v8840, 0.0
        %v8845 = vcombine.high %v1742, 0.0
        %v8847 = vunpack.c.l.s4 1983009808
        %v8848 = vunpack.c.0.s8 %v8847
        %v8849 = vlaneseq
        %v8850 = vshrl.u32 %v8849, 7
        %v8851 = vsub.s32 %v8848, %v8850
        %v8852 = vrot.slane %v1742, %v8851
        %v8854 = vunpack.c.l.s4 1983009808
        %v8855 = vunpack.c.0.s8 %v8854
        %v8856 = vlaneseq
        %v8857 = vshrl.u32 %v8856, 7
        %v8858 = vsub.s32 %v8855, %v8857
        %v8859 = vrot.slane %v8845, %v8858
        %v8860 = vcombine.high %v8852, 0.0
        %v8862 = vunpack.c.l.s4 1934713408
        %v8863 = vunpack.c.0.s8 %v8862
        %v8864 = vlaneseq
        %v8865 = vshrl.u32 %v8864, 7
        %v8866 = vsub.s32 %v8863, %v8865
        %v8867 = vrot.slane %v8852, %v8866
        %v8869 = vunpack.c.l.s4 1934713408
        %v8870 = vunpack.c.0.s8 %v8869
        %v8871 = vlaneseq
        %v8872 = vshrl.u32 %v8871, 7
        %v8873 = vsub.s32 %v8870, %v8872
        %v8874 = vrot.slane %v8860, %v8873
        %v8875 = vcombine.high %v8859, 0.0
        %v8877 = vunpack.c.l.s4 1934713408
        %v8878 = vunpack.c.0.s8 %v8877
        %v8879 = vlaneseq
        %v8880 = vshrl.u32 %v8879, 7
        %v8881 = vsub.s32 %v8878, %v8880
        %v8882 = vrot.slane %v8859, %v8881
        %v8884 = vunpack.c.l.s4 1934713408
        %v8885 = vunpack.c.0.s8 %v8884
        %v8886 = vlaneseq
        %v8887 = vshrl.u32 %v8886, 7
        %v8888 = vsub.s32 %v8885, %v8887
        %v8889 = vrot.slane %v8875, %v8888
        %v8890 = vcombine.high %v8867, 0.0
        %v8891 = vcombine.high %v8874, 0.0
        %v8892 = vcombine.high %v8882, 0.0
        %v8893 = vcombine.high %v8889, 0.0
        %v8894 = vcombine.high %v1743, 0.0
        %v8896 = vunpack.c.l.s4 1983009808
        %v8897 = vunpack.c.0.s8 %v8896
        %v8898 = vlaneseq
        %v8899 = vshrl.u32 %v8898, 7
        %v8900 = vsub.s32 %v8897, %v8899
        %v8901 = vrot.slane %v1743, %v8900
        %v8903 = vunpack.c.l.s4 1983009808
        %v8904 = vunpack.c.0.s8 %v8903
        %v8905 = vlaneseq
        %v8906 = vshrl.u32 %v8905, 7
        %v8907 = vsub.s32 %v8904, %v8906
        %v8908 = vrot.slane %v8894, %v8907
        %v8909 = vcombine.high %v8901, 0.0
        %v8911 = vunpack.c.l.s4 1934713408
        %v8912 = vunpack.c.0.s8 %v8911
        %v8913 = vlaneseq
        %v8914 = vshrl.u32 %v8913, 7
        %v8915 = vsub.s32 %v8912, %v8914
        %v8916 = vrot.slane %v8901, %v8915
        %v8918 = vunpack.c.l.s4 1934713408
        %v8919 = vunpack.c.0.s8 %v8918
        %v8920 = vlaneseq
        %v8921 = vshrl.u32 %v8920, 7
        %v8922 = vsub.s32 %v8919, %v8921
        %v8923 = vrot.slane %v8909, %v8922
        %v8924 = vcombine.high %v8908, 0.0
        %v8926 = vunpack.c.l.s4 1934713408
        %v8927 = vunpack.c.0.s8 %v8926
        %v8928 = vlaneseq
        %v8929 = vshrl.u32 %v8928, 7
        %v8930 = vsub.s32 %v8927, %v8929
        %v8931 = vrot.slane %v8908, %v8930
        %v8933 = vunpack.c.l.s4 1934713408
        %v8934 = vunpack.c.0.s8 %v8933
        %v8935 = vlaneseq
        %v8936 = vshrl.u32 %v8935, 7
        %v8937 = vsub.s32 %v8934, %v8936
        %v8938 = vrot.slane %v8924, %v8937
        %v8939 = vcombine.high %v8916, 0.0
        %v8940 = vcombine.high %v8923, 0.0
        %v8941 = vcombine.high %v8931, 0.0
        %v8942 = vcombine.high %v8938, 0.0
        %v8943 = vcombine.high %v1744, 0.0
        %v8945 = vunpack.c.l.s4 1983009808
        %v8946 = vunpack.c.0.s8 %v8945
        %v8947 = vlaneseq
        %v8948 = vshrl.u32 %v8947, 7
        %v8949 = vsub.s32 %v8946, %v8948
        %v8950 = vrot.slane %v1744, %v8949
        %v8952 = vunpack.c.l.s4 1983009808
        %v8953 = vunpack.c.0.s8 %v8952
        %v8954 = vlaneseq
        %v8955 = vshrl.u32 %v8954, 7
        %v8956 = vsub.s32 %v8953, %v8955
        %v8957 = vrot.slane %v8943, %v8956
        %v8958 = vcombine.high %v8950, 0.0
        %v8960 = vunpack.c.l.s4 1934713408
        %v8961 = vunpack.c.0.s8 %v8960
        %v8962 = vlaneseq
        %v8963 = vshrl.u32 %v8962, 7
        %v8964 = vsub.s32 %v8961, %v8963
        %v8965 = vrot.slane %v8950, %v8964
        %v8967 = vunpack.c.l.s4 1934713408
        %v8968 = vunpack.c.0.s8 %v8967
        %v8969 = vlaneseq
        %v8970 = vshrl.u32 %v8969, 7
        %v8971 = vsub.s32 %v8968, %v8970
        %v8972 = vrot.slane %v8958, %v8971
        %v8973 = vcombine.high %v8957, 0.0
        %v8975 = vunpack.c.l.s4 1934713408
        %v8976 = vunpack.c.0.s8 %v8975
        %v8977 = vlaneseq
        %v8978 = vshrl.u32 %v8977, 7
        %v8979 = vsub.s32 %v8976, %v8978
        %v8980 = vrot.slane %v8957, %v8979
        %v8982 = vunpack.c.l.s4 1934713408
        %v8983 = vunpack.c.0.s8 %v8982
        %v8984 = vlaneseq
        %v8985 = vshrl.u32 %v8984, 7
        %v8986 = vsub.s32 %v8983, %v8985
        %v8987 = vrot.slane %v8973, %v8986
        %v8988 = vcombine.high %v8965, 0.0
        %v8989 = vcombine.high %v8972, 0.0
        %v8990 = vcombine.high %v8980, 0.0
        %v8991 = vcombine.high %v8987, 0.0
        %v8992 = vcombine.high %v1745, 0.0
        %v8994 = vunpack.c.l.s4 1983009808
        %v8995 = vunpack.c.0.s8 %v8994
        %v8996 = vlaneseq
        %v8997 = vshrl.u32 %v8996, 7
        %v8998 = vsub.s32 %v8995, %v8997
        %v8999 = vrot.slane %v1745, %v8998
        %v9001 = vunpack.c.l.s4 1983009808
        %v9002 = vunpack.c.0.s8 %v9001
        %v9003 = vlaneseq
        %v9004 = vshrl.u32 %v9003, 7
        %v9005 = vsub.s32 %v9002, %v9004
        %v9006 = vrot.slane %v8992, %v9005
        %v9007 = vcombine.high %v8999, 0.0
        %v9009 = vunpack.c.l.s4 1934713408
        %v9010 = vunpack.c.0.s8 %v9009
        %v9011 = vlaneseq
        %v9012 = vshrl.u32 %v9011, 7
        %v9013 = vsub.s32 %v9010, %v9012
        %v9014 = vrot.slane %v8999, %v9013
        %v9016 = vunpack.c.l.s4 1934713408
        %v9017 = vunpack.c.0.s8 %v9016
        %v9018 = vlaneseq
        %v9019 = vshrl.u32 %v9018, 7
        %v9020 = vsub.s32 %v9017, %v9019
        %v9021 = vrot.slane %v9007, %v9020
        %v9022 = vcombine.high %v9006, 0.0
        %v9024 = vunpack.c.l.s4 1934713408
        %v9025 = vunpack.c.0.s8 %v9024
        %v9026 = vlaneseq
        %v9027 = vshrl.u32 %v9026, 7
        %v9028 = vsub.s32 %v9025, %v9027
        %v9029 = vrot.slane %v9006, %v9028
        %v9031 = vunpack.c.l.s4 1934713408
        %v9032 = vunpack.c.0.s8 %v9031
        %v9033 = vlaneseq
        %v9034 = vshrl.u32 %v9033, 7
        %v9035 = vsub.s32 %v9032, %v9034
        %v9036 = vrot.slane %v9022, %v9035
        %v9037 = vcombine.high %v9014, 0.0
        %v9038 = vcombine.high %v9021, 0.0
        %v9039 = vcombine.high %v9029, 0.0
        %v9040 = vcombine.high %v9036, 0.0
        %v9041 = vcombine.high %v1746, 0.0
        %v9043 = vunpack.c.l.s4 1983009808
        %v9044 = vunpack.c.0.s8 %v9043
        %v9045 = vlaneseq
        %v9046 = vshrl.u32 %v9045, 7
        %v9047 = vsub.s32 %v9044, %v9046
        %v9048 = vrot.slane %v1746, %v9047
        %v9050 = vunpack.c.l.s4 1983009808
        %v9051 = vunpack.c.0.s8 %v9050
        %v9052 = vlaneseq
        %v9053 = vshrl.u32 %v9052, 7
        %v9054 = vsub.s32 %v9051, %v9053
        %v9055 = vrot.slane %v9041, %v9054
        %v9056 = vcombine.high %v9048, 0.0
        %v9058 = vunpack.c.l.s4 1934713408
        %v9059 = vunpack.c.0.s8 %v9058
        %v9060 = vlaneseq
        %v9061 = vshrl.u32 %v9060, 7
        %v9062 = vsub.s32 %v9059, %v9061
        %v9063 = vrot.slane %v9048, %v9062
        %v9065 = vunpack.c.l.s4 1934713408
        %v9066 = vunpack.c.0.s8 %v9065
        %v9067 = vlaneseq
        %v9068 = vshrl.u32 %v9067, 7
        %v9069 = vsub.s32 %v9066, %v9068
        %v9070 = vrot.slane %v9056, %v9069
        %v9071 = vcombine.high %v9055, 0.0
        %v9073 = vunpack.c.l.s4 1934713408
        %v9074 = vunpack.c.0.s8 %v9073
        %v9075 = vlaneseq
        %v9076 = vshrl.u32 %v9075, 7
        %v9077 = vsub.s32 %v9074, %v9076
        %v9078 = vrot.slane %v9055, %v9077
        %v9080 = vunpack.c.l.s4 1934713408
        %v9081 = vunpack.c.0.s8 %v9080
        %v9082 = vlaneseq
        %v9083 = vshrl.u32 %v9082, 7
        %v9084 = vsub.s32 %v9081, %v9083
        %v9085 = vrot.slane %v9071, %v9084
        %v9086 = vcombine.high %v9063, 0.0
        %v9087 = vcombine.high %v9070, 0.0
        %v9088 = vcombine.high %v9078, 0.0
        %v9089 = vcombine.high %v9085, 0.0
        %v9090 = vcombine.high %v1747, 0.0
        %v9092 = vunpack.c.l.s4 1983009808
        %v9093 = vunpack.c.0.s8 %v9092
        %v9094 = vlaneseq
        %v9095 = vshrl.u32 %v9094, 7
        %v9096 = vsub.s32 %v9093, %v9095
        %v9097 = vrot.slane %v1747, %v9096
        %v9099 = vunpack.c.l.s4 1983009808
        %v9100 = vunpack.c.0.s8 %v9099
        %v9101 = vlaneseq
        %v9102 = vshrl.u32 %v9101, 7
        %v9103 = vsub.s32 %v9100, %v9102
        %v9104 = vrot.slane %v9090, %v9103
        %v9105 = vcombine.high %v9097, 0.0
        %v9107 = vunpack.c.l.s4 1934713408
        %v9108 = vunpack.c.0.s8 %v9107
        %v9109 = vlaneseq
        %v9110 = vshrl.u32 %v9109, 7
        %v9111 = vsub.s32 %v9108, %v9110
        %v9112 = vrot.slane %v9097, %v9111
        %v9114 = vunpack.c.l.s4 1934713408
        %v9115 = vunpack.c.0.s8 %v9114
        %v9116 = vlaneseq
        %v9117 = vshrl.u32 %v9116, 7
        %v9118 = vsub.s32 %v9115, %v9117
        %v9119 = vrot.slane %v9105, %v9118
        %v9120 = vcombine.high %v9104, 0.0
        %v9122 = vunpack.c.l.s4 1934713408
        %v9123 = vunpack.c.0.s8 %v9122
        %v9124 = vlaneseq
        %v9125 = vshrl.u32 %v9124, 7
        %v9126 = vsub.s32 %v9123, %v9125
        %v9127 = vrot.slane %v9104, %v9126
        %v9129 = vunpack.c.l.s4 1934713408
        %v9130 = vunpack.c.0.s8 %v9129
        %v9131 = vlaneseq
        %v9132 = vshrl.u32 %v9131, 7
        %v9133 = vsub.s32 %v9130, %v9132
        %v9134 = vrot.slane %v9120, %v9133
        %v9135 = vcombine.high %v9112, 0.0
        %v9136 = vcombine.high %v9119, 0.0
        %v9137 = vcombine.high %v9127, 0.0
        %v9138 = vcombine.high %v9134, 0.0
        %v9139 = vcombine.high %v1748, 0.0
        %v9141 = vunpack.c.l.s4 1983009808
        %v9142 = vunpack.c.0.s8 %v9141
        %v9143 = vlaneseq
        %v9144 = vshrl.u32 %v9143, 7
        %v9145 = vsub.s32 %v9142, %v9144
        %v9146 = vrot.slane %v1748, %v9145
        %v9148 = vunpack.c.l.s4 1983009808
        %v9149 = vunpack.c.0.s8 %v9148
        %v9150 = vlaneseq
        %v9151 = vshrl.u32 %v9150, 7
        %v9152 = vsub.s32 %v9149, %v9151
        %v9153 = vrot.slane %v9139, %v9152
        %v9154 = vcombine.high %v9146, 0.0
        %v9156 = vunpack.c.l.s4 1934713408
        %v9157 = vunpack.c.0.s8 %v9156
        %v9158 = vlaneseq
        %v9159 = vshrl.u32 %v9158, 7
        %v9160 = vsub.s32 %v9157, %v9159
        %v9161 = vrot.slane %v9146, %v9160
        %v9163 = vunpack.c.l.s4 1934713408
        %v9164 = vunpack.c.0.s8 %v9163
        %v9165 = vlaneseq
        %v9166 = vshrl.u32 %v9165, 7
        %v9167 = vsub.s32 %v9164, %v9166
        %v9168 = vrot.slane %v9154, %v9167
        %v9169 = vcombine.high %v9153, 0.0
        %v9171 = vunpack.c.l.s4 1934713408
        %v9172 = vunpack.c.0.s8 %v9171
        %v9173 = vlaneseq
        %v9174 = vshrl.u32 %v9173, 7
        %v9175 = vsub.s32 %v9172, %v9174
        %v9176 = vrot.slane %v9153, %v9175
        %v9178 = vunpack.c.l.s4 1934713408
        %v9179 = vunpack.c.0.s8 %v9178
        %v9180 = vlaneseq
        %v9181 = vshrl.u32 %v9180, 7
        %v9182 = vsub.s32 %v9179, %v9181
        %v9183 = vrot.slane %v9169, %v9182
        %v9184 = vcombine.high %v9161, 0.0
        %v9185 = vcombine.high %v9168, 0.0
        %v9186 = vcombine.high %v9176, 0.0
        %v9187 = vcombine.high %v9183, 0.0
        %v9188 = vcombine.high %v1749, 0.0
        %v9190 = vunpack.c.l.s4 1983009808
        %v9191 = vunpack.c.0.s8 %v9190
        %v9192 = vlaneseq
        %v9193 = vshrl.u32 %v9192, 7
        %v9194 = vsub.s32 %v9191, %v9193
        %v9195 = vrot.slane %v1749, %v9194
        %v9197 = vunpack.c.l.s4 1983009808
        %v9198 = vunpack.c.0.s8 %v9197
        %v9199 = vlaneseq
        %v9200 = vshrl.u32 %v9199, 7
        %v9201 = vsub.s32 %v9198, %v9200
        %v9202 = vrot.slane %v9188, %v9201
        %v9203 = vcombine.high %v9195, 0.0
        %v9205 = vunpack.c.l.s4 1934713408
        %v9206 = vunpack.c.0.s8 %v9205
        %v9207 = vlaneseq
        %v9208 = vshrl.u32 %v9207, 7
        %v9209 = vsub.s32 %v9206, %v9208
        %v9210 = vrot.slane %v9195, %v9209
        %v9212 = vunpack.c.l.s4 1934713408
        %v9213 = vunpack.c.0.s8 %v9212
        %v9214 = vlaneseq
        %v9215 = vshrl.u32 %v9214, 7
        %v9216 = vsub.s32 %v9213, %v9215
        %v9217 = vrot.slane %v9203, %v9216
        %v9218 = vcombine.high %v9202, 0.0
        %v9220 = vunpack.c.l.s4 1934713408
        %v9221 = vunpack.c.0.s8 %v9220
        %v9222 = vlaneseq
        %v9223 = vshrl.u32 %v9222, 7
        %v9224 = vsub.s32 %v9221, %v9223
        %v9225 = vrot.slane %v9202, %v9224
        %v9227 = vunpack.c.l.s4 1934713408
        %v9228 = vunpack.c.0.s8 %v9227
        %v9229 = vlaneseq
        %v9230 = vshrl.u32 %v9229, 7
        %v9231 = vsub.s32 %v9228, %v9230
        %v9232 = vrot.slane %v9218, %v9231
        %v9233 = vcombine.high %v9210, 0.0
        %v9234 = vcombine.high %v9217, 0.0
        %v9235 = vcombine.high %v9225, 0.0
        %v9236 = vcombine.high %v9232, 0.0
        %v9237 = vcombine.high %v1750, 0.0
        %v9239 = vunpack.c.l.s4 1983009808
        %v9240 = vunpack.c.0.s8 %v9239
        %v9241 = vlaneseq
        %v9242 = vshrl.u32 %v9241, 7
        %v9243 = vsub.s32 %v9240, %v9242
        %v9244 = vrot.slane %v1750, %v9243
        %v9246 = vunpack.c.l.s4 1983009808
        %v9247 = vunpack.c.0.s8 %v9246
        %v9248 = vlaneseq
        %v9249 = vshrl.u32 %v9248, 7
        %v9250 = vsub.s32 %v9247, %v9249
        %v9251 = vrot.slane %v9237, %v9250
        %v9252 = vcombine.high %v9244, 0.0
        %v9254 = vunpack.c.l.s4 1934713408
        %v9255 = vunpack.c.0.s8 %v9254
        %v9256 = vlaneseq
        %v9257 = vshrl.u32 %v9256, 7
        %v9258 = vsub.s32 %v9255, %v9257
        %v9259 = vrot.slane %v9244, %v9258
        %v9261 = vunpack.c.l.s4 1934713408
        %v9262 = vunpack.c.0.s8 %v9261
        %v9263 = vlaneseq
        %v9264 = vshrl.u32 %v9263, 7
        %v9265 = vsub.s32 %v9262, %v9264
        %v9266 = vrot.slane %v9252, %v9265
        %v9267 = vcombine.high %v9251, 0.0
        %v9269 = vunpack.c.l.s4 1934713408
        %v9270 = vunpack.c.0.s8 %v9269
        %v9271 = vlaneseq
        %v9272 = vshrl.u32 %v9271, 7
        %v9273 = vsub.s32 %v9270, %v9272
        %v9274 = vrot.slane %v9251, %v9273
        %v9276 = vunpack.c.l.s4 1934713408
        %v9277 = vunpack.c.0.s8 %v9276
        %v9278 = vlaneseq
        %v9279 = vshrl.u32 %v9278, 7
        %v9280 = vsub.s32 %v9277, %v9279
        %v9281 = vrot.slane %v9267, %v9280
        %v9282 = vcombine.high %v9259, 0.0
        %v9283 = vcombine.high %v9266, 0.0
        %v9284 = vcombine.high %v9274, 0.0
        %v9285 = vcombine.high %v9281, 0.0
        %v9286 = vcombine.high %v1751, 0.0
        %v9288 = vunpack.c.l.s4 1983009808
        %v9289 = vunpack.c.0.s8 %v9288
        %v9290 = vlaneseq
        %v9291 = vshrl.u32 %v9290, 7
        %v9292 = vsub.s32 %v9289, %v9291
        %v9293 = vrot.slane %v1751, %v9292
        %v9295 = vunpack.c.l.s4 1983009808
        %v9296 = vunpack.c.0.s8 %v9295
        %v9297 = vlaneseq
        %v9298 = vshrl.u32 %v9297, 7
        %v9299 = vsub.s32 %v9296, %v9298
        %v9300 = vrot.slane %v9286, %v9299
        %v9301 = vcombine.high %v9293, 0.0
        %v9303 = vunpack.c.l.s4 1934713408
        %v9304 = vunpack.c.0.s8 %v9303
        %v9305 = vlaneseq
        %v9306 = vshrl.u32 %v9305, 7
        %v9307 = vsub.s32 %v9304, %v9306
        %v9308 = vrot.slane %v9293, %v9307
        %v9310 = vunpack.c.l.s4 1934713408
        %v9311 = vunpack.c.0.s8 %v9310
        %v9312 = vlaneseq
        %v9313 = vshrl.u32 %v9312, 7
        %v9314 = vsub.s32 %v9311, %v9313
        %v9315 = vrot.slane %v9301, %v9314
        %v9316 = vcombine.high %v9300, 0.0
        %v9318 = vunpack.c.l.s4 1934713408
        %v9319 = vunpack.c.0.s8 %v9318
        %v9320 = vlaneseq
        %v9321 = vshrl.u32 %v9320, 7
        %v9322 = vsub.s32 %v9319, %v9321
        %v9323 = vrot.slane %v9300, %v9322
        %v9325 = vunpack.c.l.s4 1934713408
        %v9326 = vunpack.c.0.s8 %v9325
        %v9327 = vlaneseq
        %v9328 = vshrl.u32 %v9327, 7
        %v9329 = vsub.s32 %v9326, %v9328
        %v9330 = vrot.slane %v9316, %v9329
        %v9331 = vcombine.high %v9308, 0.0
        %v9332 = vcombine.high %v9315, 0.0
        %v9333 = vcombine.high %v9323, 0.0
        %v9334 = vcombine.high %v9330, 0.0
        %v9335 = vcombine.high %v1752, 0.0
        %v9337 = vunpack.c.l.s4 1983009808
        %v9338 = vunpack.c.0.s8 %v9337
        %v9339 = vlaneseq
        %v9340 = vshrl.u32 %v9339, 7
        %v9341 = vsub.s32 %v9338, %v9340
        %v9342 = vrot.slane %v1752, %v9341
        %v9344 = vunpack.c.l.s4 1983009808
        %v9345 = vunpack.c.0.s8 %v9344
        %v9346 = vlaneseq
        %v9347 = vshrl.u32 %v9346, 7
        %v9348 = vsub.s32 %v9345, %v9347
        %v9349 = vrot.slane %v9335, %v9348
        %v9350 = vcombine.high %v9342, 0.0
        %v9352 = vunpack.c.l.s4 1934713408
        %v9353 = vunpack.c.0.s8 %v9352
        %v9354 = vlaneseq
        %v9355 = vshrl.u32 %v9354, 7
        %v9356 = vsub.s32 %v9353, %v9355
        %v9357 = vrot.slane %v9342, %v9356
        %v9359 = vunpack.c.l.s4 1934713408
        %v9360 = vunpack.c.0.s8 %v9359
        %v9361 = vlaneseq
        %v9362 = vshrl.u32 %v9361, 7
        %v9363 = vsub.s32 %v9360, %v9362
        %v9364 = vrot.slane %v9350, %v9363
        %v9365 = vcombine.high %v9349, 0.0
        %v9367 = vunpack.c.l.s4 1934713408
        %v9368 = vunpack.c.0.s8 %v9367
        %v9369 = vlaneseq
        %v9370 = vshrl.u32 %v9369, 7
        %v9371 = vsub.s32 %v9368, %v9370
        %v9372 = vrot.slane %v9349, %v9371
        %v9374 = vunpack.c.l.s4 1934713408
        %v9375 = vunpack.c.0.s8 %v9374
        %v9376 = vlaneseq
        %v9377 = vshrl.u32 %v9376, 7
        %v9378 = vsub.s32 %v9375, %v9377
        %v9379 = vrot.slane %v9365, %v9378
        %v9380 = vcombine.high %v9357, 0.0
        %v9381 = vcombine.high %v9364, 0.0
        %v9382 = vcombine.high %v9372, 0.0
        %v9383 = vcombine.high %v9379, 0.0
        %v9384 = vcombine.high %v1753, 0.0
        %v9386 = vunpack.c.l.s4 1983009808
        %v9387 = vunpack.c.0.s8 %v9386
        %v9388 = vlaneseq
        %v9389 = vshrl.u32 %v9388, 7
        %v9390 = vsub.s32 %v9387, %v9389
        %v9391 = vrot.slane %v1753, %v9390
        %v9393 = vunpack.c.l.s4 1983009808
        %v9394 = vunpack.c.0.s8 %v9393
        %v9395 = vlaneseq
        %v9396 = vshrl.u32 %v9395, 7
        %v9397 = vsub.s32 %v9394, %v9396
        %v9398 = vrot.slane %v9384, %v9397
        %v9399 = vcombine.high %v9391, 0.0
        %v9401 = vunpack.c.l.s4 1934713408
        %v9402 = vunpack.c.0.s8 %v9401
        %v9403 = vlaneseq
        %v9404 = vshrl.u32 %v9403, 7
        %v9405 = vsub.s32 %v9402, %v9404
        %v9406 = vrot.slane %v9391, %v9405
        %v9408 = vunpack.c.l.s4 1934713408
        %v9409 = vunpack.c.0.s8 %v9408
        %v9410 = vlaneseq
        %v9411 = vshrl.u32 %v9410, 7
        %v9412 = vsub.s32 %v9409, %v9411
        %v9413 = vrot.slane %v9399, %v9412
        %v9414 = vcombine.high %v9398, 0.0
        %v9416 = vunpack.c.l.s4 1934713408
        %v9417 = vunpack.c.0.s8 %v9416
        %v9418 = vlaneseq
        %v9419 = vshrl.u32 %v9418, 7
        %v9420 = vsub.s32 %v9417, %v9419
        %v9421 = vrot.slane %v9398, %v9420
        %v9423 = vunpack.c.l.s4 1934713408
        %v9424 = vunpack.c.0.s8 %v9423
        %v9425 = vlaneseq
        %v9426 = vshrl.u32 %v9425, 7
        %v9427 = vsub.s32 %v9424, %v9426
        %v9428 = vrot.slane %v9414, %v9427
        %v9429 = vcombine.high %v9406, 0.0
        %v9430 = vcombine.high %v9413, 0.0
        %v9431 = vcombine.high %v9421, 0.0
        %v9432 = vcombine.high %v9428, 0.0
        %v9433 = vcombine.high %v1754, 0.0
        %v9435 = vunpack.c.l.s4 1983009808
        %v9436 = vunpack.c.0.s8 %v9435
        %v9437 = vlaneseq
        %v9438 = vshrl.u32 %v9437, 7
        %v9439 = vsub.s32 %v9436, %v9438
        %v9440 = vrot.slane %v1754, %v9439
        %v9442 = vunpack.c.l.s4 1983009808
        %v9443 = vunpack.c.0.s8 %v9442
        %v9444 = vlaneseq
        %v9445 = vshrl.u32 %v9444, 7
        %v9446 = vsub.s32 %v9443, %v9445
        %v9447 = vrot.slane %v9433, %v9446
        %v9448 = vcombine.high %v9440, 0.0
        %v9450 = vunpack.c.l.s4 1934713408
        %v9451 = vunpack.c.0.s8 %v9450
        %v9452 = vlaneseq
        %v9453 = vshrl.u32 %v9452, 7
        %v9454 = vsub.s32 %v9451, %v9453
        %v9455 = vrot.slane %v9440, %v9454
        %v9457 = vunpack.c.l.s4 1934713408
        %v9458 = vunpack.c.0.s8 %v9457
        %v9459 = vlaneseq
        %v9460 = vshrl.u32 %v9459, 7
        %v9461 = vsub.s32 %v9458, %v9460
        %v9462 = vrot.slane %v9448, %v9461
        %v9463 = vcombine.high %v9447, 0.0
        %v9465 = vunpack.c.l.s4 1934713408
        %v9466 = vunpack.c.0.s8 %v9465
        %v9467 = vlaneseq
        %v9468 = vshrl.u32 %v9467, 7
        %v9469 = vsub.s32 %v9466, %v9468
        %v9470 = vrot.slane %v9447, %v9469
        %v9472 = vunpack.c.l.s4 1934713408
        %v9473 = vunpack.c.0.s8 %v9472
        %v9474 = vlaneseq
        %v9475 = vshrl.u32 %v9474, 7
        %v9476 = vsub.s32 %v9473, %v9475
        %v9477 = vrot.slane %v9463, %v9476
        %v9478 = vcombine.high %v9455, 0.0
        %v9479 = vcombine.high %v9462, 0.0
        %v9480 = vcombine.high %v9470, 0.0
        %v9481 = vcombine.high %v9477, 0.0
        %v9482 = vcombine.high %v1755, 0.0
        %v9484 = vunpack.c.l.s4 1983009808
        %v9485 = vunpack.c.0.s8 %v9484
        %v9486 = vlaneseq
        %v9487 = vshrl.u32 %v9486, 7
        %v9488 = vsub.s32 %v9485, %v9487
        %v9489 = vrot.slane %v1755, %v9488
        %v9491 = vunpack.c.l.s4 1983009808
        %v9492 = vunpack.c.0.s8 %v9491
        %v9493 = vlaneseq
        %v9494 = vshrl.u32 %v9493, 7
        %v9495 = vsub.s32 %v9492, %v9494
        %v9496 = vrot.slane %v9482, %v9495
        %v9497 = vcombine.high %v9489, 0.0
        %v9499 = vunpack.c.l.s4 1934713408
        %v9500 = vunpack.c.0.s8 %v9499
        %v9501 = vlaneseq
        %v9502 = vshrl.u32 %v9501, 7
        %v9503 = vsub.s32 %v9500, %v9502
        %v9504 = vrot.slane %v9489, %v9503
        %v9506 = vunpack.c.l.s4 1934713408
        %v9507 = vunpack.c.0.s8 %v9506
        %v9508 = vlaneseq
        %v9509 = vshrl.u32 %v9508, 7
        %v9510 = vsub.s32 %v9507, %v9509
        %v9511 = vrot.slane %v9497, %v9510
        %v9512 = vcombine.high %v9496, 0.0
        %v9514 = vunpack.c.l.s4 1934713408
        %v9515 = vunpack.c.0.s8 %v9514
        %v9516 = vlaneseq
        %v9517 = vshrl.u32 %v9516, 7
        %v9518 = vsub.s32 %v9515, %v9517
        %v9519 = vrot.slane %v9496, %v9518
        %v9521 = vunpack.c.l.s4 1934713408
        %v9522 = vunpack.c.0.s8 %v9521
        %v9523 = vlaneseq
        %v9524 = vshrl.u32 %v9523, 7
        %v9525 = vsub.s32 %v9522, %v9524
        %v9526 = vrot.slane %v9512, %v9525
        %v9527 = vcombine.high %v9504, 0.0
        %v9528 = vcombine.high %v9511, 0.0
        %v9529 = vcombine.high %v9519, 0.0
        %v9530 = vcombine.high %v9526, 0.0
        %v9531 = vcombine.high %v1756, 0.0
        %v9533 = vunpack.c.l.s4 1983009808
        %v9534 = vunpack.c.0.s8 %v9533
        %v9535 = vlaneseq
        %v9536 = vshrl.u32 %v9535, 7
        %v9537 = vsub.s32 %v9534, %v9536
        %v9538 = vrot.slane %v1756, %v9537
        %v9540 = vunpack.c.l.s4 1983009808
        %v9541 = vunpack.c.0.s8 %v9540
        %v9542 = vlaneseq
        %v9543 = vshrl.u32 %v9542, 7
        %v9544 = vsub.s32 %v9541, %v9543
        %v9545 = vrot.slane %v9531, %v9544
        %v9546 = vcombine.high %v9538, 0.0
        %v9548 = vunpack.c.l.s4 1934713408
        %v9549 = vunpack.c.0.s8 %v9548
        %v9550 = vlaneseq
        %v9551 = vshrl.u32 %v9550, 7
        %v9552 = vsub.s32 %v9549, %v9551
        %v9553 = vrot.slane %v9538, %v9552
        %v9555 = vunpack.c.l.s4 1934713408
        %v9556 = vunpack.c.0.s8 %v9555
        %v9557 = vlaneseq
        %v9558 = vshrl.u32 %v9557, 7
        %v9559 = vsub.s32 %v9556, %v9558
        %v9560 = vrot.slane %v9546, %v9559
        %v9561 = vcombine.high %v9545, 0.0
        %v9563 = vunpack.c.l.s4 1934713408
        %v9564 = vunpack.c.0.s8 %v9563
        %v9565 = vlaneseq
        %v9566 = vshrl.u32 %v9565, 7
        %v9567 = vsub.s32 %v9564, %v9566
        %v9568 = vrot.slane %v9545, %v9567
        %v9570 = vunpack.c.l.s4 1934713408
        %v9571 = vunpack.c.0.s8 %v9570
        %v9572 = vlaneseq
        %v9573 = vshrl.u32 %v9572, 7
        %v9574 = vsub.s32 %v9571, %v9573
        %v9575 = vrot.slane %v9561, %v9574
        %v9576 = vcombine.high %v9553, 0.0
        %v9577 = vcombine.high %v9560, 0.0
        %v9578 = vcombine.high %v9568, 0.0
        %v9579 = vcombine.high %v9575, 0.0
        %v9580 = vcombine.high %v1757, 0.0
        %v9582 = vunpack.c.l.s4 1983009808
        %v9583 = vunpack.c.0.s8 %v9582
        %v9584 = vlaneseq
        %v9585 = vshrl.u32 %v9584, 7
        %v9586 = vsub.s32 %v9583, %v9585
        %v9587 = vrot.slane %v1757, %v9586
        %v9589 = vunpack.c.l.s4 1983009808
        %v9590 = vunpack.c.0.s8 %v9589
        %v9591 = vlaneseq
        %v9592 = vshrl.u32 %v9591, 7
        %v9593 = vsub.s32 %v9590, %v9592
        %v9594 = vrot.slane %v9580, %v9593
        %v9595 = vcombine.high %v9587, 0.0
        %v9597 = vunpack.c.l.s4 1934713408
        %v9598 = vunpack.c.0.s8 %v9597
        %v9599 = vlaneseq
        %v9600 = vshrl.u32 %v9599, 7
        %v9601 = vsub.s32 %v9598, %v9600
        %v9602 = vrot.slane %v9587, %v9601
        %v9604 = vunpack.c.l.s4 1934713408
        %v9605 = vunpack.c.0.s8 %v9604
        %v9606 = vlaneseq
        %v9607 = vshrl.u32 %v9606, 7
        %v9608 = vsub.s32 %v9605, %v9607
        %v9609 = vrot.slane %v9595, %v9608
        %v9610 = vcombine.high %v9594, 0.0
        %v9612 = vunpack.c.l.s4 1934713408
        %v9613 = vunpack.c.0.s8 %v9612
        %v9614 = vlaneseq
        %v9615 = vshrl.u32 %v9614, 7
        %v9616 = vsub.s32 %v9613, %v9615
        %v9617 = vrot.slane %v9594, %v9616
        %v9619 = vunpack.c.l.s4 1934713408
        %v9620 = vunpack.c.0.s8 %v9619
        %v9621 = vlaneseq
        %v9622 = vshrl.u32 %v9621, 7
        %v9623 = vsub.s32 %v9620, %v9622
        %v9624 = vrot.slane %v9610, %v9623
        %v9625 = vcombine.high %v9602, 0.0
        %v9626 = vcombine.high %v9609, 0.0
        %v9627 = vcombine.high %v9617, 0.0
        %v9628 = vcombine.high %v9624, 0.0
        %v9629 = vcombine.high %v1758, 0.0
        %v9631 = vunpack.c.l.s4 1983009808
        %v9632 = vunpack.c.0.s8 %v9631
        %v9633 = vlaneseq
        %v9634 = vshrl.u32 %v9633, 7
        %v9635 = vsub.s32 %v9632, %v9634
        %v9636 = vrot.slane %v1758, %v9635
        %v9638 = vunpack.c.l.s4 1983009808
        %v9639 = vunpack.c.0.s8 %v9638
        %v9640 = vlaneseq
        %v9641 = vshrl.u32 %v9640, 7
        %v9642 = vsub.s32 %v9639, %v9641
        %v9643 = vrot.slane %v9629, %v9642
        %v9644 = vcombine.high %v9636, 0.0
        %v9646 = vunpack.c.l.s4 1934713408
        %v9647 = vunpack.c.0.s8 %v9646
        %v9648 = vlaneseq
        %v9649 = vshrl.u32 %v9648, 7
        %v9650 = vsub.s32 %v9647, %v9649
        %v9651 = vrot.slane %v9636, %v9650
        %v9653 = vunpack.c.l.s4 1934713408
        %v9654 = vunpack.c.0.s8 %v9653
        %v9655 = vlaneseq
        %v9656 = vshrl.u32 %v9655, 7
        %v9657 = vsub.s32 %v9654, %v9656
        %v9658 = vrot.slane %v9644, %v9657
        %v9659 = vcombine.high %v9643, 0.0
        %v9661 = vunpack.c.l.s4 1934713408
        %v9662 = vunpack.c.0.s8 %v9661
        %v9663 = vlaneseq
        %v9664 = vshrl.u32 %v9663, 7
        %v9665 = vsub.s32 %v9662, %v9664
        %v9666 = vrot.slane %v9643, %v9665
        %v9668 = vunpack.c.l.s4 1934713408
        %v9669 = vunpack.c.0.s8 %v9668
        %v9670 = vlaneseq
        %v9671 = vshrl.u32 %v9670, 7
        %v9672 = vsub.s32 %v9669, %v9671
        %v9673 = vrot.slane %v9659, %v9672
        %v9674 = vcombine.high %v9651, 0.0
        %v9675 = vcombine.high %v9658, 0.0
        %v9676 = vcombine.high %v9666, 0.0
        %v9677 = vcombine.high %v9673, 0.0
        %v9678 = vcombine.high %v1759, 0.0
        %v9680 = vunpack.c.l.s4 1983009808
        %v9681 = vunpack.c.0.s8 %v9680
        %v9682 = vlaneseq
        %v9683 = vshrl.u32 %v9682, 7
        %v9684 = vsub.s32 %v9681, %v9683
        %v9685 = vrot.slane %v1759, %v9684
        %v9687 = vunpack.c.l.s4 1983009808
        %v9688 = vunpack.c.0.s8 %v9687
        %v9689 = vlaneseq
        %v9690 = vshrl.u32 %v9689, 7
        %v9691 = vsub.s32 %v9688, %v9690
        %v9692 = vrot.slane %v9678, %v9691
        %v9693 = vcombine.high %v9685, 0.0
        %v9695 = vunpack.c.l.s4 1934713408
        %v9696 = vunpack.c.0.s8 %v9695
        %v9697 = vlaneseq
        %v9698 = vshrl.u32 %v9697, 7
        %v9699 = vsub.s32 %v9696, %v9698
        %v9700 = vrot.slane %v9685, %v9699
        %v9702 = vunpack.c.l.s4 1934713408
        %v9703 = vunpack.c.0.s8 %v9702
        %v9704 = vlaneseq
        %v9705 = vshrl.u32 %v9704, 7
        %v9706 = vsub.s32 %v9703, %v9705
        %v9707 = vrot.slane %v9693, %v9706
        %v9708 = vcombine.high %v9692, 0.0
        %v9710 = vunpack.c.l.s4 1934713408
        %v9711 = vunpack.c.0.s8 %v9710
        %v9712 = vlaneseq
        %v9713 = vshrl.u32 %v9712, 7
        %v9714 = vsub.s32 %v9711, %v9713
        %v9715 = vrot.slane %v9692, %v9714
        %v9717 = vunpack.c.l.s4 1934713408
        %v9718 = vunpack.c.0.s8 %v9717
        %v9719 = vlaneseq
        %v9720 = vshrl.u32 %v9719, 7
        %v9721 = vsub.s32 %v9718, %v9720
        %v9722 = vrot.slane %v9708, %v9721
        %v9723 = vcombine.high %v9700, 0.0
        %v9724 = vcombine.high %v9707, 0.0
        %v9725 = vcombine.high %v9715, 0.0
        %v9726 = vcombine.high %v9722, 0.0
        %v9727 = vcombine.high %v1760, 0.0
        %v9729 = vunpack.c.l.s4 1983009808
        %v9730 = vunpack.c.0.s8 %v9729
        %v9731 = vlaneseq
        %v9732 = vshrl.u32 %v9731, 7
        %v9733 = vsub.s32 %v9730, %v9732
        %v9734 = vrot.slane %v1760, %v9733
        %v9736 = vunpack.c.l.s4 1983009808
        %v9737 = vunpack.c.0.s8 %v9736
        %v9738 = vlaneseq
        %v9739 = vshrl.u32 %v9738, 7
        %v9740 = vsub.s32 %v9737, %v9739
        %v9741 = vrot.slane %v9727, %v9740
        %v9742 = vcombine.high %v9734, 0.0
        %v9744 = vunpack.c.l.s4 1934713408
        %v9745 = vunpack.c.0.s8 %v9744
        %v9746 = vlaneseq
        %v9747 = vshrl.u32 %v9746, 7
        %v9748 = vsub.s32 %v9745, %v9747
        %v9749 = vrot.slane %v9734, %v9748
        %v9751 = vunpack.c.l.s4 1934713408
        %v9752 = vunpack.c.0.s8 %v9751
        %v9753 = vlaneseq
        %v9754 = vshrl.u32 %v9753, 7
        %v9755 = vsub.s32 %v9752, %v9754
        %v9756 = vrot.slane %v9742, %v9755
        %v9757 = vcombine.high %v9741, 0.0
        %v9759 = vunpack.c.l.s4 1934713408
        %v9760 = vunpack.c.0.s8 %v9759
        %v9761 = vlaneseq
        %v9762 = vshrl.u32 %v9761, 7
        %v9763 = vsub.s32 %v9760, %v9762
        %v9764 = vrot.slane %v9741, %v9763
        %v9766 = vunpack.c.l.s4 1934713408
        %v9767 = vunpack.c.0.s8 %v9766
        %v9768 = vlaneseq
        %v9769 = vshrl.u32 %v9768, 7
        %v9770 = vsub.s32 %v9767, %v9769
        %v9771 = vrot.slane %v9757, %v9770
        %v9772 = vcombine.high %v9749, 0.0
        %v9773 = vcombine.high %v9756, 0.0
        %v9774 = vcombine.high %v9764, 0.0
        %v9775 = vcombine.high %v9771, 0.0
        %v9776 = vcombine.high %v1761, 0.0
        %v9778 = vunpack.c.l.s4 1983009808
        %v9779 = vunpack.c.0.s8 %v9778
        %v9780 = vlaneseq
        %v9781 = vshrl.u32 %v9780, 7
        %v9782 = vsub.s32 %v9779, %v9781
        %v9783 = vrot.slane %v1761, %v9782
        %v9785 = vunpack.c.l.s4 1983009808
        %v9786 = vunpack.c.0.s8 %v9785
        %v9787 = vlaneseq
        %v9788 = vshrl.u32 %v9787, 7
        %v9789 = vsub.s32 %v9786, %v9788
        %v9790 = vrot.slane %v9776, %v9789
        %v9791 = vcombine.high %v9783, 0.0
        %v9793 = vunpack.c.l.s4 1934713408
        %v9794 = vunpack.c.0.s8 %v9793
        %v9795 = vlaneseq
        %v9796 = vshrl.u32 %v9795, 7
        %v9797 = vsub.s32 %v9794, %v9796
        %v9798 = vrot.slane %v9783, %v9797
        %v9800 = vunpack.c.l.s4 1934713408
        %v9801 = vunpack.c.0.s8 %v9800
        %v9802 = vlaneseq
        %v9803 = vshrl.u32 %v9802, 7
        %v9804 = vsub.s32 %v9801, %v9803
        %v9805 = vrot.slane %v9791, %v9804
        %v9806 = vcombine.high %v9790, 0.0
        %v9808 = vunpack.c.l.s4 1934713408
        %v9809 = vunpack.c.0.s8 %v9808
        %v9810 = vlaneseq
        %v9811 = vshrl.u32 %v9810, 7
        %v9812 = vsub.s32 %v9809, %v9811
        %v9813 = vrot.slane %v9790, %v9812
        %v9815 = vunpack.c.l.s4 1934713408
        %v9816 = vunpack.c.0.s8 %v9815
        %v9817 = vlaneseq
        %v9818 = vshrl.u32 %v9817, 7
        %v9819 = vsub.s32 %v9816, %v9818
        %v9820 = vrot.slane %v9806, %v9819
        %v9821 = vcombine.high %v9798, 0.0
        %v9822 = vcombine.high %v9805, 0.0
        %v9823 = vcombine.high %v9813, 0.0
        %v9824 = vcombine.high %v9820, 0.0
        %v9825 = vcombine.high %v1762, 0.0
        %v9827 = vunpack.c.l.s4 1983009808
        %v9828 = vunpack.c.0.s8 %v9827
        %v9829 = vlaneseq
        %v9830 = vshrl.u32 %v9829, 7
        %v9831 = vsub.s32 %v9828, %v9830
        %v9832 = vrot.slane %v1762, %v9831
        %v9834 = vunpack.c.l.s4 1983009808
        %v9835 = vunpack.c.0.s8 %v9834
        %v9836 = vlaneseq
        %v9837 = vshrl.u32 %v9836, 7
        %v9838 = vsub.s32 %v9835, %v9837
        %v9839 = vrot.slane %v9825, %v9838
        %v9840 = vcombine.high %v9832, 0.0
        %v9842 = vunpack.c.l.s4 1934713408
        %v9843 = vunpack.c.0.s8 %v9842
        %v9844 = vlaneseq
        %v9845 = vshrl.u32 %v9844, 7
        %v9846 = vsub.s32 %v9843, %v9845
        %v9847 = vrot.slane %v9832, %v9846
        %v9849 = vunpack.c.l.s4 1934713408
        %v9850 = vunpack.c.0.s8 %v9849
        %v9851 = vlaneseq
        %v9852 = vshrl.u32 %v9851, 7
        %v9853 = vsub.s32 %v9850, %v9852
        %v9854 = vrot.slane %v9840, %v9853
        %v9855 = vcombine.high %v9839, 0.0
        %v9857 = vunpack.c.l.s4 1934713408
        %v9858 = vunpack.c.0.s8 %v9857
        %v9859 = vlaneseq
        %v9860 = vshrl.u32 %v9859, 7
        %v9861 = vsub.s32 %v9858, %v9860
        %v9862 = vrot.slane %v9839, %v9861
        %v9864 = vunpack.c.l.s4 1934713408
        %v9865 = vunpack.c.0.s8 %v9864
        %v9866 = vlaneseq
        %v9867 = vshrl.u32 %v9866, 7
        %v9868 = vsub.s32 %v9865, %v9867
        %v9869 = vrot.slane %v9855, %v9868
        %v9870 = vcombine.high %v9847, 0.0
        %v9871 = vcombine.high %v9854, 0.0
        %v9872 = vcombine.high %v9862, 0.0
        %v9873 = vcombine.high %v9869, 0.0
        %v9874 = vcombine.high %v1763, 0.0
        %v9876 = vunpack.c.l.s4 1983009808
        %v9877 = vunpack.c.0.s8 %v9876
        %v9878 = vlaneseq
        %v9879 = vshrl.u32 %v9878, 7
        %v9880 = vsub.s32 %v9877, %v9879
        %v9881 = vrot.slane %v1763, %v9880
        %v9883 = vunpack.c.l.s4 1983009808
        %v9884 = vunpack.c.0.s8 %v9883
        %v9885 = vlaneseq
        %v9886 = vshrl.u32 %v9885, 7
        %v9887 = vsub.s32 %v9884, %v9886
        %v9888 = vrot.slane %v9874, %v9887
        %v9889 = vcombine.high %v9881, 0.0
        %v9891 = vunpack.c.l.s4 1934713408
        %v9892 = vunpack.c.0.s8 %v9891
        %v9893 = vlaneseq
        %v9894 = vshrl.u32 %v9893, 7
        %v9895 = vsub.s32 %v9892, %v9894
        %v9896 = vrot.slane %v9881, %v9895
        %v9898 = vunpack.c.l.s4 1934713408
        %v9899 = vunpack.c.0.s8 %v9898
        %v9900 = vlaneseq
        %v9901 = vshrl.u32 %v9900, 7
        %v9902 = vsub.s32 %v9899, %v9901
        %v9903 = vrot.slane %v9889, %v9902
        %v9904 = vcombine.high %v9888, 0.0
        %v9906 = vunpack.c.l.s4 1934713408
        %v9907 = vunpack.c.0.s8 %v9906
        %v9908 = vlaneseq
        %v9909 = vshrl.u32 %v9908, 7
        %v9910 = vsub.s32 %v9907, %v9909
        %v9911 = vrot.slane %v9888, %v9910
        %v9913 = vunpack.c.l.s4 1934713408
        %v9914 = vunpack.c.0.s8 %v9913
        %v9915 = vlaneseq
        %v9916 = vshrl.u32 %v9915, 7
        %v9917 = vsub.s32 %v9914, %v9916
        %v9918 = vrot.slane %v9904, %v9917
        %v9919 = vcombine.high %v9896, 0.0
        %v9920 = vcombine.high %v9903, 0.0
        %v9921 = vcombine.high %v9911, 0.0
        %v9922 = vcombine.high %v9918, 0.0
        %v9923 = vcombine.high %v1764, 0.0
        %v9925 = vunpack.c.l.s4 1983009808
        %v9926 = vunpack.c.0.s8 %v9925
        %v9927 = vlaneseq
        %v9928 = vshrl.u32 %v9927, 7
        %v9929 = vsub.s32 %v9926, %v9928
        %v9930 = vrot.slane %v1764, %v9929
        %v9932 = vunpack.c.l.s4 1983009808
        %v9933 = vunpack.c.0.s8 %v9932
        %v9934 = vlaneseq
        %v9935 = vshrl.u32 %v9934, 7
        %v9936 = vsub.s32 %v9933, %v9935
        %v9937 = vrot.slane %v9923, %v9936
        %v9938 = vcombine.high %v9930, 0.0
        %v9940 = vunpack.c.l.s4 1934713408
        %v9941 = vunpack.c.0.s8 %v9940
        %v9942 = vlaneseq
        %v9943 = vshrl.u32 %v9942, 7
        %v9944 = vsub.s32 %v9941, %v9943
        %v9945 = vrot.slane %v9930, %v9944
        %v9947 = vunpack.c.l.s4 1934713408
        %v9948 = vunpack.c.0.s8 %v9947
        %v9949 = vlaneseq
        %v9950 = vshrl.u32 %v9949, 7
        %v9951 = vsub.s32 %v9948, %v9950
        %v9952 = vrot.slane %v9938, %v9951
        %v9953 = vcombine.high %v9937, 0.0
        %v9955 = vunpack.c.l.s4 1934713408
        %v9956 = vunpack.c.0.s8 %v9955
        %v9957 = vlaneseq
        %v9958 = vshrl.u32 %v9957, 7
        %v9959 = vsub.s32 %v9956, %v9958
        %v9960 = vrot.slane %v9937, %v9959
        %v9962 = vunpack.c.l.s4 1934713408
        %v9963 = vunpack.c.0.s8 %v9962
        %v9964 = vlaneseq
        %v9965 = vshrl.u32 %v9964, 7
        %v9966 = vsub.s32 %v9963, %v9965
        %v9967 = vrot.slane %v9953, %v9966
        %v9968 = vcombine.high %v9945, 0.0
        %v9969 = vcombine.high %v9952, 0.0
        %v9970 = vcombine.high %v9960, 0.0
        %v9971 = vcombine.high %v9967, 0.0
        %v9972 = vcombine.high %v1765, 0.0
        %v9974 = vunpack.c.l.s4 1983009808
        %v9975 = vunpack.c.0.s8 %v9974
        %v9976 = vlaneseq
        %v9977 = vshrl.u32 %v9976, 7
        %v9978 = vsub.s32 %v9975, %v9977
        %v9979 = vrot.slane %v1765, %v9978
        %v9981 = vunpack.c.l.s4 1983009808
        %v9982 = vunpack.c.0.s8 %v9981
        %v9983 = vlaneseq
        %v9984 = vshrl.u32 %v9983, 7
        %v9985 = vsub.s32 %v9982, %v9984
        %v9986 = vrot.slane %v9972, %v9985
        %v9987 = vcombine.high %v9979, 0.0
        %v9989 = vunpack.c.l.s4 1934713408
        %v9990 = vunpack.c.0.s8 %v9989
        %v9991 = vlaneseq
        %v9992 = vshrl.u32 %v9991, 7
        %v9993 = vsub.s32 %v9990, %v9992
        %v9994 = vrot.slane %v9979, %v9993
        %v9996 = vunpack.c.l.s4 1934713408
        %v9997 = vunpack.c.0.s8 %v9996
        %v9998 = vlaneseq
        %v9999 = vshrl.u32 %v9998, 7
        %v10000 = vsub.s32 %v9997, %v9999
        %v10001 = vrot.slane %v9987, %v10000
        %v10002 = vcombine.high %v9986, 0.0
        %v10004 = vunpack.c.l.s4 1934713408
        %v10005 = vunpack.c.0.s8 %v10004
        %v10006 = vlaneseq
        %v10007 = vshrl.u32 %v10006, 7
        %v10008 = vsub.s32 %v10005, %v10007
        %v10009 = vrot.slane %v9986, %v10008
        %v10011 = vunpack.c.l.s4 1934713408
        %v10012 = vunpack.c.0.s8 %v10011
        %v10013 = vlaneseq
        %v10014 = vshrl.u32 %v10013, 7
        %v10015 = vsub.s32 %v10012, %v10014
        %v10016 = vrot.slane %v10002, %v10015
        %v10017 = vcombine.high %v9994, 0.0
        %v10018 = vcombine.high %v10001, 0.0
        %v10019 = vcombine.high %v10009, 0.0
        %v10020 = vcombine.high %v10016, 0.0
        %v10021 = vcombine.high %v1766, 0.0
        %v10023 = vunpack.c.l.s4 1983009808
        %v10024 = vunpack.c.0.s8 %v10023
        %v10025 = vlaneseq
        %v10026 = vshrl.u32 %v10025, 7
        %v10027 = vsub.s32 %v10024, %v10026
        %v10028 = vrot.slane %v1766, %v10027
        %v10030 = vunpack.c.l.s4 1983009808
        %v10031 = vunpack.c.0.s8 %v10030
        %v10032 = vlaneseq
        %v10033 = vshrl.u32 %v10032, 7
        %v10034 = vsub.s32 %v10031, %v10033
        %v10035 = vrot.slane %v10021, %v10034
        %v10036 = vcombine.high %v10028, 0.0
        %v10038 = vunpack.c.l.s4 1934713408
        %v10039 = vunpack.c.0.s8 %v10038
        %v10040 = vlaneseq
        %v10041 = vshrl.u32 %v10040, 7
        %v10042 = vsub.s32 %v10039, %v10041
        %v10043 = vrot.slane %v10028, %v10042
        %v10045 = vunpack.c.l.s4 1934713408
        %v10046 = vunpack.c.0.s8 %v10045
        %v10047 = vlaneseq
        %v10048 = vshrl.u32 %v10047, 7
        %v10049 = vsub.s32 %v10046, %v10048
        %v10050 = vrot.slane %v10036, %v10049
        %v10051 = vcombine.high %v10035, 0.0
        %v10053 = vunpack.c.l.s4 1934713408
        %v10054 = vunpack.c.0.s8 %v10053
        %v10055 = vlaneseq
        %v10056 = vshrl.u32 %v10055, 7
        %v10057 = vsub.s32 %v10054, %v10056
        %v10058 = vrot.slane %v10035, %v10057
        %v10060 = vunpack.c.l.s4 1934713408
        %v10061 = vunpack.c.0.s8 %v10060
        %v10062 = vlaneseq
        %v10063 = vshrl.u32 %v10062, 7
        %v10064 = vsub.s32 %v10061, %v10063
        %v10065 = vrot.slane %v10051, %v10064
        %v10066 = vcombine.high %v10043, 0.0
        %v10067 = vcombine.high %v10050, 0.0
        %v10068 = vcombine.high %v10058, 0.0
        %v10069 = vcombine.high %v10065, 0.0
        %v10070 = vcombine.high %v1767, 0.0
        %v10072 = vunpack.c.l.s4 1983009808
        %v10073 = vunpack.c.0.s8 %v10072
        %v10074 = vlaneseq
        %v10075 = vshrl.u32 %v10074, 7
        %v10076 = vsub.s32 %v10073, %v10075
        %v10077 = vrot.slane %v1767, %v10076
        %v10079 = vunpack.c.l.s4 1983009808
        %v10080 = vunpack.c.0.s8 %v10079
        %v10081 = vlaneseq
        %v10082 = vshrl.u32 %v10081, 7
        %v10083 = vsub.s32 %v10080, %v10082
        %v10084 = vrot.slane %v10070, %v10083
        %v10085 = vcombine.high %v10077, 0.0
        %v10087 = vunpack.c.l.s4 1934713408
        %v10088 = vunpack.c.0.s8 %v10087
        %v10089 = vlaneseq
        %v10090 = vshrl.u32 %v10089, 7
        %v10091 = vsub.s32 %v10088, %v10090
        %v10092 = vrot.slane %v10077, %v10091
        %v10094 = vunpack.c.l.s4 1934713408
        %v10095 = vunpack.c.0.s8 %v10094
        %v10096 = vlaneseq
        %v10097 = vshrl.u32 %v10096, 7
        %v10098 = vsub.s32 %v10095, %v10097
        %v10099 = vrot.slane %v10085, %v10098
        %v10100 = vcombine.high %v10084, 0.0
        %v10102 = vunpack.c.l.s4 1934713408
        %v10103 = vunpack.c.0.s8 %v10102
        %v10104 = vlaneseq
        %v10105 = vshrl.u32 %v10104, 7
        %v10106 = vsub.s32 %v10103, %v10105
        %v10107 = vrot.slane %v10084, %v10106
        %v10109 = vunpack.c.l.s4 1934713408
        %v10110 = vunpack.c.0.s8 %v10109
        %v10111 = vlaneseq
        %v10112 = vshrl.u32 %v10111, 7
        %v10113 = vsub.s32 %v10110, %v10112
        %v10114 = vrot.slane %v10100, %v10113
        %v10115 = vcombine.high %v10092, 0.0
        %v10116 = vcombine.high %v10099, 0.0
        %v10117 = vcombine.high %v10107, 0.0
        %v10118 = vcombine.high %v10114, 0.0
        %v10119 = vcombine.high %v1768, 0.0
        %v10121 = vunpack.c.l.s4 1983009808
        %v10122 = vunpack.c.0.s8 %v10121
        %v10123 = vlaneseq
        %v10124 = vshrl.u32 %v10123, 7
        %v10125 = vsub.s32 %v10122, %v10124
        %v10126 = vrot.slane %v1768, %v10125
        %v10128 = vunpack.c.l.s4 1983009808
        %v10129 = vunpack.c.0.s8 %v10128
        %v10130 = vlaneseq
        %v10131 = vshrl.u32 %v10130, 7
        %v10132 = vsub.s32 %v10129, %v10131
        %v10133 = vrot.slane %v10119, %v10132
        %v10134 = vcombine.high %v10126, 0.0
        %v10136 = vunpack.c.l.s4 1934713408
        %v10137 = vunpack.c.0.s8 %v10136
        %v10138 = vlaneseq
        %v10139 = vshrl.u32 %v10138, 7
        %v10140 = vsub.s32 %v10137, %v10139
        %v10141 = vrot.slane %v10126, %v10140
        %v10143 = vunpack.c.l.s4 1934713408
        %v10144 = vunpack.c.0.s8 %v10143
        %v10145 = vlaneseq
        %v10146 = vshrl.u32 %v10145, 7
        %v10147 = vsub.s32 %v10144, %v10146
        %v10148 = vrot.slane %v10134, %v10147
        %v10149 = vcombine.high %v10133, 0.0
        %v10151 = vunpack.c.l.s4 1934713408
        %v10152 = vunpack.c.0.s8 %v10151
        %v10153 = vlaneseq
        %v10154 = vshrl.u32 %v10153, 7
        %v10155 = vsub.s32 %v10152, %v10154
        %v10156 = vrot.slane %v10133, %v10155
        %v10158 = vunpack.c.l.s4 1934713408
        %v10159 = vunpack.c.0.s8 %v10158
        %v10160 = vlaneseq
        %v10161 = vshrl.u32 %v10160, 7
        %v10162 = vsub.s32 %v10159, %v10161
        %v10163 = vrot.slane %v10149, %v10162
        %v10164 = vcombine.high %v10141, 0.0
        %v10165 = vcombine.high %v10148, 0.0
        %v10166 = vcombine.high %v10156, 0.0
        %v10167 = vcombine.high %v10163, 0.0
        %v10168 = vcombine.high %v1769, 0.0
        %v10170 = vunpack.c.l.s4 1983009808
        %v10171 = vunpack.c.0.s8 %v10170
        %v10172 = vlaneseq
        %v10173 = vshrl.u32 %v10172, 7
        %v10174 = vsub.s32 %v10171, %v10173
        %v10175 = vrot.slane %v1769, %v10174
        %v10177 = vunpack.c.l.s4 1983009808
        %v10178 = vunpack.c.0.s8 %v10177
        %v10179 = vlaneseq
        %v10180 = vshrl.u32 %v10179, 7
        %v10181 = vsub.s32 %v10178, %v10180
        %v10182 = vrot.slane %v10168, %v10181
        %v10183 = vcombine.high %v10175, 0.0
        %v10185 = vunpack.c.l.s4 1934713408
        %v10186 = vunpack.c.0.s8 %v10185
        %v10187 = vlaneseq
        %v10188 = vshrl.u32 %v10187, 7
        %v10189 = vsub.s32 %v10186, %v10188
        %v10190 = vrot.slane %v10175, %v10189
        %v10192 = vunpack.c.l.s4 1934713408
        %v10193 = vunpack.c.0.s8 %v10192
        %v10194 = vlaneseq
        %v10195 = vshrl.u32 %v10194, 7
        %v10196 = vsub.s32 %v10193, %v10195
        %v10197 = vrot.slane %v10183, %v10196
        %v10198 = vcombine.high %v10182, 0.0
        %v10200 = vunpack.c.l.s4 1934713408
        %v10201 = vunpack.c.0.s8 %v10200
        %v10202 = vlaneseq
        %v10203 = vshrl.u32 %v10202, 7
        %v10204 = vsub.s32 %v10201, %v10203
        %v10205 = vrot.slane %v10182, %v10204
        %v10207 = vunpack.c.l.s4 1934713408
        %v10208 = vunpack.c.0.s8 %v10207
        %v10209 = vlaneseq
        %v10210 = vshrl.u32 %v10209, 7
        %v10211 = vsub.s32 %v10208, %v10210
        %v10212 = vrot.slane %v10198, %v10211
        %v10213 = vcombine.high %v10190, 0.0
        %v10214 = vcombine.high %v10197, 0.0
        %v10215 = vcombine.high %v10205, 0.0
        %v10216 = vcombine.high %v10212, 0.0
        %v10217 = vcombine.high %v1770, 0.0
        %v10219 = vunpack.c.l.s4 1983009808
        %v10220 = vunpack.c.0.s8 %v10219
        %v10221 = vlaneseq
        %v10222 = vshrl.u32 %v10221, 7
        %v10223 = vsub.s32 %v10220, %v10222
        %v10224 = vrot.slane %v1770, %v10223
        %v10226 = vunpack.c.l.s4 1983009808
        %v10227 = vunpack.c.0.s8 %v10226
        %v10228 = vlaneseq
        %v10229 = vshrl.u32 %v10228, 7
        %v10230 = vsub.s32 %v10227, %v10229
        %v10231 = vrot.slane %v10217, %v10230
        %v10232 = vcombine.high %v10224, 0.0
        %v10234 = vunpack.c.l.s4 1934713408
        %v10235 = vunpack.c.0.s8 %v10234
        %v10236 = vlaneseq
        %v10237 = vshrl.u32 %v10236, 7
        %v10238 = vsub.s32 %v10235, %v10237
        %v10239 = vrot.slane %v10224, %v10238
        %v10241 = vunpack.c.l.s4 1934713408
        %v10242 = vunpack.c.0.s8 %v10241
        %v10243 = vlaneseq
        %v10244 = vshrl.u32 %v10243, 7
        %v10245 = vsub.s32 %v10242, %v10244
        %v10246 = vrot.slane %v10232, %v10245
        %v10247 = vcombine.high %v10231, 0.0
        %v10249 = vunpack.c.l.s4 1934713408
        %v10250 = vunpack.c.0.s8 %v10249
        %v10251 = vlaneseq
        %v10252 = vshrl.u32 %v10251, 7
        %v10253 = vsub.s32 %v10250, %v10252
        %v10254 = vrot.slane %v10231, %v10253
        %v10256 = vunpack.c.l.s4 1934713408
        %v10257 = vunpack.c.0.s8 %v10256
        %v10258 = vlaneseq
        %v10259 = vshrl.u32 %v10258, 7
        %v10260 = vsub.s32 %v10257, %v10259
        %v10261 = vrot.slane %v10247, %v10260
        %v10262 = vcombine.high %v10239, 0.0
        %v10263 = vcombine.high %v10246, 0.0
        %v10264 = vcombine.high %v10254, 0.0
        %v10265 = vcombine.high %v10261, 0.0
        %v10266 = vcombine.high %v1771, 0.0
        %v10268 = vunpack.c.l.s4 1983009808
        %v10269 = vunpack.c.0.s8 %v10268
        %v10270 = vlaneseq
        %v10271 = vshrl.u32 %v10270, 7
        %v10272 = vsub.s32 %v10269, %v10271
        %v10273 = vrot.slane %v1771, %v10272
        %v10275 = vunpack.c.l.s4 1983009808
        %v10276 = vunpack.c.0.s8 %v10275
        %v10277 = vlaneseq
        %v10278 = vshrl.u32 %v10277, 7
        %v10279 = vsub.s32 %v10276, %v10278
        %v10280 = vrot.slane %v10266, %v10279
        %v10281 = vcombine.high %v10273, 0.0
        %v10283 = vunpack.c.l.s4 1934713408
        %v10284 = vunpack.c.0.s8 %v10283
        %v10285 = vlaneseq
        %v10286 = vshrl.u32 %v10285, 7
        %v10287 = vsub.s32 %v10284, %v10286
        %v10288 = vrot.slane %v10273, %v10287
        %v10290 = vunpack.c.l.s4 1934713408
        %v10291 = vunpack.c.0.s8 %v10290
        %v10292 = vlaneseq
        %v10293 = vshrl.u32 %v10292, 7
        %v10294 = vsub.s32 %v10291, %v10293
        %v10295 = vrot.slane %v10281, %v10294
        %v10296 = vcombine.high %v10280, 0.0
        %v10298 = vunpack.c.l.s4 1934713408
        %v10299 = vunpack.c.0.s8 %v10298
        %v10300 = vlaneseq
        %v10301 = vshrl.u32 %v10300, 7
        %v10302 = vsub.s32 %v10299, %v10301
        %v10303 = vrot.slane %v10280, %v10302
        %v10305 = vunpack.c.l.s4 1934713408
        %v10306 = vunpack.c.0.s8 %v10305
        %v10307 = vlaneseq
        %v10308 = vshrl.u32 %v10307, 7
        %v10309 = vsub.s32 %v10306, %v10308
        %v10310 = vrot.slane %v10296, %v10309
        %v10311 = vcombine.high %v10288, 0.0
        %v10312 = vcombine.high %v10295, 0.0
        %v10313 = vcombine.high %v10303, 0.0
        %v10314 = vcombine.high %v10310, 0.0
        %v10315 = vcombine.high %v1772, 0.0
        %v10317 = vunpack.c.l.s4 1983009808
        %v10318 = vunpack.c.0.s8 %v10317
        %v10319 = vlaneseq
        %v10320 = vshrl.u32 %v10319, 7
        %v10321 = vsub.s32 %v10318, %v10320
        %v10322 = vrot.slane %v1772, %v10321
        %v10324 = vunpack.c.l.s4 1983009808
        %v10325 = vunpack.c.0.s8 %v10324
        %v10326 = vlaneseq
        %v10327 = vshrl.u32 %v10326, 7
        %v10328 = vsub.s32 %v10325, %v10327
        %v10329 = vrot.slane %v10315, %v10328
        %v10330 = vcombine.high %v10322, 0.0
        %v10332 = vunpack.c.l.s4 1934713408
        %v10333 = vunpack.c.0.s8 %v10332
        %v10334 = vlaneseq
        %v10335 = vshrl.u32 %v10334, 7
        %v10336 = vsub.s32 %v10333, %v10335
        %v10337 = vrot.slane %v10322, %v10336
        %v10339 = vunpack.c.l.s4 1934713408
        %v10340 = vunpack.c.0.s8 %v10339
        %v10341 = vlaneseq
        %v10342 = vshrl.u32 %v10341, 7
        %v10343 = vsub.s32 %v10340, %v10342
        %v10344 = vrot.slane %v10330, %v10343
        %v10345 = vcombine.high %v10329, 0.0
        %v10347 = vunpack.c.l.s4 1934713408
        %v10348 = vunpack.c.0.s8 %v10347
        %v10349 = vlaneseq
        %v10350 = vshrl.u32 %v10349, 7
        %v10351 = vsub.s32 %v10348, %v10350
        %v10352 = vrot.slane %v10329, %v10351
        %v10354 = vunpack.c.l.s4 1934713408
        %v10355 = vunpack.c.0.s8 %v10354
        %v10356 = vlaneseq
        %v10357 = vshrl.u32 %v10356, 7
        %v10358 = vsub.s32 %v10355, %v10357
        %v10359 = vrot.slane %v10345, %v10358
        %v10360 = vcombine.high %v10337, 0.0
        %v10361 = vcombine.high %v10344, 0.0
        %v10362 = vcombine.high %v10352, 0.0
        %v10363 = vcombine.high %v10359, 0.0
        %v10364 = vcombine.high %v1773, 0.0
        %v10366 = vunpack.c.l.s4 1983009808
        %v10367 = vunpack.c.0.s8 %v10366
        %v10368 = vlaneseq
        %v10369 = vshrl.u32 %v10368, 7
        %v10370 = vsub.s32 %v10367, %v10369
        %v10371 = vrot.slane %v1773, %v10370
        %v10373 = vunpack.c.l.s4 1983009808
        %v10374 = vunpack.c.0.s8 %v10373
        %v10375 = vlaneseq
        %v10376 = vshrl.u32 %v10375, 7
        %v10377 = vsub.s32 %v10374, %v10376
        %v10378 = vrot.slane %v10364, %v10377
        %v10379 = vcombine.high %v10371, 0.0
        %v10381 = vunpack.c.l.s4 1934713408
        %v10382 = vunpack.c.0.s8 %v10381
        %v10383 = vlaneseq
        %v10384 = vshrl.u32 %v10383, 7
        %v10385 = vsub.s32 %v10382, %v10384
        %v10386 = vrot.slane %v10371, %v10385
        %v10388 = vunpack.c.l.s4 1934713408
        %v10389 = vunpack.c.0.s8 %v10388
        %v10390 = vlaneseq
        %v10391 = vshrl.u32 %v10390, 7
        %v10392 = vsub.s32 %v10389, %v10391
        %v10393 = vrot.slane %v10379, %v10392
        %v10394 = vcombine.high %v10378, 0.0
        %v10396 = vunpack.c.l.s4 1934713408
        %v10397 = vunpack.c.0.s8 %v10396
        %v10398 = vlaneseq
        %v10399 = vshrl.u32 %v10398, 7
        %v10400 = vsub.s32 %v10397, %v10399
        %v10401 = vrot.slane %v10378, %v10400
        %v10403 = vunpack.c.l.s4 1934713408
        %v10404 = vunpack.c.0.s8 %v10403
        %v10405 = vlaneseq
        %v10406 = vshrl.u32 %v10405, 7
        %v10407 = vsub.s32 %v10404, %v10406
        %v10408 = vrot.slane %v10394, %v10407
        %v10409 = vcombine.high %v10386, 0.0
        %v10410 = vcombine.high %v10393, 0.0
        %v10411 = vcombine.high %v10401, 0.0
        %v10412 = vcombine.high %v10408, 0.0
        %v10413 = vcombine.high %v1774, 0.0
        %v10415 = vunpack.c.l.s4 1983009808
        %v10416 = vunpack.c.0.s8 %v10415
        %v10417 = vlaneseq
        %v10418 = vshrl.u32 %v10417, 7
        %v10419 = vsub.s32 %v10416, %v10418
        %v10420 = vrot.slane %v1774, %v10419
        %v10422 = vunpack.c.l.s4 1983009808
        %v10423 = vunpack.c.0.s8 %v10422
        %v10424 = vlaneseq
        %v10425 = vshrl.u32 %v10424, 7
        %v10426 = vsub.s32 %v10423, %v10425
        %v10427 = vrot.slane %v10413, %v10426
        %v10428 = vcombine.high %v10420, 0.0
        %v10430 = vunpack.c.l.s4 1934713408
        %v10431 = vunpack.c.0.s8 %v10430
        %v10432 = vlaneseq
        %v10433 = vshrl.u32 %v10432, 7
        %v10434 = vsub.s32 %v10431, %v10433
        %v10435 = vrot.slane %v10420, %v10434
        %v10437 = vunpack.c.l.s4 1934713408
        %v10438 = vunpack.c.0.s8 %v10437
        %v10439 = vlaneseq
        %v10440 = vshrl.u32 %v10439, 7
        %v10441 = vsub.s32 %v10438, %v10440
        %v10442 = vrot.slane %v10428, %v10441
        %v10443 = vcombine.high %v10427, 0.0
        %v10445 = vunpack.c.l.s4 1934713408
        %v10446 = vunpack.c.0.s8 %v10445
        %v10447 = vlaneseq
        %v10448 = vshrl.u32 %v10447, 7
        %v10449 = vsub.s32 %v10446, %v10448
        %v10450 = vrot.slane %v10427, %v10449
        %v10452 = vunpack.c.l.s4 1934713408
        %v10453 = vunpack.c.0.s8 %v10452
        %v10454 = vlaneseq
        %v10455 = vshrl.u32 %v10454, 7
        %v10456 = vsub.s32 %v10453, %v10455
        %v10457 = vrot.slane %v10443, %v10456
        %v10458 = vcombine.high %v10435, 0.0
        %v10459 = vcombine.high %v10442, 0.0
        %v10460 = vcombine.high %v10450, 0.0
        %v10461 = vcombine.high %v10457, 0.0
        %10494 = vrot.lane.b32.xlu0 %v7371, 2
        %v10495 = vpop.permute.xlu0 %10494
        %10496 = vrot.lane.b32.xlu0 %v7469, 2
        %v10497 = vpop.permute.xlu0 %10496
        %10498 = vrot.lane.b32.xlu0 %v7567, 2
        %v10499 = vpop.permute.xlu0 %10498
        %10500 = vrot.lane.b32.xlu0 %v7665, 2
        %v10501 = vpop.permute.xlu0 %10500
        %10502 = vrot.lane.b32.xlu0 %v7763, 2
        %v10503 = vpop.permute.xlu0 %10502
        %10504 = vrot.lane.b32.xlu0 %v7861, 2
        %v10505 = vpop.permute.xlu0 %10504
        %10506 = vrot.lane.b32.xlu0 %v7959, 2
        %v10507 = vpop.permute.xlu0 %10506
        %10508 = vrot.lane.b32.xlu0 %v8057, 2
        %v10509 = vpop.permute.xlu0 %10508
        %10510 = vrot.lane.b32.xlu0 %v8155, 2
        %v10511 = vpop.permute.xlu0 %10510
        %10512 = vrot.lane.b32.xlu0 %v8253, 2
        %v10513 = vpop.permute.xlu0 %10512
        %10514 = vrot.lane.b32.xlu0 %v8351, 2
        %v10515 = vpop.permute.xlu0 %10514
        %10516 = vrot.lane.b32.xlu0 %v8449, 2
        %v10517 = vpop.permute.xlu0 %10516
        %10518 = vrot.lane.b32.xlu0 %v8547, 2
        %v10519 = vpop.permute.xlu0 %10518
        %10520 = vrot.lane.b32.xlu0 %v8645, 2
        %v10521 = vpop.permute.xlu0 %10520
        %10522 = vrot.lane.b32.xlu0 %v8743, 2
        %v10523 = vpop.permute.xlu0 %10522
        %10524 = vrot.lane.b32.xlu0 %v8841, 2
        %v10525 = vpop.permute.xlu0 %10524
        %10526 = vrot.lane.b32.xlu0 %v8939, 2
        %v10527 = vpop.permute.xlu0 %10526
        %10528 = vrot.lane.b32.xlu0 %v9037, 2
        %v10529 = vpop.permute.xlu0 %10528
        %10530 = vrot.lane.b32.xlu0 %v9135, 2
        %v10531 = vpop.permute.xlu0 %10530
        %10532 = vrot.lane.b32.xlu0 %v9233, 2
        %v10533 = vpop.permute.xlu0 %10532
        %10534 = vrot.lane.b32.xlu0 %v9331, 2
        %v10535 = vpop.permute.xlu0 %10534
        %10536 = vrot.lane.b32.xlu0 %v9429, 2
        %v10537 = vpop.permute.xlu0 %10536
        %10538 = vrot.lane.b32.xlu0 %v9527, 2
        %v10539 = vpop.permute.xlu0 %10538
        %10540 = vrot.lane.b32.xlu0 %v9625, 2
        %v10541 = vpop.permute.xlu0 %10540
        %10542 = vrot.lane.b32.xlu0 %v9723, 2
        %v10543 = vpop.permute.xlu0 %10542
        %10544 = vrot.lane.b32.xlu0 %v9821, 2
        %v10545 = vpop.permute.xlu0 %10544
        %10546 = vrot.lane.b32.xlu0 %v9919, 2
        %v10547 = vpop.permute.xlu0 %10546
        %10548 = vrot.lane.b32.xlu0 %v10017, 2
        %v10549 = vpop.permute.xlu0 %10548
        %10550 = vrot.lane.b32.xlu0 %v10115, 2
        %v10551 = vpop.permute.xlu0 %10550
        %10552 = vrot.lane.b32.xlu0 %v10213, 2
        %v10553 = vpop.permute.xlu0 %10552
        %10554 = vrot.lane.b32.xlu0 %v10311, 2
        %v10555 = vpop.permute.xlu0 %10554
        %10556 = vrot.lane.b32.xlu0 %v10409, 2
        %v10557 = vpop.permute.xlu0 %10556
        %10622 = vrot.lane.b32.xlu0 %v7355, 4
        %v10623 = vpop.permute.xlu0 %10622
        %10624 = vrot.lane.b32.xlu0 %v7453, 4
        %v10625 = vpop.permute.xlu0 %10624
        %10626 = vrot.lane.b32.xlu0 %v7551, 4
        %v10627 = vpop.permute.xlu0 %10626
        %10628 = vrot.lane.b32.xlu0 %v7649, 4
        %v10629 = vpop.permute.xlu0 %10628
        %10630 = vrot.lane.b32.xlu0 %v7747, 4
        %v10631 = vpop.permute.xlu0 %10630
        %10632 = vrot.lane.b32.xlu0 %v7845, 4
        %v10633 = vpop.permute.xlu0 %10632
        %10634 = vrot.lane.b32.xlu0 %v7943, 4
        %v10635 = vpop.permute.xlu0 %10634
        %10636 = vrot.lane.b32.xlu0 %v8041, 4
        %v10637 = vpop.permute.xlu0 %10636
        %10638 = vrot.lane.b32.xlu0 %v8139, 4
        %v10639 = vpop.permute.xlu0 %10638
        %10640 = vrot.lane.b32.xlu0 %v8237, 4
        %v10641 = vpop.permute.xlu0 %10640
        %10642 = vrot.lane.b32.xlu0 %v8335, 4
        %v10643 = vpop.permute.xlu0 %10642
        %10644 = vrot.lane.b32.xlu0 %v8433, 4
        %v10645 = vpop.permute.xlu0 %10644
        %10646 = vrot.lane.b32.xlu0 %v8531, 4
        %v10647 = vpop.permute.xlu0 %10646
        %10648 = vrot.lane.b32.xlu0 %v8629, 4
        %v10649 = vpop.permute.xlu0 %10648
        %10650 = vrot.lane.b32.xlu0 %v8727, 4
        %v10651 = vpop.permute.xlu0 %10650
        %10652 = vrot.lane.b32.xlu0 %v8825, 4
        %v10653 = vpop.permute.xlu0 %10652
        %10654 = vrot.lane.b32.xlu0 %v8923, 4
        %v10655 = vpop.permute.xlu0 %10654
        %10656 = vrot.lane.b32.xlu0 %v9021, 4
        %v10657 = vpop.permute.xlu0 %10656
        %10658 = vrot.lane.b32.xlu0 %v9119, 4
        %v10659 = vpop.permute.xlu0 %10658
        %10660 = vrot.lane.b32.xlu0 %v9217, 4
        %v10661 = vpop.permute.xlu0 %10660
        %10662 = vrot.lane.b32.xlu0 %v9315, 4
        %v10663 = vpop.permute.xlu0 %10662
        %10664 = vrot.lane.b32.xlu0 %v9413, 4
        %v10665 = vpop.permute.xlu0 %10664
        %10666 = vrot.lane.b32.xlu0 %v9511, 4
        %v10667 = vpop.permute.xlu0 %10666
        %10668 = vrot.lane.b32.xlu0 %v9609, 4
        %v10669 = vpop.permute.xlu0 %10668
        %10670 = vrot.lane.b32.xlu0 %v9707, 4
        %v10671 = vpop.permute.xlu0 %10670
        %10672 = vrot.lane.b32.xlu0 %v9805, 4
        %v10673 = vpop.permute.xlu0 %10672
        %10674 = vrot.lane.b32.xlu0 %v9903, 4
        %v10675 = vpop.permute.xlu0 %10674
        %10676 = vrot.lane.b32.xlu0 %v10001, 4
        %v10677 = vpop.permute.xlu0 %10676
        %10678 = vrot.lane.b32.xlu0 %v10099, 4
        %v10679 = vpop.permute.xlu0 %10678
        %10680 = vrot.lane.b32.xlu0 %v10197, 4
        %v10681 = vpop.permute.xlu0 %10680
        %10682 = vrot.lane.b32.xlu0 %v10295, 4
        %v10683 = vpop.permute.xlu0 %10682
        %10684 = vrot.lane.b32.xlu0 %v10393, 4
        %v10685 = vpop.permute.xlu0 %10684
        %10750 = vrot.lane.b32.xlu0 %v7372, 6
        %v10751 = vpop.permute.xlu0 %10750
        %10752 = vrot.lane.b32.xlu0 %v7470, 6
        %v10753 = vpop.permute.xlu0 %10752
        %10754 = vrot.lane.b32.xlu0 %v7568, 6
        %v10755 = vpop.permute.xlu0 %10754
        %10756 = vrot.lane.b32.xlu0 %v7666, 6
        %v10757 = vpop.permute.xlu0 %10756
        %10758 = vrot.lane.b32.xlu0 %v7764, 6
        %v10759 = vpop.permute.xlu0 %10758
        %10760 = vrot.lane.b32.xlu0 %v7862, 6
        %v10761 = vpop.permute.xlu0 %10760
        %10762 = vrot.lane.b32.xlu0 %v7960, 6
        %v10763 = vpop.permute.xlu0 %10762
        %10764 = vrot.lane.b32.xlu0 %v8058, 6
        %v10765 = vpop.permute.xlu0 %10764
        %10766 = vrot.lane.b32.xlu0 %v8156, 6
        %v10767 = vpop.permute.xlu0 %10766
        %10768 = vrot.lane.b32.xlu0 %v8254, 6
        %v10769 = vpop.permute.xlu0 %10768
        %10770 = vrot.lane.b32.xlu0 %v8352, 6
        %v10771 = vpop.permute.xlu0 %10770
        %10772 = vrot.lane.b32.xlu0 %v8450, 6
        %v10773 = vpop.permute.xlu0 %10772
        %10774 = vrot.lane.b32.xlu0 %v8548, 6
        %v10775 = vpop.permute.xlu0 %10774
        %10776 = vrot.lane.b32.xlu0 %v8646, 6
        %v10777 = vpop.permute.xlu0 %10776
        %10778 = vrot.lane.b32.xlu0 %v8744, 6
        %v10779 = vpop.permute.xlu0 %10778
        %10780 = vrot.lane.b32.xlu0 %v8842, 6
        %v10781 = vpop.permute.xlu0 %10780
        %10782 = vrot.lane.b32.xlu0 %v8940, 6
        %v10783 = vpop.permute.xlu0 %10782
        %10784 = vrot.lane.b32.xlu0 %v9038, 6
        %v10785 = vpop.permute.xlu0 %10784
        %10786 = vrot.lane.b32.xlu0 %v9136, 6
        %v10787 = vpop.permute.xlu0 %10786
        %10788 = vrot.lane.b32.xlu0 %v9234, 6
        %v10789 = vpop.permute.xlu0 %10788
        %10790 = vrot.lane.b32.xlu0 %v9332, 6
        %v10791 = vpop.permute.xlu0 %10790
        %10792 = vrot.lane.b32.xlu0 %v9430, 6
        %v10793 = vpop.permute.xlu0 %10792
        %10794 = vrot.lane.b32.xlu0 %v9528, 6
        %v10795 = vpop.permute.xlu0 %10794
        %10796 = vrot.lane.b32.xlu0 %v9626, 6
        %v10797 = vpop.permute.xlu0 %10796
        %10798 = vrot.lane.b32.xlu0 %v9724, 6
        %v10799 = vpop.permute.xlu0 %10798
        %10800 = vrot.lane.b32.xlu0 %v9822, 6
        %v10801 = vpop.permute.xlu0 %10800
        %10802 = vrot.lane.b32.xlu0 %v9920, 6
        %v10803 = vpop.permute.xlu0 %10802
        %10804 = vrot.lane.b32.xlu0 %v10018, 6
        %v10805 = vpop.permute.xlu0 %10804
        %10806 = vrot.lane.b32.xlu0 %v10116, 6
        %v10807 = vpop.permute.xlu0 %10806
        %10808 = vrot.lane.b32.xlu0 %v10214, 6
        %v10809 = vpop.permute.xlu0 %10808
        %10810 = vrot.lane.b32.xlu0 %v10312, 6
        %v10811 = vpop.permute.xlu0 %10810
        %10812 = vrot.lane.b32.xlu0 %v10410, 6
        %v10813 = vpop.permute.xlu0 %10812
        %10878 = vrot.lane.b32.xlu0 %v7363, 8
        %v10879 = vpop.permute.xlu0 %10878
        %10880 = vrot.lane.b32.xlu0 %v7461, 8
        %v10881 = vpop.permute.xlu0 %10880
        %10882 = vrot.lane.b32.xlu0 %v7559, 8
        %v10883 = vpop.permute.xlu0 %10882
        %10884 = vrot.lane.b32.xlu0 %v7657, 8
        %v10885 = vpop.permute.xlu0 %10884
        %10886 = vrot.lane.b32.xlu0 %v7755, 8
        %v10887 = vpop.permute.xlu0 %10886
        %10888 = vrot.lane.b32.xlu0 %v7853, 8
        %v10889 = vpop.permute.xlu0 %10888
        %10890 = vrot.lane.b32.xlu0 %v7951, 8
        %v10891 = vpop.permute.xlu0 %10890
        %10892 = vrot.lane.b32.xlu0 %v8049, 8
        %v10893 = vpop.permute.xlu0 %10892
        %10894 = vrot.lane.b32.xlu0 %v8147, 8
        %v10895 = vpop.permute.xlu0 %10894
        %10896 = vrot.lane.b32.xlu0 %v8245, 8
        %v10897 = vpop.permute.xlu0 %10896
        %10898 = vrot.lane.b32.xlu0 %v8343, 8
        %v10899 = vpop.permute.xlu0 %10898
        %10900 = vrot.lane.b32.xlu0 %v8441, 8
        %v10901 = vpop.permute.xlu0 %10900
        %10902 = vrot.lane.b32.xlu0 %v8539, 8
        %v10903 = vpop.permute.xlu0 %10902
        %10904 = vrot.lane.b32.xlu0 %v8637, 8
        %v10905 = vpop.permute.xlu0 %10904
        %10906 = vrot.lane.b32.xlu0 %v8735, 8
        %v10907 = vpop.permute.xlu0 %10906
        %10908 = vrot.lane.b32.xlu0 %v8833, 8
        %v10909 = vpop.permute.xlu0 %10908
        %10910 = vrot.lane.b32.xlu0 %v8931, 8
        %v10911 = vpop.permute.xlu0 %10910
        %10912 = vrot.lane.b32.xlu0 %v9029, 8
        %v10913 = vpop.permute.xlu0 %10912
        %10914 = vrot.lane.b32.xlu0 %v9127, 8
        %v10915 = vpop.permute.xlu0 %10914
        %10916 = vrot.lane.b32.xlu0 %v9225, 8
        %v10917 = vpop.permute.xlu0 %10916
        %10918 = vrot.lane.b32.xlu0 %v9323, 8
        %v10919 = vpop.permute.xlu0 %10918
        %10920 = vrot.lane.b32.xlu0 %v9421, 8
        %v10921 = vpop.permute.xlu0 %10920
        %10922 = vrot.lane.b32.xlu0 %v9519, 8
        %v10923 = vpop.permute.xlu0 %10922
        %10924 = vrot.lane.b32.xlu0 %v9617, 8
        %v10925 = vpop.permute.xlu0 %10924
        %10926 = vrot.lane.b32.xlu0 %v9715, 8
        %v10927 = vpop.permute.xlu0 %10926
        %10928 = vrot.lane.b32.xlu0 %v9813, 8
        %v10929 = vpop.permute.xlu0 %10928
        %10930 = vrot.lane.b32.xlu0 %v9911, 8
        %v10931 = vpop.permute.xlu0 %10930
        %10932 = vrot.lane.b32.xlu0 %v10009, 8
        %v10933 = vpop.permute.xlu0 %10932
        %10934 = vrot.lane.b32.xlu0 %v10107, 8
        %v10935 = vpop.permute.xlu0 %10934
        %10936 = vrot.lane.b32.xlu0 %v10205, 8
        %v10937 = vpop.permute.xlu0 %10936
        %10938 = vrot.lane.b32.xlu0 %v10303, 8
        %v10939 = vpop.permute.xlu0 %10938
        %10940 = vrot.lane.b32.xlu0 %v10401, 8
        %v10941 = vpop.permute.xlu0 %10940
        %11006 = vrot.lane.b32.xlu0 %v7373, 10
        %v11007 = vpop.permute.xlu0 %11006
        %11008 = vrot.lane.b32.xlu0 %v7471, 10
        %v11009 = vpop.permute.xlu0 %11008
        %11010 = vrot.lane.b32.xlu0 %v7569, 10
        %v11011 = vpop.permute.xlu0 %11010
        %11012 = vrot.lane.b32.xlu0 %v7667, 10
        %v11013 = vpop.permute.xlu0 %11012
        %11014 = vrot.lane.b32.xlu0 %v7765, 10
        %v11015 = vpop.permute.xlu0 %11014
        %11016 = vrot.lane.b32.xlu0 %v7863, 10
        %v11017 = vpop.permute.xlu0 %11016
        %11018 = vrot.lane.b32.xlu0 %v7961, 10
        %v11019 = vpop.permute.xlu0 %11018
        %11020 = vrot.lane.b32.xlu0 %v8059, 10
        %v11021 = vpop.permute.xlu0 %11020
        %11022 = vrot.lane.b32.xlu0 %v8157, 10
        %v11023 = vpop.permute.xlu0 %11022
        %11024 = vrot.lane.b32.xlu0 %v8255, 10
        %v11025 = vpop.permute.xlu0 %11024
        %11026 = vrot.lane.b32.xlu0 %v8353, 10
        %v11027 = vpop.permute.xlu0 %11026
        %11028 = vrot.lane.b32.xlu0 %v8451, 10
        %v11029 = vpop.permute.xlu0 %11028
        %11030 = vrot.lane.b32.xlu0 %v8549, 10
        %v11031 = vpop.permute.xlu0 %11030
        %11032 = vrot.lane.b32.xlu0 %v8647, 10
        %v11033 = vpop.permute.xlu0 %11032
        %11034 = vrot.lane.b32.xlu0 %v8745, 10
        %v11035 = vpop.permute.xlu0 %11034
        %11036 = vrot.lane.b32.xlu0 %v8843, 10
        %v11037 = vpop.permute.xlu0 %11036
        %11038 = vrot.lane.b32.xlu0 %v8941, 10
        %v11039 = vpop.permute.xlu0 %11038
        %11040 = vrot.lane.b32.xlu0 %v9039, 10
        %v11041 = vpop.permute.xlu0 %11040
        %11042 = vrot.lane.b32.xlu0 %v9137, 10
        %v11043 = vpop.permute.xlu0 %11042
        %11044 = vrot.lane.b32.xlu0 %v9235, 10
        %v11045 = vpop.permute.xlu0 %11044
        %11046 = vrot.lane.b32.xlu0 %v9333, 10
        %v11047 = vpop.permute.xlu0 %11046
        %11048 = vrot.lane.b32.xlu0 %v9431, 10
        %v11049 = vpop.permute.xlu0 %11048
        %11050 = vrot.lane.b32.xlu0 %v9529, 10
        %v11051 = vpop.permute.xlu0 %11050
        %11052 = vrot.lane.b32.xlu0 %v9627, 10
        %v11053 = vpop.permute.xlu0 %11052
        %11054 = vrot.lane.b32.xlu0 %v9725, 10
        %v11055 = vpop.permute.xlu0 %11054
        %11056 = vrot.lane.b32.xlu0 %v9823, 10
        %v11057 = vpop.permute.xlu0 %11056
        %11058 = vrot.lane.b32.xlu0 %v9921, 10
        %v11059 = vpop.permute.xlu0 %11058
        %11060 = vrot.lane.b32.xlu0 %v10019, 10
        %v11061 = vpop.permute.xlu0 %11060
        %11062 = vrot.lane.b32.xlu0 %v10117, 10
        %v11063 = vpop.permute.xlu0 %11062
        %11064 = vrot.lane.b32.xlu0 %v10215, 10
        %v11065 = vpop.permute.xlu0 %11064
        %11066 = vrot.lane.b32.xlu0 %v10313, 10
        %v11067 = vpop.permute.xlu0 %11066
        %11068 = vrot.lane.b32.xlu0 %v10411, 10
        %v11069 = vpop.permute.xlu0 %11068
        %11134 = vrot.lane.b32.xlu0 %v7370, 12
        %v11135 = vpop.permute.xlu0 %11134
        %11136 = vrot.lane.b32.xlu0 %v7468, 12
        %v11137 = vpop.permute.xlu0 %11136
        %11138 = vrot.lane.b32.xlu0 %v7566, 12
        %v11139 = vpop.permute.xlu0 %11138
        %11140 = vrot.lane.b32.xlu0 %v7664, 12
        %v11141 = vpop.permute.xlu0 %11140
        %11142 = vrot.lane.b32.xlu0 %v7762, 12
        %v11143 = vpop.permute.xlu0 %11142
        %11144 = vrot.lane.b32.xlu0 %v7860, 12
        %v11145 = vpop.permute.xlu0 %11144
        %11146 = vrot.lane.b32.xlu0 %v7958, 12
        %v11147 = vpop.permute.xlu0 %11146
        %11148 = vrot.lane.b32.xlu0 %v8056, 12
        %v11149 = vpop.permute.xlu0 %11148
        %11150 = vrot.lane.b32.xlu0 %v8154, 12
        %v11151 = vpop.permute.xlu0 %11150
        %11152 = vrot.lane.b32.xlu0 %v8252, 12
        %v11153 = vpop.permute.xlu0 %11152
        %11154 = vrot.lane.b32.xlu0 %v8350, 12
        %v11155 = vpop.permute.xlu0 %11154
        %11156 = vrot.lane.b32.xlu0 %v8448, 12
        %v11157 = vpop.permute.xlu0 %11156
        %11158 = vrot.lane.b32.xlu0 %v8546, 12
        %v11159 = vpop.permute.xlu0 %11158
        %11160 = vrot.lane.b32.xlu0 %v8644, 12
        %v11161 = vpop.permute.xlu0 %11160
        %11162 = vrot.lane.b32.xlu0 %v8742, 12
        %v11163 = vpop.permute.xlu0 %11162
        %11164 = vrot.lane.b32.xlu0 %v8840, 12
        %v11165 = vpop.permute.xlu0 %11164
        %11166 = vrot.lane.b32.xlu0 %v8938, 12
        %v11167 = vpop.permute.xlu0 %11166
        %11168 = vrot.lane.b32.xlu0 %v9036, 12
        %v11169 = vpop.permute.xlu0 %11168
        %11170 = vrot.lane.b32.xlu0 %v9134, 12
        %v11171 = vpop.permute.xlu0 %11170
        %11172 = vrot.lane.b32.xlu0 %v9232, 12
        %v11173 = vpop.permute.xlu0 %11172
        %11174 = vrot.lane.b32.xlu0 %v9330, 12
        %v11175 = vpop.permute.xlu0 %11174
        %11176 = vrot.lane.b32.xlu0 %v9428, 12
        %v11177 = vpop.permute.xlu0 %11176
        %11178 = vrot.lane.b32.xlu0 %v9526, 12
        %v11179 = vpop.permute.xlu0 %11178
        %11180 = vrot.lane.b32.xlu0 %v9624, 12
        %v11181 = vpop.permute.xlu0 %11180
        %11182 = vrot.lane.b32.xlu0 %v9722, 12
        %v11183 = vpop.permute.xlu0 %11182
        %11184 = vrot.lane.b32.xlu0 %v9820, 12
        %v11185 = vpop.permute.xlu0 %11184
        %11186 = vrot.lane.b32.xlu0 %v9918, 12
        %v11187 = vpop.permute.xlu0 %11186
        %11188 = vrot.lane.b32.xlu0 %v10016, 12
        %v11189 = vpop.permute.xlu0 %11188
        %11190 = vrot.lane.b32.xlu0 %v10114, 12
        %v11191 = vpop.permute.xlu0 %11190
        %11192 = vrot.lane.b32.xlu0 %v10212, 12
        %v11193 = vpop.permute.xlu0 %11192
        %11194 = vrot.lane.b32.xlu0 %v10310, 12
        %v11195 = vpop.permute.xlu0 %11194
        %11196 = vrot.lane.b32.xlu0 %v10408, 12
        %v11197 = vpop.permute.xlu0 %11196
        %11262 = vrot.lane.b32.xlu0 %v7374, 14
        %v11263 = vpop.permute.xlu0 %11262
        %11264 = vrot.lane.b32.xlu0 %v7472, 14
        %v11265 = vpop.permute.xlu0 %11264
        %11266 = vrot.lane.b32.xlu0 %v7570, 14
        %v11267 = vpop.permute.xlu0 %11266
        %11268 = vrot.lane.b32.xlu0 %v7668, 14
        %v11269 = vpop.permute.xlu0 %11268
        %11270 = vrot.lane.b32.xlu0 %v7766, 14
        %v11271 = vpop.permute.xlu0 %11270
        %11272 = vrot.lane.b32.xlu0 %v7864, 14
        %v11273 = vpop.permute.xlu0 %11272
        %11274 = vrot.lane.b32.xlu0 %v7962, 14
        %v11275 = vpop.permute.xlu0 %11274
        %11276 = vrot.lane.b32.xlu0 %v8060, 14
        %v11277 = vpop.permute.xlu0 %11276
        %11278 = vrot.lane.b32.xlu0 %v8158, 14
        %v11279 = vpop.permute.xlu0 %11278
        %11280 = vrot.lane.b32.xlu0 %v8256, 14
        %v11281 = vpop.permute.xlu0 %11280
        %11282 = vrot.lane.b32.xlu0 %v8354, 14
        %v11283 = vpop.permute.xlu0 %11282
        %11284 = vrot.lane.b32.xlu0 %v8452, 14
        %v11285 = vpop.permute.xlu0 %11284
        %11286 = vrot.lane.b32.xlu0 %v8550, 14
        %v11287 = vpop.permute.xlu0 %11286
        %11288 = vrot.lane.b32.xlu0 %v8648, 14
        %v11289 = vpop.permute.xlu0 %11288
        %11290 = vrot.lane.b32.xlu0 %v8746, 14
        %v11291 = vpop.permute.xlu0 %11290
        %11292 = vrot.lane.b32.xlu0 %v8844, 14
        %v11293 = vpop.permute.xlu0 %11292
        %11294 = vrot.lane.b32.xlu0 %v8942, 14
        %v11295 = vpop.permute.xlu0 %11294
        %11296 = vrot.lane.b32.xlu0 %v9040, 14
        %v11297 = vpop.permute.xlu0 %11296
        %11298 = vrot.lane.b32.xlu0 %v9138, 14
        %v11299 = vpop.permute.xlu0 %11298
        %11300 = vrot.lane.b32.xlu0 %v9236, 14
        %v11301 = vpop.permute.xlu0 %11300
        %11302 = vrot.lane.b32.xlu0 %v9334, 14
        %v11303 = vpop.permute.xlu0 %11302
        %11304 = vrot.lane.b32.xlu0 %v9432, 14
        %v11305 = vpop.permute.xlu0 %11304
        %11306 = vrot.lane.b32.xlu0 %v9530, 14
        %v11307 = vpop.permute.xlu0 %11306
        %11308 = vrot.lane.b32.xlu0 %v9628, 14
        %v11309 = vpop.permute.xlu0 %11308
        %11310 = vrot.lane.b32.xlu0 %v9726, 14
        %v11311 = vpop.permute.xlu0 %11310
        %11312 = vrot.lane.b32.xlu0 %v9824, 14
        %v11313 = vpop.permute.xlu0 %11312
        %11314 = vrot.lane.b32.xlu0 %v9922, 14
        %v11315 = vpop.permute.xlu0 %11314
        %11316 = vrot.lane.b32.xlu0 %v10020, 14
        %v11317 = vpop.permute.xlu0 %11316
        %11318 = vrot.lane.b32.xlu0 %v10118, 14
        %v11319 = vpop.permute.xlu0 %11318
        %11320 = vrot.lane.b32.xlu0 %v10216, 14
        %v11321 = vpop.permute.xlu0 %11320
        %11322 = vrot.lane.b32.xlu0 %v10314, 14
        %v11323 = vpop.permute.xlu0 %11322
        %11324 = vrot.lane.b32.xlu0 %v10412, 14
        %v11325 = vpop.permute.xlu0 %11324
        %11390 = vrot.lane.b32.xlu0 %v7397, 16
        %v11391 = vpop.permute.xlu0 %11390
        %11392 = vrot.lane.b32.xlu0 %v7495, 16
        %v11393 = vpop.permute.xlu0 %11392
        %11394 = vrot.lane.b32.xlu0 %v7593, 16
        %v11395 = vpop.permute.xlu0 %11394
        %11396 = vrot.lane.b32.xlu0 %v7691, 16
        %v11397 = vpop.permute.xlu0 %11396
        %11398 = vrot.lane.b32.xlu0 %v7789, 16
        %v11399 = vpop.permute.xlu0 %11398
        %11400 = vrot.lane.b32.xlu0 %v7887, 16
        %v11401 = vpop.permute.xlu0 %11400
        %11402 = vrot.lane.b32.xlu0 %v7985, 16
        %v11403 = vpop.permute.xlu0 %11402
        %11404 = vrot.lane.b32.xlu0 %v8083, 16
        %v11405 = vpop.permute.xlu0 %11404
        %11406 = vrot.lane.b32.xlu0 %v8181, 16
        %v11407 = vpop.permute.xlu0 %11406
        %11408 = vrot.lane.b32.xlu0 %v8279, 16
        %v11409 = vpop.permute.xlu0 %11408
        %11410 = vrot.lane.b32.xlu0 %v8377, 16
        %v11411 = vpop.permute.xlu0 %11410
        %11412 = vrot.lane.b32.xlu0 %v8475, 16
        %v11413 = vpop.permute.xlu0 %11412
        %11414 = vrot.lane.b32.xlu0 %v8573, 16
        %v11415 = vpop.permute.xlu0 %11414
        %11416 = vrot.lane.b32.xlu0 %v8671, 16
        %v11417 = vpop.permute.xlu0 %11416
        %11418 = vrot.lane.b32.xlu0 %v8769, 16
        %v11419 = vpop.permute.xlu0 %11418
        %11420 = vrot.lane.b32.xlu0 %v8867, 16
        %v11421 = vpop.permute.xlu0 %11420
        %11422 = vrot.lane.b32.xlu0 %v8965, 16
        %v11423 = vpop.permute.xlu0 %11422
        %11424 = vrot.lane.b32.xlu0 %v9063, 16
        %v11425 = vpop.permute.xlu0 %11424
        %11426 = vrot.lane.b32.xlu0 %v9161, 16
        %v11427 = vpop.permute.xlu0 %11426
        %11428 = vrot.lane.b32.xlu0 %v9259, 16
        %v11429 = vpop.permute.xlu0 %11428
        %11430 = vrot.lane.b32.xlu0 %v9357, 16
        %v11431 = vpop.permute.xlu0 %11430
        %11432 = vrot.lane.b32.xlu0 %v9455, 16
        %v11433 = vpop.permute.xlu0 %11432
        %11434 = vrot.lane.b32.xlu0 %v9553, 16
        %v11435 = vpop.permute.xlu0 %11434
        %11436 = vrot.lane.b32.xlu0 %v9651, 16
        %v11437 = vpop.permute.xlu0 %11436
        %11438 = vrot.lane.b32.xlu0 %v9749, 16
        %v11439 = vpop.permute.xlu0 %11438
        %11440 = vrot.lane.b32.xlu0 %v9847, 16
        %v11441 = vpop.permute.xlu0 %11440
        %11442 = vrot.lane.b32.xlu0 %v9945, 16
        %v11443 = vpop.permute.xlu0 %11442
        %11444 = vrot.lane.b32.xlu0 %v10043, 16
        %v11445 = vpop.permute.xlu0 %11444
        %11446 = vrot.lane.b32.xlu0 %v10141, 16
        %v11447 = vpop.permute.xlu0 %11446
        %11448 = vrot.lane.b32.xlu0 %v10239, 16
        %v11449 = vpop.permute.xlu0 %11448
        %11450 = vrot.lane.b32.xlu0 %v10337, 16
        %v11451 = vpop.permute.xlu0 %11450
        %11452 = vrot.lane.b32.xlu0 %v10435, 16
        %v11453 = vpop.permute.xlu0 %11452
        %11518 = vrot.lane.b32.xlu0 %v7420, 18
        %v11519 = vpop.permute.xlu0 %11518
        %11520 = vrot.lane.b32.xlu0 %v7518, 18
        %v11521 = vpop.permute.xlu0 %11520
        %11522 = vrot.lane.b32.xlu0 %v7616, 18
        %v11523 = vpop.permute.xlu0 %11522
        %11524 = vrot.lane.b32.xlu0 %v7714, 18
        %v11525 = vpop.permute.xlu0 %11524
        %11526 = vrot.lane.b32.xlu0 %v7812, 18
        %v11527 = vpop.permute.xlu0 %11526
        %11528 = vrot.lane.b32.xlu0 %v7910, 18
        %v11529 = vpop.permute.xlu0 %11528
        %11530 = vrot.lane.b32.xlu0 %v8008, 18
        %v11531 = vpop.permute.xlu0 %11530
        %11532 = vrot.lane.b32.xlu0 %v8106, 18
        %v11533 = vpop.permute.xlu0 %11532
        %11534 = vrot.lane.b32.xlu0 %v8204, 18
        %v11535 = vpop.permute.xlu0 %11534
        %11536 = vrot.lane.b32.xlu0 %v8302, 18
        %v11537 = vpop.permute.xlu0 %11536
        %11538 = vrot.lane.b32.xlu0 %v8400, 18
        %v11539 = vpop.permute.xlu0 %11538
        %11540 = vrot.lane.b32.xlu0 %v8498, 18
        %v11541 = vpop.permute.xlu0 %11540
        %11542 = vrot.lane.b32.xlu0 %v8596, 18
        %v11543 = vpop.permute.xlu0 %11542
        %11544 = vrot.lane.b32.xlu0 %v8694, 18
        %v11545 = vpop.permute.xlu0 %11544
        %11546 = vrot.lane.b32.xlu0 %v8792, 18
        %v11547 = vpop.permute.xlu0 %11546
        %11548 = vrot.lane.b32.xlu0 %v8890, 18
        %v11549 = vpop.permute.xlu0 %11548
        %11550 = vrot.lane.b32.xlu0 %v8988, 18
        %v11551 = vpop.permute.xlu0 %11550
        %11552 = vrot.lane.b32.xlu0 %v9086, 18
        %v11553 = vpop.permute.xlu0 %11552
        %11554 = vrot.lane.b32.xlu0 %v9184, 18
        %v11555 = vpop.permute.xlu0 %11554
        %11556 = vrot.lane.b32.xlu0 %v9282, 18
        %v11557 = vpop.permute.xlu0 %11556
        %11558 = vrot.lane.b32.xlu0 %v9380, 18
        %v11559 = vpop.permute.xlu0 %11558
        %11560 = vrot.lane.b32.xlu0 %v9478, 18
        %v11561 = vpop.permute.xlu0 %11560
        %11562 = vrot.lane.b32.xlu0 %v9576, 18
        %v11563 = vpop.permute.xlu0 %11562
        %11564 = vrot.lane.b32.xlu0 %v9674, 18
        %v11565 = vpop.permute.xlu0 %11564
        %11566 = vrot.lane.b32.xlu0 %v9772, 18
        %v11567 = vpop.permute.xlu0 %11566
        %11568 = vrot.lane.b32.xlu0 %v9870, 18
        %v11569 = vpop.permute.xlu0 %11568
        %11570 = vrot.lane.b32.xlu0 %v9968, 18
        %v11571 = vpop.permute.xlu0 %11570
        %11572 = vrot.lane.b32.xlu0 %v10066, 18
        %v11573 = vpop.permute.xlu0 %11572
        %11574 = vrot.lane.b32.xlu0 %v10164, 18
        %v11575 = vpop.permute.xlu0 %11574
        %11576 = vrot.lane.b32.xlu0 %v10262, 18
        %v11577 = vpop.permute.xlu0 %11576
        %11578 = vrot.lane.b32.xlu0 %v10360, 18
        %v11579 = vpop.permute.xlu0 %11578
        %11580 = vrot.lane.b32.xlu0 %v10458, 18
        %v11581 = vpop.permute.xlu0 %11580
        %11646 = vrot.lane.b32.xlu0 %v7404, 20
        %v11647 = vpop.permute.xlu0 %11646
        %11648 = vrot.lane.b32.xlu0 %v7502, 20
        %v11649 = vpop.permute.xlu0 %11648
        %11650 = vrot.lane.b32.xlu0 %v7600, 20
        %v11651 = vpop.permute.xlu0 %11650
        %11652 = vrot.lane.b32.xlu0 %v7698, 20
        %v11653 = vpop.permute.xlu0 %11652
        %11654 = vrot.lane.b32.xlu0 %v7796, 20
        %v11655 = vpop.permute.xlu0 %11654
        %11656 = vrot.lane.b32.xlu0 %v7894, 20
        %v11657 = vpop.permute.xlu0 %11656
        %11658 = vrot.lane.b32.xlu0 %v7992, 20
        %v11659 = vpop.permute.xlu0 %11658
        %11660 = vrot.lane.b32.xlu0 %v8090, 20
        %v11661 = vpop.permute.xlu0 %11660
        %11662 = vrot.lane.b32.xlu0 %v8188, 20
        %v11663 = vpop.permute.xlu0 %11662
        %11664 = vrot.lane.b32.xlu0 %v8286, 20
        %v11665 = vpop.permute.xlu0 %11664
        %11666 = vrot.lane.b32.xlu0 %v8384, 20
        %v11667 = vpop.permute.xlu0 %11666
        %11668 = vrot.lane.b32.xlu0 %v8482, 20
        %v11669 = vpop.permute.xlu0 %11668
        %11670 = vrot.lane.b32.xlu0 %v8580, 20
        %v11671 = vpop.permute.xlu0 %11670
        %11672 = vrot.lane.b32.xlu0 %v8678, 20
        %v11673 = vpop.permute.xlu0 %11672
        %11674 = vrot.lane.b32.xlu0 %v8776, 20
        %v11675 = vpop.permute.xlu0 %11674
        %11676 = vrot.lane.b32.xlu0 %v8874, 20
        %v11677 = vpop.permute.xlu0 %11676
        %11678 = vrot.lane.b32.xlu0 %v8972, 20
        %v11679 = vpop.permute.xlu0 %11678
        %11680 = vrot.lane.b32.xlu0 %v9070, 20
        %v11681 = vpop.permute.xlu0 %11680
        %11682 = vrot.lane.b32.xlu0 %v9168, 20
        %v11683 = vpop.permute.xlu0 %11682
        %11684 = vrot.lane.b32.xlu0 %v9266, 20
        %v11685 = vpop.permute.xlu0 %11684
        %11686 = vrot.lane.b32.xlu0 %v9364, 20
        %v11687 = vpop.permute.xlu0 %11686
        %11688 = vrot.lane.b32.xlu0 %v9462, 20
        %v11689 = vpop.permute.xlu0 %11688
        %11690 = vrot.lane.b32.xlu0 %v9560, 20
        %v11691 = vpop.permute.xlu0 %11690
        %11692 = vrot.lane.b32.xlu0 %v9658, 20
        %v11693 = vpop.permute.xlu0 %11692
        %11694 = vrot.lane.b32.xlu0 %v9756, 20
        %v11695 = vpop.permute.xlu0 %11694
        %11696 = vrot.lane.b32.xlu0 %v9854, 20
        %v11697 = vpop.permute.xlu0 %11696
        %11698 = vrot.lane.b32.xlu0 %v9952, 20
        %v11699 = vpop.permute.xlu0 %11698
        %11700 = vrot.lane.b32.xlu0 %v10050, 20
        %v11701 = vpop.permute.xlu0 %11700
        %11702 = vrot.lane.b32.xlu0 %v10148, 20
        %v11703 = vpop.permute.xlu0 %11702
        %11704 = vrot.lane.b32.xlu0 %v10246, 20
        %v11705 = vpop.permute.xlu0 %11704
        %11706 = vrot.lane.b32.xlu0 %v10344, 20
        %v11707 = vpop.permute.xlu0 %11706
        %11708 = vrot.lane.b32.xlu0 %v10442, 20
        %v11709 = vpop.permute.xlu0 %11708
        %11774 = vrot.lane.b32.xlu0 %v7421, 22
        %v11775 = vpop.permute.xlu0 %11774
        %11776 = vrot.lane.b32.xlu0 %v7519, 22
        %v11777 = vpop.permute.xlu0 %11776
        %11778 = vrot.lane.b32.xlu0 %v7617, 22
        %v11779 = vpop.permute.xlu0 %11778
        %11780 = vrot.lane.b32.xlu0 %v7715, 22
        %v11781 = vpop.permute.xlu0 %11780
        %11782 = vrot.lane.b32.xlu0 %v7813, 22
        %v11783 = vpop.permute.xlu0 %11782
        %11784 = vrot.lane.b32.xlu0 %v7911, 22
        %v11785 = vpop.permute.xlu0 %11784
        %11786 = vrot.lane.b32.xlu0 %v8009, 22
        %v11787 = vpop.permute.xlu0 %11786
        %11788 = vrot.lane.b32.xlu0 %v8107, 22
        %v11789 = vpop.permute.xlu0 %11788
        %11790 = vrot.lane.b32.xlu0 %v8205, 22
        %v11791 = vpop.permute.xlu0 %11790
        %11792 = vrot.lane.b32.xlu0 %v8303, 22
        %v11793 = vpop.permute.xlu0 %11792
        %11794 = vrot.lane.b32.xlu0 %v8401, 22
        %v11795 = vpop.permute.xlu0 %11794
        %11796 = vrot.lane.b32.xlu0 %v8499, 22
        %v11797 = vpop.permute.xlu0 %11796
        %11798 = vrot.lane.b32.xlu0 %v8597, 22
        %v11799 = vpop.permute.xlu0 %11798
        %11800 = vrot.lane.b32.xlu0 %v8695, 22
        %v11801 = vpop.permute.xlu0 %11800
        %11802 = vrot.lane.b32.xlu0 %v8793, 22
        %v11803 = vpop.permute.xlu0 %11802
        %11804 = vrot.lane.b32.xlu0 %v8891, 22
        %v11805 = vpop.permute.xlu0 %11804
        %11806 = vrot.lane.b32.xlu0 %v8989, 22
        %v11807 = vpop.permute.xlu0 %11806
        %11808 = vrot.lane.b32.xlu0 %v9087, 22
        %v11809 = vpop.permute.xlu0 %11808
        %11810 = vrot.lane.b32.xlu0 %v9185, 22
        %v11811 = vpop.permute.xlu0 %11810
        %11812 = vrot.lane.b32.xlu0 %v9283, 22
        %v11813 = vpop.permute.xlu0 %11812
        %11814 = vrot.lane.b32.xlu0 %v9381, 22
        %v11815 = vpop.permute.xlu0 %11814
        %11816 = vrot.lane.b32.xlu0 %v9479, 22
        %v11817 = vpop.permute.xlu0 %11816
        %11818 = vrot.lane.b32.xlu0 %v9577, 22
        %v11819 = vpop.permute.xlu0 %11818
        %11820 = vrot.lane.b32.xlu0 %v9675, 22
        %v11821 = vpop.permute.xlu0 %11820
        %11822 = vrot.lane.b32.xlu0 %v9773, 22
        %v11823 = vpop.permute.xlu0 %11822
        %11824 = vrot.lane.b32.xlu0 %v9871, 22
        %v11825 = vpop.permute.xlu0 %11824
        %11826 = vrot.lane.b32.xlu0 %v9969, 22
        %v11827 = vpop.permute.xlu0 %11826
        %11828 = vrot.lane.b32.xlu0 %v10067, 22
        %v11829 = vpop.permute.xlu0 %11828
        %11830 = vrot.lane.b32.xlu0 %v10165, 22
        %v11831 = vpop.permute.xlu0 %11830
        %11832 = vrot.lane.b32.xlu0 %v10263, 22
        %v11833 = vpop.permute.xlu0 %11832
        %11834 = vrot.lane.b32.xlu0 %v10361, 22
        %v11835 = vpop.permute.xlu0 %11834
        %11836 = vrot.lane.b32.xlu0 %v10459, 22
        %v11837 = vpop.permute.xlu0 %11836
        %11902 = vrot.lane.b32.xlu0 %v7412, 24
        %v11903 = vpop.permute.xlu0 %11902
        %11904 = vrot.lane.b32.xlu0 %v7510, 24
        %v11905 = vpop.permute.xlu0 %11904
        %11906 = vrot.lane.b32.xlu0 %v7608, 24
        %v11907 = vpop.permute.xlu0 %11906
        %11908 = vrot.lane.b32.xlu0 %v7706, 24
        %v11909 = vpop.permute.xlu0 %11908
        %11910 = vrot.lane.b32.xlu0 %v7804, 24
        %v11911 = vpop.permute.xlu0 %11910
        %11912 = vrot.lane.b32.xlu0 %v7902, 24
        %v11913 = vpop.permute.xlu0 %11912
        %11914 = vrot.lane.b32.xlu0 %v8000, 24
        %v11915 = vpop.permute.xlu0 %11914
        %11916 = vrot.lane.b32.xlu0 %v8098, 24
        %v11917 = vpop.permute.xlu0 %11916
        %11918 = vrot.lane.b32.xlu0 %v8196, 24
        %v11919 = vpop.permute.xlu0 %11918
        %11920 = vrot.lane.b32.xlu0 %v8294, 24
        %v11921 = vpop.permute.xlu0 %11920
        %11922 = vrot.lane.b32.xlu0 %v8392, 24
        %v11923 = vpop.permute.xlu0 %11922
        %11924 = vrot.lane.b32.xlu0 %v8490, 24
        %v11925 = vpop.permute.xlu0 %11924
        %11926 = vrot.lane.b32.xlu0 %v8588, 24
        %v11927 = vpop.permute.xlu0 %11926
        %11928 = vrot.lane.b32.xlu0 %v8686, 24
        %v11929 = vpop.permute.xlu0 %11928
        %11930 = vrot.lane.b32.xlu0 %v8784, 24
        %v11931 = vpop.permute.xlu0 %11930
        %11932 = vrot.lane.b32.xlu0 %v8882, 24
        %v11933 = vpop.permute.xlu0 %11932
        %11934 = vrot.lane.b32.xlu0 %v8980, 24
        %v11935 = vpop.permute.xlu0 %11934
        %11936 = vrot.lane.b32.xlu0 %v9078, 24
        %v11937 = vpop.permute.xlu0 %11936
        %11938 = vrot.lane.b32.xlu0 %v9176, 24
        %v11939 = vpop.permute.xlu0 %11938
        %11940 = vrot.lane.b32.xlu0 %v9274, 24
        %v11941 = vpop.permute.xlu0 %11940
        %11942 = vrot.lane.b32.xlu0 %v9372, 24
        %v11943 = vpop.permute.xlu0 %11942
        %11944 = vrot.lane.b32.xlu0 %v9470, 24
        %v11945 = vpop.permute.xlu0 %11944
        %11946 = vrot.lane.b32.xlu0 %v9568, 24
        %v11947 = vpop.permute.xlu0 %11946
        %11948 = vrot.lane.b32.xlu0 %v9666, 24
        %v11949 = vpop.permute.xlu0 %11948
        %11950 = vrot.lane.b32.xlu0 %v9764, 24
        %v11951 = vpop.permute.xlu0 %11950
        %11952 = vrot.lane.b32.xlu0 %v9862, 24
        %v11953 = vpop.permute.xlu0 %11952
        %11954 = vrot.lane.b32.xlu0 %v9960, 24
        %v11955 = vpop.permute.xlu0 %11954
        %11956 = vrot.lane.b32.xlu0 %v10058, 24
        %v11957 = vpop.permute.xlu0 %11956
        %11958 = vrot.lane.b32.xlu0 %v10156, 24
        %v11959 = vpop.permute.xlu0 %11958
        %11960 = vrot.lane.b32.xlu0 %v10254, 24
        %v11961 = vpop.permute.xlu0 %11960
        %11962 = vrot.lane.b32.xlu0 %v10352, 24
        %v11963 = vpop.permute.xlu0 %11962
        %11964 = vrot.lane.b32.xlu0 %v10450, 24
        %v11965 = vpop.permute.xlu0 %11964
        %12030 = vrot.lane.b32.xlu0 %v7422, 26
        %v12031 = vpop.permute.xlu0 %12030
        %12032 = vrot.lane.b32.xlu0 %v7520, 26
        %v12033 = vpop.permute.xlu0 %12032
        %12034 = vrot.lane.b32.xlu0 %v7618, 26
        %v12035 = vpop.permute.xlu0 %12034
        %12036 = vrot.lane.b32.xlu0 %v7716, 26
        %v12037 = vpop.permute.xlu0 %12036
        %12038 = vrot.lane.b32.xlu0 %v7814, 26
        %v12039 = vpop.permute.xlu0 %12038
        %12040 = vrot.lane.b32.xlu0 %v7912, 26
        %v12041 = vpop.permute.xlu0 %12040
        %12042 = vrot.lane.b32.xlu0 %v8010, 26
        %v12043 = vpop.permute.xlu0 %12042
        %12044 = vrot.lane.b32.xlu0 %v8108, 26
        %v12045 = vpop.permute.xlu0 %12044
        %12046 = vrot.lane.b32.xlu0 %v8206, 26
        %v12047 = vpop.permute.xlu0 %12046
        %12048 = vrot.lane.b32.xlu0 %v8304, 26
        %v12049 = vpop.permute.xlu0 %12048
        %12050 = vrot.lane.b32.xlu0 %v8402, 26
        %v12051 = vpop.permute.xlu0 %12050
        %12052 = vrot.lane.b32.xlu0 %v8500, 26
        %v12053 = vpop.permute.xlu0 %12052
        %12054 = vrot.lane.b32.xlu0 %v8598, 26
        %v12055 = vpop.permute.xlu0 %12054
        %12056 = vrot.lane.b32.xlu0 %v8696, 26
        %v12057 = vpop.permute.xlu0 %12056
        %12058 = vrot.lane.b32.xlu0 %v8794, 26
        %v12059 = vpop.permute.xlu0 %12058
        %12060 = vrot.lane.b32.xlu0 %v8892, 26
        %v12061 = vpop.permute.xlu0 %12060
        %12062 = vrot.lane.b32.xlu0 %v8990, 26
        %v12063 = vpop.permute.xlu0 %12062
        %12064 = vrot.lane.b32.xlu0 %v9088, 26
        %v12065 = vpop.permute.xlu0 %12064
        %12066 = vrot.lane.b32.xlu0 %v9186, 26
        %v12067 = vpop.permute.xlu0 %12066
        %12068 = vrot.lane.b32.xlu0 %v9284, 26
        %v12069 = vpop.permute.xlu0 %12068
        %12070 = vrot.lane.b32.xlu0 %v9382, 26
        %v12071 = vpop.permute.xlu0 %12070
        %12072 = vrot.lane.b32.xlu0 %v9480, 26
        %v12073 = vpop.permute.xlu0 %12072
        %12074 = vrot.lane.b32.xlu0 %v9578, 26
        %v12075 = vpop.permute.xlu0 %12074
        %12076 = vrot.lane.b32.xlu0 %v9676, 26
        %v12077 = vpop.permute.xlu0 %12076
        %12078 = vrot.lane.b32.xlu0 %v9774, 26
        %v12079 = vpop.permute.xlu0 %12078
        %12080 = vrot.lane.b32.xlu0 %v9872, 26
        %v12081 = vpop.permute.xlu0 %12080
        %12082 = vrot.lane.b32.xlu0 %v9970, 26
        %v12083 = vpop.permute.xlu0 %12082
        %12084 = vrot.lane.b32.xlu0 %v10068, 26
        %v12085 = vpop.permute.xlu0 %12084
        %12086 = vrot.lane.b32.xlu0 %v10166, 26
        %v12087 = vpop.permute.xlu0 %12086
        %12088 = vrot.lane.b32.xlu0 %v10264, 26
        %v12089 = vpop.permute.xlu0 %12088
        %12090 = vrot.lane.b32.xlu0 %v10362, 26
        %v12091 = vpop.permute.xlu0 %12090
        %12092 = vrot.lane.b32.xlu0 %v10460, 26
        %v12093 = vpop.permute.xlu0 %12092
        %12158 = vrot.lane.b32.xlu0 %v7419, 28
        %v12159 = vpop.permute.xlu0 %12158
        %12160 = vrot.lane.b32.xlu0 %v7517, 28
        %v12161 = vpop.permute.xlu0 %12160
        %12162 = vrot.lane.b32.xlu0 %v7615, 28
        %v12163 = vpop.permute.xlu0 %12162
        %12164 = vrot.lane.b32.xlu0 %v7713, 28
        %v12165 = vpop.permute.xlu0 %12164
        %12166 = vrot.lane.b32.xlu0 %v7811, 28
        %v12167 = vpop.permute.xlu0 %12166
        %12168 = vrot.lane.b32.xlu0 %v7909, 28
        %v12169 = vpop.permute.xlu0 %12168
        %12170 = vrot.lane.b32.xlu0 %v8007, 28
        %v12171 = vpop.permute.xlu0 %12170
        %12172 = vrot.lane.b32.xlu0 %v8105, 28
        %v12173 = vpop.permute.xlu0 %12172
        %12174 = vrot.lane.b32.xlu0 %v8203, 28
        %v12175 = vpop.permute.xlu0 %12174
        %12176 = vrot.lane.b32.xlu0 %v8301, 28
        %v12177 = vpop.permute.xlu0 %12176
        %12178 = vrot.lane.b32.xlu0 %v8399, 28
        %v12179 = vpop.permute.xlu0 %12178
        %12180 = vrot.lane.b32.xlu0 %v8497, 28
        %v12181 = vpop.permute.xlu0 %12180
        %12182 = vrot.lane.b32.xlu0 %v8595, 28
        %v12183 = vpop.permute.xlu0 %12182
        %12184 = vrot.lane.b32.xlu0 %v8693, 28
        %v12185 = vpop.permute.xlu0 %12184
        %12186 = vrot.lane.b32.xlu0 %v8791, 28
        %v12187 = vpop.permute.xlu0 %12186
        %12188 = vrot.lane.b32.xlu0 %v8889, 28
        %v12189 = vpop.permute.xlu0 %12188
        %12190 = vrot.lane.b32.xlu0 %v8987, 28
        %v12191 = vpop.permute.xlu0 %12190
        %12192 = vrot.lane.b32.xlu0 %v9085, 28
        %v12193 = vpop.permute.xlu0 %12192
        %12194 = vrot.lane.b32.xlu0 %v9183, 28
        %v12195 = vpop.permute.xlu0 %12194
        %12196 = vrot.lane.b32.xlu0 %v9281, 28
        %v12197 = vpop.permute.xlu0 %12196
        %12198 = vrot.lane.b32.xlu0 %v9379, 28
        %v12199 = vpop.permute.xlu0 %12198
        %12200 = vrot.lane.b32.xlu0 %v9477, 28
        %v12201 = vpop.permute.xlu0 %12200
        %12202 = vrot.lane.b32.xlu0 %v9575, 28
        %v12203 = vpop.permute.xlu0 %12202
        %12204 = vrot.lane.b32.xlu0 %v9673, 28
        %v12205 = vpop.permute.xlu0 %12204
        %12206 = vrot.lane.b32.xlu0 %v9771, 28
        %v12207 = vpop.permute.xlu0 %12206
        %12208 = vrot.lane.b32.xlu0 %v9869, 28
        %v12209 = vpop.permute.xlu0 %12208
        %12210 = vrot.lane.b32.xlu0 %v9967, 28
        %v12211 = vpop.permute.xlu0 %12210
        %12212 = vrot.lane.b32.xlu0 %v10065, 28
        %v12213 = vpop.permute.xlu0 %12212
        %12214 = vrot.lane.b32.xlu0 %v10163, 28
        %v12215 = vpop.permute.xlu0 %12214
        %12216 = vrot.lane.b32.xlu0 %v10261, 28
        %v12217 = vpop.permute.xlu0 %12216
        %12218 = vrot.lane.b32.xlu0 %v10359, 28
        %v12219 = vpop.permute.xlu0 %12218
        %12220 = vrot.lane.b32.xlu0 %v10457, 28
        %v12221 = vpop.permute.xlu0 %12220
        %12286 = vrot.lane.b32.xlu0 %v7423, 30
        %v12287 = vpop.permute.xlu0 %12286
        %12288 = vrot.lane.b32.xlu0 %v7521, 30
        %v12289 = vpop.permute.xlu0 %12288
        %12290 = vrot.lane.b32.xlu0 %v7619, 30
        %v12291 = vpop.permute.xlu0 %12290
        %12292 = vrot.lane.b32.xlu0 %v7717, 30
        %v12293 = vpop.permute.xlu0 %12292
        %12294 = vrot.lane.b32.xlu0 %v7815, 30
        %v12295 = vpop.permute.xlu0 %12294
        %12296 = vrot.lane.b32.xlu0 %v7913, 30
        %v12297 = vpop.permute.xlu0 %12296
        %12298 = vrot.lane.b32.xlu0 %v8011, 30
        %v12299 = vpop.permute.xlu0 %12298
        %12300 = vrot.lane.b32.xlu0 %v8109, 30
        %v12301 = vpop.permute.xlu0 %12300
        %12302 = vrot.lane.b32.xlu0 %v8207, 30
        %v12303 = vpop.permute.xlu0 %12302
        %12304 = vrot.lane.b32.xlu0 %v8305, 30
        %v12305 = vpop.permute.xlu0 %12304
        %12306 = vrot.lane.b32.xlu0 %v8403, 30
        %v12307 = vpop.permute.xlu0 %12306
        %12308 = vrot.lane.b32.xlu0 %v8501, 30
        %v12309 = vpop.permute.xlu0 %12308
        %12310 = vrot.lane.b32.xlu0 %v8599, 30
        %v12311 = vpop.permute.xlu0 %12310
        %12312 = vrot.lane.b32.xlu0 %v8697, 30
        %v12313 = vpop.permute.xlu0 %12312
        %12314 = vrot.lane.b32.xlu0 %v8795, 30
        %v12315 = vpop.permute.xlu0 %12314
        %12316 = vrot.lane.b32.xlu0 %v8893, 30
        %v12317 = vpop.permute.xlu0 %12316
        %12318 = vrot.lane.b32.xlu0 %v8991, 30
        %v12319 = vpop.permute.xlu0 %12318
        %12320 = vrot.lane.b32.xlu0 %v9089, 30
        %v12321 = vpop.permute.xlu0 %12320
        %12322 = vrot.lane.b32.xlu0 %v9187, 30
        %v12323 = vpop.permute.xlu0 %12322
        %12324 = vrot.lane.b32.xlu0 %v9285, 30
        %v12325 = vpop.permute.xlu0 %12324
        %12326 = vrot.lane.b32.xlu0 %v9383, 30
        %v12327 = vpop.permute.xlu0 %12326
        %12328 = vrot.lane.b32.xlu0 %v9481, 30
        %v12329 = vpop.permute.xlu0 %12328
        %12330 = vrot.lane.b32.xlu0 %v9579, 30
        %v12331 = vpop.permute.xlu0 %12330
        %12332 = vrot.lane.b32.xlu0 %v9677, 30
        %v12333 = vpop.permute.xlu0 %12332
        %12334 = vrot.lane.b32.xlu0 %v9775, 30
        %v12335 = vpop.permute.xlu0 %12334
        %12336 = vrot.lane.b32.xlu0 %v9873, 30
        %v12337 = vpop.permute.xlu0 %12336
        %12338 = vrot.lane.b32.xlu0 %v9971, 30
        %v12339 = vpop.permute.xlu0 %12338
        %12340 = vrot.lane.b32.xlu0 %v10069, 30
        %v12341 = vpop.permute.xlu0 %12340
        %12342 = vrot.lane.b32.xlu0 %v10167, 30
        %v12343 = vpop.permute.xlu0 %12342
        %12344 = vrot.lane.b32.xlu0 %v10265, 30
        %v12345 = vpop.permute.xlu0 %12344
        %12346 = vrot.lane.b32.xlu0 %v10363, 30
        %v12347 = vpop.permute.xlu0 %12346
        %12348 = vrot.lane.b32.xlu0 %v10461, 30
        %v12349 = vpop.permute.xlu0 %12348
        %v12382 = vsel %vm6831, %v7348, %v10495
        %v12383 = vsel %vm6831, %v7446, %v10497
        %v12384 = vsel %vm6831, %v7544, %v10499
        %v12385 = vsel %vm6831, %v7642, %v10501
        %v12386 = vsel %vm6831, %v7740, %v10503
        %v12387 = vsel %vm6831, %v7838, %v10505
        %v12388 = vsel %vm6831, %v7936, %v10507
        %v12389 = vsel %vm6831, %v8034, %v10509
        %v12390 = vsel %vm6831, %v8132, %v10511
        %v12391 = vsel %vm6831, %v8230, %v10513
        %v12392 = vsel %vm6831, %v8328, %v10515
        %v12393 = vsel %vm6831, %v8426, %v10517
        %v12394 = vsel %vm6831, %v8524, %v10519
        %v12395 = vsel %vm6831, %v8622, %v10521
        %v12396 = vsel %vm6831, %v8720, %v10523
        %v12397 = vsel %vm6831, %v8818, %v10525
        %v12398 = vsel %vm6831, %v8916, %v10527
        %v12399 = vsel %vm6831, %v9014, %v10529
        %v12400 = vsel %vm6831, %v9112, %v10531
        %v12401 = vsel %vm6831, %v9210, %v10533
        %v12402 = vsel %vm6831, %v9308, %v10535
        %v12403 = vsel %vm6831, %v9406, %v10537
        %v12404 = vsel %vm6831, %v9504, %v10539
        %v12405 = vsel %vm6831, %v9602, %v10541
        %v12406 = vsel %vm6831, %v9700, %v10543
        %v12407 = vsel %vm6831, %v9798, %v10545
        %v12408 = vsel %vm6831, %v9896, %v10547
        %v12409 = vsel %vm6831, %v9994, %v10549
        %v12410 = vsel %vm6831, %v10092, %v10551
        %v12411 = vsel %vm6831, %v10190, %v10553
        %v12412 = vsel %vm6831, %v10288, %v10555
        %v12413 = vsel %vm6831, %v10386, %v10557
        %v12414 = vsel %vm6864, %v12382, %v10623
        %v12415 = vsel %vm6864, %v12383, %v10625
        %v12416 = vsel %vm6864, %v12384, %v10627
        %v12417 = vsel %vm6864, %v12385, %v10629
        %v12418 = vsel %vm6864, %v12386, %v10631
        %v12419 = vsel %vm6864, %v12387, %v10633
        %v12420 = vsel %vm6864, %v12388, %v10635
        %v12421 = vsel %vm6864, %v12389, %v10637
        %v12422 = vsel %vm6864, %v12390, %v10639
        %v12423 = vsel %vm6864, %v12391, %v10641
        %v12424 = vsel %vm6864, %v12392, %v10643
        %v12425 = vsel %vm6864, %v12393, %v10645
        %v12426 = vsel %vm6864, %v12394, %v10647
        %v12427 = vsel %vm6864, %v12395, %v10649
        %v12428 = vsel %vm6864, %v12396, %v10651
        %v12429 = vsel %vm6864, %v12397, %v10653
        %v12430 = vsel %vm6864, %v12398, %v10655
        %v12431 = vsel %vm6864, %v12399, %v10657
        %v12432 = vsel %vm6864, %v12400, %v10659
        %v12433 = vsel %vm6864, %v12401, %v10661
        %v12434 = vsel %vm6864, %v12402, %v10663
        %v12435 = vsel %vm6864, %v12403, %v10665
        %v12436 = vsel %vm6864, %v12404, %v10667
        %v12437 = vsel %vm6864, %v12405, %v10669
        %v12438 = vsel %vm6864, %v12406, %v10671
        %v12439 = vsel %vm6864, %v12407, %v10673
        %v12440 = vsel %vm6864, %v12408, %v10675
        %v12441 = vsel %vm6864, %v12409, %v10677
        %v12442 = vsel %vm6864, %v12410, %v10679
        %v12443 = vsel %vm6864, %v12411, %v10681
        %v12444 = vsel %vm6864, %v12412, %v10683
        %v12445 = vsel %vm6864, %v12413, %v10685
        %v12446 = vsel %vm6897, %v12414, %v10751
        %v12447 = vsel %vm6897, %v12415, %v10753
        %v12448 = vsel %vm6897, %v12416, %v10755
        %v12449 = vsel %vm6897, %v12417, %v10757
        %v12450 = vsel %vm6897, %v12418, %v10759
        %v12451 = vsel %vm6897, %v12419, %v10761
        %v12452 = vsel %vm6897, %v12420, %v10763
        %v12453 = vsel %vm6897, %v12421, %v10765
        %v12454 = vsel %vm6897, %v12422, %v10767
        %v12455 = vsel %vm6897, %v12423, %v10769
        %v12456 = vsel %vm6897, %v12424, %v10771
        %v12457 = vsel %vm6897, %v12425, %v10773
        %v12458 = vsel %vm6897, %v12426, %v10775
        %v12459 = vsel %vm6897, %v12427, %v10777
        %v12460 = vsel %vm6897, %v12428, %v10779
        %v12461 = vsel %vm6897, %v12429, %v10781
        %v12462 = vsel %vm6897, %v12430, %v10783
        %v12463 = vsel %vm6897, %v12431, %v10785
        %v12464 = vsel %vm6897, %v12432, %v10787
        %v12465 = vsel %vm6897, %v12433, %v10789
        %v12466 = vsel %vm6897, %v12434, %v10791
        %v12467 = vsel %vm6897, %v12435, %v10793
        %v12468 = vsel %vm6897, %v12436, %v10795
        %v12469 = vsel %vm6897, %v12437, %v10797
        %v12470 = vsel %vm6897, %v12438, %v10799
        %v12471 = vsel %vm6897, %v12439, %v10801
        %v12472 = vsel %vm6897, %v12440, %v10803
        %v12473 = vsel %vm6897, %v12441, %v10805
        %v12474 = vsel %vm6897, %v12442, %v10807
        %v12475 = vsel %vm6897, %v12443, %v10809
        %v12476 = vsel %vm6897, %v12444, %v10811
        %v12477 = vsel %vm6897, %v12445, %v10813
        %v12478 = vsel %vm6930, %v12446, %v10879
        %v12479 = vsel %vm6930, %v12447, %v10881
        %v12480 = vsel %vm6930, %v12448, %v10883
        %v12481 = vsel %vm6930, %v12449, %v10885
        %v12482 = vsel %vm6930, %v12450, %v10887
        %v12483 = vsel %vm6930, %v12451, %v10889
        %v12484 = vsel %vm6930, %v12452, %v10891
        %v12485 = vsel %vm6930, %v12453, %v10893
        %v12486 = vsel %vm6930, %v12454, %v10895
        %v12487 = vsel %vm6930, %v12455, %v10897
        %v12488 = vsel %vm6930, %v12456, %v10899
        %v12489 = vsel %vm6930, %v12457, %v10901
        %v12490 = vsel %vm6930, %v12458, %v10903
        %v12491 = vsel %vm6930, %v12459, %v10905
        %v12492 = vsel %vm6930, %v12460, %v10907
        %v12493 = vsel %vm6930, %v12461, %v10909
        %v12494 = vsel %vm6930, %v12462, %v10911
        %v12495 = vsel %vm6930, %v12463, %v10913
        %v12496 = vsel %vm6930, %v12464, %v10915
        %v12497 = vsel %vm6930, %v12465, %v10917
        %v12498 = vsel %vm6930, %v12466, %v10919
        %v12499 = vsel %vm6930, %v12467, %v10921
        %v12500 = vsel %vm6930, %v12468, %v10923
        %v12501 = vsel %vm6930, %v12469, %v10925
        %v12502 = vsel %vm6930, %v12470, %v10927
        %v12503 = vsel %vm6930, %v12471, %v10929
        %v12504 = vsel %vm6930, %v12472, %v10931
        %v12505 = vsel %vm6930, %v12473, %v10933
        %v12506 = vsel %vm6930, %v12474, %v10935
        %v12507 = vsel %vm6930, %v12475, %v10937
        %v12508 = vsel %vm6930, %v12476, %v10939
        %v12509 = vsel %vm6930, %v12477, %v10941
        %v12510 = vsel %vm6963, %v12478, %v11007
        %v12511 = vsel %vm6963, %v12479, %v11009
        %v12512 = vsel %vm6963, %v12480, %v11011
        %v12513 = vsel %vm6963, %v12481, %v11013
        %v12514 = vsel %vm6963, %v12482, %v11015
        %v12515 = vsel %vm6963, %v12483, %v11017
        %v12516 = vsel %vm6963, %v12484, %v11019
        %v12517 = vsel %vm6963, %v12485, %v11021
        %v12518 = vsel %vm6963, %v12486, %v11023
        %v12519 = vsel %vm6963, %v12487, %v11025
        %v12520 = vsel %vm6963, %v12488, %v11027
        %v12521 = vsel %vm6963, %v12489, %v11029
        %v12522 = vsel %vm6963, %v12490, %v11031
        %v12523 = vsel %vm6963, %v12491, %v11033
        %v12524 = vsel %vm6963, %v12492, %v11035
        %v12525 = vsel %vm6963, %v12493, %v11037
        %v12526 = vsel %vm6963, %v12494, %v11039
        %v12527 = vsel %vm6963, %v12495, %v11041
        %v12528 = vsel %vm6963, %v12496, %v11043
        %v12529 = vsel %vm6963, %v12497, %v11045
        %v12530 = vsel %vm6963, %v12498, %v11047
        %v12531 = vsel %vm6963, %v12499, %v11049
        %v12532 = vsel %vm6963, %v12500, %v11051
        %v12533 = vsel %vm6963, %v12501, %v11053
        %v12534 = vsel %vm6963, %v12502, %v11055
        %v12535 = vsel %vm6963, %v12503, %v11057
        %v12536 = vsel %vm6963, %v12504, %v11059
        %v12537 = vsel %vm6963, %v12505, %v11061
        %v12538 = vsel %vm6963, %v12506, %v11063
        %v12539 = vsel %vm6963, %v12507, %v11065
        %v12540 = vsel %vm6963, %v12508, %v11067
        %v12541 = vsel %vm6963, %v12509, %v11069
        %v12542 = vsel %vm6996, %v12510, %v11135
        %v12543 = vsel %vm6996, %v12511, %v11137
        %v12544 = vsel %vm6996, %v12512, %v11139
        %v12545 = vsel %vm6996, %v12513, %v11141
        %v12546 = vsel %vm6996, %v12514, %v11143
        %v12547 = vsel %vm6996, %v12515, %v11145
        %v12548 = vsel %vm6996, %v12516, %v11147
        %v12549 = vsel %vm6996, %v12517, %v11149
        %v12550 = vsel %vm6996, %v12518, %v11151
        %v12551 = vsel %vm6996, %v12519, %v11153
        %v12552 = vsel %vm6996, %v12520, %v11155
        %v12553 = vsel %vm6996, %v12521, %v11157
        %v12554 = vsel %vm6996, %v12522, %v11159
        %v12555 = vsel %vm6996, %v12523, %v11161
        %v12556 = vsel %vm6996, %v12524, %v11163
        %v12557 = vsel %vm6996, %v12525, %v11165
        %v12558 = vsel %vm6996, %v12526, %v11167
        %v12559 = vsel %vm6996, %v12527, %v11169
        %v12560 = vsel %vm6996, %v12528, %v11171
        %v12561 = vsel %vm6996, %v12529, %v11173
        %v12562 = vsel %vm6996, %v12530, %v11175
        %v12563 = vsel %vm6996, %v12531, %v11177
        %v12564 = vsel %vm6996, %v12532, %v11179
        %v12565 = vsel %vm6996, %v12533, %v11181
        %v12566 = vsel %vm6996, %v12534, %v11183
        %v12567 = vsel %vm6996, %v12535, %v11185
        %v12568 = vsel %vm6996, %v12536, %v11187
        %v12569 = vsel %vm6996, %v12537, %v11189
        %v12570 = vsel %vm6996, %v12538, %v11191
        %v12571 = vsel %vm6996, %v12539, %v11193
        %v12572 = vsel %vm6996, %v12540, %v11195
        %v12573 = vsel %vm6996, %v12541, %v11197
        %v12574 = vsel %vm7029, %v12542, %v11263
        %v12575 = vsel %vm7029, %v12543, %v11265
        %v12576 = vsel %vm7029, %v12544, %v11267
        %v12577 = vsel %vm7029, %v12545, %v11269
        %v12578 = vsel %vm7029, %v12546, %v11271
        %v12579 = vsel %vm7029, %v12547, %v11273
        %v12580 = vsel %vm7029, %v12548, %v11275
        %v12581 = vsel %vm7029, %v12549, %v11277
        %v12582 = vsel %vm7029, %v12550, %v11279
        %v12583 = vsel %vm7029, %v12551, %v11281
        %v12584 = vsel %vm7029, %v12552, %v11283
        %v12585 = vsel %vm7029, %v12553, %v11285
        %v12586 = vsel %vm7029, %v12554, %v11287
        %v12587 = vsel %vm7029, %v12555, %v11289
        %v12588 = vsel %vm7029, %v12556, %v11291
        %v12589 = vsel %vm7029, %v12557, %v11293
        %v12590 = vsel %vm7029, %v12558, %v11295
        %v12591 = vsel %vm7029, %v12559, %v11297
        %v12592 = vsel %vm7029, %v12560, %v11299
        %v12593 = vsel %vm7029, %v12561, %v11301
        %v12594 = vsel %vm7029, %v12562, %v11303
        %v12595 = vsel %vm7029, %v12563, %v11305
        %v12596 = vsel %vm7029, %v12564, %v11307
        %v12597 = vsel %vm7029, %v12565, %v11309
        %v12598 = vsel %vm7029, %v12566, %v11311
        %v12599 = vsel %vm7029, %v12567, %v11313
        %v12600 = vsel %vm7029, %v12568, %v11315
        %v12601 = vsel %vm7029, %v12569, %v11317
        %v12602 = vsel %vm7029, %v12570, %v11319
        %v12603 = vsel %vm7029, %v12571, %v11321
        %v12604 = vsel %vm7029, %v12572, %v11323
        %v12605 = vsel %vm7029, %v12573, %v11325
        %v12606 = vsel %vm7062, %v12574, %v11391
        %v12607 = vsel %vm7062, %v12575, %v11393
        %v12608 = vsel %vm7062, %v12576, %v11395
        %v12609 = vsel %vm7062, %v12577, %v11397
        %v12610 = vsel %vm7062, %v12578, %v11399
        %v12611 = vsel %vm7062, %v12579, %v11401
        %v12612 = vsel %vm7062, %v12580, %v11403
        %v12613 = vsel %vm7062, %v12581, %v11405
        %v12614 = vsel %vm7062, %v12582, %v11407
        %v12615 = vsel %vm7062, %v12583, %v11409
        %v12616 = vsel %vm7062, %v12584, %v11411
        %v12617 = vsel %vm7062, %v12585, %v11413
        %v12618 = vsel %vm7062, %v12586, %v11415
        %v12619 = vsel %vm7062, %v12587, %v11417
        %v12620 = vsel %vm7062, %v12588, %v11419
        %v12621 = vsel %vm7062, %v12589, %v11421
        %v12622 = vsel %vm7062, %v12590, %v11423
        %v12623 = vsel %vm7062, %v12591, %v11425
        %v12624 = vsel %vm7062, %v12592, %v11427
        %v12625 = vsel %vm7062, %v12593, %v11429
        %v12626 = vsel %vm7062, %v12594, %v11431
        %v12627 = vsel %vm7062, %v12595, %v11433
        %v12628 = vsel %vm7062, %v12596, %v11435
        %v12629 = vsel %vm7062, %v12597, %v11437
        %v12630 = vsel %vm7062, %v12598, %v11439
        %v12631 = vsel %vm7062, %v12599, %v11441
        %v12632 = vsel %vm7062, %v12600, %v11443
        %v12633 = vsel %vm7062, %v12601, %v11445
        %v12634 = vsel %vm7062, %v12602, %v11447
        %v12635 = vsel %vm7062, %v12603, %v11449
        %v12636 = vsel %vm7062, %v12604, %v11451
        %v12637 = vsel %vm7062, %v12605, %v11453
        %v12638 = vsel %vm7095, %v12606, %v11519
        %v12639 = vsel %vm7095, %v12607, %v11521
        %v12640 = vsel %vm7095, %v12608, %v11523
        %v12641 = vsel %vm7095, %v12609, %v11525
        %v12642 = vsel %vm7095, %v12610, %v11527
        %v12643 = vsel %vm7095, %v12611, %v11529
        %v12644 = vsel %vm7095, %v12612, %v11531
        %v12645 = vsel %vm7095, %v12613, %v11533
        %v12646 = vsel %vm7095, %v12614, %v11535
        %v12647 = vsel %vm7095, %v12615, %v11537
        %v12648 = vsel %vm7095, %v12616, %v11539
        %v12649 = vsel %vm7095, %v12617, %v11541
        %v12650 = vsel %vm7095, %v12618, %v11543
        %v12651 = vsel %vm7095, %v12619, %v11545
        %v12652 = vsel %vm7095, %v12620, %v11547
        %v12653 = vsel %vm7095, %v12621, %v11549
        %v12654 = vsel %vm7095, %v12622, %v11551
        %v12655 = vsel %vm7095, %v12623, %v11553
        %v12656 = vsel %vm7095, %v12624, %v11555
        %v12657 = vsel %vm7095, %v12625, %v11557
        %v12658 = vsel %vm7095, %v12626, %v11559
        %v12659 = vsel %vm7095, %v12627, %v11561
        %v12660 = vsel %vm7095, %v12628, %v11563
        %v12661 = vsel %vm7095, %v12629, %v11565
        %v12662 = vsel %vm7095, %v12630, %v11567
        %v12663 = vsel %vm7095, %v12631, %v11569
        %v12664 = vsel %vm7095, %v12632, %v11571
        %v12665 = vsel %vm7095, %v12633, %v11573
        %v12666 = vsel %vm7095, %v12634, %v11575
        %v12667 = vsel %vm7095, %v12635, %v11577
        %v12668 = vsel %vm7095, %v12636, %v11579
        %v12669 = vsel %vm7095, %v12637, %v11581
        %v12670 = vsel %vm7128, %v12638, %v11647
        %v12671 = vsel %vm7128, %v12639, %v11649
        %v12672 = vsel %vm7128, %v12640, %v11651
        %v12673 = vsel %vm7128, %v12641, %v11653
        %v12674 = vsel %vm7128, %v12642, %v11655
        %v12675 = vsel %vm7128, %v12643, %v11657
        %v12676 = vsel %vm7128, %v12644, %v11659
        %v12677 = vsel %vm7128, %v12645, %v11661
        %v12678 = vsel %vm7128, %v12646, %v11663
        %v12679 = vsel %vm7128, %v12647, %v11665
        %v12680 = vsel %vm7128, %v12648, %v11667
        %v12681 = vsel %vm7128, %v12649, %v11669
        %v12682 = vsel %vm7128, %v12650, %v11671
        %v12683 = vsel %vm7128, %v12651, %v11673
        %v12684 = vsel %vm7128, %v12652, %v11675
        %v12685 = vsel %vm7128, %v12653, %v11677
        %v12686 = vsel %vm7128, %v12654, %v11679
        %v12687 = vsel %vm7128, %v12655, %v11681
        %v12688 = vsel %vm7128, %v12656, %v11683
        %v12689 = vsel %vm7128, %v12657, %v11685
        %v12690 = vsel %vm7128, %v12658, %v11687
        %v12691 = vsel %vm7128, %v12659, %v11689
        %v12692 = vsel %vm7128, %v12660, %v11691
        %v12693 = vsel %vm7128, %v12661, %v11693
        %v12694 = vsel %vm7128, %v12662, %v11695
        %v12695 = vsel %vm7128, %v12663, %v11697
        %v12696 = vsel %vm7128, %v12664, %v11699
        %v12697 = vsel %vm7128, %v12665, %v11701
        %v12698 = vsel %vm7128, %v12666, %v11703
        %v12699 = vsel %vm7128, %v12667, %v11705
        %v12700 = vsel %vm7128, %v12668, %v11707
        %v12701 = vsel %vm7128, %v12669, %v11709
        %v12702 = vsel %vm7161, %v12670, %v11775
        %v12703 = vsel %vm7161, %v12671, %v11777
        %v12704 = vsel %vm7161, %v12672, %v11779
        %v12705 = vsel %vm7161, %v12673, %v11781
        %v12706 = vsel %vm7161, %v12674, %v11783
        %v12707 = vsel %vm7161, %v12675, %v11785
        %v12708 = vsel %vm7161, %v12676, %v11787
        %v12709 = vsel %vm7161, %v12677, %v11789
        %v12710 = vsel %vm7161, %v12678, %v11791
        %v12711 = vsel %vm7161, %v12679, %v11793
        %v12712 = vsel %vm7161, %v12680, %v11795
        %v12713 = vsel %vm7161, %v12681, %v11797
        %v12714 = vsel %vm7161, %v12682, %v11799
        %v12715 = vsel %vm7161, %v12683, %v11801
        %v12716 = vsel %vm7161, %v12684, %v11803
        %v12717 = vsel %vm7161, %v12685, %v11805
        %v12718 = vsel %vm7161, %v12686, %v11807
        %v12719 = vsel %vm7161, %v12687, %v11809
        %v12720 = vsel %vm7161, %v12688, %v11811
        %v12721 = vsel %vm7161, %v12689, %v11813
        %v12722 = vsel %vm7161, %v12690, %v11815
        %v12723 = vsel %vm7161, %v12691, %v11817
        %v12724 = vsel %vm7161, %v12692, %v11819
        %v12725 = vsel %vm7161, %v12693, %v11821
        %v12726 = vsel %vm7161, %v12694, %v11823
        %v12727 = vsel %vm7161, %v12695, %v11825
        %v12728 = vsel %vm7161, %v12696, %v11827
        %v12729 = vsel %vm7161, %v12697, %v11829
        %v12730 = vsel %vm7161, %v12698, %v11831
        %v12731 = vsel %vm7161, %v12699, %v11833
        %v12732 = vsel %vm7161, %v12700, %v11835
        %v12733 = vsel %vm7161, %v12701, %v11837
        %v12734 = vsel %vm7194, %v12702, %v11903
        %v12735 = vsel %vm7194, %v12703, %v11905
        %v12736 = vsel %vm7194, %v12704, %v11907
        %v12737 = vsel %vm7194, %v12705, %v11909
        %v12738 = vsel %vm7194, %v12706, %v11911
        %v12739 = vsel %vm7194, %v12707, %v11913
        %v12740 = vsel %vm7194, %v12708, %v11915
        %v12741 = vsel %vm7194, %v12709, %v11917
        %v12742 = vsel %vm7194, %v12710, %v11919
        %v12743 = vsel %vm7194, %v12711, %v11921
        %v12744 = vsel %vm7194, %v12712, %v11923
        %v12745 = vsel %vm7194, %v12713, %v11925
        %v12746 = vsel %vm7194, %v12714, %v11927
        %v12747 = vsel %vm7194, %v12715, %v11929
        %v12748 = vsel %vm7194, %v12716, %v11931
        %v12749 = vsel %vm7194, %v12717, %v11933
        %v12750 = vsel %vm7194, %v12718, %v11935
        %v12751 = vsel %vm7194, %v12719, %v11937
        %v12752 = vsel %vm7194, %v12720, %v11939
        %v12753 = vsel %vm7194, %v12721, %v11941
        %v12754 = vsel %vm7194, %v12722, %v11943
        %v12755 = vsel %vm7194, %v12723, %v11945
        %v12756 = vsel %vm7194, %v12724, %v11947
        %v12757 = vsel %vm7194, %v12725, %v11949
        %v12758 = vsel %vm7194, %v12726, %v11951
        %v12759 = vsel %vm7194, %v12727, %v11953
        %v12760 = vsel %vm7194, %v12728, %v11955
        %v12761 = vsel %vm7194, %v12729, %v11957
        %v12762 = vsel %vm7194, %v12730, %v11959
        %v12763 = vsel %vm7194, %v12731, %v11961
        %v12764 = vsel %vm7194, %v12732, %v11963
        %v12765 = vsel %vm7194, %v12733, %v11965
        %v12766 = vsel %vm7227, %v12734, %v12031
        %v12767 = vsel %vm7227, %v12735, %v12033
        %v12768 = vsel %vm7227, %v12736, %v12035
        %v12769 = vsel %vm7227, %v12737, %v12037
        %v12770 = vsel %vm7227, %v12738, %v12039
        %v12771 = vsel %vm7227, %v12739, %v12041
        %v12772 = vsel %vm7227, %v12740, %v12043
        %v12773 = vsel %vm7227, %v12741, %v12045
        %v12774 = vsel %vm7227, %v12742, %v12047
        %v12775 = vsel %vm7227, %v12743, %v12049
        %v12776 = vsel %vm7227, %v12744, %v12051
        %v12777 = vsel %vm7227, %v12745, %v12053
        %v12778 = vsel %vm7227, %v12746, %v12055
        %v12779 = vsel %vm7227, %v12747, %v12057
        %v12780 = vsel %vm7227, %v12748, %v12059
        %v12781 = vsel %vm7227, %v12749, %v12061
        %v12782 = vsel %vm7227, %v12750, %v12063
        %v12783 = vsel %vm7227, %v12751, %v12065
        %v12784 = vsel %vm7227, %v12752, %v12067
        %v12785 = vsel %vm7227, %v12753, %v12069
        %v12786 = vsel %vm7227, %v12754, %v12071
        %v12787 = vsel %vm7227, %v12755, %v12073
        %v12788 = vsel %vm7227, %v12756, %v12075
        %v12789 = vsel %vm7227, %v12757, %v12077
        %v12790 = vsel %vm7227, %v12758, %v12079
        %v12791 = vsel %vm7227, %v12759, %v12081
        %v12792 = vsel %vm7227, %v12760, %v12083
        %v12793 = vsel %vm7227, %v12761, %v12085
        %v12794 = vsel %vm7227, %v12762, %v12087
        %v12795 = vsel %vm7227, %v12763, %v12089
        %v12796 = vsel %vm7227, %v12764, %v12091
        %v12797 = vsel %vm7227, %v12765, %v12093
        %v12798 = vsel %vm7260, %v12766, %v12159
        %v12799 = vsel %vm7260, %v12767, %v12161
        %v12800 = vsel %vm7260, %v12768, %v12163
        %v12801 = vsel %vm7260, %v12769, %v12165
        %v12802 = vsel %vm7260, %v12770, %v12167
        %v12803 = vsel %vm7260, %v12771, %v12169
        %v12804 = vsel %vm7260, %v12772, %v12171
        %v12805 = vsel %vm7260, %v12773, %v12173
        %v12806 = vsel %vm7260, %v12774, %v12175
        %v12807 = vsel %vm7260, %v12775, %v12177
        %v12808 = vsel %vm7260, %v12776, %v12179
        %v12809 = vsel %vm7260, %v12777, %v12181
        %v12810 = vsel %vm7260, %v12778, %v12183
        %v12811 = vsel %vm7260, %v12779, %v12185
        %v12812 = vsel %vm7260, %v12780, %v12187
        %v12813 = vsel %vm7260, %v12781, %v12189
        %v12814 = vsel %vm7260, %v12782, %v12191
        %v12815 = vsel %vm7260, %v12783, %v12193
        %v12816 = vsel %vm7260, %v12784, %v12195
        %v12817 = vsel %vm7260, %v12785, %v12197
        %v12818 = vsel %vm7260, %v12786, %v12199
        %v12819 = vsel %vm7260, %v12787, %v12201
        %v12820 = vsel %vm7260, %v12788, %v12203
        %v12821 = vsel %vm7260, %v12789, %v12205
        %v12822 = vsel %vm7260, %v12790, %v12207
        %v12823 = vsel %vm7260, %v12791, %v12209
        %v12824 = vsel %vm7260, %v12792, %v12211
        %v12825 = vsel %vm7260, %v12793, %v12213
        %v12826 = vsel %vm7260, %v12794, %v12215
        %v12827 = vsel %vm7260, %v12795, %v12217
        %v12828 = vsel %vm7260, %v12796, %v12219
        %v12829 = vsel %vm7260, %v12797, %v12221
        %v12830 = vsel %vm7293, %v12798, %v12287
        %v12831 = vsel %vm7293, %v12799, %v12289
        %v12832 = vsel %vm7293, %v12800, %v12291
        %v12833 = vsel %vm7293, %v12801, %v12293
        %v12834 = vsel %vm7293, %v12802, %v12295
        %v12835 = vsel %vm7293, %v12803, %v12297
        %v12836 = vsel %vm7293, %v12804, %v12299
        %v12837 = vsel %vm7293, %v12805, %v12301
        %v12838 = vsel %vm7293, %v12806, %v12303
        %v12839 = vsel %vm7293, %v12807, %v12305
        %v12840 = vsel %vm7293, %v12808, %v12307
        %v12841 = vsel %vm7293, %v12809, %v12309
        %v12842 = vsel %vm7293, %v12810, %v12311
        %v12843 = vsel %vm7293, %v12811, %v12313
        %v12844 = vsel %vm7293, %v12812, %v12315
        %v12845 = vsel %vm7293, %v12813, %v12317
        %v12846 = vsel %vm7293, %v12814, %v12319
        %v12847 = vsel %vm7293, %v12815, %v12321
        %v12848 = vsel %vm7293, %v12816, %v12323
        %v12849 = vsel %vm7293, %v12817, %v12325
        %v12850 = vsel %vm7293, %v12818, %v12327
        %v12851 = vsel %vm7293, %v12819, %v12329
        %v12852 = vsel %vm7293, %v12820, %v12331
        %v12853 = vsel %vm7293, %v12821, %v12333
        %v12854 = vsel %vm7293, %v12822, %v12335
        %v12855 = vsel %vm7293, %v12823, %v12337
        %v12856 = vsel %vm7293, %v12824, %v12339
        %v12857 = vsel %vm7293, %v12825, %v12341
        %v12858 = vsel %vm7293, %v12826, %v12343
        %v12859 = vsel %vm7293, %v12827, %v12345
        %v12860 = vsel %vm7293, %v12828, %v12347
        %v12861 = vsel %vm7293, %v12829, %v12349
        %v12894 = vrot.slane %v12830, 7
        %v12895 = vrot.slane %v12831, 7
        %v12896 = vrot.slane %v12832, 7
        %v12897 = vrot.slane %v12833, 7
        %v12898 = vrot.slane %v12834, 7
        %v12899 = vrot.slane %v12835, 7
        %v12900 = vrot.slane %v12836, 7
        %v12901 = vrot.slane %v12837, 7
        %v12902 = vrot.slane %v12838, 7
        %v12903 = vrot.slane %v12839, 7
        %v12904 = vrot.slane %v12840, 7
        %v12905 = vrot.slane %v12841, 7
        %v12906 = vrot.slane %v12842, 7
        %v12907 = vrot.slane %v12843, 7
        %v12908 = vrot.slane %v12844, 7
        %v12909 = vrot.slane %v12845, 7
        %v12910 = vrot.slane %v12846, 7
        %v12911 = vrot.slane %v12847, 7
        %v12912 = vrot.slane %v12848, 7
        %v12913 = vrot.slane %v12849, 7
        %v12914 = vrot.slane %v12850, 7
        %v12915 = vrot.slane %v12851, 7
        %v12916 = vrot.slane %v12852, 7
        %v12917 = vrot.slane %v12853, 7
        %v12918 = vrot.slane %v12854, 7
        %v12919 = vrot.slane %v12855, 7
        %v12920 = vrot.slane %v12856, 7
        %v12921 = vrot.slane %v12857, 7
        %v12922 = vrot.slane %v12858, 7
        %v12923 = vrot.slane %v12859, 7
        %v12924 = vrot.slane %v12860, 7
        %v12925 = vrot.slane %v12861, 7
        %vm12958 = vcmask 1040384
        %v12959 = vsel %vm12958, %v7294, %v12894
        %v12960 = vsel %vm12958, %v7295, %v12895
        %v12961 = vsel %vm12958, %v7296, %v12896
        %v12962 = vsel %vm12958, %v7297, %v12897
        %v12963 = vsel %vm12958, %v7298, %v12898
        %v12964 = vsel %vm12958, %v7299, %v12899
        %v12965 = vsel %vm12958, %v7300, %v12900
        %v12966 = vsel %vm12958, %v7301, %v12901
        %v12967 = vsel %vm12958, %v7302, %v12902
        %v12968 = vsel %vm12958, %v7303, %v12903
        %v12969 = vsel %vm12958, %v7304, %v12904
        %v12970 = vsel %vm12958, %v7305, %v12905
        %v12971 = vsel %vm12958, %v7306, %v12906
        %v12972 = vsel %vm12958, %v7307, %v12907
        %v12973 = vsel %vm12958, %v7308, %v12908
        %v12974 = vsel %vm12958, %v7309, %v12909
        %v12975 = vsel %vm12958, %v7310, %v12910
        %v12976 = vsel %vm12958, %v7311, %v12911
        %v12977 = vsel %vm12958, %v7312, %v12912
        %v12978 = vsel %vm12958, %v7313, %v12913
        %v12979 = vsel %vm12958, %v7314, %v12914
        %v12980 = vsel %vm12958, %v7315, %v12915
        %v12981 = vsel %vm12958, %v7316, %v12916
        %v12982 = vsel %vm12958, %v7317, %v12917
        %v12983 = vsel %vm12958, %v7318, %v12918
        %v12984 = vsel %vm12958, %v7319, %v12919
        %v12985 = vsel %vm12958, %v7320, %v12920
        %v12986 = vsel %vm12958, %v7321, %v12921
        %v12987 = vsel %vm12958, %v7322, %v12922
        %v12988 = vsel %vm12958, %v7323, %v12923
        %v12989 = vsel %vm12958, %v7324, %v12924
        %v12990 = vsel %vm12958, %v7325, %v12925
        %v13023 = vcombine.low %v12959, %v12960
        %v13024 = vcombine.low %v12961, %v12962
        %v13026 = vunpack.c.l.s4 1983009808
        %v13027 = vunpack.c.0.s8 %v13026
        %v13028 = vlaneseq
        %v13029 = vshrl.u32 %v13028, 7
        %v13030 = vsub.s32 %v13027, %v13029
        %v13031 = vrot.slane %v13023, %v13030
        %v13033 = vunpack.c.l.s4 1983009808
        %v13034 = vunpack.c.0.s8 %v13033
        %v13035 = vlaneseq
        %v13036 = vshrl.u32 %v13035, 7
        %v13037 = vsub.s32 %v13034, %v13036
        %v13038 = vrot.slane %v13024, %v13037
        %v13039 = vcombine.low %v13031, %v13038
        %v13040 = vcombine.low %v12963, %v12964
        %v13041 = vcombine.low %v12965, %v12966
        %v13043 = vunpack.c.l.s4 1983009808
        %v13044 = vunpack.c.0.s8 %v13043
        %v13045 = vlaneseq
        %v13046 = vshrl.u32 %v13045, 7
        %v13047 = vsub.s32 %v13044, %v13046
        %v13048 = vrot.slane %v13040, %v13047
        %v13050 = vunpack.c.l.s4 1983009808
        %v13051 = vunpack.c.0.s8 %v13050
        %v13052 = vlaneseq
        %v13053 = vshrl.u32 %v13052, 7
        %v13054 = vsub.s32 %v13051, %v13053
        %v13055 = vrot.slane %v13041, %v13054
        %v13056 = vcombine.low %v13048, %v13055
        %v13057 = vcombine.low %v12967, %v12968
        %v13058 = vcombine.low %v12969, %v12970
        %v13060 = vunpack.c.l.s4 1983009808
        %v13061 = vunpack.c.0.s8 %v13060
        %v13062 = vlaneseq
        %v13063 = vshrl.u32 %v13062, 7
        %v13064 = vsub.s32 %v13061, %v13063
        %v13065 = vrot.slane %v13057, %v13064
        %v13067 = vunpack.c.l.s4 1983009808
        %v13068 = vunpack.c.0.s8 %v13067
        %v13069 = vlaneseq
        %v13070 = vshrl.u32 %v13069, 7
        %v13071 = vsub.s32 %v13068, %v13070
        %v13072 = vrot.slane %v13058, %v13071
        %v13073 = vcombine.low %v13065, %v13072
        %v13074 = vcombine.low %v12971, %v12972
        %v13075 = vcombine.low %v12973, %v12974
        %v13077 = vunpack.c.l.s4 1983009808
        %v13078 = vunpack.c.0.s8 %v13077
        %v13079 = vlaneseq
        %v13080 = vshrl.u32 %v13079, 7
        %v13081 = vsub.s32 %v13078, %v13080
        %v13082 = vrot.slane %v13074, %v13081
        %v13084 = vunpack.c.l.s4 1983009808
        %v13085 = vunpack.c.0.s8 %v13084
        %v13086 = vlaneseq
        %v13087 = vshrl.u32 %v13086, 7
        %v13088 = vsub.s32 %v13085, %v13087
        %v13089 = vrot.slane %v13075, %v13088
        %v13090 = vcombine.low %v13082, %v13089
        %v13091 = vcombine.low %v12975, %v12976
        %v13092 = vcombine.low %v12977, %v12978
        %v13094 = vunpack.c.l.s4 1983009808
        %v13095 = vunpack.c.0.s8 %v13094
        %v13096 = vlaneseq
        %v13097 = vshrl.u32 %v13096, 7
        %v13098 = vsub.s32 %v13095, %v13097
        %v13099 = vrot.slane %v13091, %v13098
        %v13101 = vunpack.c.l.s4 1983009808
        %v13102 = vunpack.c.0.s8 %v13101
        %v13103 = vlaneseq
        %v13104 = vshrl.u32 %v13103, 7
        %v13105 = vsub.s32 %v13102, %v13104
        %v13106 = vrot.slane %v13092, %v13105
        %v13107 = vcombine.low %v13099, %v13106
        %v13108 = vcombine.low %v12979, %v12980
        %v13109 = vcombine.low %v12981, %v12982
        %v13111 = vunpack.c.l.s4 1983009808
        %v13112 = vunpack.c.0.s8 %v13111
        %v13113 = vlaneseq
        %v13114 = vshrl.u32 %v13113, 7
        %v13115 = vsub.s32 %v13112, %v13114
        %v13116 = vrot.slane %v13108, %v13115
        %v13118 = vunpack.c.l.s4 1983009808
        %v13119 = vunpack.c.0.s8 %v13118
        %v13120 = vlaneseq
        %v13121 = vshrl.u32 %v13120, 7
        %v13122 = vsub.s32 %v13119, %v13121
        %v13123 = vrot.slane %v13109, %v13122
        %v13124 = vcombine.low %v13116, %v13123
        %v13125 = vcombine.low %v12983, %v12984
        %v13126 = vcombine.low %v12985, %v12986
        %v13128 = vunpack.c.l.s4 1983009808
        %v13129 = vunpack.c.0.s8 %v13128
        %v13130 = vlaneseq
        %v13131 = vshrl.u32 %v13130, 7
        %v13132 = vsub.s32 %v13129, %v13131
        %v13133 = vrot.slane %v13125, %v13132
        %v13135 = vunpack.c.l.s4 1983009808
        %v13136 = vunpack.c.0.s8 %v13135
        %v13137 = vlaneseq
        %v13138 = vshrl.u32 %v13137, 7
        %v13139 = vsub.s32 %v13136, %v13138
        %v13140 = vrot.slane %v13126, %v13139
        %v13141 = vcombine.low %v13133, %v13140
        %v13142 = vcombine.low %v12987, %v12988
        %v13143 = vcombine.low %v12989, %v12990
        %v13145 = vunpack.c.l.s4 1983009808
        %v13146 = vunpack.c.0.s8 %v13145
        %v13147 = vlaneseq
        %v13148 = vshrl.u32 %v13147, 7
        %v13149 = vsub.s32 %v13146, %v13148
        %v13150 = vrot.slane %v13142, %v13149
        %v13152 = vunpack.c.l.s4 1983009808
        %v13153 = vunpack.c.0.s8 %v13152
        %v13154 = vlaneseq
        %v13155 = vshrl.u32 %v13154, 7
        %v13156 = vsub.s32 %v13153, %v13155
        %v13157 = vrot.slane %v13143, %v13156
        %v13158 = vcombine.low %v13150, %v13157
        %vm13167 = vcmask 261120
        %13168 = vst.msk [vmem:[%s166] sm:$0xff] %vm13167, %v13039
        %13169 = vst.msk [vmem:[%s166 + $0x8] sm:$0xff] %vm13167, %v13056
        %13170 = vst.msk [vmem:[%s166 + $0x10] sm:$0xff] %vm13167, %v13073
        %13171 = vst.msk [vmem:[%s166 + $0x18] sm:$0xff] %vm13167, %v13090
        %13172 = vst.msk [vmem:[%s166 + $0x20] sm:$0xff] %vm13167, %v13107
        %13173 = vst.msk [vmem:[%s166 + $0x28] sm:$0xff] %vm13167, %v13124
        %13174 = vst.msk [vmem:[%s166 + $0x30] sm:$0xff] %vm13167, %v13141
        %13175 = vst.msk [vmem:[%s166 + $0x38] sm:$0xff] %vm13167, %v13158
        %s13176 = sand.u32 %s79, 1
        %s13177 = scalar_lea.sflag [#allocation4], %s13176
        %s13178 = sand.u32 %s79, 1
        %s13179 = smul.addr %s13178, 64
        %s13180 = scalar_lea.vmem [#allocation5], %s13179
        // Predicated region
        $region29: #{inverse_haar_transform.1} parent=23 // pred_check
          %p13181 = pneg %p89
        $region30: #{inverse_haar_transform.1} parent=23 // pred_check_branch
          %13183 = sbr.rel (%p13181) target = $region32
        $region31: #{inverse_haar_transform.1} parent=23 // pred_region
          %s13184 = smul.u32 2, %s24
          %s13185 = smul.u32 4, %s25
          %s13187 = ssub.s32 1024, 1024
          %13188 = vsyncadd %s13177, %s13187
          %s13189 = smul.addr %s13184, 4
          %s13190 = sadd.s32 %s13185, %s13189
          %s13191 = smul.addr %s23, 8
          %s13192 = sadd.s32 %s13190, %s13191
          %s13193 = smul.addr %s13192, 128
          %s13194 = scalar_lea.hbm %s1, %s13193
          %s13195 = sshll.u32 %s13180, 4
          %s13196 = int_to_ptr.vmem [resolvable:$true] %s13195
          %13201 = dma.vmem_to_hbm [thread:$0]  %s13196, 1024, %s13194, %s13177, 128, 128, 8
        $region32: #{inverse_haar_transform.1} parent=23 // pred_fallthru
          _
      $region24: #{inverse_haar_transform.1} parent=5 // pred_fallthru
        _
      %p13202 = scmp.le.s32.totalorder 2, %s13
      // Predicated region
      $region33: #{inverse_haar_transform.1} parent=5 // pred_check
        %p13203 = pneg %p13202
      $region34: #{inverse_haar_transform.1} parent=5 // pred_check_branch
        %13205 = sbr.rel (%p13203) target = $region36
      $region35: #{inverse_haar_transform.1} parent=5 // pred_region
        %s13206 = ssub.s32 %s13, 2
        // Predicated region
        $region37: #{inverse_haar_transform.1} parent=35 // pred_check
          %p13207 = pneg %p95
        $region38: #{inverse_haar_transform.1} parent=35 // pred_check_branch
          %13209 = sbr.rel (%p13207) target = $region40
        $region39: #{inverse_haar_transform.1} parent=35 // pred_region
          %s13210 = sand.u32 %s80, 1
          %s13211 = scalar_lea.sflag [#allocation4], %s13210
          %s13212 = sand.u32 %s80, 1
          %s13213 = smul.addr %s13212, 64
          %s13214 = scalar_lea.vmem [#allocation5], %s13213
          %13215 = dma.done %s13211, 1024
        $region40: #{inverse_haar_transform.1} parent=35 // pred_fallthru
          _
      $region36: #{inverse_haar_transform.1} parent=5 // pred_fallthru
        _
    $region6: #{inverse_haar_transform.1} parent=1 // loop_footer
      %s17 = sadd.s32 1, %s13
    $region7: #{inverse_haar_transform.1} parent=1 // loop_footer_branch
      %12 = sbr.rel target = $region3
    $region8: #{inverse_haar_transform.1} parent=1 // loop_exit
      _
    %13216 = vsyncpa [#allocation3], 1
    %s13217 = scalar_lea.sflag [#allocation3], 1
    %13218 = vsyncpa %s13217, 1
    %13219 = vsyncpa [#allocation4], 1
    %s13220 = scalar_lea.sflag [#allocation4], 1
    %13221 = vsyncpa %s13220, 1

</llo_original>
